<compile_context>
chip_gen: v6e
topology: v6e:2x2x1
jax: 0.10.0
libtpu: 0.0.40
codegen_flags: <defaults>
</compile_context>

<pallas_src>
import functools

import jax
import jax.numpy as jnp
from jax.experimental import pallas as pl
from jax.experimental.pallas import tpu as pltpu

# ----------------------------- configuration -------------------------------

_TM_MAX = 1024                           # lane tile (multiple of 128)

try:                                     # v7x has 64 MiB VMEM per TC; v5e/v6e 128 MiB
    _VMEM_CAP = int(getattr(pltpu.get_tpu_info(), "vmem_capacity_bytes",
                            64 * 1024 * 1024))
except Exception:                        # conservative fallback
    _VMEM_CAP = 64 * 1024 * 1024
_VMEM_LIMIT = int(min(96 * 1024 * 1024, (_VMEM_CAP * 3) // 4))
_VMEM_BUDGET = int(min(32 * 1024 * 1024, _VMEM_LIMIT // 2))

_BUF3 = False                            # set by _probe_buffered3() in __main__


def _probe_buffered3():
    """Only use pipeline_mode=pl.Buffered(3) if it compiles/runs on this jax."""
    try:
        def k(x_ref, o_ref):
            o_ref[...] = x_ref[...]
        spec = pl.BlockSpec((8, 128), lambda i: (0, i),
                            pipeline_mode=pl.Buffered(3))
        f = pl.pallas_call(
            k, out_shape=jax.ShapeDtypeStruct((8, 512), jnp.float32),
            grid=(4,), in_specs=[spec],
            out_specs=pl.BlockSpec((8, 128), lambda i: (0, i)))
        jax.block_until_ready(f(jnp.zeros((8, 512), jnp.float32)))
        return True
    except Exception:
        return False


# ----------------------------- Pallas kernels ------------------------------

def _conv_epilogue_kernel(w_ref, x_ref, s_ref, t_ref, *rest, relu, has_residual):
    """(O, TM) block of  act((W @ X) * scale + shift) [+ residual].
    scale/shift fold the conv bias and eval-mode BatchNorm; f32 accumulation."""
    if has_residual:
        r_ref, o_ref = rest
    else:
        (o_ref,) = rest
    y = jnp.dot(w_ref[...], x_ref[...], preferred_element_type=jnp.float32)
    y = y * s_ref[...] + t_ref[...]                 # (O,1) broadcast over lanes
    if relu:
        y = jnp.maximum(y, 0.0)
    if has_residual:
        y = y + r_ref[...].astype(jnp.float32)
    o_ref[...] = y.astype(o_ref.dtype)


def _conv_compose_kernel(w_ref, b_ref, x_ref, occ_ref, d_ref, o_ref):
    """Merged final/final2 conv fused with sigmoid + occlusion compose:
       y = sigmoid(W_s @ X + b_s) * (1 - occ) + deformed * occ
    occ is a (1, TM) row broadcast in-kernel (no (M, N) slab)."""
    y = jnp.dot(w_ref[0], x_ref[...], preferred_element_type=jnp.float32)
    y = y + b_ref[0]
    m = occ_ref[...].astype(jnp.float32)
    o_ref[...] = (jax.nn.sigmoid(y) * (1.0 - m)
                  + d_ref[...].astype(jnp.float32) * m).astype(o_ref.dtype)


# ------------------------------ tiling helpers ------------------------------

def _round_up(x, k):
    return (x + k - 1) // k * k


def _tile_m(m):
    """Lane tile: multiple of 128 (or m itself when m < 128).  Guarantees >= 2
    M-blocks when possible so the 'parallel' M axis shards across v7x's 2 TCs."""
    if m <= 128:
        return m
    tm = min(_TM_MAX, (m // 128) * 128)
    if pl.cdiv(m, tm) == 1:
        tm = max(128, _round_up(pl.cdiv(m, 2), 128))
    return tm


def _fit_vmem(tm, k, o, n_slabs):
    """Shrink tm until triple-buffered X + double-buffered out/slab blocks fit
    the per-call VMEM budget (keeps v7x's 64 MiB safe at production K)."""
    def est(t):
        return (3 * k * t * 2 + 2 * o * t * 4 + n_slabs * 2 * o * t * 4
                + o * k * 2 + 4 * o * 4)
    while tm > 128 and est(tm) > _VMEM_BUDGET:
        tm = max(128, tm // 2)
    return tm


def _x_block_spec(k, tm, index_map, n_steps):
    if _BUF3 and n_steps >= 3:
        # v5e: deeper input buffering hides the exposed streaming-X DMA.
        return pl.BlockSpec((k, tm), index_map, pipeline_mode=pl.Buffered(3))
    return pl.BlockSpec((k, tm), index_map)


# --------------------------- patches / weights (T) ---------------------------

def _patches_T(x, kh, kw):
    """(C,B,H,W) activation -> transposed patch matrix (kh*kw*C, B*H*W), bfloat16.

    Channel-leading layout => K=(tap, c) rows and M=(b, h, w) lanes are built
    with zero transposes.
    # TODO(synk): the tap stack is still one materialized HBM pass (kh*kw x the
    # activation).  Fully fusing it needs Element-indexed halo windows or
    # in-kernel lane-offset slicing of a resident padded block, both of which
    # are lowering-fragile on current Mosaic, so the explicit bf16 patch matrix
    # is kept (it is at least transposed-in-place and half-width).
    """
    c, b, h, w = x.shape
    ph, pw = kh // 2, kw // 2
    xp = jnp.pad(x, ((0, 0), (0, 0), (ph, ph), (pw, pw)))
    taps = [xp[:, :, i:i + h, j:j + w] for i in range(kh) for j in range(kw)]
    return jnp.stack(taps, axis=0).reshape(kh * kw * c, b * h * w)


def _weight_T(w):
    """PyTorch (O, Cin, kh, kw) -> (O, kh*kw*Cin) matching the (tap, c) K-order."""
    o, cin, kh, kw = w.shape
    return w.transpose(0, 2, 3, 1).reshape(o, kh * kw * cin)


# ------------------------------ conv wrappers -------------------------------

def conv2d_fused(x, w, scale, shift, *, relu, residual=None,
                 out_dtype=jnp.bfloat16):
    """k x k same-padding conv on a (C,B,H,W) activation as a lane-dense
    transposed GEMM with a fused scale/shift(+bias)/ReLU/residual epilogue."""
    c, b, h, wd = x.shape
    o = w.shape[0]
    m = b * h * wd
    xT = _patches_T(x, w.shape[2], w.shape[3]).astype(jnp.bfloat16)
    wT = _weight_T(w).astype(jnp.bfloat16)
    k = wT.shape[1]
    vecs = [scale.reshape(o, 1).astype(jnp.float32),
            shift.reshape(o, 1).astype(jnp.float32)]
    slabs = []
    if residual is not None:
        slabs.append(residual.reshape(o, m).astype(jnp.bfloat16))

    tm = _fit_vmem(_tile_m(m), k, o, len(slabs))
    nblk = pl.cdiv(m, tm)
    in_specs = [pl.BlockSpec((o, k), lambda i: (0, 0)),
                _x_block_spec(k, tm, lambda i: (0, i), nblk)]
    in_specs += [pl.BlockSpec((o, 1), lambda i: (0, 0)) for _ in vecs]
    in_specs += [pl.BlockSpec((o, tm), lambda i: (0, i)) for _ in slabs]
    kernel = functools.partial(_conv_epilogue_kernel, relu=relu,
                               has_residual=residual is not None)
    y = pl.pallas_call(
        kernel,
        out_shape=jax.ShapeDtypeStruct((o, m), out_dtype),
        grid=(nblk,),
        in_specs=in_specs,
        out_specs=pl.BlockSpec((o, tm), lambda i: (0, i)),
        compiler_params=pltpu.CompilerParams(
            dimension_semantics=("parallel",),
            vmem_limit_bytes=_VMEM_LIMIT),
    )(wT, xT, *vecs, *slabs)
    return y.reshape(o, b, h, wd)


def conv2d_compose(x, w_stack, b_stack, occ, deformed):
    """Final 7x7 conv fused with sigmoid + occlusion compose.  `w_stack` stacks
    the `final` and `final2` weights; a leading grid axis selects the weight
    block so all four decoder streams run in ONE pallas_call."""
    c, bt, h, wd = x.shape
    n_w, o = w_stack.shape[0], w_stack.shape[1]
    kh, kw = w_stack.shape[3], w_stack.shape[4]
    k = kh * kw * c
    m = bt * h * wd

    if n_w > 1 and (bt % n_w != 0 or (m // n_w) % 128 != 0):
        # Rare fallback: per-weight calls when stream halves are not lane-tileable.
        bs = bt // n_w
        parts = [conv2d_compose(x[:, s * bs:(s + 1) * bs], w_stack[s:s + 1],
                                b_stack[s:s + 1], occ[:, s * bs:(s + 1) * bs],
                                deformed[:, s * bs:(s + 1) * bs])
                 for s in range(n_w)]
        return jnp.concatenate(parts, axis=1)

    xT = _patches_T(x, kh, kw).astype(jnp.bfloat16)
    wT = jnp.stack([_weight_T(w_stack[s]) for s in range(n_w)],
                   axis=0).astype(jnp.bfloat16)                    # (n_w, O, K)
    bT = b_stack.reshape(n_w, o, 1).astype(jnp.float32)
    occ_row = occ.reshape(1, m).astype(jnp.float32)
    d_slab = deformed.reshape(o, m).astype(jnp.bfloat16)

    half = m // n_w
    if n_w == 1:
        tm = _tile_m(m)
        nblk = pl.cdiv(m, tm)
    else:
        tm = min(_TM_MAX, half)                    # tm | half so the stream
        while half % tm:                           # boundary lands on a block edge
            tm -= 128
        nblk = half // tm

    in_specs = [
        pl.BlockSpec((1, o, k), lambda s, i: (s, 0, 0)),
        pl.BlockSpec((1, o, 1), lambda s, i: (s, 0, 0)),
        pl.BlockSpec((k, tm), lambda s, i: (0, s * nblk + i)),
        pl.BlockSpec((1, tm), lambda s, i: (0, s * nblk + i)),
        pl.BlockSpec((o, tm), lambda s, i: (0, s * nblk + i)),
    ]
    out = pl.pallas_call(
        _conv_compose_kernel,
        out_shape=jax.ShapeDtypeStruct((o, m), jnp.float32),
        grid=(n_w, nblk),
        in_specs=in_specs,
        out_specs=pl.BlockSpec((o, tm), lambda s, i: (0, s * nblk + i)),
        compiler_params=pltpu.CompilerParams(
            dimension_semantics=("parallel", "parallel"),
            vmem_limit_bytes=_VMEM_LIMIT),
    )(wT, bT, xT, occ_row, d_slab)
    return out.reshape(o, bt, h, wd)


# ------------------------------ building blocks -----------------------------

def bn_affine(gamma, beta, mean, var, eps=1e-5):
    # TODO(synk): eval-mode BatchNorm (running stats folded into the conv
    # epilogue); training-mode batch statistics are not reproduced.
    s = gamma * jax.lax.rsqrt(var + eps)
    return s, beta - mean * s


def same_block(x, p):
    """Conv -> BN(eval) -> ReLU, all in one fused matmul epilogue."""
    s, t = bn_affine(p['gamma'], p['beta'], p['mean'], p['var'])
    return conv2d_fused(x, p['w'], s, p['b'] * s + t, relu=True)


def avg_pool2x2(x):
    # TODO(synk): the horizontal half of this pool could fold into the conv
    # epilogue (adjacent lanes are width neighbours); kept in XLA because the
    # strided in-kernel lane slice is relayout-fragile.
    c, b, h, w = x.shape
    return x.reshape(c, b, h // 2, 2, w // 2, 2).mean(axis=(3, 5))


def down_block(x, p):
    return avg_pool2x2(same_block(x, p))


def up_block(x, p):
    # TODO(synk): the nearest x2 upsample could be folded into the next conv's
    # patch gather instead of materializing the 4x-larger tensor.
    y = jnp.repeat(jnp.repeat(x, 2, axis=2), 2, axis=3)
    return same_block(y, p)


def res_block(x, p):
    """BN-ReLU-conv1-BN-ReLU-conv2 + x (eval BN).  The leading BN/ReLU folds
    into the patch producer, BN2/ReLU into conv1's epilogue and the residual
    add into conv2's epilogue."""
    s1, t1 = bn_affine(p['g1'], p['b1'], p['m1'], p['v1'])
    s2, t2 = bn_affine(p['g2'], p['b2'], p['m2'], p['v2'])
    h = jnp.maximum(x * s1[:, None, None, None] + t1[:, None, None, None], 0.0)
    h = conv2d_fused(h, p['w1'], s2, p['bias1'] * s2 + t2, relu=True)
    return conv2d_fused(h, p['w2'], jnp.ones_like(p['bias2']), p['bias2'],
                        relu=False, residual=x)


# ---------------- warping (plain JAX: data-dependent gather) ----------------
# TODO(synk): grid_sample's per-pixel dynamic gather and align_corners resizes
# stay in JAX; no clean Pallas TPU gather at this granularity.

def to_cbhw(x):       # (B,C,H,W) -> (C,B,H,W)
    return jnp.transpose(x, (1, 0, 2, 3))


def from_cbhw(x):     # (C,B,H,W) -> (B,C,H,W)
    return jnp.transpose(x, (1, 0, 2, 3))


def grid_sample_bilinear_cbhw(inp, grid):
    """F.grid_sample(mode='bilinear', padding_mode='zeros', align_corners=True)
    on a channel-leading (C,B,H,W) input with a (B,Hg,Wg,2) grid."""
    c, b, h, w = inp.shape
    hg, wg = grid.shape[1], grid.shape[2]
    gx, gy = grid[..., 0], grid[..., 1]
    ix = (gx + 1.0) * (w - 1) / 2.0
    iy = (gy + 1.0) * (h - 1) / 2.0
    ix0 = jnp.floor(ix)
    iy0 = jnp.floor(iy)
    ix1, iy1 = ix0 + 1.0, iy0 + 1.0
    wx1, wy1 = ix - ix0, iy - iy0
    wx0, wy0 = 1.0 - wx1, 1.0 - wy1
    flat = inp.reshape(c, b, h * w).astype(jnp.float32)

    def sample(iy_, ix_):
        valid = ((ix_ >= 0) & (ix_ <= w - 1) & (iy_ >= 0) & (iy_ <= h - 1))
        ixc = jnp.clip(ix_, 0, w - 1).astype(jnp.int32)
        iyc = jnp.clip(iy_, 0, h - 1).astype(jnp.int32)
        idx = (iyc * w + ixc).reshape(1, b, hg * wg)
        g = jnp.take_along_axis(flat, jnp.broadcast_to(idx, (c, b, hg * wg)),
                                axis=2)
        return g.reshape(c, b, hg, wg) * valid[None].astype(jnp.float32)

    v00, v01 = sample(iy0, ix0), sample(iy0, ix1)
    v10, v11 = sample(iy1, ix0), sample(iy1, ix1)
    return (v00 * (wy0 * wx0)[None] + v01 * (wy0 * wx1)[None]
            + v10 * (wy1 * wx0)[None] + v11 * (wy1 * wx1)[None])


def resize_bilinear_ac(x, out_h, out_w):
    """F.interpolate(mode='bilinear', align_corners=True) on a (B,H,W,2) grid."""
    b, h, w, c = x.shape
    if out_h == h and out_w == w:
        return x
    ys = jnp.linspace(0.0, h - 1.0, out_h)
    xs = jnp.linspace(0.0, w - 1.0, out_w)
    y0 = jnp.floor(ys).astype(jnp.int32)
    x0 = jnp.floor(xs).astype(jnp.int32)
    y1 = jnp.minimum(y0 + 1, h - 1)
    x1 = jnp.minimum(x0 + 1, w - 1)
    wy = (ys - y0.astype(ys.dtype))[None, :, None, None]
    wx = (xs - x0.astype(xs.dtype))[None, None, :, None]
    top, bot = x[:, y0], x[:, y1]
    v = top * (1.0 - wy) + bot * wy
    left, right = v[:, :, x0], v[:, :, x1]
    return left * (1.0 - wx) + right * wx


def deform_input(inp_cbhw, deformation):
    _, h_old, w_old, _ = deformation.shape
    _, _, h, w = inp_cbhw.shape
    if h_old != h or w_old != w:
        deformation = resize_bilinear_ac(deformation, h, w)
    return grid_sample_bilinear_cbhw(inp_cbhw, deformation)


# ------------------------------- parameters --------------------------------

def conv_init(key, out_c, in_c, kh, kw):
    k1, k2 = jax.random.split(key)
    return {'w': 0.05 * jax.random.normal(k1, (out_c, in_c, kh, kw), jnp.float32),
            'b': 0.05 * jax.random.normal(k2, (out_c,), jnp.float32)}


def bn_init(key, c):
    k1, k2, k3, k4 = jax.random.split(key, 4)
    return {'gamma': 1.0 + 0.1 * jax.random.normal(k1, (c,), jnp.float32),
            'beta': 0.1 * jax.random.normal(k2, (c,), jnp.float32),
            'mean': 0.1 * jax.random.normal(k3, (c,), jnp.float32),
            'var': jax.random.uniform(k4, (c,), jnp.float32,
                                      minval=0.5, maxval=1.5)}


def cn_init(key, out_c, in_c, kh, kw):
    k1, k2 = jax.random.split(key)
    p = conv_init(k1, out_c, in_c, kh, kw)
    p.update(bn_init(k2, out_c))
    return p


def res_init(key, c):
    k1, k2, k3, k4 = jax.random.split(key, 4)
    c1, c2 = conv_init(k1, c, c, 3, 3), conv_init(k2, c, c, 3, 3)
    bn1, bn2 = bn_init(k3, c), bn_init(k4, c)
    return {'w1': c1['w'], 'bias1': c1['b'], 'w2': c2['w'], 'bias2': c2['b'],
            'g1': bn1['gamma'], 'b1': bn1['beta'], 'm1': bn1['mean'], 'v1': bn1['var'],
            'g2': bn2['gamma'], 'b2': bn2['beta'], 'm2': bn2['mean'], 'v2': bn2['var']}


def init_params(key, num_channels, block_expansion, max_features, num_down_blocks):
    keys = iter(jax.random.split(key, 128))
    params = {'first': cn_init(next(keys), block_expansion, num_channels, 7, 7)}
    down, ups, ress = [], [], []
    for i in range(num_down_blocks):
        in_f = min(max_features, block_expansion * 2 ** i)
        out_f = min(max_features, block_expansion * 2 ** (i + 1))
        down.append(cn_init(next(keys), out_f, in_f, 3, 3))
        dec_in = out_f if i == num_down_blocks - 1 else out_f * 2
        ups.append(cn_init(next(keys), in_f, dec_in, 3, 3))
        ress.append(res_init(next(keys), dec_in))
        ress.append(res_init(next(keys), dec_in))
    params['down'] = down
    params['up'] = ups[::-1]       # up_blocks2 / resblock2 share these modules
    params['res'] = ress[::-1]     # (same nn.Module objects in the PyTorch code)
    params['final'] = conv_init(next(keys), num_channels, block_expansion, 7, 7)
    params['final2'] = conv_init(next(keys), num_channels, block_expansion, 7, 7)
    return params


# --------------------------------- forward ---------------------------------

def forward(params, source_image, driving_image, dense_motion, dense_motion2,
            *, num_down_blocks):
    B = source_image.shape[0]
    src, drv = to_cbhw(source_image), to_cbhw(driving_image)

    d1 = dense_motion['deformation']
    d2 = dense_motion2['deformation']
    occ1 = [to_cbhw(o) for o in dense_motion['occlusion_map']]
    occ2 = [to_cbhw(o) for o in dense_motion2['occlusion_map']]

    # ---- encoders: source + driving batched through the shared weights ----
    x = same_block(jnp.concatenate([src, drv], axis=1), params['first'])
    enc_both = [x]
    for i in range(num_down_blocks):
        x = down_block(x, params['down'][i])
        enc_both.append(x)
    enc_s = [e[:, :B] for e in enc_both]
    enc_d = [e[:, B:] for e in enc_both]

    output_dict = {}
    output_dict['contribution_maps'] = dense_motion['contribution_maps']
    output_dict['deformed_source'] = dense_motion['deformed_source']
    output_dict['occlusion_map'] = dense_motion['occlusion_map']
    output_dict['deformation'] = d1
    output_dict['contribution_maps2'] = dense_motion2['contribution_maps']
    output_dict['deformed_driving'] = dense_motion2['deformed_source']
    output_dict['occlusion_map2'] = dense_motion2['occlusion_map']
    output_dict['deformation2'] = d2

    # ---- warp + occlude bottleneck features (detach() is value-identical;
    #      the occlusion multiply fuses into the gather / patch producer) ----
    f0 = occ1[0] * deform_input(enc_s[-1], d1)      # out   (source  -> d1)
    f1 = occ2[0] * deform_input(enc_d[-1], d2)      # out2  (driving -> d2)
    f2 = occ2[0] * deform_input(f0, d2)             # out_1
    f3 = occ1[0] * deform_input(f1, d1)             # out_2
    wem0, wem1, wem2, wem3 = [f0], [f1], [f2], [f3]

    # ---- decoder: all four streams share res/up weights -> one 4B batch ----
    X = jnp.concatenate([f0, f1, f2, f3], axis=1)
    last_skip = None
    for i in range(num_down_blocks):
        X = res_block(X, params['res'][2 * i])
        X = res_block(X, params['res'][2 * i + 1])
        X = up_block(X, params['up'][i])
        oi = i + 1                                   # multi_mask=True
        s0 = occ1[oi] * deform_input(enc_s[-(i + 2)], d1)
        s1 = occ2[oi] * deform_input(enc_d[-(i + 2)], d2)
        s2 = occ2[oi] * deform_input(s0, d2)
        s3 = occ1[oi] * deform_input(s1, d1)
        wem0.append(s0); wem1.append(s1); wem2.append(s2); wem3.append(s3)
        skip = jnp.concatenate([s0, s1, s2, s3], axis=1)
        if i == num_down_blocks - 1:
            last_skip = skip
            break
        X = jnp.concatenate([X, skip], axis=0)       # channel concat (CBHW)

    deformed_source = deform_input(src, d1)
    deformed_driving = deform_input(drv, d2)
    output_dict['deformed'] = from_cbhw(deformed_source)
    output_dict['deformed2'] = from_cbhw(deformed_driving)
    output_dict['warped_encoder_maps'] = [from_cbhw(m) for m in wem0]
    output_dict['warped_encoder_maps2'] = [from_cbhw(m) for m in wem1]
    output_dict['warped_encoder_maps_1'] = [from_cbhw(m) for m in wem2]
    output_dict['warped_encoder_maps_2'] = [from_cbhw(m) for m in wem3]

    occ_last = jnp.concatenate([occ1[-1], occ2[-1], occ2[-1], occ1[-1]], axis=1)
    deformed = jnp.concatenate([deformed_source, deformed_driving,
                                deformed_driving, deformed_source], axis=1)
    # Pre-final blend (out*(1-occ)+encode_i) fuses into the patch producer;
    # sigmoid + compose are fused inside the merged final/final2 conv kernel.
    Xb = X * (1.0 - occ_last) + last_skip

    w_stack = jnp.stack([params['final']['w'], params['final2']['w']], axis=0)
    b_stack = jnp.stack([params['final']['b'], params['final2']['b']], axis=0)
    pred = conv2d_compose(Xb, w_stack, b_stack, occ_last, deformed)
    output_dict['prediction_sd'] = from_cbhw(pred[:, :B])
    output_dict['prediction_ds'] = from_cbhw(pred[:, B:2 * B])
    output_dict['prediction_sds'] = from_cbhw(pred[:, 2 * B:3 * B])
    output_dict['prediction_dsd'] = from_cbhw(pred[:, 3 * B:])
    return output_dict


# ----------------------------------- main -----------------------------------

if __name__ == "__main__":
    _BUF3 = _probe_buffered3()

    B, NUM_CHANNELS, HW = 2, 3, 16
    BLOCK_EXPANSION, MAX_FEATURES, NUM_DOWN_BLOCKS = 8, 32, 2

    key = jax.random.PRNGKey(0)
    kp, ks, kd, km1, km2 = jax.random.split(key, 5)

    params = init_params(kp, NUM_CHANNELS, BLOCK_EXPANSION, MAX_FEATURES,
                         NUM_DOWN_BLOCKS)

    source_image = jax.random.uniform(ks, (B, NUM_CHANNELS, HW, HW), jnp.float32)
    driving_image = jax.random.uniform(kd, (B, NUM_CHANNELS, HW, HW), jnp.float32)

    occ_sizes = [HW // (2 ** (NUM_DOWN_BLOCKS - j)) for j in range(NUM_DOWN_BLOCKS + 1)]

    def make_dense_motion(k):
        kk = jax.random.split(k, 3 + len(occ_sizes))
        deformation = jax.random.uniform(kk[0], (B, HW, HW, 2), jnp.float32,
                                         minval=-1.0, maxval=1.0)
        occlusion = [jax.nn.sigmoid(jax.random.normal(kk[3 + j], (B, 1, s, s),
                                                      jnp.float32))
                     for j, s in enumerate(occ_sizes)]
        return {
            'deformation': deformation,
            'occlusion_map': occlusion,
            'contribution_maps': jax.random.uniform(kk[1], (B, 5, HW, HW),
                                                    jnp.float32),
            'deformed_source': jax.random.uniform(kk[2],
                                                  (B, 5, NUM_CHANNELS, HW, HW),
                                                  jnp.float32),
        }

    dense_motion = make_dense_motion(km1)
    dense_motion2 = make_dense_motion(km2)

    fwd = jax.jit(functools.partial(forward, num_down_blocks=NUM_DOWN_BLOCKS))
    out = fwd(params, source_image, driving_image, dense_motion, dense_motion2)
    jax.block_until_ready(out)

    assert out['prediction_sd'].shape == (B, NUM_CHANNELS, HW, HW)
    assert out['prediction_ds'].shape == (B, NUM_CHANNELS, HW, HW)
    assert out['prediction_sds'].shape == (B, NUM_CHANNELS, HW, HW)
    assert out['prediction_dsd'].shape == (B, NUM_CHANNELS, HW, HW)
    assert len(out['warped_encoder_maps']) == NUM_DOWN_BLOCKS + 1
    assert bool(jnp.isfinite(out['prediction_sd']).all())
    print("KERNEL_OK")
</pallas_src>

<mosaic_0001>
module attributes {stable_mosaic.version = 11 : i64} {
  func.func @_conv_epilogue_kernel(%arg0: i32, %arg1: memref<8x147xbf16, #tpu.memory_space<vmem>>, %arg2: memref<147x512xbf16, #tpu.memory_space<vmem>>, %arg3: memref<8x1xf32, #tpu.memory_space<vmem>>, %arg4: memref<8x1xf32, #tpu.memory_space<vmem>>, %arg5: memref<8x512xbf16, #tpu.memory_space<vmem>>) attributes {dimension_semantics = [#tpu.dimension_semantics<parallel>], iteration_bounds = array<i64: 2>, scalar_prefetch = 0 : i64, scratch_operands = 0 : i64, tpu.core_type = #tpu.core_type<tc>, window_params = [{pipeline_mode = #tpu.pipeline_mode<synchronous>, transform_indices = @transform_0, window_bounds = array<i64: 8, 147>}, {transform_indices = @transform_1, window_bounds = array<i64: 147, 512>}, {pipeline_mode = #tpu.pipeline_mode<synchronous>, transform_indices = @transform_2, window_bounds = array<i64: 8, 1>}, {pipeline_mode = #tpu.pipeline_mode<synchronous>, transform_indices = @transform_3, window_bounds = array<i64: 8, 1>}, {transform_indices = @transform_4, window_bounds = array<i64: 8, 512>}]} {
    %c0 = arith.constant 0 : index
    %c0_0 = arith.constant 0 : index
    %0 = vector.load %arg1[%c0, %c0_0] : memref<8x147xbf16, #tpu.memory_space<vmem>>, vector<8x147xbf16>
    %c0_1 = arith.constant 0 : index
    %c0_2 = arith.constant 0 : index
    %1 = vector.load %arg2[%c0_1, %c0_2] : memref<147x512xbf16, #tpu.memory_space<vmem>>, vector<147x512xbf16>
    %cst = arith.constant dense<0.000000e+00> : vector<8x512xf32>
    %2 = tpu.matmul %0, %1, %cst {dimension_numbers = #tpu.dot_dimension_numbers<[1], [0], [0], [1], [0, 0, 1, 1], [], []>} : vector<8x147xbf16>, vector<147x512xbf16>, vector<8x512xf32> -> vector<8x512xf32>
    %c0_3 = arith.constant 0 : index
    %c0_4 = arith.constant 0 : index
    %3 = vector.load %arg3[%c0_3, %c0_4] : memref<8x1xf32, #tpu.memory_space<vmem>>, vector<8x1xf32>
    %4 = vector.broadcast %3 : vector<8x1xf32> to vector<8x512xf32>
    %5 = arith.mulf %2, %4 : vector<8x512xf32>
    %c0_5 = arith.constant 0 : index
    %c0_6 = arith.constant 0 : index
    %6 = vector.load %arg4[%c0_5, %c0_6] : memref<8x1xf32, #tpu.memory_space<vmem>>, vector<8x1xf32>
    %7 = vector.broadcast %6 : vector<8x1xf32> to vector<8x512xf32>
    %8 = arith.addf %5, %7 : vector<8x512xf32>
    %cst_7 = arith.constant 0.000000e+00 : f32
    %9 = vector.broadcast %cst_7 : f32 to vector<8x512xf32>
    %10 = arith.maximumf %8, %9 : vector<8x512xf32>
    %11 = arith.truncf %10 : vector<8x512xf32> to vector<8x512xbf16>
    %c0_8 = arith.constant 0 : index
    %c0_9 = arith.constant 0 : index
    %12 = vector.load %arg5[%c0_8, %c0_9] : memref<8x512xbf16, #tpu.memory_space<vmem>>, vector<8x512xbf16>
    tpu.vector_store %arg5[%c0_8, %c0_9], %11 {strides = array<i32>} : memref<8x512xbf16, #tpu.memory_space<vmem>>, vector<8x512xbf16>,
    return
  }
  func.func @transform_0(%arg0: i32) -> (i32, i32) {
    %c0_i32 = arith.constant 0 : i32
    %c0_i32_0 = arith.constant 0 : i32
    %c0_i32_1 = arith.constant 0 : i32
    return %c0_i32, %c0_i32_0 : i32, i32
  }
  func.func @transform_1(%arg0: i32) -> (i32, i32) {
    %c0_i32 = arith.constant 0 : i32
    %c0_i32_0 = arith.constant 0 : i32
    return %c0_i32, %arg0 : i32, i32
  }
  func.func @transform_2(%arg0: i32) -> (i32, i32) {
    %c0_i32 = arith.constant 0 : i32
    %c0_i32_0 = arith.constant 0 : i32
    %c0_i32_1 = arith.constant 0 : i32
    return %c0_i32, %c0_i32_0 : i32, i32
  }
  func.func @transform_3(%arg0: i32) -> (i32, i32) {
    %c0_i32 = arith.constant 0 : i32
    %c0_i32_0 = arith.constant 0 : i32
    %c0_i32_1 = arith.constant 0 : i32
    return %c0_i32, %c0_i32_0 : i32, i32
  }
  func.func @transform_4(%arg0: i32) -> (i32, i32) {
    %c0_i32 = arith.constant 0 : i32
    %c0_i32_0 = arith.constant 0 : i32
    return %c0_i32, %arg0 : i32, i32
  }
}

module attributes {stable_mosaic.version = 11 : i64} {
  func.func @_conv_epilogue_kernel(%arg0: i32, %arg1: memref<16x72xbf16, #tpu.memory_space<vmem>>, %arg2: memref<72x512xbf16, #tpu.memory_space<vmem>>, %arg3: memref<16x1xf32, #tpu.memory_space<vmem>>, %arg4: memref<16x1xf32, #tpu.memory_space<vmem>>, %arg5: memref<16x512xbf16, #tpu.memory_space<vmem>>) attributes {dimension_semantics = [#tpu.dimension_semantics<parallel>], iteration_bounds = array<i64: 2>, scalar_prefetch = 0 : i64, scratch_operands = 0 : i64, tpu.core_type = #tpu.core_type<tc>, window_params = [{pipeline_mode = #tpu.pipeline_mode<synchronous>, transform_indices = @transform_0, window_bounds = array<i64: 16, 72>}, {transform_indices = @transform_1, window_bounds = array<i64: 72, 512>}, {pipeline_mode = #tpu.pipeline_mode<synchronous>, transform_indices = @transform_2, window_bounds = array<i64: 16, 1>}, {pipeline_mode = #tpu.pipeline_mode<synchronous>, transform_indices = @transform_3, window_bounds = array<i64: 16, 1>}, {transform_indices = @transform_4, window_bounds = array<i64: 16, 512>}]} {
    %c0 = arith.constant 0 : index
    %c0_0 = arith.constant 0 : index
    %0 = vector.load %arg1[%c0, %c0_0] : memref<16x72xbf16, #tpu.memory_space<vmem>>, vector<16x72xbf16>
    %c0_1 = arith.constant 0 : index
    %c0_2 = arith.constant 0 : index
    %1 = vector.load %arg2[%c0_1, %c0_2] : memref<72x512xbf16, #tpu.memory_space<vmem>>, vector<72x512xbf16>
    %cst = arith.constant dense<0.000000e+00> : vector<16x512xf32>
    %2 = tpu.matmul %0, %1, %cst {dimension_numbers = #tpu.dot_dimension_numbers<[1], [0], [0], [1], [0, 0, 1, 1], [], []>} : vector<16x72xbf16>, vector<72x512xbf16>, vector<16x512xf32> -> vector<16x512xf32>
    %c0_3 = arith.constant 0 : index
    %c0_4 = arith.constant 0 : index
    %3 = vector.load %arg3[%c0_3, %c0_4] : memref<16x1xf32, #tpu.memory_space<vmem>>, vector<16x1xf32>
    %4 = vector.broadcast %3 : vector<16x1xf32> to vector<16x512xf32>
    %5 = arith.mulf %2, %4 : vector<16x512xf32>
    %c0_5 = arith.constant 0 : index
    %c0_6 = arith.constant 0 : index
    %6 = vector.load %arg4[%c0_5, %c0_6] : memref<16x1xf32, #tpu.memory_space<vmem>>, vector<16x1xf32>
    %7 = vector.broadcast %6 : vector<16x1xf32> to vector<16x512xf32>
    %8 = arith.addf %5, %7 : vector<16x512xf32>
    %cst_7 = arith.constant 0.000000e+00 : f32
    %9 = vector.broadcast %cst_7 : f32 to vector<16x512xf32>
    %10 = arith.maximumf %8, %9 : vector<16x512xf32>
    %11 = arith.truncf %10 : vector<16x512xf32> to vector<16x512xbf16>
    %c0_8 = arith.constant 0 : index
    %c0_9 = arith.constant 0 : index
    %12 = vector.load %arg5[%c0_8, %c0_9] : memref<16x512xbf16, #tpu.memory_space<vmem>>, vector<16x512xbf16>
    tpu.vector_store %arg5[%c0_8, %c0_9], %11 {strides = array<i32>} : memref<16x512xbf16, #tpu.memory_space<vmem>>, vector<16x512xbf16>,
    return
  }
  func.func @transform_0(%arg0: i32) -> (i32, i32) {
    %c0_i32 = arith.constant 0 : i32
    %c0_i32_0 = arith.constant 0 : i32
    %c0_i32_1 = arith.constant 0 : i32
    return %c0_i32, %c0_i32_0 : i32, i32
  }
  func.func @transform_1(%arg0: i32) -> (i32, i32) {
    %c0_i32 = arith.constant 0 : i32
    %c0_i32_0 = arith.constant 0 : i32
    return %c0_i32, %arg0 : i32, i32
  }
  func.func @transform_2(%arg0: i32) -> (i32, i32) {
    %c0_i32 = arith.constant 0 : i32
    %c0_i32_0 = arith.constant 0 : i32
    %c0_i32_1 = arith.constant 0 : i32
    return %c0_i32, %c0_i32_0 : i32, i32
  }
  func.func @transform_3(%arg0: i32) -> (i32, i32) {
    %c0_i32 = arith.constant 0 : i32
    %c0_i32_0 = arith.constant 0 : i32
    %c0_i32_1 = arith.constant 0 : i32
    return %c0_i32, %c0_i32_0 : i32, i32
  }
  func.func @transform_4(%arg0: i32) -> (i32, i32) {
    %c0_i32 = arith.constant 0 : i32
    %c0_i32_0 = arith.constant 0 : i32
    return %c0_i32, %arg0 : i32, i32
  }
}

module attributes {stable_mosaic.version = 11 : i64} {
  func.func @_conv_epilogue_kernel(%arg0: i32, %arg1: memref<32x144xbf16, #tpu.memory_space<vmem>>, %arg2: memref<144x128xbf16, #tpu.memory_space<vmem>>, %arg3: memref<32x1xf32, #tpu.memory_space<vmem>>, %arg4: memref<32x1xf32, #tpu.memory_space<vmem>>, %arg5: memref<32x128xbf16, #tpu.memory_space<vmem>>) attributes {dimension_semantics = [#tpu.dimension_semantics<parallel>], iteration_bounds = array<i64: 2>, scalar_prefetch = 0 : i64, scratch_operands = 0 : i64, tpu.core_type = #tpu.core_type<tc>, window_params = [{pipeline_mode = #tpu.pipeline_mode<synchronous>, transform_indices = @transform_0, window_bounds = array<i64: 32, 144>}, {transform_indices = @transform_1, window_bounds = array<i64: 144, 128>}, {pipeline_mode = #tpu.pipeline_mode<synchronous>, transform_indices = @transform_2, window_bounds = array<i64: 32, 1>}, {pipeline_mode = #tpu.pipeline_mode<synchronous>, transform_indices = @transform_3, window_bounds = array<i64: 32, 1>}, {transform_indices = @transform_4, window_bounds = array<i64: 32, 128>}]} {
    %c0 = arith.constant 0 : index
    %c0_0 = arith.constant 0 : index
    %0 = vector.load %arg1[%c0, %c0_0] : memref<32x144xbf16, #tpu.memory_space<vmem>>, vector<32x144xbf16>
    %c0_1 = arith.constant 0 : index
    %c0_2 = arith.constant 0 : index
    %1 = vector.load %arg2[%c0_1, %c0_2] : memref<144x128xbf16, #tpu.memory_space<vmem>>, vector<144x128xbf16>
    %cst = arith.constant dense<0.000000e+00> : vector<32x128xf32>
    %2 = tpu.matmul %0, %1, %cst {dimension_numbers = #tpu.dot_dimension_numbers<[1], [0], [0], [1], [0, 0, 1, 1], [], []>} : vector<32x144xbf16>, vector<144x128xbf16>, vector<32x128xf32> -> vector<32x128xf32>
    %c0_3 = arith.constant 0 : index
    %c0_4 = arith.constant 0 : index
    %3 = vector.load %arg3[%c0_3, %c0_4] : memref<32x1xf32, #tpu.memory_space<vmem>>, vector<32x1xf32>
    %4 = vector.broadcast %3 : vector<32x1xf32> to vector<32x128xf32>
    %5 = arith.mulf %2, %4 : vector<32x128xf32>
    %c0_5 = arith.constant 0 : index
    %c0_6 = arith.constant 0 : index
    %6 = vector.load %arg4[%c0_5, %c0_6] : memref<32x1xf32, #tpu.memory_space<vmem>>, vector<32x1xf32>
    %7 = vector.broadcast %6 : vector<32x1xf32> to vector<32x128xf32>
    %8 = arith.addf %5, %7 : vector<32x128xf32>
    %cst_7 = arith.constant 0.000000e+00 : f32
    %9 = vector.broadcast %cst_7 : f32 to vector<32x128xf32>
    %10 = arith.maximumf %8, %9 : vector<32x128xf32>
    %11 = arith.truncf %10 : vector<32x128xf32> to vector<32x128xbf16>
    %c0_8 = arith.constant 0 : index
    %c0_9 = arith.constant 0 : index
    %12 = vector.load %arg5[%c0_8, %c0_9] : memref<32x128xbf16, #tpu.memory_space<vmem>>, vector<32x128xbf16>
    tpu.vector_store %arg5[%c0_8, %c0_9], %11 {strides = array<i32>} : memref<32x128xbf16, #tpu.memory_space<vmem>>, vector<32x128xbf16>,
    return
  }
  func.func @transform_0(%arg0: i32) -> (i32, i32) {
    %c0_i32 = arith.constant 0 : i32
    %c0_i32_0 = arith.constant 0 : i32
    %c0_i32_1 = arith.constant 0 : i32
    return %c0_i32, %c0_i32_0 : i32, i32
  }
  func.func @transform_1(%arg0: i32) -> (i32, i32) {
    %c0_i32 = arith.constant 0 : i32
    %c0_i32_0 = arith.constant 0 : i32
    return %c0_i32, %arg0 : i32, i32
  }
  func.func @transform_2(%arg0: i32) -> (i32, i32) {
    %c0_i32 = arith.constant 0 : i32
    %c0_i32_0 = arith.constant 0 : i32
    %c0_i32_1 = arith.constant 0 : i32
    return %c0_i32, %c0_i32_0 : i32, i32
  }
  func.func @transform_3(%arg0: i32) -> (i32, i32) {
    %c0_i32 = arith.constant 0 : i32
    %c0_i32_0 = arith.constant 0 : i32
    %c0_i32_1 = arith.constant 0 : i32
    return %c0_i32, %c0_i32_0 : i32, i32
  }
  func.func @transform_4(%arg0: i32) -> (i32, i32) {
    %c0_i32 = arith.constant 0 : i32
    %c0_i32_0 = arith.constant 0 : i32
    return %c0_i32, %arg0 : i32, i32
  }
}

module attributes {stable_mosaic.version = 11 : i64} {
  func.func @_conv_epilogue_kernel(%arg0: i32, %arg1: memref<32x288xbf16, #tpu.memory_space<vmem>>, %arg2: memref<288x128xbf16, #tpu.memory_space<vmem>>, %arg3: memref<32x1xf32, #tpu.memory_space<vmem>>, %arg4: memref<32x1xf32, #tpu.memory_space<vmem>>, %arg5: memref<32x128xbf16, #tpu.memory_space<vmem>>) attributes {dimension_semantics = [#tpu.dimension_semantics<parallel>], iteration_bounds = array<i64: 1>, scalar_prefetch = 0 : i64, scratch_operands = 0 : i64, tpu.core_type = #tpu.core_type<tc>, window_params = [{pipeline_mode = #tpu.pipeline_mode<synchronous>, transform_indices = @transform_0, window_bounds = array<i64: 32, 288>}, {transform_indices = @transform_1, window_bounds = array<i64: 288, 128>}, {pipeline_mode = #tpu.pipeline_mode<synchronous>, transform_indices = @transform_2, window_bounds = array<i64: 32, 1>}, {pipeline_mode = #tpu.pipeline_mode<synchronous>, transform_indices = @transform_3, window_bounds = array<i64: 32, 1>}, {transform_indices = @transform_4, window_bounds = array<i64: 32, 128>}]} {
    %c0 = arith.constant 0 : index
    %c0_0 = arith.constant 0 : index
    %0 = vector.load %arg1[%c0, %c0_0] : memref<32x288xbf16, #tpu.memory_space<vmem>>, vector<32x288xbf16>
    %c0_1 = arith.constant 0 : index
    %c0_2 = arith.constant 0 : index
    %1 = vector.load %arg2[%c0_1, %c0_2] : memref<288x128xbf16, #tpu.memory_space<vmem>>, vector<288x128xbf16>
    %cst = arith.constant dense<0.000000e+00> : vector<32x128xf32>
    %2 = tpu.matmul %0, %1, %cst {dimension_numbers = #tpu.dot_dimension_numbers<[1], [0], [0], [1], [0, 0, 1, 1], [], []>} : vector<32x288xbf16>, vector<288x128xbf16>, vector<32x128xf32> -> vector<32x128xf32>
    %c0_3 = arith.constant 0 : index
    %c0_4 = arith.constant 0 : index
    %3 = vector.load %arg3[%c0_3, %c0_4] : memref<32x1xf32, #tpu.memory_space<vmem>>, vector<32x1xf32>
    %4 = vector.broadcast %3 : vector<32x1xf32> to vector<32x128xf32>
    %5 = arith.mulf %2, %4 : vector<32x128xf32>
    %c0_5 = arith.constant 0 : index
    %c0_6 = arith.constant 0 : index
    %6 = vector.load %arg4[%c0_5, %c0_6] : memref<32x1xf32, #tpu.memory_space<vmem>>, vector<32x1xf32>
    %7 = vector.broadcast %6 : vector<32x1xf32> to vector<32x128xf32>
    %8 = arith.addf %5, %7 : vector<32x128xf32>
    %cst_7 = arith.constant 0.000000e+00 : f32
    %9 = vector.broadcast %cst_7 : f32 to vector<32x128xf32>
    %10 = arith.maximumf %8, %9 : vector<32x128xf32>
    %11 = arith.truncf %10 : vector<32x128xf32> to vector<32x128xbf16>
    %c0_8 = arith.constant 0 : index
    %c0_9 = arith.constant 0 : index
    %12 = vector.load %arg5[%c0_8, %c0_9] : memref<32x128xbf16, #tpu.memory_space<vmem>>, vector<32x128xbf16>
    tpu.vector_store %arg5[%c0_8, %c0_9], %11 {strides = array<i32>} : memref<32x128xbf16, #tpu.memory_space<vmem>>, vector<32x128xbf16>,
    return
  }
  func.func @transform_0(%arg0: i32) -> (i32, i32) {
    %c0_i32 = arith.constant 0 : i32
    %c0_i32_0 = arith.constant 0 : i32
    %c0_i32_1 = arith.constant 0 : i32
    return %c0_i32, %c0_i32_0 : i32, i32
  }
  func.func @transform_1(%arg0: i32) -> (i32, i32) {
    %c0_i32 = arith.constant 0 : i32
    %c0_i32_0 = arith.constant 0 : i32
    return %c0_i32, %arg0 : i32, i32
  }
  func.func @transform_2(%arg0: i32) -> (i32, i32) {
    %c0_i32 = arith.constant 0 : i32
    %c0_i32_0 = arith.constant 0 : i32
    %c0_i32_1 = arith.constant 0 : i32
    return %c0_i32, %c0_i32_0 : i32, i32
  }
  func.func @transform_3(%arg0: i32) -> (i32, i32) {
    %c0_i32 = arith.constant 0 : i32
    %c0_i32_0 = arith.constant 0 : i32
    %c0_i32_1 = arith.constant 0 : i32
    return %c0_i32, %c0_i32_0 : i32, i32
  }
  func.func @transform_4(%arg0: i32) -> (i32, i32) {
    %c0_i32 = arith.constant 0 : i32
    %c0_i32_0 = arith.constant 0 : i32
    return %c0_i32, %arg0 : i32, i32
  }
}

module attributes {stable_mosaic.version = 11 : i64} {
  func.func @_conv_epilogue_kernel(%arg0: i32, %arg1: memref<32x288xbf16, #tpu.memory_space<vmem>>, %arg2: memref<288x128xbf16, #tpu.memory_space<vmem>>, %arg3: memref<32x1xf32, #tpu.memory_space<vmem>>, %arg4: memref<32x1xf32, #tpu.memory_space<vmem>>, %arg5: memref<32x128xbf16, #tpu.memory_space<vmem>>, %arg6: memref<32x128xbf16, #tpu.memory_space<vmem>>) attributes {dimension_semantics = [#tpu.dimension_semantics<parallel>], iteration_bounds = array<i64: 1>, scalar_prefetch = 0 : i64, scratch_operands = 0 : i64, tpu.core_type = #tpu.core_type<tc>, window_params = [{pipeline_mode = #tpu.pipeline_mode<synchronous>, transform_indices = @transform_0, window_bounds = array<i64: 32, 288>}, {transform_indices = @transform_1, window_bounds = array<i64: 288, 128>}, {pipeline_mode = #tpu.pipeline_mode<synchronous>, transform_indices = @transform_2, window_bounds = array<i64: 32, 1>}, {pipeline_mode = #tpu.pipeline_mode<synchronous>, transform_indices = @transform_3, window_bounds = array<i64: 32, 1>}, {transform_indices = @transform_4, window_bounds = array<i64: 32, 128>}, {transform_indices = @transform_5, window_bounds = array<i64: 32, 128>}]} {
    %c0 = arith.constant 0 : index
    %c0_0 = arith.constant 0 : index
    %0 = vector.load %arg1[%c0, %c0_0] : memref<32x288xbf16, #tpu.memory_space<vmem>>, vector<32x288xbf16>
    %c0_1 = arith.constant 0 : index
    %c0_2 = arith.constant 0 : index
    %1 = vector.load %arg2[%c0_1, %c0_2] : memref<288x128xbf16, #tpu.memory_space<vmem>>, vector<288x128xbf16>
    %cst = arith.constant dense<0.000000e+00> : vector<32x128xf32>
    %2 = tpu.matmul %0, %1, %cst {dimension_numbers = #tpu.dot_dimension_numbers<[1], [0], [0], [1], [0, 0, 1, 1], [], []>} : vector<32x288xbf16>, vector<288x128xbf16>, vector<32x128xf32> -> vector<32x128xf32>
    %c0_3 = arith.constant 0 : index
    %c0_4 = arith.constant 0 : index
    %3 = vector.load %arg3[%c0_3, %c0_4] : memref<32x1xf32, #tpu.memory_space<vmem>>, vector<32x1xf32>
    %4 = vector.broadcast %3 : vector<32x1xf32> to vector<32x128xf32>
    %5 = arith.mulf %2, %4 : vector<32x128xf32>
    %c0_5 = arith.constant 0 : index
    %c0_6 = arith.constant 0 : index
    %6 = vector.load %arg4[%c0_5, %c0_6] : memref<32x1xf32, #tpu.memory_space<vmem>>, vector<32x1xf32>
    %7 = vector.broadcast %6 : vector<32x1xf32> to vector<32x128xf32>
    %8 = arith.addf %5, %7 : vector<32x128xf32>
    %c0_7 = arith.constant 0 : index
    %c0_8 = arith.constant 0 : index
    %9 = vector.load %arg5[%c0_7, %c0_8] : memref<32x128xbf16, #tpu.memory_space<vmem>>, vector<32x128xbf16>
    %10 = arith.extf %9 : vector<32x128xbf16> to vector<32x128xf32>
    %11 = arith.addf %8, %10 : vector<32x128xf32>
    %12 = arith.truncf %11 : vector<32x128xf32> to vector<32x128xbf16>
    %c0_9 = arith.constant 0 : index
    %c0_10 = arith.constant 0 : index
    %13 = vector.load %arg6[%c0_9, %c0_10] : memref<32x128xbf16, #tpu.memory_space<vmem>>, vector<32x128xbf16>
    tpu.vector_store %arg6[%c0_9, %c0_10], %12 {strides = array<i32>} : memref<32x128xbf16, #tpu.memory_space<vmem>>, vector<32x128xbf16>,
    return
  }
  func.func @transform_0(%arg0: i32) -> (i32, i32) {
    %c0_i32 = arith.constant 0 : i32
    %c0_i32_0 = arith.constant 0 : i32
    %c0_i32_1 = arith.constant 0 : i32
    return %c0_i32, %c0_i32_0 : i32, i32
  }
  func.func @transform_1(%arg0: i32) -> (i32, i32) {
    %c0_i32 = arith.constant 0 : i32
    %c0_i32_0 = arith.constant 0 : i32
    return %c0_i32, %arg0 : i32, i32
  }
  func.func @transform_2(%arg0: i32) -> (i32, i32) {
    %c0_i32 = arith.constant 0 : i32
    %c0_i32_0 = arith.constant 0 : i32
    %c0_i32_1 = arith.constant 0 : i32
    return %c0_i32, %c0_i32_0 : i32, i32
  }
  func.func @transform_3(%arg0: i32) -> (i32, i32) {
    %c0_i32 = arith.constant 0 : i32
    %c0_i32_0 = arith.constant 0 : i32
    %c0_i32_1 = arith.constant 0 : i32
    return %c0_i32, %c0_i32_0 : i32, i32
  }
  func.func @transform_4(%arg0: i32) -> (i32, i32) {
    %c0_i32 = arith.constant 0 : i32
    %c0_i32_0 = arith.constant 0 : i32
    return %c0_i32, %arg0 : i32, i32
  }
  func.func @transform_5(%arg0: i32) -> (i32, i32) {
    %c0_i32 = arith.constant 0 : i32
    %c0_i32_0 = arith.constant 0 : i32
    return %c0_i32, %arg0 : i32, i32
  }
}

module attributes {stable_mosaic.version = 11 : i64} {
  func.func @_conv_epilogue_kernel(%arg0: i32, %arg1: memref<16x288xbf16, #tpu.memory_space<vmem>>, %arg2: memref<288x256xbf16, #tpu.memory_space<vmem>>, %arg3: memref<16x1xf32, #tpu.memory_space<vmem>>, %arg4: memref<16x1xf32, #tpu.memory_space<vmem>>, %arg5: memref<16x256xbf16, #tpu.memory_space<vmem>>) attributes {dimension_semantics = [#tpu.dimension_semantics<parallel>], iteration_bounds = array<i64: 2>, scalar_prefetch = 0 : i64, scratch_operands = 0 : i64, tpu.core_type = #tpu.core_type<tc>, window_params = [{pipeline_mode = #tpu.pipeline_mode<synchronous>, transform_indices = @transform_0, window_bounds = array<i64: 16, 288>}, {transform_indices = @transform_1, window_bounds = array<i64: 288, 256>}, {pipeline_mode = #tpu.pipeline_mode<synchronous>, transform_indices = @transform_2, window_bounds = array<i64: 16, 1>}, {pipeline_mode = #tpu.pipeline_mode<synchronous>, transform_indices = @transform_3, window_bounds = array<i64: 16, 1>}, {transform_indices = @transform_4, window_bounds = array<i64: 16, 256>}]} {
    %c0 = arith.constant 0 : index
    %c0_0 = arith.constant 0 : index
    %0 = vector.load %arg1[%c0, %c0_0] : memref<16x288xbf16, #tpu.memory_space<vmem>>, vector<16x288xbf16>
    %c0_1 = arith.constant 0 : index
    %c0_2 = arith.constant 0 : index
    %1 = vector.load %arg2[%c0_1, %c0_2] : memref<288x256xbf16, #tpu.memory_space<vmem>>, vector<288x256xbf16>
    %cst = arith.constant dense<0.000000e+00> : vector<16x256xf32>
    %2 = tpu.matmul %0, %1, %cst {dimension_numbers = #tpu.dot_dimension_numbers<[1], [0], [0], [1], [0, 0, 1, 1], [], []>} : vector<16x288xbf16>, vector<288x256xbf16>, vector<16x256xf32> -> vector<16x256xf32>
    %c0_3 = arith.constant 0 : index
    %c0_4 = arith.constant 0 : index
    %3 = vector.load %arg3[%c0_3, %c0_4] : memref<16x1xf32, #tpu.memory_space<vmem>>, vector<16x1xf32>
    %4 = vector.broadcast %3 : vector<16x1xf32> to vector<16x256xf32>
    %5 = arith.mulf %2, %4 : vector<16x256xf32>
    %c0_5 = arith.constant 0 : index
    %c0_6 = arith.constant 0 : index
    %6 = vector.load %arg4[%c0_5, %c0_6] : memref<16x1xf32, #tpu.memory_space<vmem>>, vector<16x1xf32>
    %7 = vector.broadcast %6 : vector<16x1xf32> to vector<16x256xf32>
    %8 = arith.addf %5, %7 : vector<16x256xf32>
    %cst_7 = arith.constant 0.000000e+00 : f32
    %9 = vector.broadcast %cst_7 : f32 to vector<16x256xf32>
    %10 = arith.maximumf %8, %9 : vector<16x256xf32>
    %11 = arith.truncf %10 : vector<16x256xf32> to vector<16x256xbf16>
    %c0_8 = arith.constant 0 : index
    %c0_9 = arith.constant 0 : index
    %12 = vector.load %arg5[%c0_8, %c0_9] : memref<16x256xbf16, #tpu.memory_space<vmem>>, vector<16x256xbf16>
    tpu.vector_store %arg5[%c0_8, %c0_9], %11 {strides = array<i32>} : memref<16x256xbf16, #tpu.memory_space<vmem>>, vector<16x256xbf16>,
    return
  }
  func.func @transform_0(%arg0: i32) -> (i32, i32) {
    %c0_i32 = arith.constant 0 : i32
    %c0_i32_0 = arith.constant 0 : i32
    %c0_i32_1 = arith.constant 0 : i32
    return %c0_i32, %c0_i32_0 : i32, i32
  }
  func.func @transform_1(%arg0: i32) -> (i32, i32) {
    %c0_i32 = arith.constant 0 : i32
    %c0_i32_0 = arith.constant 0 : i32
    return %c0_i32, %arg0 : i32, i32
  }
  func.func @transform_2(%arg0: i32) -> (i32, i32) {
    %c0_i32 = arith.constant 0 : i32
    %c0_i32_0 = arith.constant 0 : i32
    %c0_i32_1 = arith.constant 0 : i32
    return %c0_i32, %c0_i32_0 : i32, i32
  }
  func.func @transform_3(%arg0: i32) -> (i32, i32) {
    %c0_i32 = arith.constant 0 : i32
    %c0_i32_0 = arith.constant 0 : i32
    %c0_i32_1 = arith.constant 0 : i32
    return %c0_i32, %c0_i32_0 : i32, i32
  }
  func.func @transform_4(%arg0: i32) -> (i32, i32) {
    %c0_i32 = arith.constant 0 : i32
    %c0_i32_0 = arith.constant 0 : i32
    return %c0_i32, %arg0 : i32, i32
  }
}

module attributes {stable_mosaic.version = 11 : i64} {
  func.func @_conv_epilogue_kernel(%arg0: i32, %arg1: memref<32x288xbf16, #tpu.memory_space<vmem>>, %arg2: memref<288x256xbf16, #tpu.memory_space<vmem>>, %arg3: memref<32x1xf32, #tpu.memory_space<vmem>>, %arg4: memref<32x1xf32, #tpu.memory_space<vmem>>, %arg5: memref<32x256xbf16, #tpu.memory_space<vmem>>) attributes {dimension_semantics = [#tpu.dimension_semantics<parallel>], iteration_bounds = array<i64: 2>, scalar_prefetch = 0 : i64, scratch_operands = 0 : i64, tpu.core_type = #tpu.core_type<tc>, window_params = [{pipeline_mode = #tpu.pipeline_mode<synchronous>, transform_indices = @transform_0, window_bounds = array<i64: 32, 288>}, {transform_indices = @transform_1, window_bounds = array<i64: 288, 256>}, {pipeline_mode = #tpu.pipeline_mode<synchronous>, transform_indices = @transform_2, window_bounds = array<i64: 32, 1>}, {pipeline_mode = #tpu.pipeline_mode<synchronous>, transform_indices = @transform_3, window_bounds = array<i64: 32, 1>}, {transform_indices = @transform_4, window_bounds = array<i64: 32, 256>}]} {
    %c0 = arith.constant 0 : index
    %c0_0 = arith.constant 0 : index
    %0 = vector.load %arg1[%c0, %c0_0] : memref<32x288xbf16, #tpu.memory_space<vmem>>, vector<32x288xbf16>
    %c0_1 = arith.constant 0 : index
    %c0_2 = arith.constant 0 : index
    %1 = vector.load %arg2[%c0_1, %c0_2] : memref<288x256xbf16, #tpu.memory_space<vmem>>, vector<288x256xbf16>
    %cst = arith.constant dense<0.000000e+00> : vector<32x256xf32>
    %2 = tpu.matmul %0, %1, %cst {dimension_numbers = #tpu.dot_dimension_numbers<[1], [0], [0], [1], [0, 0, 1, 1], [], []>} : vector<32x288xbf16>, vector<288x256xbf16>, vector<32x256xf32> -> vector<32x256xf32>
    %c0_3 = arith.constant 0 : index
    %c0_4 = arith.constant 0 : index
    %3 = vector.load %arg3[%c0_3, %c0_4] : memref<32x1xf32, #tpu.memory_space<vmem>>, vector<32x1xf32>
    %4 = vector.broadcast %3 : vector<32x1xf32> to vector<32x256xf32>
    %5 = arith.mulf %2, %4 : vector<32x256xf32>
    %c0_5 = arith.constant 0 : index
    %c0_6 = arith.constant 0 : index
    %6 = vector.load %arg4[%c0_5, %c0_6] : memref<32x1xf32, #tpu.memory_space<vmem>>, vector<32x1xf32>
    %7 = vector.broadcast %6 : vector<32x1xf32> to vector<32x256xf32>
    %8 = arith.addf %5, %7 : vector<32x256xf32>
    %cst_7 = arith.constant 0.000000e+00 : f32
    %9 = vector.broadcast %cst_7 : f32 to vector<32x256xf32>
    %10 = arith.maximumf %8, %9 : vector<32x256xf32>
    %11 = arith.truncf %10 : vector<32x256xf32> to vector<32x256xbf16>
    %c0_8 = arith.constant 0 : index
    %c0_9 = arith.constant 0 : index
    %12 = vector.load %arg5[%c0_8, %c0_9] : memref<32x256xbf16, #tpu.memory_space<vmem>>, vector<32x256xbf16>
    tpu.vector_store %arg5[%c0_8, %c0_9], %11 {strides = array<i32>} : memref<32x256xbf16, #tpu.memory_space<vmem>>, vector<32x256xbf16>,
    return
  }
  func.func @transform_0(%arg0: i32) -> (i32, i32) {
    %c0_i32 = arith.constant 0 : i32
    %c0_i32_0 = arith.constant 0 : i32
    %c0_i32_1 = arith.constant 0 : i32
    return %c0_i32, %c0_i32_0 : i32, i32
  }
  func.func @transform_1(%arg0: i32) -> (i32, i32) {
    %c0_i32 = arith.constant 0 : i32
    %c0_i32_0 = arith.constant 0 : i32
    return %c0_i32, %arg0 : i32, i32
  }
  func.func @transform_2(%arg0: i32) -> (i32, i32) {
    %c0_i32 = arith.constant 0 : i32
    %c0_i32_0 = arith.constant 0 : i32
    %c0_i32_1 = arith.constant 0 : i32
    return %c0_i32, %c0_i32_0 : i32, i32
  }
  func.func @transform_3(%arg0: i32) -> (i32, i32) {
    %c0_i32 = arith.constant 0 : i32
    %c0_i32_0 = arith.constant 0 : i32
    %c0_i32_1 = arith.constant 0 : i32
    return %c0_i32, %c0_i32_0 : i32, i32
  }
  func.func @transform_4(%arg0: i32) -> (i32, i32) {
    %c0_i32 = arith.constant 0 : i32
    %c0_i32_0 = arith.constant 0 : i32
    return %c0_i32, %arg0 : i32, i32
  }
}

module attributes {stable_mosaic.version = 11 : i64} {
  func.func @_conv_epilogue_kernel(%arg0: i32, %arg1: memref<32x288xbf16, #tpu.memory_space<vmem>>, %arg2: memref<288x256xbf16, #tpu.memory_space<vmem>>, %arg3: memref<32x1xf32, #tpu.memory_space<vmem>>, %arg4: memref<32x1xf32, #tpu.memory_space<vmem>>, %arg5: memref<32x256xbf16, #tpu.memory_space<vmem>>, %arg6: memref<32x256xbf16, #tpu.memory_space<vmem>>) attributes {dimension_semantics = [#tpu.dimension_semantics<parallel>], iteration_bounds = array<i64: 2>, scalar_prefetch = 0 : i64, scratch_operands = 0 : i64, tpu.core_type = #tpu.core_type<tc>, window_params = [{pipeline_mode = #tpu.pipeline_mode<synchronous>, transform_indices = @transform_0, window_bounds = array<i64: 32, 288>}, {transform_indices = @transform_1, window_bounds = array<i64: 288, 256>}, {pipeline_mode = #tpu.pipeline_mode<synchronous>, transform_indices = @transform_2, window_bounds = array<i64: 32, 1>}, {pipeline_mode = #tpu.pipeline_mode<synchronous>, transform_indices = @transform_3, window_bounds = array<i64: 32, 1>}, {transform_indices = @transform_4, window_bounds = array<i64: 32, 256>}, {transform_indices = @transform_5, window_bounds = array<i64: 32, 256>}]} {
    %c0 = arith.constant 0 : index
    %c0_0 = arith.constant 0 : index
    %0 = vector.load %arg1[%c0, %c0_0] : memref<32x288xbf16, #tpu.memory_space<vmem>>, vector<32x288xbf16>
    %c0_1 = arith.constant 0 : index
    %c0_2 = arith.constant 0 : index
    %1 = vector.load %arg2[%c0_1, %c0_2] : memref<288x256xbf16, #tpu.memory_space<vmem>>, vector<288x256xbf16>
    %cst = arith.constant dense<0.000000e+00> : vector<32x256xf32>
    %2 = tpu.matmul %0, %1, %cst {dimension_numbers = #tpu.dot_dimension_numbers<[1], [0], [0], [1], [0, 0, 1, 1], [], []>} : vector<32x288xbf16>, vector<288x256xbf16>, vector<32x256xf32> -> vector<32x256xf32>
    %c0_3 = arith.constant 0 : index
    %c0_4 = arith.constant 0 : index
    %3 = vector.load %arg3[%c0_3, %c0_4] : memref<32x1xf32, #tpu.memory_space<vmem>>, vector<32x1xf32>
    %4 = vector.broadcast %3 : vector<32x1xf32> to vector<32x256xf32>
    %5 = arith.mulf %2, %4 : vector<32x256xf32>
    %c0_5 = arith.constant 0 : index
    %c0_6 = arith.constant 0 : index
    %6 = vector.load %arg4[%c0_5, %c0_6] : memref<32x1xf32, #tpu.memory_space<vmem>>, vector<32x1xf32>
    %7 = vector.broadcast %6 : vector<32x1xf32> to vector<32x256xf32>
    %8 = arith.addf %5, %7 : vector<32x256xf32>
    %c0_7 = arith.constant 0 : index
    %c0_8 = arith.constant 0 : index
    %9 = vector.load %arg5[%c0_7, %c0_8] : memref<32x256xbf16, #tpu.memory_space<vmem>>, vector<32x256xbf16>
    %10 = arith.extf %9 : vector<32x256xbf16> to vector<32x256xf32>
    %11 = arith.addf %8, %10 : vector<32x256xf32>
    %12 = arith.truncf %11 : vector<32x256xf32> to vector<32x256xbf16>
    %c0_9 = arith.constant 0 : index
    %c0_10 = arith.constant 0 : index
    %13 = vector.load %arg6[%c0_9, %c0_10] : memref<32x256xbf16, #tpu.memory_space<vmem>>, vector<32x256xbf16>
    tpu.vector_store %arg6[%c0_9, %c0_10], %12 {strides = array<i32>} : memref<32x256xbf16, #tpu.memory_space<vmem>>, vector<32x256xbf16>,
    return
  }
  func.func @transform_0(%arg0: i32) -> (i32, i32) {
    %c0_i32 = arith.constant 0 : i32
    %c0_i32_0 = arith.constant 0 : i32
    %c0_i32_1 = arith.constant 0 : i32
    return %c0_i32, %c0_i32_0 : i32, i32
  }
  func.func @transform_1(%arg0: i32) -> (i32, i32) {
    %c0_i32 = arith.constant 0 : i32
    %c0_i32_0 = arith.constant 0 : i32
    return %c0_i32, %arg0 : i32, i32
  }
  func.func @transform_2(%arg0: i32) -> (i32, i32) {
    %c0_i32 = arith.constant 0 : i32
    %c0_i32_0 = arith.constant 0 : i32
    %c0_i32_1 = arith.constant 0 : i32
    return %c0_i32, %c0_i32_0 : i32, i32
  }
  func.func @transform_3(%arg0: i32) -> (i32, i32) {
    %c0_i32 = arith.constant 0 : i32
    %c0_i32_0 = arith.constant 0 : i32
    %c0_i32_1 = arith.constant 0 : i32
    return %c0_i32, %c0_i32_0 : i32, i32
  }
  func.func @transform_4(%arg0: i32) -> (i32, i32) {
    %c0_i32 = arith.constant 0 : i32
    %c0_i32_0 = arith.constant 0 : i32
    return %c0_i32, %arg0 : i32, i32
  }
  func.func @transform_5(%arg0: i32) -> (i32, i32) {
    %c0_i32 = arith.constant 0 : i32
    %c0_i32_0 = arith.constant 0 : i32
    return %c0_i32, %arg0 : i32, i32
  }
}

module attributes {stable_mosaic.version = 11 : i64} {
  func.func @_conv_epilogue_kernel(%arg0: i32, %arg1: memref<8x288xbf16, #tpu.memory_space<vmem>>, %arg2: memref<288x1024xbf16, #tpu.memory_space<vmem>>, %arg3: memref<8x1xf32, #tpu.memory_space<vmem>>, %arg4: memref<8x1xf32, #tpu.memory_space<vmem>>, %arg5: memref<8x1024xbf16, #tpu.memory_space<vmem>>) attributes {dimension_semantics = [#tpu.dimension_semantics<parallel>], iteration_bounds = array<i64: 2>, scalar_prefetch = 0 : i64, scratch_operands = 0 : i64, tpu.core_type = #tpu.core_type<tc>, window_params = [{pipeline_mode = #tpu.pipeline_mode<synchronous>, transform_indices = @transform_0, window_bounds = array<i64: 8, 288>}, {transform_indices = @transform_1, window_bounds = array<i64: 288, 1024>}, {pipeline_mode = #tpu.pipeline_mode<synchronous>, transform_indices = @transform_2, window_bounds = array<i64: 8, 1>}, {pipeline_mode = #tpu.pipeline_mode<synchronous>, transform_indices = @transform_3, window_bounds = array<i64: 8, 1>}, {transform_indices = @transform_4, window_bounds = array<i64: 8, 1024>}]} {
    %c0 = arith.constant 0 : index
    %c0_0 = arith.constant 0 : index
    %0 = vector.load %arg1[%c0, %c0_0] : memref<8x288xbf16, #tpu.memory_space<vmem>>, vector<8x288xbf16>
    %c0_1 = arith.constant 0 : index
    %c0_2 = arith.constant 0 : index
    %1 = vector.load %arg2[%c0_1, %c0_2] : memref<288x1024xbf16, #tpu.memory_space<vmem>>, vector<288x1024xbf16>
    %cst = arith.constant dense<0.000000e+00> : vector<8x1024xf32>
    %2 = tpu.matmul %0, %1, %cst {dimension_numbers = #tpu.dot_dimension_numbers<[1], [0], [0], [1], [0, 0, 1, 1], [], []>} : vector<8x288xbf16>, vector<288x1024xbf16>, vector<8x1024xf32> -> vector<8x1024xf32>
    %c0_3 = arith.constant 0 : index
    %c0_4 = arith.constant 0 : index
    %3 = vector.load %arg3[%c0_3, %c0_4] : memref<8x1xf32, #tpu.memory_space<vmem>>, vector<8x1xf32>
    %4 = vector.broadcast %3 : vector<8x1xf32> to vector<8x1024xf32>
    %5 = arith.mulf %2, %4 : vector<8x1024xf32>
    %c0_5 = arith.constant 0 : index
    %c0_6 = arith.constant 0 : index
    %6 = vector.load %arg4[%c0_5, %c0_6] : memref<8x1xf32, #tpu.memory_space<vmem>>, vector<8x1xf32>
    %7 = vector.broadcast %6 : vector<8x1xf32> to vector<8x1024xf32>
    %8 = arith.addf %5, %7 : vector<8x1024xf32>
    %cst_7 = arith.constant 0.000000e+00 : f32
    %9 = vector.broadcast %cst_7 : f32 to vector<8x1024xf32>
    %10 = arith.maximumf %8, %9 : vector<8x1024xf32>
    %11 = arith.truncf %10 : vector<8x1024xf32> to vector<8x1024xbf16>
    %c0_8 = arith.constant 0 : index
    %c0_9 = arith.constant 0 : index
    %12 = vector.load %arg5[%c0_8, %c0_9] : memref<8x1024xbf16, #tpu.memory_space<vmem>>, vector<8x1024xbf16>
    tpu.vector_store %arg5[%c0_8, %c0_9], %11 {strides = array<i32>} : memref<8x1024xbf16, #tpu.memory_space<vmem>>, vector<8x1024xbf16>,
    return
  }
  func.func @transform_0(%arg0: i32) -> (i32, i32) {
    %c0_i32 = arith.constant 0 : i32
    %c0_i32_0 = arith.constant 0 : i32
    %c0_i32_1 = arith.constant 0 : i32
    return %c0_i32, %c0_i32_0 : i32, i32
  }
  func.func @transform_1(%arg0: i32) -> (i32, i32) {
    %c0_i32 = arith.constant 0 : i32
    %c0_i32_0 = arith.constant 0 : i32
    return %c0_i32, %arg0 : i32, i32
  }
  func.func @transform_2(%arg0: i32) -> (i32, i32) {
    %c0_i32 = arith.constant 0 : i32
    %c0_i32_0 = arith.constant 0 : i32
    %c0_i32_1 = arith.constant 0 : i32
    return %c0_i32, %c0_i32_0 : i32, i32
  }
  func.func @transform_3(%arg0: i32) -> (i32, i32) {
    %c0_i32 = arith.constant 0 : i32
    %c0_i32_0 = arith.constant 0 : i32
    %c0_i32_1 = arith.constant 0 : i32
    return %c0_i32, %c0_i32_0 : i32, i32
  }
  func.func @transform_4(%arg0: i32) -> (i32, i32) {
    %c0_i32 = arith.constant 0 : i32
    %c0_i32_0 = arith.constant 0 : i32
    return %c0_i32, %arg0 : i32, i32
  }
}

module attributes {stable_mosaic.version = 11 : i64} {
  func.func @_conv_compose_kernel(%arg0: i32, %arg1: i32, %arg2: memref<1x3x392xbf16, #tpu.memory_space<vmem>>, %arg3: memref<1x3x1xf32, #tpu.memory_space<vmem>>, %arg4: memref<392x1024xbf16, #tpu.memory_space<vmem>>, %arg5: memref<1x1024xf32, #tpu.memory_space<vmem>>, %arg6: memref<3x1024xbf16, #tpu.memory_space<vmem>>, %arg7: memref<3x1024xf32, #tpu.memory_space<vmem>>) attributes {dimension_semantics = [#tpu.dimension_semantics<parallel>, #tpu.dimension_semantics<parallel>], iteration_bounds = array<i64: 2, 1>, scalar_prefetch = 0 : i64, scratch_operands = 0 : i64, tpu.core_type = #tpu.core_type<tc>, window_params = [{transform_indices = @transform_0, window_bounds = array<i64: 1, 3, 392>}, {transform_indices = @transform_1, window_bounds = array<i64: 1, 3, 1>}, {transform_indices = @transform_2, window_bounds = array<i64: 392, 1024>}, {transform_indices = @transform_3, window_bounds = array<i64: 1, 1024>}, {transform_indices = @transform_4, window_bounds = array<i64: 3, 1024>}, {transform_indices = @transform_5, window_bounds = array<i64: 3, 1024>}]} {
    %c0 = arith.constant 0 : index
    %c0_0 = arith.constant 0 : index
    %c0_1 = arith.constant 0 : index
    %0 = vector.load %arg2[%c0, %c0_0, %c0_1] : memref<1x3x392xbf16, #tpu.memory_space<vmem>>, vector<1x3x392xbf16>
    %1 = vector.shape_cast %0 : vector<1x3x392xbf16> to vector<3x392xbf16>
    %c0_2 = arith.constant 0 : index
    %c0_3 = arith.constant 0 : index
    %2 = vector.load %arg4[%c0_2, %c0_3] : memref<392x1024xbf16, #tpu.memory_space<vmem>>, vector<392x1024xbf16>
    %cst = arith.constant dense<0.000000e+00> : vector<3x1024xf32>
    %3 = tpu.matmul %1, %2, %cst {dimension_numbers = #tpu.dot_dimension_numbers<[1], [0], [0], [1], [0, 0, 1, 1], [], []>} : vector<3x392xbf16>, vector<392x1024xbf16>, vector<3x1024xf32> -> vector<3x1024xf32>
    %c0_4 = arith.constant 0 : index
    %c0_5 = arith.constant 0 : index
    %c0_6 = arith.constant 0 : index
    %4 = vector.load %arg3[%c0_4, %c0_5, %c0_6] : memref<1x3x1xf32, #tpu.memory_space<vmem>>, vector<1x3x1xf32>
    %5 = vector.shape_cast %4 : vector<1x3x1xf32> to vector<3x1xf32>
    %6 = vector.broadcast %5 : vector<3x1xf32> to vector<3x1024xf32>
    %7 = arith.addf %3, %6 : vector<3x1024xf32>
    %c0_7 = arith.constant 0 : index
    %c0_8 = arith.constant 0 : index
    %8 = vector.load %arg5[%c0_7, %c0_8] : memref<1x1024xf32, #tpu.memory_space<vmem>>, vector<1x1024xf32>
    %9 = arith.negf %7 : vector<3x1024xf32>
    %10 = math.exp %9 : vector<3x1024xf32>
    %cst_9 = arith.constant 1.000000e+00 : f32
    %11 = vector.broadcast %cst_9 : f32 to vector<3x1024xf32>
    %12 = arith.addf %11, %10 : vector<3x1024xf32>
    %13 = arith.divf %11, %12 : vector<3x1024xf32>
    %cst_10 = arith.constant 1.000000e+00 : f32
    %14 = vector.broadcast %cst_10 : f32 to vector<1x1024xf32>
    %15 = arith.subf %14, %8 : vector<1x1024xf32>
    %16 = vector.broadcast %15 : vector<1x1024xf32> to vector<3x1024xf32>
    %17 = arith.mulf %13, %16 : vector<3x1024xf32>
    %c0_11 = arith.constant 0 : index
    %c0_12 = arith.constant 0 : index
    %18 = vector.load %arg6[%c0_11, %c0_12] : memref<3x1024xbf16, #tpu.memory_space<vmem>>, vector<3x1024xbf16>
    %19 = arith.extf %18 : vector<3x1024xbf16> to vector<3x1024xf32>
    %20 = vector.broadcast %8 : vector<1x1024xf32> to vector<3x1024xf32>
    %21 = arith.mulf %19, %20 : vector<3x1024xf32>
    %22 = arith.addf %17, %21 : vector<3x1024xf32>
    %c0_13 = arith.constant 0 : index
    %c0_14 = arith.constant 0 : index
    %23 = vector.load %arg7[%c0_13, %c0_14] : memref<3x1024xf32, #tpu.memory_space<vmem>>, vector<3x1024xf32>
    tpu.vector_store %arg7[%c0_13, %c0_14], %22 {strides = array<i32>} : memref<3x1024xf32, #tpu.memory_space<vmem>>, vector<3x1024xf32>,
    return
  }
  func.func @transform_0(%arg0: i32, %arg1: i32) -> (i32, i32, i32) {
    %c0_i32 = arith.constant 0 : i32
    %c0_i32_0 = arith.constant 0 : i32
    %c0_i32_1 = arith.constant 0 : i32
    return %arg0, %c0_i32, %c0_i32_0 : i32, i32, i32
  }
  func.func @transform_1(%arg0: i32, %arg1: i32) -> (i32, i32, i32) {
    %c0_i32 = arith.constant 0 : i32
    %c0_i32_0 = arith.constant 0 : i32
    %c0_i32_1 = arith.constant 0 : i32
    return %arg0, %c0_i32, %c0_i32_0 : i32, i32, i32
  }
  func.func @transform_2(%arg0: i32, %arg1: i32) -> (i32, i32) {
    %c1_i32 = arith.constant 1 : i32
    %0 = arith.muli %arg0, %c1_i32 : i32
    %1 = arith.addi %0, %arg1 : i32
    %c0_i32 = arith.constant 0 : i32
    %c0_i32_0 = arith.constant 0 : i32
    return %c0_i32, %1 : i32, i32
  }
  func.func @transform_3(%arg0: i32, %arg1: i32) -> (i32, i32) {
    %c1_i32 = arith.constant 1 : i32
    %0 = arith.muli %arg0, %c1_i32 : i32
    %1 = arith.addi %0, %arg1 : i32
    %c0_i32 = arith.constant 0 : i32
    %c0_i32_0 = arith.constant 0 : i32
    return %c0_i32, %1 : i32, i32
  }
  func.func @transform_4(%arg0: i32, %arg1: i32) -> (i32, i32) {
    %c1_i32 = arith.constant 1 : i32
    %0 = arith.muli %arg0, %c1_i32 : i32
    %1 = arith.addi %0, %arg1 : i32
    %c0_i32 = arith.constant 0 : i32
    %c0_i32_0 = arith.constant 0 : i32
    return %c0_i32, %1 : i32, i32
  }
  func.func @transform_5(%arg0: i32, %arg1: i32) -> (i32, i32) {
    %c1_i32 = arith.constant 1 : i32
    %0 = arith.muli %arg0, %c1_i32 : i32
    %1 = arith.addi %0, %arg1 : i32
    %c0_i32 = arith.constant 0 : i32
    %c0_i32_0 = arith.constant 0 : i32
    return %c0_i32, %1 : i32, i32
  }
}

</mosaic_0001>

<llo_original>
// kernel: forward.14
$region0: #{forward.14}
  #allocation0 [shape = 'u32[]', space=smem, size = 0x4, offset = 0x4, fixed_abs, tag = 'smem constant byte address 0x4 - core index']
  #allocation1 [shape = 'u32[144,128]{1,0:T(1,128)}', space=vmem, size = 0x12000, scoped, tag = 'internal scratch']
  %s0 = inlined_call_operand.vmem [shape: bf16[8,147], index: 0, kind: input, shape index: {}]
  %s1 = inlined_call_operand.vmem [shape: bf16[147,1024], index: 1, kind: input, shape index: {}]
  %s2 = inlined_call_operand.vmem [shape: f32[8,1], index: 2, kind: input, shape index: {}]
  %s3 = inlined_call_operand.vmem [shape: f32[8,1], index: 3, kind: input, shape index: {}]
  %s4 = inlined_call_operand.vmem [shape: bf16[8,1024], index: 4, kind: output, shape index: {}]
  %s5 = sld [smem:[#allocation0]]
  $region72: #{forward.14} parent=0
    _
  %s7 = ssub.s32 1, %s5
  %s8 = scalar_select 0, %s7, %s5
  $region1: #{forward.14} parent=0
    #allocation2 [shape = 'u8[311296]{0}', space=vmem, size = 0x4c000, scoped, tag = 'input window, operand 1']
    loop: start=0, step=1, limit=4
    $region2: #{forward.14} parent=1 // loop_pre_header
      _
    $region3: #{forward.14} parent=1 // loop_header
      %s10 = sphi 0, %s14
      %p11 = scmp.ge.s32.totalorder %s10, 4
      %s18 = sphi 0, %s18
      %s20 = sphi 0, %s18
      %s21 = sphi 0, %s20
      %s35 = sphi 0, %s21
      %s41 = sphi 0, %s43
      %s44 = sphi 0, %s41
      %s45 = sphi 0, %s44
      %s61 = sphi 0, %s45
      %s65 = sphi 0, %s65
      %s67 = sphi 0, %s65
      %s68 = sphi 0, %s67
      %s82 = sphi 0, %s68
      %s86 = sphi 0, %s86
      %s88 = sphi 0, %s86
      %s89 = sphi 0, %s88
      %s103 = sphi 0, %s89
      %s109 = sphi 0, %s111
      %s112 = sphi 0, %s109
      %s113 = sphi 0, %s112
      %s129 = sphi 0, %s113
    $region4: #{forward.14} parent=1 // loop_header_branch
      %13 = sbr.rel (%p11) target = $region8
    $region5: #{forward.14} parent=1 // loop_body
      %s15 = ssub.s32 %s10, 1
      %s16 = ssub.s32 %s10, 2
      %s17 = sadd.s32 %s10, 1
      %s19 = sadd.s32 %s18, 1
      %p22 = scmp.eq.s32.totalorder %s10, 1
      %p23 = scmp.ne.s32.totalorder %s18, %s20
      %p24 = scmp.eq.s32.totalorder %s10, 0
      %p25 = por %p23, %p24
      %p26 = scmp.ne.s32.totalorder %s18, %s20
      %p27 = scmp.eq.s32.totalorder %s15, 1
      %p28 = por %p26, %p27
      %p29 = scmp.ne.s32.totalorder %s20, %s21
      %p30 = scmp.eq.s32.totalorder %s15, 0
      %p31 = por %p29, %p30
      %p32 = scmp.ne.s32.totalorder %s20, %s21
      %p33 = scmp.eq.s32.totalorder %s16, 1
      %p34 = por %p32, %p33
      %p36 = scmp.ne.s32.totalorder %s21, %s35
      %p37 = scmp.eq.s32.totalorder %s16, 0
      %p38 = por %p36, %p37
      %s39 = ssub.s32 %s10, %s17
      %p40 = scmp.eq.s32.totalorder %s39, 0
      %s42 = sadd.s32 %s41, 1
      %s43 = scalar_select %p40, %s41, %s42
      %p46 = pneg %p40
      %p47 = scmp.eq.s32.totalorder %s10, 1
      %p48 = por %p46, %p47
      %p49 = scmp.ne.s32.totalorder %s41, %s44
      %p50 = scmp.eq.s32.totalorder %s10, 0
      %p51 = por %p49, %p50
      %p52 = scmp.ne.s32.totalorder %s41, %s44
      %p53 = scmp.eq.s32.totalorder %s15, 1
      %p54 = por %p52, %p53
      %p55 = scmp.ne.s32.totalorder %s44, %s45
      %p56 = scmp.eq.s32.totalorder %s15, 0
      %p57 = por %p55, %p56
      %p58 = scmp.ne.s32.totalorder %s44, %s45
      %p59 = scmp.eq.s32.totalorder %s16, 1
      %p60 = por %p58, %p59
      %p62 = scmp.ne.s32.totalorder %s45, %s61
      %p63 = scmp.eq.s32.totalorder %s16, 0
      %p64 = por %p62, %p63
      %s66 = sadd.s32 %s65, 1
      %p69 = scmp.eq.s32.totalorder %s10, 1
      %p70 = scmp.ne.s32.totalorder %s65, %s67
      %p71 = scmp.eq.s32.totalorder %s10, 0
      %p72 = por %p70, %p71
      %p73 = scmp.ne.s32.totalorder %s65, %s67
      %p74 = scmp.eq.s32.totalorder %s15, 1
      %p75 = por %p73, %p74
      %p76 = scmp.ne.s32.totalorder %s67, %s68
      %p77 = scmp.eq.s32.totalorder %s15, 0
      %p78 = por %p76, %p77
      %p79 = scmp.ne.s32.totalorder %s67, %s68
      %p80 = scmp.eq.s32.totalorder %s16, 1
      %p81 = por %p79, %p80
      %p83 = scmp.ne.s32.totalorder %s68, %s82
      %p84 = scmp.eq.s32.totalorder %s16, 0
      %p85 = por %p83, %p84
      %s87 = sadd.s32 %s86, 1
      %p90 = scmp.eq.s32.totalorder %s10, 1
      %p91 = scmp.ne.s32.totalorder %s86, %s88
      %p92 = scmp.eq.s32.totalorder %s10, 0
      %p93 = por %p91, %p92
      %p94 = scmp.ne.s32.totalorder %s86, %s88
      %p95 = scmp.eq.s32.totalorder %s15, 1
      %p96 = por %p94, %p95
      %p97 = scmp.ne.s32.totalorder %s88, %s89
      %p98 = scmp.eq.s32.totalorder %s15, 0
      %p99 = por %p97, %p98
      %p100 = scmp.ne.s32.totalorder %s88, %s89
      %p101 = scmp.eq.s32.totalorder %s16, 1
      %p102 = por %p100, %p101
      %p104 = scmp.ne.s32.totalorder %s89, %s103
      %p105 = scmp.eq.s32.totalorder %s16, 0
      %p106 = por %p104, %p105
      %s107 = ssub.s32 %s10, %s17
      %p108 = scmp.eq.s32.totalorder %s107, 0
      %s110 = sadd.s32 %s109, 1
      %s111 = scalar_select %p108, %s109, %s110
      %p114 = pneg %p108
      %p115 = scmp.eq.s32.totalorder %s10, 1
      %p116 = por %p114, %p115
      %p117 = scmp.ne.s32.totalorder %s109, %s112
      %p118 = scmp.eq.s32.totalorder %s10, 0
      %p119 = por %p117, %p118
      %p120 = scmp.ne.s32.totalorder %s109, %s112
      %p121 = scmp.eq.s32.totalorder %s15, 1
      %p122 = por %p120, %p121
      %p123 = scmp.ne.s32.totalorder %s112, %s113
      %p124 = scmp.eq.s32.totalorder %s15, 0
      %p125 = por %p123, %p124
      %p126 = scmp.ne.s32.totalorder %s112, %s113
      %p127 = scmp.eq.s32.totalorder %s16, 1
      %p128 = por %p126, %p127
      %p130 = scmp.ne.s32.totalorder %s113, %s129
      %p131 = scmp.eq.s32.totalorder %s16, 0
      %p132 = por %p130, %p131
      %p133 = scmp.le.s32.totalorder 1, %s10
      %p134 = scmp.lt.s32.totalorder %s10, 3
      %p135 = pnand %p133, %p134
      %p136 = pneg %p135
      // Predicated region
      $region9: #{forward.14} parent=5 // pred_check
        _
      $region10: #{forward.14} parent=5 // pred_check_branch
        %138 = sbr.rel (%p135) target = $region12
      $region11: #{forward.14} parent=5 // pred_region
        %s139 = ssub.s32 %s10, 1
        // Predicated region
        $region13: #{forward.14} parent=11 // pred_check
          %p140 = pneg %p31
        $region14: #{forward.14} parent=11 // pred_check_branch
          %142 = sbr.rel (%p140) target = $region16
        $region15: #{forward.14} parent=11 // pred_region
          _
        $region16: #{forward.14} parent=11 // pred_fallthru
          _
        // Predicated region
        $region17: #{forward.14} parent=11 // pred_check
          %p143 = pneg %p78
        $region18: #{forward.14} parent=11 // pred_check_branch
          %145 = sbr.rel (%p143) target = $region20
        $region19: #{forward.14} parent=11 // pred_region
          _
        $region20: #{forward.14} parent=11 // pred_fallthru
          _
        // Predicated region
        $region21: #{forward.14} parent=11 // pred_check
          %p146 = pneg %p99
        $region22: #{forward.14} parent=11 // pred_check_branch
          %148 = sbr.rel (%p146) target = $region24
        $region23: #{forward.14} parent=11 // pred_region
          _
        $region24: #{forward.14} parent=11 // pred_fallthru
          _
      $region12: #{forward.14} parent=5 // pred_fallthru
        _
      %p149 = scmp.lt.s32.totalorder %s10, 2
      // Predicated region
      $region25: #{forward.14} parent=5 // pred_check
        %p150 = pneg %p149
      $region26: #{forward.14} parent=5 // pred_check_branch
        %152 = sbr.rel (%p150) target = $region28
      $region27: #{forward.14} parent=5 // pred_region
        // Predicated region
        $region29: #{forward.14} parent=27 // pred_check
          %p153 = pneg %p51
        $region30: #{forward.14} parent=27 // pred_check_branch
          %155 = sbr.rel (%p153) target = $region32
        $region31: #{forward.14} parent=27 // pred_region
          %s156 = sand.u32 %s41, 1
          %s157 = sand.u32 %s41, 1
          %s158 = smul.addr %s157, 304
          %s159 = scalar_lea.vmem [#allocation2], %s158
          %s160 = smul.u32 4, %s10
          %s161 = smul.addr %s160, 4
          %s162 = scalar_lea.vmem %s1, %s161
          // Predicated region
          $region33: #{forward.14} parent=31 // pred_check
            _
          $region34: #{forward.14} parent=31 // pred_check_branch
            %164 = sbr.rel (0) target = $region36
          $region35: #{forward.14} parent=31 // pred_region
            // Predicated region
            $region37: #{forward.14} parent=35 // pred_check
              _
            $region38: #{forward.14} parent=35 // pred_check_branch
              %166 = sbr.rel (0) target = $region40
            $region39: #{forward.14} parent=35 // pred_region
              loop: start=0, step=1, limit=1
              $region41: #{forward.14} parent=39 // loop_pre_header
                _
              $region42: #{forward.14} parent=39 // loop_header
                %s168 = sphi 0, %s172
                %p169 = scmp.ge.s32.totalorder %s168, 1
                %s173 = sphi %s162, %s162
                %s174 = sphi %s159, %s159
              $region43: #{forward.14} parent=39 // loop_header_branch
                %171 = sbr.rel (%p169) target = $region47
              $region44: #{forward.14} parent=39 // loop_body
                %v175 = vld [vmem:[%s173] sm:$0xff]
                %176 = vst [vmem:[%s174] sm:$0xff] %v175
                %v177 = vld [vmem:[%s173 + $0x8] sm:$0xff]
                %178 = vst [vmem:[%s174 + $0x8] sm:$0xff] %v177
                %v179 = vld [vmem:[%s173 + $0x20] sm:$0xff]
                %180 = vst [vmem:[%s174 + $0x10] sm:$0xff] %v179
                %v181 = vld [vmem:[%s173 + $0x28] sm:$0xff]
                %182 = vst [vmem:[%s174 + $0x18] sm:$0xff] %v181
                %v183 = vld [vmem:[%s173 + $0x40] sm:$0xff]
                %184 = vst [vmem:[%s174 + $0x20] sm:$0xff] %v183
                %v185 = vld [vmem:[%s173 + $0x48] sm:$0xff]
                %186 = vst [vmem:[%s174 + $0x28] sm:$0xff] %v185
                %v187 = vld [vmem:[%s173 + $0x60] sm:$0xff]
                %188 = vst [vmem:[%s174 + $0x30] sm:$0xff] %v187
                %v189 = vld [vmem:[%s173 + $0x68] sm:$0xff]
                %190 = vst [vmem:[%s174 + $0x38] sm:$0xff] %v189
                %v191 = vld [vmem:[%s173 + $0x80] sm:$0xff]
                %192 = vst [vmem:[%s174 + $0x40] sm:$0xff] %v191
                %v193 = vld [vmem:[%s173 + $0x88] sm:$0xff]
                %194 = vst [vmem:[%s174 + $0x48] sm:$0xff] %v193
                %v195 = vld [vmem:[%s173 + $0xa0] sm:$0xff]
                %196 = vst [vmem:[%s174 + $0x50] sm:$0xff] %v195
                %v197 = vld [vmem:[%s173 + $0xa8] sm:$0xff]
                %198 = vst [vmem:[%s174 + $0x58] sm:$0xff] %v197
                %v199 = vld [vmem:[%s173 + $0xc0] sm:$0xff]
                %200 = vst [vmem:[%s174 + $0x60] sm:$0xff] %v199
                %v201 = vld [vmem:[%s173 + $0xc8] sm:$0xff]
                %202 = vst [vmem:[%s174 + $0x68] sm:$0xff] %v201
                %v203 = vld [vmem:[%s173 + $0xe0] sm:$0xff]
                %204 = vst [vmem:[%s174 + $0x70] sm:$0xff] %v203
                %v205 = vld [vmem:[%s173 + $0xe8] sm:$0xff]
                %206 = vst [vmem:[%s174 + $0x78] sm:$0xff] %v205
                %v207 = vld [vmem:[%s173 + $0x100] sm:$0xff]
                %208 = vst [vmem:[%s174 + $0x80] sm:$0xff] %v207
                %v209 = vld [vmem:[%s173 + $0x108] sm:$0xff]
                %210 = vst [vmem:[%s174 + $0x88] sm:$0xff] %v209
                %v211 = vld [vmem:[%s173 + $0x120] sm:$0xff]
                %212 = vst [vmem:[%s174 + $0x90] sm:$0xff] %v211
                %v213 = vld [vmem:[%s173 + $0x128] sm:$0xff]
                %214 = vst [vmem:[%s174 + $0x98] sm:$0xff] %v213
                %v215 = vld [vmem:[%s173 + $0x140] sm:$0xff]
                %216 = vst [vmem:[%s174 + $0xa0] sm:$0xff] %v215
                %v217 = vld [vmem:[%s173 + $0x148] sm:$0xff]
                %218 = vst [vmem:[%s174 + $0xa8] sm:$0xff] %v217
                %v219 = vld [vmem:[%s173 + $0x160] sm:$0xff]
                %220 = vst [vmem:[%s174 + $0xb0] sm:$0xff] %v219
                %v221 = vld [vmem:[%s173 + $0x168] sm:$0xff]
                %222 = vst [vmem:[%s174 + $0xb8] sm:$0xff] %v221
                %v223 = vld [vmem:[%s173 + $0x180] sm:$0xff]
                %224 = vst [vmem:[%s174 + $0xc0] sm:$0xff] %v223
                %v225 = vld [vmem:[%s173 + $0x188] sm:$0xff]
                %226 = vst [vmem:[%s174 + $0xc8] sm:$0xff] %v225
                %v227 = vld [vmem:[%s173 + $0x1a0] sm:$0xff]
                %228 = vst [vmem:[%s174 + $0xd0] sm:$0xff] %v227
                %v229 = vld [vmem:[%s173 + $0x1a8] sm:$0xff]
                %230 = vst [vmem:[%s174 + $0xd8] sm:$0xff] %v229
                %v231 = vld [vmem:[%s173 + $0x1c0] sm:$0xff]
                %232 = vst [vmem:[%s174 + $0xe0] sm:$0xff] %v231
                %v233 = vld [vmem:[%s173 + $0x1c8] sm:$0xff]
                %234 = vst [vmem:[%s174 + $0xe8] sm:$0xff] %v233
                %v235 = vld [vmem:[%s173 + $0x1e0] sm:$0xff]
                %236 = vst [vmem:[%s174 + $0xf0] sm:$0xff] %v235
                %v237 = vld [vmem:[%s173 + $0x1e8] sm:$0xff]
                %238 = vst [vmem:[%s174 + $0xf8] sm:$0xff] %v237
                %v239 = vld [vmem:[%s173 + $0x200] sm:$0xff]
                %240 = vst [vmem:[%s174 + $0x100] sm:$0xff] %v239
                %v241 = vld [vmem:[%s173 + $0x208] sm:$0xff]
                %242 = vst [vmem:[%s174 + $0x108] sm:$0xff] %v241
                %v243 = vld [vmem:[%s173 + $0x220] sm:$0xff]
                %244 = vst [vmem:[%s174 + $0x110] sm:$0xff] %v243
                %v245 = vld [vmem:[%s173 + $0x228] sm:$0xff]
                %246 = vst [vmem:[%s174 + $0x118] sm:$0xff] %v245
                %v247 = vld [vmem:[%s173 + $0x240] sm:$0xff]
                %248 = vst [vmem:[%s174 + $0x120] sm:$0xff] %v247
                %v249 = vld [vmem:[%s173 + $0x248] sm:$0xff]
                %250 = vst [vmem:[%s174 + $0x128] sm:$0xff] %v249
              $region45: #{forward.14} parent=39 // loop_footer
                %s172 = sadd.s32 1, %s168
              $region46: #{forward.14} parent=39 // loop_footer_branch
                %167 = sbr.rel target = $region42
              $region47: #{forward.14} parent=39 // loop_exit
                _
            $region40: #{forward.14} parent=35 // pred_fallthru
              _
            // Predicated region
            $region48: #{forward.14} parent=35 // pred_check
              _
            $region49: #{forward.14} parent=35 // pred_check_branch
              %252 = sbr.rel target = $region51
            $region50: #{forward.14} parent=35 // pred_region
              _
            $region51: #{forward.14} parent=35 // pred_fallthru
              _
          $region36: #{forward.14} parent=31 // pred_fallthru
            _
          %253 = vnop
        $region32: #{forward.14} parent=27 // pred_fallthru
          _
      $region28: #{forward.14} parent=5 // pred_fallthru
        _
      %p254 = scmp.le.s32.totalorder 1, %s10
      %p255 = scmp.lt.s32.totalorder %s10, 3
      %p256 = pnand %p254, %p255
      %p257 = pneg %p256
      // Predicated region
      $region52: #{forward.14} parent=5 // pred_check
        _
      $region53: #{forward.14} parent=5 // pred_check_branch
        %259 = sbr.rel (%p256) target = $region55
      $region54: #{forward.14} parent=5 // pred_region
        %s260 = ssub.s32 %s10, 1
        %s261 = sand.u32 %s44, 1
        %s262 = sand.u32 %s44, 1
        %s263 = smul.addr %s262, 304
        %s264 = scalar_lea.vmem [#allocation2], %s263
        // Predicated region
        $region56: #{forward.14} parent=54 // pred_check
          %p265 = pneg %p57
        $region57: #{forward.14} parent=54 // pred_check_branch
          %267 = sbr.rel (%p265) target = $region59
        $region58: #{forward.14} parent=54 // pred_region
          _
        $region59: #{forward.14} parent=54 // pred_fallthru
          _
        %p268 = pneg %p31
        %p269 = pneg %p28
        %s270 = sand.u32 %s44, 1
        %s271 = sand.u32 %s44, 1
        %s272 = smul.addr %s271, 304
        %s273 = scalar_lea.vmem [#allocation2], %s272
        %p274 = pneg %p57
        %p275 = pneg %p54
        %p276 = pneg %p78
        %p277 = pneg %p75
        %p278 = pneg %p99
        %p279 = pneg %p96
        %p280 = pneg %p125
        %p281 = pneg %p122
        %s282 = smul.u32 4, %s15
        %p283 = scmp.lt.s32.totalorder %s282, 7
        %s284 = scalar_select %p283, %s282, 7
        %s285 = smul.addr %s284, 4
        %s286 = scalar_lea.vmem %s4, %s285
        %s287 = smul.u32 4, %s15
        %s288 = smul.u32 4, %s15
        %p289 = scmp.lt.s32.totalorder %s288, 7
        %s290 = scalar_select %p289, %s288, 7
        %s291 = smul.addr %s290, 4
        %s292 = scalar_lea.vmem %s4, %s291
        %s293 = smul.u32 4, %s15
        %v295 = vld [vmem:[%s0] sm:$0xff]
        %v296 = vld [vmem:[%s264] sm:$0xff]
        %v297 = vld [vmem:[%s264 + $0x8] sm:$0xff]
        %v298 = vld [vmem:[%s264 + $0x10] sm:$0xff]
        %v299 = vld [vmem:[%s264 + $0x18] sm:$0xff]
        %v300 = vld [vmem:[%s264 + $0x20] sm:$0xff]
        %v301 = vld [vmem:[%s264 + $0x28] sm:$0xff]
        %v302 = vld [vmem:[%s264 + $0x30] sm:$0xff]
        %v303 = vld [vmem:[%s264 + $0x38] sm:$0xff]
        %v304 = vld [vmem:[%s264 + $0x40] sm:$0xff]
        %v305 = vld [vmem:[%s264 + $0x48] sm:$0xff]
        %v306 = vld [vmem:[%s264 + $0x50] sm:$0xff]
        %v307 = vld [vmem:[%s264 + $0x58] sm:$0xff]
        %v308 = vld [vmem:[%s264 + $0x60] sm:$0xff]
        %v309 = vld [vmem:[%s264 + $0x68] sm:$0xff]
        %v310 = vld [vmem:[%s264 + $0x70] sm:$0xff]
        %v311 = vld [vmem:[%s264 + $0x78] sm:$0xff]
        %v312 = vld [vmem:[%s264 + $0x80] sm:$0xff]
        %v313 = vld [vmem:[%s264 + $0x88] sm:$0xff]
        %v314 = vld [vmem:[%s264 + $0x90] sm:$0xff]
        %v315 = vld [vmem:[%s264 + $0x98] sm:$0xff]
        %v316 = vld [vmem:[%s264 + $0xa0] sm:$0xff]
        %v317 = vld [vmem:[%s264 + $0xa8] sm:$0xff]
        %v318 = vld [vmem:[%s264 + $0xb0] sm:$0xff]
        %v319 = vld [vmem:[%s264 + $0xb8] sm:$0xff]
        %v320 = vld [vmem:[%s264 + $0xc0] sm:$0xff]
        %v321 = vld [vmem:[%s264 + $0xc8] sm:$0xff]
        %v322 = vld [vmem:[%s264 + $0xd0] sm:$0xff]
        %v323 = vld [vmem:[%s264 + $0xd8] sm:$0xff]
        %v324 = vld [vmem:[%s264 + $0xe0] sm:$0xff]
        %v325 = vld [vmem:[%s264 + $0xe8] sm:$0xff]
        %v326 = vld [vmem:[%s264 + $0xf0] sm:$0xff]
        %v327 = vld [vmem:[%s264 + $0xf8] sm:$0xff]
        %v328 = vld [vmem:[%s264 + $0x100] sm:$0xff]
        %v329 = vld [vmem:[%s264 + $0x108] sm:$0xff]
        %v330 = vld [vmem:[%s264 + $0x110] sm:$0xff]
        %v331 = vld [vmem:[%s264 + $0x118] sm:$0xff]
        %v332 = vld [vmem:[%s264 + $0x120] sm:$0x33]
        %v333 = vld [vmem:[%s264 + $0x128] sm:$0x33]
        %v335 = vunpack.c.l.b16 %v295
        %v336 = vunpack.c.h.b16 %v295
        %v337 = vpack.c.b16 %v335, %v335
        %v338 = vpack.c.b16 %v336, %v336
        %v378 = vunpack.c.l.b16 %v296
        %v379 = vunpack.c.h.b16 %v296
        %v380 = vunpack.c.l.b16 %v297
        %v381 = vunpack.c.h.b16 %v297
        %v382 = vunpack.c.l.b16 %v298
        %v383 = vunpack.c.h.b16 %v298
        %v384 = vunpack.c.l.b16 %v299
        %v385 = vunpack.c.h.b16 %v299
        %v386 = vunpack.c.l.b16 %v300
        %v387 = vunpack.c.h.b16 %v300
        %v388 = vunpack.c.l.b16 %v301
        %v389 = vunpack.c.h.b16 %v301
        %v390 = vunpack.c.l.b16 %v302
        %v391 = vunpack.c.h.b16 %v302
        %v392 = vunpack.c.l.b16 %v303
        %v393 = vunpack.c.h.b16 %v303
        %v394 = vunpack.c.l.b16 %v304
        %v395 = vunpack.c.h.b16 %v304
        %v396 = vunpack.c.l.b16 %v305
        %v397 = vunpack.c.h.b16 %v305
        %v398 = vunpack.c.l.b16 %v306
        %v399 = vunpack.c.h.b16 %v306
        %v400 = vunpack.c.l.b16 %v307
        %v401 = vunpack.c.h.b16 %v307
        %v402 = vunpack.c.l.b16 %v308
        %v403 = vunpack.c.h.b16 %v308
        %v404 = vunpack.c.l.b16 %v309
        %v405 = vunpack.c.h.b16 %v309
        %v406 = vunpack.c.l.b16 %v310
        %v407 = vunpack.c.h.b16 %v310
        %v408 = vunpack.c.l.b16 %v311
        %v409 = vunpack.c.h.b16 %v311
        %v410 = vunpack.c.l.b16 %v312
        %v411 = vunpack.c.h.b16 %v312
        %v412 = vunpack.c.l.b16 %v313
        %v413 = vunpack.c.h.b16 %v313
        %v414 = vunpack.c.l.b16 %v314
        %v415 = vunpack.c.h.b16 %v314
        %v416 = vunpack.c.l.b16 %v315
        %v417 = vunpack.c.h.b16 %v315
        %v418 = vunpack.c.l.b16 %v316
        %v419 = vunpack.c.h.b16 %v316
        %v420 = vunpack.c.l.b16 %v317
        %v421 = vunpack.c.h.b16 %v317
        %v422 = vunpack.c.l.b16 %v318
        %v423 = vunpack.c.h.b16 %v318
        %v424 = vunpack.c.l.b16 %v319
        %v425 = vunpack.c.h.b16 %v319
        %v426 = vunpack.c.l.b16 %v320
        %v427 = vunpack.c.h.b16 %v320
        %v428 = vunpack.c.l.b16 %v321
        %v429 = vunpack.c.h.b16 %v321
        %v430 = vunpack.c.l.b16 %v322
        %v431 = vunpack.c.h.b16 %v322
        %v432 = vunpack.c.l.b16 %v323
        %v433 = vunpack.c.h.b16 %v323
        %v434 = vunpack.c.l.b16 %v324
        %v435 = vunpack.c.h.b16 %v324
        %v436 = vunpack.c.l.b16 %v325
        %v437 = vunpack.c.h.b16 %v325
        %v438 = vunpack.c.l.b16 %v326
        %v439 = vunpack.c.h.b16 %v326
        %v440 = vunpack.c.l.b16 %v327
        %v441 = vunpack.c.h.b16 %v327
        %v442 = vunpack.c.l.b16 %v328
        %v443 = vunpack.c.h.b16 %v328
        %v444 = vunpack.c.l.b16 %v329
        %v445 = vunpack.c.h.b16 %v329
        %v446 = vunpack.c.l.b16 %v330
        %v447 = vunpack.c.h.b16 %v330
        %v448 = vunpack.c.l.b16 %v331
        %v449 = vunpack.c.h.b16 %v331
        %v450 = vunpack.c.l.b16 %v332
        %v451 = vunpack.c.h.b16 %v332
        %v452 = vunpack.c.l.b16 %v333
        %v453 = vunpack.c.h.b16 %v333
        %v454 = vpack.c.b16 %v382, %v378
        %v455 = vpack.c.b16 %v383, %v379
        %v456 = vpack.c.b16 %v384, %v380
        %v457 = vpack.c.b16 %v385, %v381
        %v458 = vpack.c.b16 %v390, %v386
        %v459 = vpack.c.b16 %v391, %v387
        %v460 = vpack.c.b16 %v392, %v388
        %v461 = vpack.c.b16 %v393, %v389
        %v462 = vpack.c.b16 %v398, %v394
        %v463 = vpack.c.b16 %v399, %v395
        %v464 = vpack.c.b16 %v400, %v396
        %v465 = vpack.c.b16 %v401, %v397
        %v466 = vpack.c.b16 %v406, %v402
        %v467 = vpack.c.b16 %v407, %v403
        %v468 = vpack.c.b16 %v408, %v404
        %v469 = vpack.c.b16 %v409, %v405
        %v470 = vpack.c.b16 %v414, %v410
        %v471 = vpack.c.b16 %v415, %v411
        %v472 = vpack.c.b16 %v416, %v412
        %v473 = vpack.c.b16 %v417, %v413
        %v474 = vpack.c.b16 %v422, %v418
        %v475 = vpack.c.b16 %v423, %v419
        %v476 = vpack.c.b16 %v424, %v420
        %v477 = vpack.c.b16 %v425, %v421
        %v478 = vpack.c.b16 %v430, %v426
        %v479 = vpack.c.b16 %v431, %v427
        %v480 = vpack.c.b16 %v432, %v428
        %v481 = vpack.c.b16 %v433, %v429
        %v482 = vpack.c.b16 %v438, %v434
        %v483 = vpack.c.b16 %v439, %v435
        %v484 = vpack.c.b16 %v440, %v436
        %v485 = vpack.c.b16 %v441, %v437
        %v486 = vpack.c.b16 %v446, %v442
        %v487 = vpack.c.b16 %v447, %v443
        %v488 = vpack.c.b16 %v448, %v444
        %v489 = vpack.c.b16 %v449, %v445
        %v490 = vpack.c.b16 %v450, %v450
        %v491 = vpack.c.b16 %v451, %v451
        %v492 = vpack.c.b16 %v452, %v452
        %v493 = vpack.c.b16 %v453, %v453
        %vm530 = vcmask 154624
        %v532 = vsel %vm530, %v338, 0
        %vm534 = vcmask 1040384
        %vm535 = vcmask 1041408
        %v536 = vsel %vm534, 4294967295, 65535
        %v537 = vsel %vm535, %v536, 0
        %v539 = vand.u32 %v490, %v537
        %v542 = vand.u32 %v491, %v537
        %v545 = vand.u32 %v492, %v537
        %v548 = vand.u32 %v493, %v537
        %550 = vmatprep.subr.bf16.mxu0 %v483
        %551 = vmatpush1.bf16.msra.mxu0 %v482
        %552 = vmatprep.subr.bf16.mxu0 %v479
        %553 = vmatpush1.bf16.msra.mxu0 %v478
        %554 = vmatprep.subr.bf16.mxu0 %v475
        %555 = vmatpush1.bf16.msra.mxu0 %v474
        %556 = vmatprep.subr.bf16.mxu0 %v471
        %557 = vmatpush1.bf16.msra.mxu0 %v470
        %558 = vmatprep.subr.bf16.mxu0 %v467
        %559 = vmatpush1.bf16.msra.mxu0 %v466
        %560 = vmatprep.subr.bf16.mxu0 %v463
        %561 = vmatpush1.bf16.msra.mxu0 %v462
        %562 = vmatprep.subr.bf16.mxu0 %v459
        %563 = vmatpush1.bf16.msra.mxu0 %v458
        %564 = vmatprep.subr.bf16.mxu0 %v455
        %565 = vmatpush1.bf16.msra.mxu0 %v454
        %566 = vmatprep.subr.bf16.mxu0 0
        %567 = vmatpush2.bf16.msra.mxu0 0
        %568 = vmatprep.subr.bf16.mxu0 0
        %569 = vmatpush2.bf16.msra.mxu0 0
        %570 = vmatprep.subr.bf16.mxu0 0
        %571 = vmatpush2.bf16.msra.mxu0 0
        %572 = vmatprep.subr.bf16.mxu0 0
        %573 = vmatpush2.bf16.msra.mxu0 0
        %574 = vmatprep.subr.bf16.mxu0 0
        %575 = vmatpush2.bf16.msra.mxu0 0
        %576 = vmatprep.subr.bf16.mxu0 0
        %577 = vmatpush2.bf16.msra.mxu0 0
        %578 = vmatprep.subr.bf16.mxu0 %v542
        %579 = vmatpush2.bf16.msra.mxu0 %v539
        %580 = vmatprep.subr.bf16.mxu0 %v487
        %581 = vmatpush2.bf16.msra.mxu0 %v486
        %582 = vmatprep.mubr.bf16.mxu0 %v532
        %583 = vmatmul.mubr.bf16.gmra.mxu0 %v337
        %v584 = vpop.f32.mrf.mxu0
        %v585 = vadd.f32 0.0, %v584
        %v586 = vpop.f32.mrf.mxu0
        %v587 = vadd.f32 0.0, %v586
        %v588 = vpop.f32.mrf.mxu0
        %v589 = vpop.f32.mrf.mxu0
        %590 = vdwg.mxu0
        %591 = vmatprep.subr.bf16.mxu0 %v485
        %592 = vmatpush1.bf16.msra.mxu0 %v484
        %593 = vmatprep.subr.bf16.mxu0 %v481
        %594 = vmatpush1.bf16.msra.mxu0 %v480
        %595 = vmatprep.subr.bf16.mxu0 %v477
        %596 = vmatpush1.bf16.msra.mxu0 %v476
        %597 = vmatprep.subr.bf16.mxu0 %v473
        %598 = vmatpush1.bf16.msra.mxu0 %v472
        %599 = vmatprep.subr.bf16.mxu0 %v469
        %600 = vmatpush1.bf16.msra.mxu0 %v468
        %601 = vmatprep.subr.bf16.mxu0 %v465
        %602 = vmatpush1.bf16.msra.mxu0 %v464
        %603 = vmatprep.subr.bf16.mxu0 %v461
        %604 = vmatpush1.bf16.msra.mxu0 %v460
        %605 = vmatprep.subr.bf16.mxu0 %v457
        %606 = vmatpush1.bf16.msra.mxu0 %v456
        %607 = vmatprep.subr.bf16.mxu0 0
        %608 = vmatpush2.bf16.msra.mxu0 0
        %609 = vmatprep.subr.bf16.mxu0 0
        %610 = vmatpush2.bf16.msra.mxu0 0
        %611 = vmatprep.subr.bf16.mxu0 0
        %612 = vmatpush2.bf16.msra.mxu0 0
        %613 = vmatprep.subr.bf16.mxu0 0
        %614 = vmatpush2.bf16.msra.mxu0 0
        %615 = vmatprep.subr.bf16.mxu0 0
        %616 = vmatpush2.bf16.msra.mxu0 0
        %617 = vmatprep.subr.bf16.mxu0 0
        %618 = vmatpush2.bf16.msra.mxu0 0
        %619 = vmatprep.subr.bf16.mxu0 %v548
        %620 = vmatpush2.bf16.msra.mxu0 %v545
        %621 = vmatprep.subr.bf16.mxu0 %v489
        %622 = vmatpush2.bf16.msra.mxu0 %v488
        %623 = vmatprep.mubr.bf16.mxu0 %v532
        %624 = vmatmul.mubr.bf16.gmra.mxu0 %v337
        %v625 = vpop.f32.mrf.mxu0
        %v626 = vadd.f32 0.0, %v625
        %v627 = vpop.f32.mrf.mxu0
        %v628 = vadd.f32 0.0, %v627
        %v629 = vpop.f32.mrf.mxu0
        %v630 = vpop.f32.mrf.mxu0
        %631 = vdwg.mxu0
        %v632 = vld [vmem:[%s2] sm:$0xff]
        %634 = vset.pattern.permute.xlu0 0
        %635 = vperm.xlu0 %634, %v632
        %v636 = vpop.permute.xlu0 %635
        %v638 = vmul.f32 %v585, %v636
        %v639 = vmul.f32 %v587, %v636
        %v640 = vmul.f32 %v626, %v636
        %v641 = vmul.f32 %v628, %v636
        %v642 = vld [vmem:[%s3] sm:$0xff]
        %644 = vset.pattern.permute.xlu0 0
        %645 = vperm.xlu0 %644, %v642
        %v646 = vpop.permute.xlu0 %645
        %v648 = vadd.f32 %v638, %v646
        %v649 = vadd.f32 %v639, %v646
        %v650 = vadd.f32 %v640, %v646
        %v651 = vadd.f32 %v641, %v646
        %v652 = vmax.f32 %v648, 0.0
        %v653 = vmax.f32 %v649, 0.0
        %v654 = vmax.f32 %v650, 0.0
        %v655 = vmax.f32 %v651, 0.0
        %v656 = vpack.c.bf16 %v652, %v652
        %v657 = vpack.c.bf16 %v653, %v653
        %v658 = vpack.c.bf16 %v654, %v654
        %v659 = vpack.c.bf16 %v655, %v655
        %v664 = vunpack.c.l.b16 %v656
        %v665 = vunpack.c.l.b16 %v657
        %v666 = vunpack.c.l.b16 %v658
        %v667 = vunpack.c.l.b16 %v659
        %v668 = vpack.c.b16 %v665, %v664
        %v669 = vpack.c.b16 %v667, %v666
        %672 = vst [vmem:[%s292] sm:$0xff] %v668
        %673 = vst [vmem:[%s292 + $0x8] sm:$0xff] %v669
        %s674 = smul.u32 4, %s15
        %p675 = scmp.lt.s32.totalorder %s674, 7
        %s676 = scalar_select %p675, %s674, 7
        %s677 = smul.addr %s676, 4
        %s678 = scalar_lea.vmem %s4, %s677
        // Predicated region
        $region60: #{forward.14} parent=54 // pred_check
          %p679 = pneg %p122
        $region61: #{forward.14} parent=54 // pred_check_branch
          %681 = sbr.rel (%p679) target = $region63
        $region62: #{forward.14} parent=54 // pred_region
          %s682 = smul.u32 4, %s15
        $region63: #{forward.14} parent=54 // pred_fallthru
          _
      $region55: #{forward.14} parent=5 // pred_fallthru
        _
      %p683 = scmp.le.s32.totalorder 2, %s10
      // Predicated region
      $region64: #{forward.14} parent=5 // pred_check
        %p684 = pneg %p683
      $region65: #{forward.14} parent=5 // pred_check_branch
        %686 = sbr.rel (%p684) target = $region67
      $region66: #{forward.14} parent=5 // pred_region
        %s687 = ssub.s32 %s10, 2
        // Predicated region
        $region68: #{forward.14} parent=66 // pred_check
          %p688 = pneg %p128
        $region69: #{forward.14} parent=66 // pred_check_branch
          %690 = sbr.rel (%p688) target = $region71
        $region70: #{forward.14} parent=66 // pred_region
          %s691 = smul.u32 4, %s16
          %p692 = scmp.lt.s32.totalorder %s691, 7
          %s693 = scalar_select %p692, %s691, 7
          %s694 = smul.addr %s693, 4
          %s695 = scalar_lea.vmem %s4, %s694
        $region71: #{forward.14} parent=66 // pred_fallthru
          _
      $region67: #{forward.14} parent=5 // pred_fallthru
        _
    $region6: #{forward.14} parent=1 // loop_footer
      %s14 = sadd.s32 1, %s10
    $region7: #{forward.14} parent=1 // loop_footer_branch
      %9 = sbr.rel target = $region3
    $region8: #{forward.14} parent=1 // loop_exit
      _

// kernel: forward.15
$region0: #{forward.15}
  #allocation0 [shape = 'u32[]', space=smem, size = 0x4, offset = 0x4, fixed_abs, tag = 'smem constant byte address 0x4 - core index']
  #allocation1 [shape = 'u32[144,128]{1,0:T(1,128)}', space=vmem, size = 0x12000, scoped, tag = 'internal scratch']
  %s0 = inlined_call_operand.vmem [shape: bf16[16,72], index: 0, kind: input, shape index: {}]
  %s1 = inlined_call_operand.vmem [shape: bf16[72,1024], index: 1, kind: input, shape index: {}]
  %s2 = inlined_call_operand.vmem [shape: f32[16,1], index: 2, kind: input, shape index: {}]
  %s3 = inlined_call_operand.vmem [shape: f32[16,1], index: 3, kind: input, shape index: {}]
  %s4 = inlined_call_operand.vmem [shape: bf16[16,1024], index: 4, kind: output, shape index: {}]
  %s5 = sld [smem:[#allocation0]]
  $region91: #{forward.15} parent=0
    _
  %s7 = ssub.s32 1, %s5
  %s8 = scalar_select 0, %s7, %s5
  $region1: #{forward.15} parent=0
    #allocation2 [shape = 'u8[147456]{0}', space=vmem, size = 0x24000, scoped, tag = 'input window, operand 1']
    #allocation3 [shape = 'u8[32768]{0}', space=vmem, size = 0x8000, scoped, tag = 'output window, operand 0']
    loop: start=0, step=1, limit=4
    $region2: #{forward.15} parent=1 // loop_pre_header
      _
    $region3: #{forward.15} parent=1 // loop_header
      %s10 = sphi 0, %s14
      %p11 = scmp.ge.s32.totalorder %s10, 4
      %s18 = sphi 0, %s18
      %s20 = sphi 0, %s18
      %s21 = sphi 0, %s20
      %s35 = sphi 0, %s21
      %s41 = sphi 0, %s43
      %s44 = sphi 0, %s41
      %s45 = sphi 0, %s44
      %s61 = sphi 0, %s45
      %s65 = sphi 0, %s65
      %s67 = sphi 0, %s65
      %s68 = sphi 0, %s67
      %s82 = sphi 0, %s68
      %s86 = sphi 0, %s86
      %s88 = sphi 0, %s86
      %s89 = sphi 0, %s88
      %s103 = sphi 0, %s89
      %s109 = sphi 0, %s111
      %s112 = sphi 0, %s109
      %s113 = sphi 0, %s112
      %s129 = sphi 0, %s113
    $region4: #{forward.15} parent=1 // loop_header_branch
      %13 = sbr.rel (%p11) target = $region8
    $region5: #{forward.15} parent=1 // loop_body
      %s15 = ssub.s32 %s10, 1
      %s16 = ssub.s32 %s10, 2
      %s17 = sadd.s32 %s10, 1
      %s19 = sadd.s32 %s18, 1
      %p22 = scmp.eq.s32.totalorder %s10, 1
      %p23 = scmp.ne.s32.totalorder %s18, %s20
      %p24 = scmp.eq.s32.totalorder %s10, 0
      %p25 = por %p23, %p24
      %p26 = scmp.ne.s32.totalorder %s18, %s20
      %p27 = scmp.eq.s32.totalorder %s15, 1
      %p28 = por %p26, %p27
      %p29 = scmp.ne.s32.totalorder %s20, %s21
      %p30 = scmp.eq.s32.totalorder %s15, 0
      %p31 = por %p29, %p30
      %p32 = scmp.ne.s32.totalorder %s20, %s21
      %p33 = scmp.eq.s32.totalorder %s16, 1
      %p34 = por %p32, %p33
      %p36 = scmp.ne.s32.totalorder %s21, %s35
      %p37 = scmp.eq.s32.totalorder %s16, 0
      %p38 = por %p36, %p37
      %s39 = ssub.s32 %s10, %s17
      %p40 = scmp.eq.s32.totalorder %s39, 0
      %s42 = sadd.s32 %s41, 1
      %s43 = scalar_select %p40, %s41, %s42
      %p46 = pneg %p40
      %p47 = scmp.eq.s32.totalorder %s10, 1
      %p48 = por %p46, %p47
      %p49 = scmp.ne.s32.totalorder %s41, %s44
      %p50 = scmp.eq.s32.totalorder %s10, 0
      %p51 = por %p49, %p50
      %p52 = scmp.ne.s32.totalorder %s41, %s44
      %p53 = scmp.eq.s32.totalorder %s15, 1
      %p54 = por %p52, %p53
      %p55 = scmp.ne.s32.totalorder %s44, %s45
      %p56 = scmp.eq.s32.totalorder %s15, 0
      %p57 = por %p55, %p56
      %p58 = scmp.ne.s32.totalorder %s44, %s45
      %p59 = scmp.eq.s32.totalorder %s16, 1
      %p60 = por %p58, %p59
      %p62 = scmp.ne.s32.totalorder %s45, %s61
      %p63 = scmp.eq.s32.totalorder %s16, 0
      %p64 = por %p62, %p63
      %s66 = sadd.s32 %s65, 1
      %p69 = scmp.eq.s32.totalorder %s10, 1
      %p70 = scmp.ne.s32.totalorder %s65, %s67
      %p71 = scmp.eq.s32.totalorder %s10, 0
      %p72 = por %p70, %p71
      %p73 = scmp.ne.s32.totalorder %s65, %s67
      %p74 = scmp.eq.s32.totalorder %s15, 1
      %p75 = por %p73, %p74
      %p76 = scmp.ne.s32.totalorder %s67, %s68
      %p77 = scmp.eq.s32.totalorder %s15, 0
      %p78 = por %p76, %p77
      %p79 = scmp.ne.s32.totalorder %s67, %s68
      %p80 = scmp.eq.s32.totalorder %s16, 1
      %p81 = por %p79, %p80
      %p83 = scmp.ne.s32.totalorder %s68, %s82
      %p84 = scmp.eq.s32.totalorder %s16, 0
      %p85 = por %p83, %p84
      %s87 = sadd.s32 %s86, 1
      %p90 = scmp.eq.s32.totalorder %s10, 1
      %p91 = scmp.ne.s32.totalorder %s86, %s88
      %p92 = scmp.eq.s32.totalorder %s10, 0
      %p93 = por %p91, %p92
      %p94 = scmp.ne.s32.totalorder %s86, %s88
      %p95 = scmp.eq.s32.totalorder %s15, 1
      %p96 = por %p94, %p95
      %p97 = scmp.ne.s32.totalorder %s88, %s89
      %p98 = scmp.eq.s32.totalorder %s15, 0
      %p99 = por %p97, %p98
      %p100 = scmp.ne.s32.totalorder %s88, %s89
      %p101 = scmp.eq.s32.totalorder %s16, 1
      %p102 = por %p100, %p101
      %p104 = scmp.ne.s32.totalorder %s89, %s103
      %p105 = scmp.eq.s32.totalorder %s16, 0
      %p106 = por %p104, %p105
      %s107 = ssub.s32 %s10, %s17
      %p108 = scmp.eq.s32.totalorder %s107, 0
      %s110 = sadd.s32 %s109, 1
      %s111 = scalar_select %p108, %s109, %s110
      %p114 = pneg %p108
      %p115 = scmp.eq.s32.totalorder %s10, 1
      %p116 = por %p114, %p115
      %p117 = scmp.ne.s32.totalorder %s109, %s112
      %p118 = scmp.eq.s32.totalorder %s10, 0
      %p119 = por %p117, %p118
      %p120 = scmp.ne.s32.totalorder %s109, %s112
      %p121 = scmp.eq.s32.totalorder %s15, 1
      %p122 = por %p120, %p121
      %p123 = scmp.ne.s32.totalorder %s112, %s113
      %p124 = scmp.eq.s32.totalorder %s15, 0
      %p125 = por %p123, %p124
      %p126 = scmp.ne.s32.totalorder %s112, %s113
      %p127 = scmp.eq.s32.totalorder %s16, 1
      %p128 = por %p126, %p127
      %p130 = scmp.ne.s32.totalorder %s113, %s129
      %p131 = scmp.eq.s32.totalorder %s16, 0
      %p132 = por %p130, %p131
      %p133 = scmp.le.s32.totalorder 1, %s10
      %p134 = scmp.lt.s32.totalorder %s10, 3
      %p135 = pnand %p133, %p134
      %p136 = pneg %p135
      // Predicated region
      $region9: #{forward.15} parent=5 // pred_check
        _
      $region10: #{forward.15} parent=5 // pred_check_branch
        %138 = sbr.rel (%p135) target = $region12
      $region11: #{forward.15} parent=5 // pred_region
        %s139 = ssub.s32 %s10, 1
        // Predicated region
        $region13: #{forward.15} parent=11 // pred_check
          %p140 = pneg %p31
        $region14: #{forward.15} parent=11 // pred_check_branch
          %142 = sbr.rel (%p140) target = $region16
        $region15: #{forward.15} parent=11 // pred_region
          _
        $region16: #{forward.15} parent=11 // pred_fallthru
          _
        // Predicated region
        $region17: #{forward.15} parent=11 // pred_check
          %p143 = pneg %p78
        $region18: #{forward.15} parent=11 // pred_check_branch
          %145 = sbr.rel (%p143) target = $region20
        $region19: #{forward.15} parent=11 // pred_region
          _
        $region20: #{forward.15} parent=11 // pred_fallthru
          _
        // Predicated region
        $region21: #{forward.15} parent=11 // pred_check
          %p146 = pneg %p99
        $region22: #{forward.15} parent=11 // pred_check_branch
          %148 = sbr.rel (%p146) target = $region24
        $region23: #{forward.15} parent=11 // pred_region
          _
        $region24: #{forward.15} parent=11 // pred_fallthru
          _
      $region12: #{forward.15} parent=5 // pred_fallthru
        _
      %p149 = scmp.lt.s32.totalorder %s10, 2
      // Predicated region
      $region25: #{forward.15} parent=5 // pred_check
        %p150 = pneg %p149
      $region26: #{forward.15} parent=5 // pred_check_branch
        %152 = sbr.rel (%p150) target = $region28
      $region27: #{forward.15} parent=5 // pred_region
        // Predicated region
        $region29: #{forward.15} parent=27 // pred_check
          %p153 = pneg %p51
        $region30: #{forward.15} parent=27 // pred_check_branch
          %155 = sbr.rel (%p153) target = $region32
        $region31: #{forward.15} parent=27 // pred_region
          %s156 = sand.u32 %s41, 1
          %s157 = sand.u32 %s41, 1
          %s158 = smul.addr %s157, 144
          %s159 = scalar_lea.vmem [#allocation2], %s158
          %s160 = smul.u32 4, %s10
          %s161 = smul.addr %s160, 4
          %s162 = scalar_lea.vmem %s1, %s161
          // Predicated region
          $region33: #{forward.15} parent=31 // pred_check
            _
          $region34: #{forward.15} parent=31 // pred_check_branch
            %164 = sbr.rel (0) target = $region36
          $region35: #{forward.15} parent=31 // pred_region
            // Predicated region
            $region37: #{forward.15} parent=35 // pred_check
              _
            $region38: #{forward.15} parent=35 // pred_check_branch
              %166 = sbr.rel (0) target = $region40
            $region39: #{forward.15} parent=35 // pred_region
              loop: start=0, step=1, limit=1
              $region41: #{forward.15} parent=39 // loop_pre_header
                _
              $region42: #{forward.15} parent=39 // loop_header
                %s168 = sphi 0, %s172
                %p169 = scmp.ge.s32.totalorder %s168, 1
                %s173 = sphi %s162, %s162
                %s174 = sphi %s159, %s159
              $region43: #{forward.15} parent=39 // loop_header_branch
                %171 = sbr.rel (%p169) target = $region47
              $region44: #{forward.15} parent=39 // loop_body
                %v175 = vld [vmem:[%s173] sm:$0xff]
                %176 = vst [vmem:[%s174] sm:$0xff] %v175
                %v177 = vld [vmem:[%s173 + $0x8] sm:$0xff]
                %178 = vst [vmem:[%s174 + $0x8] sm:$0xff] %v177
                %v179 = vld [vmem:[%s173 + $0x20] sm:$0xff]
                %180 = vst [vmem:[%s174 + $0x10] sm:$0xff] %v179
                %v181 = vld [vmem:[%s173 + $0x28] sm:$0xff]
                %182 = vst [vmem:[%s174 + $0x18] sm:$0xff] %v181
                %v183 = vld [vmem:[%s173 + $0x40] sm:$0xff]
                %184 = vst [vmem:[%s174 + $0x20] sm:$0xff] %v183
                %v185 = vld [vmem:[%s173 + $0x48] sm:$0xff]
                %186 = vst [vmem:[%s174 + $0x28] sm:$0xff] %v185
                %v187 = vld [vmem:[%s173 + $0x60] sm:$0xff]
                %188 = vst [vmem:[%s174 + $0x30] sm:$0xff] %v187
                %v189 = vld [vmem:[%s173 + $0x68] sm:$0xff]
                %190 = vst [vmem:[%s174 + $0x38] sm:$0xff] %v189
                %v191 = vld [vmem:[%s173 + $0x80] sm:$0xff]
                %192 = vst [vmem:[%s174 + $0x40] sm:$0xff] %v191
                %v193 = vld [vmem:[%s173 + $0x88] sm:$0xff]
                %194 = vst [vmem:[%s174 + $0x48] sm:$0xff] %v193
                %v195 = vld [vmem:[%s173 + $0xa0] sm:$0xff]
                %196 = vst [vmem:[%s174 + $0x50] sm:$0xff] %v195
                %v197 = vld [vmem:[%s173 + $0xa8] sm:$0xff]
                %198 = vst [vmem:[%s174 + $0x58] sm:$0xff] %v197
                %v199 = vld [vmem:[%s173 + $0xc0] sm:$0xff]
                %200 = vst [vmem:[%s174 + $0x60] sm:$0xff] %v199
                %v201 = vld [vmem:[%s173 + $0xc8] sm:$0xff]
                %202 = vst [vmem:[%s174 + $0x68] sm:$0xff] %v201
                %v203 = vld [vmem:[%s173 + $0xe0] sm:$0xff]
                %204 = vst [vmem:[%s174 + $0x70] sm:$0xff] %v203
                %v205 = vld [vmem:[%s173 + $0xe8] sm:$0xff]
                %206 = vst [vmem:[%s174 + $0x78] sm:$0xff] %v205
                %v207 = vld [vmem:[%s173 + $0x100] sm:$0xff]
                %208 = vst [vmem:[%s174 + $0x80] sm:$0xff] %v207
                %v209 = vld [vmem:[%s173 + $0x108] sm:$0xff]
                %210 = vst [vmem:[%s174 + $0x88] sm:$0xff] %v209
              $region45: #{forward.15} parent=39 // loop_footer
                %s172 = sadd.s32 1, %s168
              $region46: #{forward.15} parent=39 // loop_footer_branch
                %167 = sbr.rel target = $region42
              $region47: #{forward.15} parent=39 // loop_exit
                _
            $region40: #{forward.15} parent=35 // pred_fallthru
              _
            // Predicated region
            $region48: #{forward.15} parent=35 // pred_check
              _
            $region49: #{forward.15} parent=35 // pred_check_branch
              %212 = sbr.rel target = $region51
            $region50: #{forward.15} parent=35 // pred_region
              _
            $region51: #{forward.15} parent=35 // pred_fallthru
              _
          $region36: #{forward.15} parent=31 // pred_fallthru
            _
          %213 = vnop
        $region32: #{forward.15} parent=27 // pred_fallthru
          _
      $region28: #{forward.15} parent=5 // pred_fallthru
        _
      %p214 = scmp.le.s32.totalorder 1, %s10
      %p215 = scmp.lt.s32.totalorder %s10, 3
      %p216 = pnand %p214, %p215
      %p217 = pneg %p216
      // Predicated region
      $region52: #{forward.15} parent=5 // pred_check
        _
      $region53: #{forward.15} parent=5 // pred_check_branch
        %219 = sbr.rel (%p216) target = $region55
      $region54: #{forward.15} parent=5 // pred_region
        %s220 = ssub.s32 %s10, 1
        %s221 = sand.u32 %s44, 1
        %s222 = sand.u32 %s44, 1
        %s223 = smul.addr %s222, 144
        %s224 = scalar_lea.vmem [#allocation2], %s223
        // Predicated region
        $region56: #{forward.15} parent=54 // pred_check
          %p225 = pneg %p57
        $region57: #{forward.15} parent=54 // pred_check_branch
          %227 = sbr.rel (%p225) target = $region59
        $region58: #{forward.15} parent=54 // pred_region
          _
        $region59: #{forward.15} parent=54 // pred_fallthru
          _
        %p228 = pneg %p31
        %p229 = pneg %p28
        %s230 = sand.u32 %s44, 1
        %s231 = sand.u32 %s44, 1
        %s232 = smul.addr %s231, 144
        %s233 = scalar_lea.vmem [#allocation2], %s232
        %p234 = pneg %p57
        %p235 = pneg %p54
        %p236 = pneg %p78
        %p237 = pneg %p75
        %p238 = pneg %p99
        %p239 = pneg %p96
        %p240 = pneg %p125
        %p241 = pneg %p122
        %s242 = sand.u32 %s112, 1
        %s243 = sand.u32 %s112, 1
        %s244 = smul.addr %s243, 32
        %s245 = scalar_lea.vmem [#allocation3], %s244
        %s246 = smul.u32 4, %s15
        %s247 = smul.u32 4, %s15
        %v249 = vld [vmem:[%s0] sm:$0xf]
        %v250 = vld [vmem:[%s0 + $0x4] sm:$0xf]
        %v251 = vld [vmem:[%s224] sm:$0xff]
        %v252 = vld [vmem:[%s224 + $0x8] sm:$0xff]
        %v253 = vld [vmem:[%s224 + $0x10] sm:$0xff]
        %v254 = vld [vmem:[%s224 + $0x18] sm:$0xff]
        %v255 = vld [vmem:[%s224 + $0x20] sm:$0xff]
        %v256 = vld [vmem:[%s224 + $0x28] sm:$0xff]
        %v257 = vld [vmem:[%s224 + $0x30] sm:$0xff]
        %v258 = vld [vmem:[%s224 + $0x38] sm:$0xff]
        %v259 = vld [vmem:[%s224 + $0x40] sm:$0xff]
        %v260 = vld [vmem:[%s224 + $0x48] sm:$0xff]
        %v261 = vld [vmem:[%s224 + $0x50] sm:$0xff]
        %v262 = vld [vmem:[%s224 + $0x58] sm:$0xff]
        %v263 = vld [vmem:[%s224 + $0x60] sm:$0xff]
        %v264 = vld [vmem:[%s224 + $0x68] sm:$0xff]
        %v265 = vld [vmem:[%s224 + $0x70] sm:$0xff]
        %v266 = vld [vmem:[%s224 + $0x78] sm:$0xff]
        %v267 = vld [vmem:[%s224 + $0x80] sm:$0xff]
        %v268 = vld [vmem:[%s224 + $0x88] sm:$0xff]
        %v271 = vunpack.c.l.b16 %v249
        %v272 = vunpack.c.l.b16 %v250
        %v273 = vpack.c.b16 %v272, %v271
        %v292 = vunpack.c.l.b16 %v251
        %v293 = vunpack.c.h.b16 %v251
        %v294 = vunpack.c.l.b16 %v252
        %v295 = vunpack.c.h.b16 %v252
        %v296 = vunpack.c.l.b16 %v253
        %v297 = vunpack.c.h.b16 %v253
        %v298 = vunpack.c.l.b16 %v254
        %v299 = vunpack.c.h.b16 %v254
        %v300 = vunpack.c.l.b16 %v255
        %v301 = vunpack.c.h.b16 %v255
        %v302 = vunpack.c.l.b16 %v256
        %v303 = vunpack.c.h.b16 %v256
        %v304 = vunpack.c.l.b16 %v257
        %v305 = vunpack.c.h.b16 %v257
        %v306 = vunpack.c.l.b16 %v258
        %v307 = vunpack.c.h.b16 %v258
        %v308 = vunpack.c.l.b16 %v259
        %v309 = vunpack.c.h.b16 %v259
        %v310 = vunpack.c.l.b16 %v260
        %v311 = vunpack.c.h.b16 %v260
        %v312 = vunpack.c.l.b16 %v261
        %v313 = vunpack.c.h.b16 %v261
        %v314 = vunpack.c.l.b16 %v262
        %v315 = vunpack.c.h.b16 %v262
        %v316 = vunpack.c.l.b16 %v263
        %v317 = vunpack.c.h.b16 %v263
        %v318 = vunpack.c.l.b16 %v264
        %v319 = vunpack.c.h.b16 %v264
        %v320 = vunpack.c.l.b16 %v265
        %v321 = vunpack.c.h.b16 %v265
        %v322 = vunpack.c.l.b16 %v266
        %v323 = vunpack.c.h.b16 %v266
        %v324 = vunpack.c.l.b16 %v267
        %v325 = vunpack.c.h.b16 %v267
        %v326 = vunpack.c.l.b16 %v268
        %v327 = vunpack.c.h.b16 %v268
        %v328 = vpack.c.b16 %v296, %v292
        %v329 = vpack.c.b16 %v297, %v293
        %v330 = vpack.c.b16 %v298, %v294
        %v331 = vpack.c.b16 %v299, %v295
        %v332 = vpack.c.b16 %v304, %v300
        %v333 = vpack.c.b16 %v305, %v301
        %v334 = vpack.c.b16 %v306, %v302
        %v335 = vpack.c.b16 %v307, %v303
        %v336 = vpack.c.b16 %v312, %v308
        %v337 = vpack.c.b16 %v313, %v309
        %v338 = vpack.c.b16 %v314, %v310
        %v339 = vpack.c.b16 %v315, %v311
        %v340 = vpack.c.b16 %v320, %v316
        %v341 = vpack.c.b16 %v321, %v317
        %v342 = vpack.c.b16 %v322, %v318
        %v343 = vpack.c.b16 %v323, %v319
        %v344 = vpack.c.b16 %v324, %v324
        %v345 = vpack.c.b16 %v325, %v325
        %v346 = vpack.c.b16 %v326, %v326
        %v347 = vpack.c.b16 %v327, %v327
        %vm364 = vcmask 588800
        %v366 = vsel %vm364, %v273, 0
        %vm368 = vcmask 1043456
        %v370 = vsel %vm368, %v344, 0
        %v373 = vsel %vm368, %v345, 0
        %v376 = vsel %vm368, %v346, 0
        %v379 = vsel %vm368, %v347, 0
        %381 = vmatprep.subr.bf16.mxu0 0
        %382 = vmatpush1.bf16.msra.mxu0 0
        %383 = vmatprep.subr.bf16.mxu0 0
        %384 = vmatpush1.bf16.msra.mxu0 0
        %385 = vmatprep.subr.bf16.mxu0 0
        %386 = vmatpush1.bf16.msra.mxu0 0
        %387 = vmatprep.subr.bf16.mxu0 %v373
        %388 = vmatpush1.bf16.msra.mxu0 %v370
        %389 = vmatprep.subr.bf16.mxu0 %v341
        %390 = vmatpush1.bf16.msra.mxu0 %v340
        %391 = vmatprep.subr.bf16.mxu0 %v337
        %392 = vmatpush1.bf16.msra.mxu0 %v336
        %393 = vmatprep.subr.bf16.mxu0 %v333
        %394 = vmatpush1.bf16.msra.mxu0 %v332
        %395 = vmatprep.subr.bf16.mxu0 %v329
        %396 = vmatpush1.bf16.msra.mxu0 %v328
        %397 = vmatprep.subr.bf16.mxu0 0
        %398 = vmatpush2.bf16.msra.mxu0 0
        %399 = vmatprep.subr.bf16.mxu0 0
        %400 = vmatpush2.bf16.msra.mxu0 0
        %401 = vmatprep.subr.bf16.mxu0 0
        %402 = vmatpush2.bf16.msra.mxu0 0
        %403 = vmatprep.subr.bf16.mxu0 0
        %404 = vmatpush2.bf16.msra.mxu0 0
        %405 = vmatprep.subr.bf16.mxu0 0
        %406 = vmatpush2.bf16.msra.mxu0 0
        %407 = vmatprep.subr.bf16.mxu0 0
        %408 = vmatpush2.bf16.msra.mxu0 0
        %409 = vmatprep.subr.bf16.mxu0 0
        %410 = vmatpush2.bf16.msra.mxu0 0
        %411 = vmatprep.subr.bf16.mxu0 0
        %412 = vmatpush2.bf16.msra.mxu0 0
        %413 = vmatprep.mubr.bf16.mxu0 0
        %414 = vmatmul.mubr.bf16.gmra.mxu0 %v366
        %v415 = vpop.f32.mrf.mxu0
        %v416 = vadd.f32 0.0, %v415
        %v417 = vpop.f32.mrf.mxu0
        %v418 = vadd.f32 0.0, %v417
        %v419 = vpop.f32.mrf.mxu0
        %v420 = vadd.f32 0.0, %v419
        %v421 = vpop.f32.mrf.mxu0
        %v422 = vadd.f32 0.0, %v421
        %423 = vdwg.mxu0
        %424 = vmatprep.subr.bf16.mxu0 0
        %425 = vmatpush1.bf16.msra.mxu0 0
        %426 = vmatprep.subr.bf16.mxu0 0
        %427 = vmatpush1.bf16.msra.mxu0 0
        %428 = vmatprep.subr.bf16.mxu0 0
        %429 = vmatpush1.bf16.msra.mxu0 0
        %430 = vmatprep.subr.bf16.mxu0 %v379
        %431 = vmatpush1.bf16.msra.mxu0 %v376
        %432 = vmatprep.subr.bf16.mxu0 %v343
        %433 = vmatpush1.bf16.msra.mxu0 %v342
        %434 = vmatprep.subr.bf16.mxu0 %v339
        %435 = vmatpush1.bf16.msra.mxu0 %v338
        %436 = vmatprep.subr.bf16.mxu0 %v335
        %437 = vmatpush1.bf16.msra.mxu0 %v334
        %438 = vmatprep.subr.bf16.mxu0 %v331
        %439 = vmatpush1.bf16.msra.mxu0 %v330
        %440 = vmatprep.subr.bf16.mxu0 0
        %441 = vmatpush2.bf16.msra.mxu0 0
        %442 = vmatprep.subr.bf16.mxu0 0
        %443 = vmatpush2.bf16.msra.mxu0 0
        %444 = vmatprep.subr.bf16.mxu0 0
        %445 = vmatpush2.bf16.msra.mxu0 0
        %446 = vmatprep.subr.bf16.mxu0 0
        %447 = vmatpush2.bf16.msra.mxu0 0
        %448 = vmatprep.subr.bf16.mxu0 0
        %449 = vmatpush2.bf16.msra.mxu0 0
        %450 = vmatprep.subr.bf16.mxu0 0
        %451 = vmatpush2.bf16.msra.mxu0 0
        %452 = vmatprep.subr.bf16.mxu0 0
        %453 = vmatpush2.bf16.msra.mxu0 0
        %454 = vmatprep.subr.bf16.mxu0 0
        %455 = vmatpush2.bf16.msra.mxu0 0
        %456 = vmatprep.mubr.bf16.mxu0 0
        %457 = vmatmul.mubr.bf16.gmra.mxu0 %v366
        %v458 = vpop.f32.mrf.mxu0
        %v459 = vadd.f32 0.0, %v458
        %v460 = vpop.f32.mrf.mxu0
        %v461 = vadd.f32 0.0, %v460
        %v462 = vpop.f32.mrf.mxu0
        %v463 = vadd.f32 0.0, %v462
        %v464 = vpop.f32.mrf.mxu0
        %v465 = vadd.f32 0.0, %v464
        %466 = vdwg.mxu0
        %v467 = vld [vmem:[%s2] sm:$0xff]
        %v468 = vld [vmem:[%s2 + $0x8] sm:$0xff]
        %470 = vset.pattern.permute.xlu0 0
        %471 = vperm.xlu0 %470, %v467
        %v472 = vpop.permute.xlu0 %471
        %475 = vset.pattern.permute.xlu0 0
        %476 = vperm.xlu0 %475, %v468
        %v477 = vpop.permute.xlu0 %476
        %v479 = vmul.f32 %v416, %v472
        %v480 = vmul.f32 %v418, %v472
        %v481 = vmul.f32 %v459, %v472
        %v482 = vmul.f32 %v461, %v472
        %v483 = vmul.f32 %v420, %v477
        %v484 = vmul.f32 %v422, %v477
        %v485 = vmul.f32 %v463, %v477
        %v486 = vmul.f32 %v465, %v477
        %v487 = vld [vmem:[%s3] sm:$0xff]
        %v488 = vld [vmem:[%s3 + $0x8] sm:$0xff]
        %490 = vset.pattern.permute.xlu0 0
        %491 = vperm.xlu0 %490, %v487
        %v492 = vpop.permute.xlu0 %491
        %495 = vset.pattern.permute.xlu0 0
        %496 = vperm.xlu0 %495, %v488
        %v497 = vpop.permute.xlu0 %496
        %v499 = vadd.f32 %v479, %v492
        %v500 = vadd.f32 %v480, %v492
        %v501 = vadd.f32 %v481, %v492
        %v502 = vadd.f32 %v482, %v492
        %v503 = vadd.f32 %v483, %v497
        %v504 = vadd.f32 %v484, %v497
        %v505 = vadd.f32 %v485, %v497
        %v506 = vadd.f32 %v486, %v497
        %v507 = vmax.f32 %v499, 0.0
        %v508 = vmax.f32 %v500, 0.0
        %v509 = vmax.f32 %v501, 0.0
        %v510 = vmax.f32 %v502, 0.0
        %v511 = vmax.f32 %v503, 0.0
        %v512 = vmax.f32 %v504, 0.0
        %v513 = vmax.f32 %v505, 0.0
        %v514 = vmax.f32 %v506, 0.0
        %v515 = vpack.c.bf16 %v511, %v507
        %v516 = vpack.c.bf16 %v512, %v508
        %v517 = vpack.c.bf16 %v513, %v509
        %v518 = vpack.c.bf16 %v514, %v510
        %v523 = vunpack.c.l.b16 %v515
        %v524 = vunpack.c.l.b16 %v516
        %v525 = vunpack.c.l.b16 %v517
        %v526 = vunpack.c.l.b16 %v518
        %v527 = vunpack.c.h.b16 %v515
        %v528 = vunpack.c.h.b16 %v516
        %v529 = vunpack.c.h.b16 %v517
        %v530 = vunpack.c.h.b16 %v518
        %v531 = vpack.c.b16 %v524, %v523
        %v532 = vpack.c.b16 %v526, %v525
        %v533 = vpack.c.b16 %v528, %v527
        %v534 = vpack.c.b16 %v530, %v529
        %539 = vst [vmem:[%s245] sm:$0xff] %v531
        %540 = vst [vmem:[%s245 + $0x8] sm:$0xff] %v532
        %541 = vst [vmem:[%s245 + $0x10] sm:$0xff] %v533
        %542 = vst [vmem:[%s245 + $0x18] sm:$0xff] %v534
        %s543 = sand.u32 %s112, 1
        %s544 = sand.u32 %s112, 1
        %s545 = smul.addr %s544, 32
        %s546 = scalar_lea.vmem [#allocation3], %s545
        // Predicated region
        $region60: #{forward.15} parent=54 // pred_check
          %p547 = pneg %p122
        $region61: #{forward.15} parent=54 // pred_check_branch
          %549 = sbr.rel (%p547) target = $region63
        $region62: #{forward.15} parent=54 // pred_region
          %s550 = smul.u32 4, %s15
          %s551 = smul.addr %s550, 4
          %s552 = scalar_lea.vmem %s4, %s551
          // Predicated region
          $region64: #{forward.15} parent=62 // pred_check
            _
          $region65: #{forward.15} parent=62 // pred_check_branch
            %554 = sbr.rel (0) target = $region67
          $region66: #{forward.15} parent=62 // pred_region
            // Predicated region
            $region68: #{forward.15} parent=66 // pred_check
              _
            $region69: #{forward.15} parent=66 // pred_check_branch
              %556 = sbr.rel (0) target = $region71
            $region70: #{forward.15} parent=66 // pred_region
              loop: start=0, step=1, limit=1
              $region72: #{forward.15} parent=70 // loop_pre_header
                _
              $region73: #{forward.15} parent=70 // loop_header
                %s558 = sphi 0, %s562
                %p559 = scmp.ge.s32.totalorder %s558, 1
                %s563 = sphi %s546, %s546
                %s564 = sphi %s552, %s552
              $region74: #{forward.15} parent=70 // loop_header_branch
                %561 = sbr.rel (%p559) target = $region78
              $region75: #{forward.15} parent=70 // loop_body
                %v565 = vld [vmem:[%s563] sm:$0xff]
                %566 = vst [vmem:[%s564] sm:$0xff] %v565
                %v567 = vld [vmem:[%s563 + $0x8] sm:$0xff]
                %568 = vst [vmem:[%s564 + $0x8] sm:$0xff] %v567
                %v569 = vld [vmem:[%s563 + $0x10] sm:$0xff]
                %570 = vst [vmem:[%s564 + $0x20] sm:$0xff] %v569
                %v571 = vld [vmem:[%s563 + $0x18] sm:$0xff]
                %572 = vst [vmem:[%s564 + $0x28] sm:$0xff] %v571
              $region76: #{forward.15} parent=70 // loop_footer
                %s562 = sadd.s32 1, %s558
              $region77: #{forward.15} parent=70 // loop_footer_branch
                %557 = sbr.rel target = $region73
              $region78: #{forward.15} parent=70 // loop_exit
                _
            $region71: #{forward.15} parent=66 // pred_fallthru
              _
            // Predicated region
            $region79: #{forward.15} parent=66 // pred_check
              _
            $region80: #{forward.15} parent=66 // pred_check_branch
              %574 = sbr.rel target = $region82
            $region81: #{forward.15} parent=66 // pred_region
              _
            $region82: #{forward.15} parent=66 // pred_fallthru
              _
          $region67: #{forward.15} parent=62 // pred_fallthru
            _
          %575 = vnop
        $region63: #{forward.15} parent=54 // pred_fallthru
          _
      $region55: #{forward.15} parent=5 // pred_fallthru
        _
      %p576 = scmp.le.s32.totalorder 2, %s10
      // Predicated region
      $region83: #{forward.15} parent=5 // pred_check
        %p577 = pneg %p576
      $region84: #{forward.15} parent=5 // pred_check_branch
        %579 = sbr.rel (%p577) target = $region86
      $region85: #{forward.15} parent=5 // pred_region
        %s580 = ssub.s32 %s10, 2
        // Predicated region
        $region87: #{forward.15} parent=85 // pred_check
          %p581 = pneg %p128
        $region88: #{forward.15} parent=85 // pred_check_branch
          %583 = sbr.rel (%p581) target = $region90
        $region89: #{forward.15} parent=85 // pred_region
          %s584 = sand.u32 %s113, 1
          %s585 = sand.u32 %s113, 1
          %s586 = smul.addr %s585, 32
          %s587 = scalar_lea.vmem [#allocation3], %s586
        $region90: #{forward.15} parent=85 // pred_fallthru
          _
      $region86: #{forward.15} parent=5 // pred_fallthru
        _
    $region6: #{forward.15} parent=1 // loop_footer
      %s14 = sadd.s32 1, %s10
    $region7: #{forward.15} parent=1 // loop_footer_branch
      %9 = sbr.rel target = $region3
    $region8: #{forward.15} parent=1 // loop_exit
      _

// kernel: forward.16
$region0: #{forward.16}
  #allocation0 [shape = 'u32[]', space=smem, size = 0x4, offset = 0x4, fixed_abs, tag = 'smem constant byte address 0x4 - core index']
  #allocation1 [shape = 'u32[144,128]{1,0:T(1,128)}', space=vmem, size = 0x12000, scoped, tag = 'internal scratch']
  %s0 = inlined_call_operand.vmem [shape: bf16[32,144], index: 0, kind: input, shape index: {}]
  %s1 = inlined_call_operand.vmem [shape: bf16[144,256], index: 1, kind: input, shape index: {}]
  %s2 = inlined_call_operand.vmem [shape: f32[32,1], index: 2, kind: input, shape index: {}]
  %s3 = inlined_call_operand.vmem [shape: f32[32,1], index: 3, kind: input, shape index: {}]
  %s4 = inlined_call_operand.vmem [shape: bf16[32,256], index: 4, kind: output, shape index: {}]
  %s5 = sld [smem:[#allocation0]]
  $region127: #{forward.16} parent=0
    _
  %s7 = ssub.s32 1, %s5
  %s8 = scalar_select 0, %s7, %s5
  $region1: #{forward.16} parent=0
    #allocation2 [shape = 'u8[73728]{0}', space=vmem, size = 0x12000, scoped, tag = 'input window, operand 1']
    #allocation3 [shape = 'u8[16384]{0}', space=vmem, size = 0x4000, scoped, tag = 'output window, operand 0']
    loop: start=0, step=1, limit=4
    $region2: #{forward.16} parent=1 // loop_pre_header
      _
    $region3: #{forward.16} parent=1 // loop_header
      %s10 = sphi 0, %s14
      %p11 = scmp.ge.s32.totalorder %s10, 4
      %s18 = sphi 0, %s18
      %s20 = sphi 0, %s18
      %s21 = sphi 0, %s20
      %s35 = sphi 0, %s21
      %s41 = sphi 0, %s43
      %s44 = sphi 0, %s41
      %s45 = sphi 0, %s44
      %s61 = sphi 0, %s45
      %s65 = sphi 0, %s65
      %s67 = sphi 0, %s65
      %s68 = sphi 0, %s67
      %s82 = sphi 0, %s68
      %s86 = sphi 0, %s86
      %s88 = sphi 0, %s86
      %s89 = sphi 0, %s88
      %s103 = sphi 0, %s89
      %s109 = sphi 0, %s111
      %s112 = sphi 0, %s109
      %s113 = sphi 0, %s112
      %s129 = sphi 0, %s113
    $region4: #{forward.16} parent=1 // loop_header_branch
      %13 = sbr.rel (%p11) target = $region8
    $region5: #{forward.16} parent=1 // loop_body
      %s15 = ssub.s32 %s10, 1
      %s16 = ssub.s32 %s10, 2
      %s17 = sadd.s32 %s10, 1
      %s19 = sadd.s32 %s18, 1
      %p22 = scmp.eq.s32.totalorder %s10, 1
      %p23 = scmp.ne.s32.totalorder %s18, %s20
      %p24 = scmp.eq.s32.totalorder %s10, 0
      %p25 = por %p23, %p24
      %p26 = scmp.ne.s32.totalorder %s18, %s20
      %p27 = scmp.eq.s32.totalorder %s15, 1
      %p28 = por %p26, %p27
      %p29 = scmp.ne.s32.totalorder %s20, %s21
      %p30 = scmp.eq.s32.totalorder %s15, 0
      %p31 = por %p29, %p30
      %p32 = scmp.ne.s32.totalorder %s20, %s21
      %p33 = scmp.eq.s32.totalorder %s16, 1
      %p34 = por %p32, %p33
      %p36 = scmp.ne.s32.totalorder %s21, %s35
      %p37 = scmp.eq.s32.totalorder %s16, 0
      %p38 = por %p36, %p37
      %s39 = ssub.s32 %s10, %s17
      %p40 = scmp.eq.s32.totalorder %s39, 0
      %s42 = sadd.s32 %s41, 1
      %s43 = scalar_select %p40, %s41, %s42
      %p46 = pneg %p40
      %p47 = scmp.eq.s32.totalorder %s10, 1
      %p48 = por %p46, %p47
      %p49 = scmp.ne.s32.totalorder %s41, %s44
      %p50 = scmp.eq.s32.totalorder %s10, 0
      %p51 = por %p49, %p50
      %p52 = scmp.ne.s32.totalorder %s41, %s44
      %p53 = scmp.eq.s32.totalorder %s15, 1
      %p54 = por %p52, %p53
      %p55 = scmp.ne.s32.totalorder %s44, %s45
      %p56 = scmp.eq.s32.totalorder %s15, 0
      %p57 = por %p55, %p56
      %p58 = scmp.ne.s32.totalorder %s44, %s45
      %p59 = scmp.eq.s32.totalorder %s16, 1
      %p60 = por %p58, %p59
      %p62 = scmp.ne.s32.totalorder %s45, %s61
      %p63 = scmp.eq.s32.totalorder %s16, 0
      %p64 = por %p62, %p63
      %s66 = sadd.s32 %s65, 1
      %p69 = scmp.eq.s32.totalorder %s10, 1
      %p70 = scmp.ne.s32.totalorder %s65, %s67
      %p71 = scmp.eq.s32.totalorder %s10, 0
      %p72 = por %p70, %p71
      %p73 = scmp.ne.s32.totalorder %s65, %s67
      %p74 = scmp.eq.s32.totalorder %s15, 1
      %p75 = por %p73, %p74
      %p76 = scmp.ne.s32.totalorder %s67, %s68
      %p77 = scmp.eq.s32.totalorder %s15, 0
      %p78 = por %p76, %p77
      %p79 = scmp.ne.s32.totalorder %s67, %s68
      %p80 = scmp.eq.s32.totalorder %s16, 1
      %p81 = por %p79, %p80
      %p83 = scmp.ne.s32.totalorder %s68, %s82
      %p84 = scmp.eq.s32.totalorder %s16, 0
      %p85 = por %p83, %p84
      %s87 = sadd.s32 %s86, 1
      %p90 = scmp.eq.s32.totalorder %s10, 1
      %p91 = scmp.ne.s32.totalorder %s86, %s88
      %p92 = scmp.eq.s32.totalorder %s10, 0
      %p93 = por %p91, %p92
      %p94 = scmp.ne.s32.totalorder %s86, %s88
      %p95 = scmp.eq.s32.totalorder %s15, 1
      %p96 = por %p94, %p95
      %p97 = scmp.ne.s32.totalorder %s88, %s89
      %p98 = scmp.eq.s32.totalorder %s15, 0
      %p99 = por %p97, %p98
      %p100 = scmp.ne.s32.totalorder %s88, %s89
      %p101 = scmp.eq.s32.totalorder %s16, 1
      %p102 = por %p100, %p101
      %p104 = scmp.ne.s32.totalorder %s89, %s103
      %p105 = scmp.eq.s32.totalorder %s16, 0
      %p106 = por %p104, %p105
      %s107 = ssub.s32 %s10, %s17
      %p108 = scmp.eq.s32.totalorder %s107, 0
      %s110 = sadd.s32 %s109, 1
      %s111 = scalar_select %p108, %s109, %s110
      %p114 = pneg %p108
      %p115 = scmp.eq.s32.totalorder %s10, 1
      %p116 = por %p114, %p115
      %p117 = scmp.ne.s32.totalorder %s109, %s112
      %p118 = scmp.eq.s32.totalorder %s10, 0
      %p119 = por %p117, %p118
      %p120 = scmp.ne.s32.totalorder %s109, %s112
      %p121 = scmp.eq.s32.totalorder %s15, 1
      %p122 = por %p120, %p121
      %p123 = scmp.ne.s32.totalorder %s112, %s113
      %p124 = scmp.eq.s32.totalorder %s15, 0
      %p125 = por %p123, %p124
      %p126 = scmp.ne.s32.totalorder %s112, %s113
      %p127 = scmp.eq.s32.totalorder %s16, 1
      %p128 = por %p126, %p127
      %p130 = scmp.ne.s32.totalorder %s113, %s129
      %p131 = scmp.eq.s32.totalorder %s16, 0
      %p132 = por %p130, %p131
      %p133 = scmp.le.s32.totalorder 1, %s10
      %p134 = scmp.lt.s32.totalorder %s10, 3
      %p135 = pnand %p133, %p134
      %p136 = pneg %p135
      // Predicated region
      $region9: #{forward.16} parent=5 // pred_check
        _
      $region10: #{forward.16} parent=5 // pred_check_branch
        %138 = sbr.rel (%p135) target = $region12
      $region11: #{forward.16} parent=5 // pred_region
        %s139 = ssub.s32 %s10, 1
        // Predicated region
        $region13: #{forward.16} parent=11 // pred_check
          %p140 = pneg %p31
        $region14: #{forward.16} parent=11 // pred_check_branch
          %142 = sbr.rel (%p140) target = $region16
        $region15: #{forward.16} parent=11 // pred_region
          _
        $region16: #{forward.16} parent=11 // pred_fallthru
          _
        // Predicated region
        $region17: #{forward.16} parent=11 // pred_check
          %p143 = pneg %p78
        $region18: #{forward.16} parent=11 // pred_check_branch
          %145 = sbr.rel (%p143) target = $region20
        $region19: #{forward.16} parent=11 // pred_region
          _
        $region20: #{forward.16} parent=11 // pred_fallthru
          _
        // Predicated region
        $region21: #{forward.16} parent=11 // pred_check
          %p146 = pneg %p99
        $region22: #{forward.16} parent=11 // pred_check_branch
          %148 = sbr.rel (%p146) target = $region24
        $region23: #{forward.16} parent=11 // pred_region
          _
        $region24: #{forward.16} parent=11 // pred_fallthru
          _
      $region12: #{forward.16} parent=5 // pred_fallthru
        _
      %p149 = scmp.lt.s32.totalorder %s10, 2
      // Predicated region
      $region25: #{forward.16} parent=5 // pred_check
        %p150 = pneg %p149
      $region26: #{forward.16} parent=5 // pred_check_branch
        %152 = sbr.rel (%p150) target = $region28
      $region27: #{forward.16} parent=5 // pred_region
        // Predicated region
        $region29: #{forward.16} parent=27 // pred_check
          %p153 = pneg %p51
        $region30: #{forward.16} parent=27 // pred_check_branch
          %155 = sbr.rel (%p153) target = $region32
        $region31: #{forward.16} parent=27 // pred_region
          %s156 = sand.u32 %s41, 1
          %s157 = sand.u32 %s41, 1
          %s158 = smul.addr %s157, 72
          %s159 = scalar_lea.vmem [#allocation2], %s158
          %s160 = smul.addr %s10, 4
          %s161 = scalar_lea.vmem %s1, %s160
          // Predicated region
          $region33: #{forward.16} parent=31 // pred_check
            _
          $region34: #{forward.16} parent=31 // pred_check_branch
            %163 = sbr.rel (0) target = $region36
          $region35: #{forward.16} parent=31 // pred_region
            // Predicated region
            $region37: #{forward.16} parent=35 // pred_check
              _
            $region38: #{forward.16} parent=35 // pred_check_branch
              %165 = sbr.rel target = $region40
            $region39: #{forward.16} parent=35 // pred_region
              // Predicated region
              $region52: #{forward.16} parent=39 // pred_check
                _
              $region53: #{forward.16} parent=39 // pred_check_branch
                %215 = sbr.rel (0) target = $region55
              $region54: #{forward.16} parent=39 // pred_region
                loop: start=0, step=1, limit=1
                $region56: #{forward.16} parent=54 // loop_pre_header
                  _
                $region57: #{forward.16} parent=54 // loop_header
                  %s217 = sphi 0, %s221
                  %p218 = scmp.ge.s32.totalorder %s217, 1
                  %s222 = sphi %s161, %s161
                  %s223 = sphi %s159, %s159
                $region58: #{forward.16} parent=54 // loop_header_branch
                  %220 = sbr.rel (%p218) target = $region62
                $region59: #{forward.16} parent=54 // loop_body
                  _
                $region60: #{forward.16} parent=54 // loop_footer
                  %s221 = sadd.s32 1, %s217
                $region61: #{forward.16} parent=54 // loop_footer_branch
                  %216 = sbr.rel target = $region57
                $region62: #{forward.16} parent=54 // loop_exit
                  _
                %s225 = ssub.s32 16, 1
                loop: start=0, step=1, limit=1
                $region63: #{forward.16} parent=54 // loop_pre_header
                  _
                $region64: #{forward.16} parent=54 // loop_header
                  %s227 = sphi 0, %s231
                  %p228 = scmp.ge.s32.totalorder %s227, 1
                  %s232 = sphi %s161, %s161
                  %s233 = sphi %s159, %s159
                $region65: #{forward.16} parent=54 // loop_header_branch
                  %230 = sbr.rel (%p228) target = $region69
                $region66: #{forward.16} parent=54 // loop_body
                  %v234 = vld [vmem:[%s232] sm:%s225]
                  %235 = vst [vmem:[%s233] sm:%s225] %v234
                  %v236 = vld [vmem:[%s232 + $0x8] sm:%s225]
                  %237 = vst [vmem:[%s233 + $0x4] sm:%s225] %v236
                  %v238 = vld [vmem:[%s232 + $0x10] sm:%s225]
                  %239 = vst [vmem:[%s233 + $0x8] sm:%s225] %v238
                  %v240 = vld [vmem:[%s232 + $0x18] sm:%s225]
                  %241 = vst [vmem:[%s233 + $0xc] sm:%s225] %v240
                  %v242 = vld [vmem:[%s232 + $0x20] sm:%s225]
                  %243 = vst [vmem:[%s233 + $0x10] sm:%s225] %v242
                  %v244 = vld [vmem:[%s232 + $0x28] sm:%s225]
                  %245 = vst [vmem:[%s233 + $0x14] sm:%s225] %v244
                  %v246 = vld [vmem:[%s232 + $0x30] sm:%s225]
                  %247 = vst [vmem:[%s233 + $0x18] sm:%s225] %v246
                  %v248 = vld [vmem:[%s232 + $0x38] sm:%s225]
                  %249 = vst [vmem:[%s233 + $0x1c] sm:%s225] %v248
                  %v250 = vld [vmem:[%s232 + $0x40] sm:%s225]
                  %251 = vst [vmem:[%s233 + $0x20] sm:%s225] %v250
                  %v252 = vld [vmem:[%s232 + $0x48] sm:%s225]
                  %253 = vst [vmem:[%s233 + $0x24] sm:%s225] %v252
                  %v254 = vld [vmem:[%s232 + $0x50] sm:%s225]
                  %255 = vst [vmem:[%s233 + $0x28] sm:%s225] %v254
                  %v256 = vld [vmem:[%s232 + $0x58] sm:%s225]
                  %257 = vst [vmem:[%s233 + $0x2c] sm:%s225] %v256
                  %v258 = vld [vmem:[%s232 + $0x60] sm:%s225]
                  %259 = vst [vmem:[%s233 + $0x30] sm:%s225] %v258
                  %v260 = vld [vmem:[%s232 + $0x68] sm:%s225]
                  %261 = vst [vmem:[%s233 + $0x34] sm:%s225] %v260
                  %v262 = vld [vmem:[%s232 + $0x70] sm:%s225]
                  %263 = vst [vmem:[%s233 + $0x38] sm:%s225] %v262
                  %v264 = vld [vmem:[%s232 + $0x78] sm:%s225]
                  %265 = vst [vmem:[%s233 + $0x3c] sm:%s225] %v264
                  %v266 = vld [vmem:[%s232 + $0x80] sm:%s225]
                  %267 = vst [vmem:[%s233 + $0x40] sm:%s225] %v266
                  %v268 = vld [vmem:[%s232 + $0x88] sm:%s225]
                  %269 = vst [vmem:[%s233 + $0x44] sm:%s225] %v268
                $region67: #{forward.16} parent=54 // loop_footer
                  %s231 = sadd.s32 1, %s227
                $region68: #{forward.16} parent=54 // loop_footer_branch
                  %226 = sbr.rel target = $region64
                $region69: #{forward.16} parent=54 // loop_exit
                  _
              $region55: #{forward.16} parent=39 // pred_fallthru
                _
            $region40: #{forward.16} parent=35 // pred_fallthru
              _
            // Predicated region
            $region41: #{forward.16} parent=35 // pred_check
              _
            $region42: #{forward.16} parent=35 // pred_check_branch
              %167 = sbr.rel (0) target = $region44
            $region43: #{forward.16} parent=35 // pred_region
              %s169 = ssub.s32 16, 1
              loop: start=0, step=1, limit=1
              $region45: #{forward.16} parent=43 // loop_pre_header
                _
              $region46: #{forward.16} parent=43 // loop_header
                %s171 = sphi 0, %s175
                %p172 = scmp.ge.s32.totalorder %s171, 1
                %s176 = sphi %s161, %s161
                %s177 = sphi %s159, %s159
              $region47: #{forward.16} parent=43 // loop_header_branch
                %174 = sbr.rel (%p172) target = $region51
              $region48: #{forward.16} parent=43 // loop_body
                %v178 = vld [vmem:[%s176] sm:%s169]
                %179 = vst [vmem:[%s177] sm:%s169] %v178
                %v180 = vld [vmem:[%s176 + $0x8] sm:%s169]
                %181 = vst [vmem:[%s177 + $0x4] sm:%s169] %v180
                %v182 = vld [vmem:[%s176 + $0x10] sm:%s169]
                %183 = vst [vmem:[%s177 + $0x8] sm:%s169] %v182
                %v184 = vld [vmem:[%s176 + $0x18] sm:%s169]
                %185 = vst [vmem:[%s177 + $0xc] sm:%s169] %v184
                %v186 = vld [vmem:[%s176 + $0x20] sm:%s169]
                %187 = vst [vmem:[%s177 + $0x10] sm:%s169] %v186
                %v188 = vld [vmem:[%s176 + $0x28] sm:%s169]
                %189 = vst [vmem:[%s177 + $0x14] sm:%s169] %v188
                %v190 = vld [vmem:[%s176 + $0x30] sm:%s169]
                %191 = vst [vmem:[%s177 + $0x18] sm:%s169] %v190
                %v192 = vld [vmem:[%s176 + $0x38] sm:%s169]
                %193 = vst [vmem:[%s177 + $0x1c] sm:%s169] %v192
                %v194 = vld [vmem:[%s176 + $0x40] sm:%s169]
                %195 = vst [vmem:[%s177 + $0x20] sm:%s169] %v194
                %v196 = vld [vmem:[%s176 + $0x48] sm:%s169]
                %197 = vst [vmem:[%s177 + $0x24] sm:%s169] %v196
                %v198 = vld [vmem:[%s176 + $0x50] sm:%s169]
                %199 = vst [vmem:[%s177 + $0x28] sm:%s169] %v198
                %v200 = vld [vmem:[%s176 + $0x58] sm:%s169]
                %201 = vst [vmem:[%s177 + $0x2c] sm:%s169] %v200
                %v202 = vld [vmem:[%s176 + $0x60] sm:%s169]
                %203 = vst [vmem:[%s177 + $0x30] sm:%s169] %v202
                %v204 = vld [vmem:[%s176 + $0x68] sm:%s169]
                %205 = vst [vmem:[%s177 + $0x34] sm:%s169] %v204
                %v206 = vld [vmem:[%s176 + $0x70] sm:%s169]
                %207 = vst [vmem:[%s177 + $0x38] sm:%s169] %v206
                %v208 = vld [vmem:[%s176 + $0x78] sm:%s169]
                %209 = vst [vmem:[%s177 + $0x3c] sm:%s169] %v208
                %v210 = vld [vmem:[%s176 + $0x80] sm:%s169]
                %211 = vst [vmem:[%s177 + $0x40] sm:%s169] %v210
                %v212 = vld [vmem:[%s176 + $0x88] sm:%s169]
                %213 = vst [vmem:[%s177 + $0x44] sm:%s169] %v212
              $region49: #{forward.16} parent=43 // loop_footer
                %s175 = sadd.s32 1, %s171
              $region50: #{forward.16} parent=43 // loop_footer_branch
                %170 = sbr.rel target = $region46
              $region51: #{forward.16} parent=43 // loop_exit
                _
            $region44: #{forward.16} parent=35 // pred_fallthru
              _
          $region36: #{forward.16} parent=31 // pred_fallthru
            _
          %270 = vnop
        $region32: #{forward.16} parent=27 // pred_fallthru
          _
      $region28: #{forward.16} parent=5 // pred_fallthru
        _
      %p271 = scmp.le.s32.totalorder 1, %s10
      %p272 = scmp.lt.s32.totalorder %s10, 3
      %p273 = pnand %p271, %p272
      %p274 = pneg %p273
      // Predicated region
      $region70: #{forward.16} parent=5 // pred_check
        _
      $region71: #{forward.16} parent=5 // pred_check_branch
        %276 = sbr.rel (%p273) target = $region73
      $region72: #{forward.16} parent=5 // pred_region
        %s277 = ssub.s32 %s10, 1
        %s278 = sand.u32 %s44, 1
        %s279 = sand.u32 %s44, 1
        %s280 = smul.addr %s279, 72
        %s281 = scalar_lea.vmem [#allocation2], %s280
        // Predicated region
        $region74: #{forward.16} parent=72 // pred_check
          %p282 = pneg %p57
        $region75: #{forward.16} parent=72 // pred_check_branch
          %284 = sbr.rel (%p282) target = $region77
        $region76: #{forward.16} parent=72 // pred_region
          _
        $region77: #{forward.16} parent=72 // pred_fallthru
          _
        %p285 = pneg %p31
        %p286 = pneg %p28
        %s287 = sand.u32 %s44, 1
        %s288 = sand.u32 %s44, 1
        %s289 = smul.addr %s288, 72
        %s290 = scalar_lea.vmem [#allocation2], %s289
        %p291 = pneg %p57
        %p292 = pneg %p54
        %p293 = pneg %p78
        %p294 = pneg %p75
        %p295 = pneg %p99
        %p296 = pneg %p96
        %p297 = pneg %p125
        %p298 = pneg %p122
        %s299 = sand.u32 %s112, 1
        %s300 = sand.u32 %s112, 1
        %s301 = smul.addr %s300, 16
        %s302 = scalar_lea.vmem [#allocation3], %s301
        %v304 = vld [vmem:[%s0] sm:$0xff]
        %v305 = vld [vmem:[%s0 + $0x8] sm:$0xff]
        %v306 = vld [vmem:[%s0 + $0x10] sm:$0xff]
        %v307 = vld [vmem:[%s0 + $0x18] sm:$0xff]
        %v308 = vld [vmem:[%s281] sm:$0xf]
        %v309 = vld [vmem:[%s281 + $0x4] sm:$0xf]
        %v310 = vld [vmem:[%s281 + $0x8] sm:$0xf]
        %v311 = vld [vmem:[%s281 + $0xc] sm:$0xf]
        %v312 = vld [vmem:[%s281 + $0x10] sm:$0xf]
        %v313 = vld [vmem:[%s281 + $0x14] sm:$0xf]
        %v314 = vld [vmem:[%s281 + $0x18] sm:$0xf]
        %v315 = vld [vmem:[%s281 + $0x1c] sm:$0xf]
        %v316 = vld [vmem:[%s281 + $0x20] sm:$0xf]
        %v317 = vld [vmem:[%s281 + $0x24] sm:$0xf]
        %v318 = vld [vmem:[%s281 + $0x28] sm:$0xf]
        %v319 = vld [vmem:[%s281 + $0x2c] sm:$0xf]
        %v320 = vld [vmem:[%s281 + $0x30] sm:$0xf]
        %v321 = vld [vmem:[%s281 + $0x34] sm:$0xf]
        %v322 = vld [vmem:[%s281 + $0x38] sm:$0xf]
        %v323 = vld [vmem:[%s281 + $0x3c] sm:$0xf]
        %v324 = vld [vmem:[%s281 + $0x40] sm:$0xf]
        %v325 = vld [vmem:[%s281 + $0x44] sm:$0xf]
        %v330 = vunpack.c.l.b16 %v304
        %v331 = vunpack.c.h.b16 %v304
        %v332 = vunpack.c.l.b16 %v305
        %v333 = vunpack.c.h.b16 %v305
        %v334 = vunpack.c.l.b16 %v306
        %v335 = vunpack.c.h.b16 %v306
        %v336 = vunpack.c.l.b16 %v307
        %v337 = vunpack.c.h.b16 %v307
        %v338 = vpack.c.b16 %v332, %v330
        %v339 = vpack.c.b16 %v333, %v331
        %v340 = vpack.c.b16 %v336, %v334
        %v341 = vpack.c.b16 %v337, %v335
        %v362 = vunpack.c.l.b16 %v308
        %v363 = vunpack.c.l.b16 %v309
        %v364 = vunpack.c.l.b16 %v310
        %v365 = vunpack.c.l.b16 %v311
        %v366 = vunpack.c.l.b16 %v312
        %v367 = vunpack.c.l.b16 %v313
        %v368 = vunpack.c.l.b16 %v314
        %v369 = vunpack.c.l.b16 %v315
        %v370 = vunpack.c.l.b16 %v316
        %v371 = vunpack.c.l.b16 %v317
        %v372 = vunpack.c.l.b16 %v318
        %v373 = vunpack.c.l.b16 %v319
        %v374 = vunpack.c.l.b16 %v320
        %v375 = vunpack.c.l.b16 %v321
        %v376 = vunpack.c.l.b16 %v322
        %v377 = vunpack.c.l.b16 %v323
        %v378 = vunpack.c.l.b16 %v324
        %v379 = vunpack.c.l.b16 %v325
        %v380 = vpack.c.b16 %v363, %v362
        %v381 = vpack.c.b16 %v365, %v364
        %v382 = vpack.c.b16 %v367, %v366
        %v383 = vpack.c.b16 %v369, %v368
        %v384 = vpack.c.b16 %v371, %v370
        %v385 = vpack.c.b16 %v373, %v372
        %v386 = vpack.c.b16 %v375, %v374
        %v387 = vpack.c.b16 %v377, %v376
        %v388 = vpack.c.b16 %v379, %v378
        %vm398 = vcmask 130048
        %v400 = vsel %vm398, %v339, 0
        %v403 = vsel %vm398, %v341, 0
        %405 = vmatprep.subr.bf16.mxu0 0
        %406 = vmatpush1.bf16.msra.mxu0 %v387
        %407 = vmatprep.subr.bf16.mxu0 0
        %408 = vmatpush1.bf16.msra.mxu0 %v386
        %409 = vmatprep.subr.bf16.mxu0 0
        %410 = vmatpush1.bf16.msra.mxu0 %v385
        %411 = vmatprep.subr.bf16.mxu0 0
        %412 = vmatpush1.bf16.msra.mxu0 %v384
        %413 = vmatprep.subr.bf16.mxu0 0
        %414 = vmatpush1.bf16.msra.mxu0 %v383
        %415 = vmatprep.subr.bf16.mxu0 0
        %416 = vmatpush1.bf16.msra.mxu0 %v382
        %417 = vmatprep.subr.bf16.mxu0 0
        %418 = vmatpush1.bf16.msra.mxu0 %v381
        %419 = vmatprep.subr.bf16.mxu0 0
        %420 = vmatpush1.bf16.msra.mxu0 %v380
        %421 = vmatprep.subr.bf16.mxu0 0
        %422 = vmatpush2.bf16.msra.mxu0 0
        %423 = vmatprep.subr.bf16.mxu0 0
        %424 = vmatpush2.bf16.msra.mxu0 0
        %425 = vmatprep.subr.bf16.mxu0 0
        %426 = vmatpush2.bf16.msra.mxu0 0
        %427 = vmatprep.subr.bf16.mxu0 0
        %428 = vmatpush2.bf16.msra.mxu0 0
        %429 = vmatprep.subr.bf16.mxu0 0
        %430 = vmatpush2.bf16.msra.mxu0 0
        %431 = vmatprep.subr.bf16.mxu0 0
        %432 = vmatpush2.bf16.msra.mxu0 0
        %433 = vmatprep.subr.bf16.mxu0 0
        %434 = vmatpush2.bf16.msra.mxu0 0
        %435 = vmatprep.subr.bf16.mxu0 0
        %436 = vmatpush2.bf16.msra.mxu0 %v388
        %437 = vmatprep.mubr.bf16.mxu0 %v400
        %438 = vmatmul.mubr.bf16.gmra.mxu0 %v338
        %v439 = vpop.f32.mrf.mxu0
        %v440 = vadd.f32 0.0, %v439
        %v441 = vpop.f32.mrf.mxu0
        %v442 = vpop.f32.mrf.mxu0
        %v443 = vadd.f32 0.0, %v442
        %v444 = vpop.f32.mrf.mxu0
        %445 = vmatprep.mubr.bf16.mxu0 %v403
        %446 = vmatmul.mubr.bf16.gmra.mxu0 %v340
        %v447 = vpop.f32.mrf.mxu0
        %v448 = vadd.f32 0.0, %v447
        %v449 = vpop.f32.mrf.mxu0
        %v450 = vpop.f32.mrf.mxu0
        %v451 = vadd.f32 0.0, %v450
        %v452 = vpop.f32.mrf.mxu0
        %453 = vdwg.mxu0
        %v454 = vld [vmem:[%s2] sm:$0xff]
        %v455 = vld [vmem:[%s2 + $0x8] sm:$0xff]
        %v456 = vld [vmem:[%s2 + $0x10] sm:$0xff]
        %v457 = vld [vmem:[%s2 + $0x18] sm:$0xff]
        %459 = vset.pattern.permute.xlu0 0
        %460 = vperm.xlu0 %459, %v454
        %v461 = vpop.permute.xlu0 %460
        %464 = vset.pattern.permute.xlu0 0
        %465 = vperm.xlu0 %464, %v455
        %v466 = vpop.permute.xlu0 %465
        %469 = vset.pattern.permute.xlu0 0
        %470 = vperm.xlu0 %469, %v456
        %v471 = vpop.permute.xlu0 %470
        %474 = vset.pattern.permute.xlu0 0
        %475 = vperm.xlu0 %474, %v457
        %v476 = vpop.permute.xlu0 %475
        %v478 = vmul.f32 %v440, %v461
        %v479 = vmul.f32 %v443, %v466
        %v480 = vmul.f32 %v448, %v471
        %v481 = vmul.f32 %v451, %v476
        %v482 = vld [vmem:[%s3] sm:$0xff]
        %v483 = vld [vmem:[%s3 + $0x8] sm:$0xff]
        %v484 = vld [vmem:[%s3 + $0x10] sm:$0xff]
        %v485 = vld [vmem:[%s3 + $0x18] sm:$0xff]
        %487 = vset.pattern.permute.xlu0 0
        %488 = vperm.xlu0 %487, %v482
        %v489 = vpop.permute.xlu0 %488
        %492 = vset.pattern.permute.xlu0 0
        %493 = vperm.xlu0 %492, %v483
        %v494 = vpop.permute.xlu0 %493
        %497 = vset.pattern.permute.xlu0 0
        %498 = vperm.xlu0 %497, %v484
        %v499 = vpop.permute.xlu0 %498
        %502 = vset.pattern.permute.xlu0 0
        %503 = vperm.xlu0 %502, %v485
        %v504 = vpop.permute.xlu0 %503
        %v506 = vadd.f32 %v478, %v489
        %v507 = vadd.f32 %v479, %v494
        %v508 = vadd.f32 %v480, %v499
        %v509 = vadd.f32 %v481, %v504
        %v510 = vmax.f32 %v506, 0.0
        %v511 = vmax.f32 %v507, 0.0
        %v512 = vmax.f32 %v508, 0.0
        %v513 = vmax.f32 %v509, 0.0
        %v514 = vpack.c.bf16 %v511, %v510
        %v515 = vpack.c.bf16 %v513, %v512
        %v518 = vunpack.c.l.b16 %v514
        %v519 = vunpack.c.h.b16 %v514
        %v520 = vunpack.c.l.b16 %v515
        %v521 = vunpack.c.h.b16 %v515
        %v522 = vpack.c.b16 %v518, %v518
        %v523 = vpack.c.b16 %v519, %v519
        %v524 = vpack.c.b16 %v520, %v520
        %v525 = vpack.c.b16 %v521, %v521
        %530 = vst [vmem:[%s302] sm:$0xf] %v522
        %531 = vst [vmem:[%s302 + $0x4] sm:$0xf] %v523
        %532 = vst [vmem:[%s302 + $0x8] sm:$0xf] %v524
        %533 = vst [vmem:[%s302 + $0xc] sm:$0xf] %v525
        %s534 = sand.u32 %s112, 1
        %s535 = sand.u32 %s112, 1
        %s536 = smul.addr %s535, 16
        %s537 = scalar_lea.vmem [#allocation3], %s536
        // Predicated region
        $region78: #{forward.16} parent=72 // pred_check
          %p538 = pneg %p122
        $region79: #{forward.16} parent=72 // pred_check_branch
          %540 = sbr.rel (%p538) target = $region81
        $region80: #{forward.16} parent=72 // pred_region
          %s541 = smul.addr %s15, 4
          %s542 = scalar_lea.vmem %s4, %s541
          // Predicated region
          $region82: #{forward.16} parent=80 // pred_check
            _
          $region83: #{forward.16} parent=80 // pred_check_branch
            %544 = sbr.rel (0) target = $region85
          $region84: #{forward.16} parent=80 // pred_region
            // Predicated region
            $region86: #{forward.16} parent=84 // pred_check
              _
            $region87: #{forward.16} parent=84 // pred_check_branch
              %546 = sbr.rel target = $region89
            $region88: #{forward.16} parent=84 // pred_region
              // Predicated region
              $region101: #{forward.16} parent=88 // pred_check
                _
              $region102: #{forward.16} parent=88 // pred_check_branch
                %568 = sbr.rel (0) target = $region104
              $region103: #{forward.16} parent=88 // pred_region
                loop: start=0, step=1, limit=1
                $region105: #{forward.16} parent=103 // loop_pre_header
                  _
                $region106: #{forward.16} parent=103 // loop_header
                  %s570 = sphi 0, %s574
                  %p571 = scmp.ge.s32.totalorder %s570, 1
                  %s575 = sphi %s537, %s537
                  %s576 = sphi %s542, %s542
                $region107: #{forward.16} parent=103 // loop_header_branch
                  %573 = sbr.rel (%p571) target = $region111
                $region108: #{forward.16} parent=103 // loop_body
                  _
                $region109: #{forward.16} parent=103 // loop_footer
                  %s574 = sadd.s32 1, %s570
                $region110: #{forward.16} parent=103 // loop_footer_branch
                  %569 = sbr.rel target = $region106
                $region111: #{forward.16} parent=103 // loop_exit
                  _
                %s578 = ssub.s32 16, 1
                loop: start=0, step=1, limit=1
                $region112: #{forward.16} parent=103 // loop_pre_header
                  _
                $region113: #{forward.16} parent=103 // loop_header
                  %s580 = sphi 0, %s584
                  %p581 = scmp.ge.s32.totalorder %s580, 1
                  %s585 = sphi %s537, %s537
                  %s586 = sphi %s542, %s542
                $region114: #{forward.16} parent=103 // loop_header_branch
                  %583 = sbr.rel (%p581) target = $region118
                $region115: #{forward.16} parent=103 // loop_body
                  %v587 = vld [vmem:[%s585] sm:%s578]
                  %588 = vst [vmem:[%s586] sm:%s578] %v587
                  %v589 = vld [vmem:[%s585 + $0x4] sm:%s578]
                  %590 = vst [vmem:[%s586 + $0x8] sm:%s578] %v589
                  %v591 = vld [vmem:[%s585 + $0x8] sm:%s578]
                  %592 = vst [vmem:[%s586 + $0x10] sm:%s578] %v591
                  %v593 = vld [vmem:[%s585 + $0xc] sm:%s578]
                  %594 = vst [vmem:[%s586 + $0x18] sm:%s578] %v593
                $region116: #{forward.16} parent=103 // loop_footer
                  %s584 = sadd.s32 1, %s580
                $region117: #{forward.16} parent=103 // loop_footer_branch
                  %579 = sbr.rel target = $region113
                $region118: #{forward.16} parent=103 // loop_exit
                  _
              $region104: #{forward.16} parent=88 // pred_fallthru
                _
            $region89: #{forward.16} parent=84 // pred_fallthru
              _
            // Predicated region
            $region90: #{forward.16} parent=84 // pred_check
              _
            $region91: #{forward.16} parent=84 // pred_check_branch
              %548 = sbr.rel (0) target = $region93
            $region92: #{forward.16} parent=84 // pred_region
              %s550 = ssub.s32 16, 1
              loop: start=0, step=1, limit=1
              $region94: #{forward.16} parent=92 // loop_pre_header
                _
              $region95: #{forward.16} parent=92 // loop_header
                %s552 = sphi 0, %s556
                %p553 = scmp.ge.s32.totalorder %s552, 1
                %s557 = sphi %s537, %s537
                %s558 = sphi %s542, %s542
              $region96: #{forward.16} parent=92 // loop_header_branch
                %555 = sbr.rel (%p553) target = $region100
              $region97: #{forward.16} parent=92 // loop_body
                %v559 = vld [vmem:[%s557] sm:%s550]
                %560 = vst [vmem:[%s558] sm:%s550] %v559
                %v561 = vld [vmem:[%s557 + $0x4] sm:%s550]
                %562 = vst [vmem:[%s558 + $0x8] sm:%s550] %v561
                %v563 = vld [vmem:[%s557 + $0x8] sm:%s550]
                %564 = vst [vmem:[%s558 + $0x10] sm:%s550] %v563
                %v565 = vld [vmem:[%s557 + $0xc] sm:%s550]
                %566 = vst [vmem:[%s558 + $0x18] sm:%s550] %v565
              $region98: #{forward.16} parent=92 // loop_footer
                %s556 = sadd.s32 1, %s552
              $region99: #{forward.16} parent=92 // loop_footer_branch
                %551 = sbr.rel target = $region95
              $region100: #{forward.16} parent=92 // loop_exit
                _
            $region93: #{forward.16} parent=84 // pred_fallthru
              _
          $region85: #{forward.16} parent=80 // pred_fallthru
            _
          %595 = vnop
        $region81: #{forward.16} parent=72 // pred_fallthru
          _
      $region73: #{forward.16} parent=5 // pred_fallthru
        _
      %p596 = scmp.le.s32.totalorder 2, %s10
      // Predicated region
      $region119: #{forward.16} parent=5 // pred_check
        %p597 = pneg %p596
      $region120: #{forward.16} parent=5 // pred_check_branch
        %599 = sbr.rel (%p597) target = $region122
      $region121: #{forward.16} parent=5 // pred_region
        %s600 = ssub.s32 %s10, 2
        // Predicated region
        $region123: #{forward.16} parent=121 // pred_check
          %p601 = pneg %p128
        $region124: #{forward.16} parent=121 // pred_check_branch
          %603 = sbr.rel (%p601) target = $region126
        $region125: #{forward.16} parent=121 // pred_region
          %s604 = sand.u32 %s113, 1
          %s605 = sand.u32 %s113, 1
          %s606 = smul.addr %s605, 16
          %s607 = scalar_lea.vmem [#allocation3], %s606
        $region126: #{forward.16} parent=121 // pred_fallthru
          _
      $region122: #{forward.16} parent=5 // pred_fallthru
        _
    $region6: #{forward.16} parent=1 // loop_footer
      %s14 = sadd.s32 1, %s10
    $region7: #{forward.16} parent=1 // loop_footer_branch
      %9 = sbr.rel target = $region3
    $region8: #{forward.16} parent=1 // loop_exit
      _

// kernel: forward.17
$region0: #{forward.17}
  #allocation0 [shape = 'u32[]', space=smem, size = 0x4, offset = 0x4, fixed_abs, tag = 'smem constant byte address 0x4 - core index']
  #allocation1 [shape = 'u32[144,128]{1,0:T(1,128)}', space=vmem, size = 0x12000, scoped, tag = 'internal scratch']
  %s0 = inlined_call_operand.vmem [shape: bf16[32,288], index: 0, kind: input, shape index: {}]
  %s1 = inlined_call_operand.vmem [shape: bf16[288,128], index: 1, kind: input, shape index: {}]
  %s2 = inlined_call_operand.vmem [shape: f32[32,1], index: 2, kind: input, shape index: {}]
  %s3 = inlined_call_operand.vmem [shape: f32[32,1], index: 3, kind: input, shape index: {}]
  %s4 = inlined_call_operand.vmem [shape: bf16[32,128], index: 4, kind: output, shape index: {}]
  %s5 = sld [smem:[#allocation0]]
  $region26: #{forward.17} parent=0
    _
  %s7 = ssub.s32 1, %s5
  %s8 = scalar_select 0, %s7, %s5
  // Predicated region
  $region2: #{forward.17} parent=0 // pred_check
    _
  $region3: #{forward.17} parent=0 // pred_check_branch
    %10 = sbr.rel (0) target = $region5
  $region4: #{forward.17} parent=0 // pred_region
    _
  $region5: #{forward.17} parent=0 // pred_fallthru
    _
  // Predicated region
  $region6: #{forward.17} parent=0 // pred_check
    _
  $region7: #{forward.17} parent=0 // pred_check_branch
    %12 = sbr.rel (0) target = $region9
  $region8: #{forward.17} parent=0 // pred_region
    _
  $region9: #{forward.17} parent=0 // pred_fallthru
    _
  // Predicated region
  $region10: #{forward.17} parent=0 // pred_check
    _
  $region11: #{forward.17} parent=0 // pred_check_branch
    %14 = sbr.rel (0) target = $region13
  $region12: #{forward.17} parent=0 // pred_region
    _
  $region13: #{forward.17} parent=0 // pred_fallthru
    _
  // Predicated region
  $region14: #{forward.17} parent=0 // pred_check
    _
  $region15: #{forward.17} parent=0 // pred_check_branch
    %16 = sbr.rel (0) target = $region17
  $region16: #{forward.17} parent=0 // pred_region
    _
  $region17: #{forward.17} parent=0 // pred_fallthru
    _
  %v18 = vld [vmem:[%s0] sm:$0xff]
  %v19 = vld [vmem:[%s0 + $0x8] sm:$0xf]
  %v20 = vld [vmem:[%s0 + $0xc] sm:$0xff]
  %v21 = vld [vmem:[%s0 + $0x14] sm:$0xf]
  %v22 = vld [vmem:[%s0 + $0x18] sm:$0xff]
  %v23 = vld [vmem:[%s0 + $0x20] sm:$0xf]
  %v24 = vld [vmem:[%s0 + $0x24] sm:$0xff]
  %v25 = vld [vmem:[%s0 + $0x2c] sm:$0xf]
  %v26 = vld [vmem:[%s1] sm:$0xf]
  %v27 = vld [vmem:[%s1 + $0x4] sm:$0xf]
  %v28 = vld [vmem:[%s1 + $0x8] sm:$0xf]
  %v29 = vld [vmem:[%s1 + $0xc] sm:$0xf]
  %v30 = vld [vmem:[%s1 + $0x10] sm:$0xf]
  %v31 = vld [vmem:[%s1 + $0x14] sm:$0xf]
  %v32 = vld [vmem:[%s1 + $0x18] sm:$0xf]
  %v33 = vld [vmem:[%s1 + $0x1c] sm:$0xf]
  %v34 = vld [vmem:[%s1 + $0x20] sm:$0xf]
  %v35 = vld [vmem:[%s1 + $0x24] sm:$0xf]
  %v36 = vld [vmem:[%s1 + $0x28] sm:$0xf]
  %v37 = vld [vmem:[%s1 + $0x2c] sm:$0xf]
  %v38 = vld [vmem:[%s1 + $0x30] sm:$0xf]
  %v39 = vld [vmem:[%s1 + $0x34] sm:$0xf]
  %v40 = vld [vmem:[%s1 + $0x38] sm:$0xf]
  %v41 = vld [vmem:[%s1 + $0x3c] sm:$0xf]
  %v42 = vld [vmem:[%s1 + $0x40] sm:$0xf]
  %v43 = vld [vmem:[%s1 + $0x44] sm:$0xf]
  %v44 = vld [vmem:[%s1 + $0x48] sm:$0xf]
  %v45 = vld [vmem:[%s1 + $0x4c] sm:$0xf]
  %v46 = vld [vmem:[%s1 + $0x50] sm:$0xf]
  %v47 = vld [vmem:[%s1 + $0x54] sm:$0xf]
  %v48 = vld [vmem:[%s1 + $0x58] sm:$0xf]
  %v49 = vld [vmem:[%s1 + $0x5c] sm:$0xf]
  %v50 = vld [vmem:[%s1 + $0x60] sm:$0xf]
  %v51 = vld [vmem:[%s1 + $0x64] sm:$0xf]
  %v52 = vld [vmem:[%s1 + $0x68] sm:$0xf]
  %v53 = vld [vmem:[%s1 + $0x6c] sm:$0xf]
  %v54 = vld [vmem:[%s1 + $0x70] sm:$0xf]
  %v55 = vld [vmem:[%s1 + $0x74] sm:$0xf]
  %v56 = vld [vmem:[%s1 + $0x78] sm:$0xf]
  %v57 = vld [vmem:[%s1 + $0x7c] sm:$0xf]
  %v58 = vld [vmem:[%s1 + $0x80] sm:$0xf]
  %v59 = vld [vmem:[%s1 + $0x84] sm:$0xf]
  %v60 = vld [vmem:[%s1 + $0x88] sm:$0xf]
  %v61 = vld [vmem:[%s1 + $0x8c] sm:$0xf]
  %v70 = vunpack.c.l.b16 %v18
  %v71 = vunpack.c.h.b16 %v18
  %v72 = vunpack.c.l.b16 %v19
  %v73 = vunpack.c.l.b16 %v20
  %v74 = vunpack.c.h.b16 %v20
  %v75 = vunpack.c.l.b16 %v21
  %v76 = vunpack.c.l.b16 %v22
  %v77 = vunpack.c.h.b16 %v22
  %v78 = vunpack.c.l.b16 %v23
  %v79 = vunpack.c.l.b16 %v24
  %v80 = vunpack.c.h.b16 %v24
  %v81 = vunpack.c.l.b16 %v25
  %v82 = vpack.c.b16 %v73, %v70
  %v83 = vpack.c.b16 %v74, %v71
  %v84 = vpack.c.b16 %v75, %v72
  %v85 = vpack.c.b16 %v79, %v76
  %v86 = vpack.c.b16 %v80, %v77
  %v87 = vpack.c.b16 %v81, %v78
  %v128 = vunpack.c.l.b16 %v26
  %v129 = vunpack.c.l.b16 %v27
  %v130 = vunpack.c.l.b16 %v28
  %v131 = vunpack.c.l.b16 %v29
  %v132 = vunpack.c.l.b16 %v30
  %v133 = vunpack.c.l.b16 %v31
  %v134 = vunpack.c.l.b16 %v32
  %v135 = vunpack.c.l.b16 %v33
  %v136 = vunpack.c.l.b16 %v34
  %v137 = vunpack.c.l.b16 %v35
  %v138 = vunpack.c.l.b16 %v36
  %v139 = vunpack.c.l.b16 %v37
  %v140 = vunpack.c.l.b16 %v38
  %v141 = vunpack.c.l.b16 %v39
  %v142 = vunpack.c.l.b16 %v40
  %v143 = vunpack.c.l.b16 %v41
  %v144 = vunpack.c.l.b16 %v42
  %v145 = vunpack.c.l.b16 %v43
  %v146 = vunpack.c.l.b16 %v44
  %v147 = vunpack.c.l.b16 %v45
  %v148 = vunpack.c.l.b16 %v46
  %v149 = vunpack.c.l.b16 %v47
  %v150 = vunpack.c.l.b16 %v48
  %v151 = vunpack.c.l.b16 %v49
  %v152 = vunpack.c.l.b16 %v50
  %v153 = vunpack.c.l.b16 %v51
  %v154 = vunpack.c.l.b16 %v52
  %v155 = vunpack.c.l.b16 %v53
  %v156 = vunpack.c.l.b16 %v54
  %v157 = vunpack.c.l.b16 %v55
  %v158 = vunpack.c.l.b16 %v56
  %v159 = vunpack.c.l.b16 %v57
  %v160 = vunpack.c.l.b16 %v58
  %v161 = vunpack.c.l.b16 %v59
  %v162 = vunpack.c.l.b16 %v60
  %v163 = vunpack.c.l.b16 %v61
  %v164 = vpack.c.b16 %v129, %v128
  %v165 = vpack.c.b16 %v131, %v130
  %v166 = vpack.c.b16 %v133, %v132
  %v167 = vpack.c.b16 %v135, %v134
  %v168 = vpack.c.b16 %v137, %v136
  %v169 = vpack.c.b16 %v139, %v138
  %v170 = vpack.c.b16 %v141, %v140
  %v171 = vpack.c.b16 %v143, %v142
  %v172 = vpack.c.b16 %v145, %v144
  %v173 = vpack.c.b16 %v147, %v146
  %v174 = vpack.c.b16 %v149, %v148
  %v175 = vpack.c.b16 %v151, %v150
  %v176 = vpack.c.b16 %v153, %v152
  %v177 = vpack.c.b16 %v155, %v154
  %v178 = vpack.c.b16 %v157, %v156
  %v179 = vpack.c.b16 %v159, %v158
  %v180 = vpack.c.b16 %v161, %v160
  %v181 = vpack.c.b16 %v163, %v162
  %vm200 = vcmask 261120
  %v202 = vsel %vm200, %v84, 0
  %v205 = vsel %vm200, %v87, 0
  %207 = vmatprep.subr.bf16.mxu0 0
  %208 = vmatpush1.bf16.msra.mxu0 %v171
  %209 = vmatprep.subr.bf16.mxu0 0
  %210 = vmatpush1.bf16.msra.mxu0 %v170
  %211 = vmatprep.subr.bf16.mxu0 0
  %212 = vmatpush1.bf16.msra.mxu0 %v169
  %213 = vmatprep.subr.bf16.mxu0 0
  %214 = vmatpush1.bf16.msra.mxu0 %v168
  %215 = vmatprep.subr.bf16.mxu0 0
  %216 = vmatpush1.bf16.msra.mxu0 %v167
  %217 = vmatprep.subr.bf16.mxu0 0
  %218 = vmatpush1.bf16.msra.mxu0 %v166
  %219 = vmatprep.subr.bf16.mxu0 0
  %220 = vmatpush1.bf16.msra.mxu0 %v165
  %221 = vmatprep.subr.bf16.mxu0 0
  %222 = vmatpush1.bf16.msra.mxu0 %v164
  %223 = vmatprep.subr.bf16.mxu0 0
  %224 = vmatpush2.bf16.msra.mxu0 %v179
  %225 = vmatprep.subr.bf16.mxu0 0
  %226 = vmatpush2.bf16.msra.mxu0 %v178
  %227 = vmatprep.subr.bf16.mxu0 0
  %228 = vmatpush2.bf16.msra.mxu0 %v177
  %229 = vmatprep.subr.bf16.mxu0 0
  %230 = vmatpush2.bf16.msra.mxu0 %v176
  %231 = vmatprep.subr.bf16.mxu0 0
  %232 = vmatpush2.bf16.msra.mxu0 %v175
  %233 = vmatprep.subr.bf16.mxu0 0
  %234 = vmatpush2.bf16.msra.mxu0 %v174
  %235 = vmatprep.subr.bf16.mxu0 0
  %236 = vmatpush2.bf16.msra.mxu0 %v173
  %237 = vmatprep.subr.bf16.mxu0 0
  %238 = vmatpush2.bf16.msra.mxu0 %v172
  %239 = vmatprep.mubr.bf16.mxu0 %v83
  %240 = vmatmul.mubr.bf16.gmra.mxu0 %v82
  %v241 = vpop.f32.mrf.mxu0
  %v242 = vadd.f32 0.0, %v241
  %v243 = vpop.f32.mrf.mxu0
  %v244 = vpop.f32.mrf.mxu0
  %v245 = vadd.f32 0.0, %v244
  %v246 = vpop.f32.mrf.mxu0
  %247 = vmatprep.mubr.bf16.mxu0 %v86
  %248 = vmatmul.mubr.bf16.gmra.mxu0 %v85
  %v249 = vpop.f32.mrf.mxu0
  %v250 = vadd.f32 0.0, %v249
  %v251 = vpop.f32.mrf.mxu0
  %v252 = vpop.f32.mrf.mxu0
  %v253 = vadd.f32 0.0, %v252
  %v254 = vpop.f32.mrf.mxu0
  %255 = vdwg.mxu0
  %256 = vmatprep.subr.bf16.mxu0 0
  %257 = vmatpush1.bf16.msra.mxu0 0
  %258 = vmatprep.subr.bf16.mxu0 0
  %259 = vmatpush1.bf16.msra.mxu0 0
  %260 = vmatprep.subr.bf16.mxu0 0
  %261 = vmatpush1.bf16.msra.mxu0 0
  %262 = vmatprep.subr.bf16.mxu0 0
  %263 = vmatpush1.bf16.msra.mxu0 0
  %264 = vmatprep.subr.bf16.mxu0 0
  %265 = vmatpush1.bf16.msra.mxu0 0
  %266 = vmatprep.subr.bf16.mxu0 0
  %267 = vmatpush1.bf16.msra.mxu0 0
  %268 = vmatprep.subr.bf16.mxu0 0
  %269 = vmatpush1.bf16.msra.mxu0 %v181
  %270 = vmatprep.subr.bf16.mxu0 0
  %271 = vmatpush1.bf16.msra.mxu0 %v180
  %272 = vmatprep.subr.bf16.mxu0 0
  %273 = vmatpush2.bf16.msra.mxu0 0
  %274 = vmatprep.subr.bf16.mxu0 0
  %275 = vmatpush2.bf16.msra.mxu0 0
  %276 = vmatprep.subr.bf16.mxu0 0
  %277 = vmatpush2.bf16.msra.mxu0 0
  %278 = vmatprep.subr.bf16.mxu0 0
  %279 = vmatpush2.bf16.msra.mxu0 0
  %280 = vmatprep.subr.bf16.mxu0 0
  %281 = vmatpush2.bf16.msra.mxu0 0
  %282 = vmatprep.subr.bf16.mxu0 0
  %283 = vmatpush2.bf16.msra.mxu0 0
  %284 = vmatprep.subr.bf16.mxu0 0
  %285 = vmatpush2.bf16.msra.mxu0 0
  %286 = vmatprep.subr.bf16.mxu0 0
  %287 = vmatpush2.bf16.msra.mxu0 0
  %288 = vmatprep.mubr.bf16.mxu0 0
  %289 = vmatmul.mubr.bf16.gmra.mxu0 %v202
  %v290 = vpop.f32.mrf.mxu0
  %v291 = vadd.f32 %v242, %v290
  %v292 = vpop.f32.mrf.mxu0
  %v293 = vpop.f32.mrf.mxu0
  %v294 = vadd.f32 %v245, %v293
  %v295 = vpop.f32.mrf.mxu0
  %296 = vmatprep.mubr.bf16.mxu0 0
  %297 = vmatmul.mubr.bf16.gmra.mxu0 %v205
  %v298 = vpop.f32.mrf.mxu0
  %v299 = vadd.f32 %v250, %v298
  %v300 = vpop.f32.mrf.mxu0
  %v301 = vpop.f32.mrf.mxu0
  %v302 = vadd.f32 %v253, %v301
  %v303 = vpop.f32.mrf.mxu0
  %304 = vdwg.mxu0
  %v305 = vld [vmem:[%s2] sm:$0xff]
  %v306 = vld [vmem:[%s2 + $0x8] sm:$0xff]
  %v307 = vld [vmem:[%s2 + $0x10] sm:$0xff]
  %v308 = vld [vmem:[%s2 + $0x18] sm:$0xff]
  %310 = vset.pattern.permute.xlu0 0
  %311 = vperm.xlu0 %310, %v305
  %v312 = vpop.permute.xlu0 %311
  %315 = vset.pattern.permute.xlu0 0
  %316 = vperm.xlu0 %315, %v306
  %v317 = vpop.permute.xlu0 %316
  %320 = vset.pattern.permute.xlu0 0
  %321 = vperm.xlu0 %320, %v307
  %v322 = vpop.permute.xlu0 %321
  %325 = vset.pattern.permute.xlu0 0
  %326 = vperm.xlu0 %325, %v308
  %v327 = vpop.permute.xlu0 %326
  %v329 = vmul.f32 %v291, %v312
  %v330 = vmul.f32 %v294, %v317
  %v331 = vmul.f32 %v299, %v322
  %v332 = vmul.f32 %v302, %v327
  %v333 = vld [vmem:[%s3] sm:$0xff]
  %v334 = vld [vmem:[%s3 + $0x8] sm:$0xff]
  %v335 = vld [vmem:[%s3 + $0x10] sm:$0xff]
  %v336 = vld [vmem:[%s3 + $0x18] sm:$0xff]
  %338 = vset.pattern.permute.xlu0 0
  %339 = vperm.xlu0 %338, %v333
  %v340 = vpop.permute.xlu0 %339
  %343 = vset.pattern.permute.xlu0 0
  %344 = vperm.xlu0 %343, %v334
  %v345 = vpop.permute.xlu0 %344
  %348 = vset.pattern.permute.xlu0 0
  %349 = vperm.xlu0 %348, %v335
  %v350 = vpop.permute.xlu0 %349
  %353 = vset.pattern.permute.xlu0 0
  %354 = vperm.xlu0 %353, %v336
  %v355 = vpop.permute.xlu0 %354
  %v357 = vadd.f32 %v329, %v340
  %v358 = vadd.f32 %v330, %v345
  %v359 = vadd.f32 %v331, %v350
  %v360 = vadd.f32 %v332, %v355
  %v361 = vmax.f32 %v357, 0.0
  %v362 = vmax.f32 %v358, 0.0
  %v363 = vmax.f32 %v359, 0.0
  %v364 = vmax.f32 %v360, 0.0
  %v365 = vpack.c.bf16 %v362, %v361
  %v366 = vpack.c.bf16 %v364, %v363
  %v369 = vunpack.c.l.b16 %v365
  %v370 = vunpack.c.h.b16 %v365
  %v371 = vunpack.c.l.b16 %v366
  %v372 = vunpack.c.h.b16 %v366
  %v373 = vpack.c.b16 %v369, %v369
  %v374 = vpack.c.b16 %v370, %v370
  %v375 = vpack.c.b16 %v371, %v371
  %v376 = vpack.c.b16 %v372, %v372
  %381 = vst [vmem:[%s4] sm:$0xf] %v373
  %382 = vst [vmem:[%s4 + $0x4] sm:$0xf] %v374
  %383 = vst [vmem:[%s4 + $0x8] sm:$0xf] %v375
  %384 = vst [vmem:[%s4 + $0xc] sm:$0xf] %v376
  // Predicated region
  $region18: #{forward.17} parent=0 // pred_check
    _
  $region19: #{forward.17} parent=0 // pred_check_branch
    %386 = sbr.rel (0) target = $region21
  $region20: #{forward.17} parent=0 // pred_region
    _
  $region21: #{forward.17} parent=0 // pred_fallthru
    _
  // Predicated region
  $region22: #{forward.17} parent=0 // pred_check
    _
  $region23: #{forward.17} parent=0 // pred_check_branch
    %388 = sbr.rel (0) target = $region25
  $region24: #{forward.17} parent=0 // pred_region
    _
  $region25: #{forward.17} parent=0 // pred_fallthru
    _

// kernel: forward.18
$region0: #{forward.18}
  #allocation0 [shape = 'u32[]', space=smem, size = 0x4, offset = 0x4, fixed_abs, tag = 'smem constant byte address 0x4 - core index']
  #allocation1 [shape = 'u32[144,128]{1,0:T(1,128)}', space=vmem, size = 0x12000, scoped, tag = 'internal scratch']
  %s0 = inlined_call_operand.vmem [shape: bf16[32,288], index: 0, kind: input, shape index: {}]
  %s1 = inlined_call_operand.vmem [shape: bf16[288,128], index: 1, kind: input, shape index: {}]
  %s2 = inlined_call_operand.vmem [shape: f32[32,1], index: 2, kind: input, shape index: {}]
  %s3 = inlined_call_operand.vmem [shape: f32[32,1], index: 3, kind: input, shape index: {}]
  %s4 = inlined_call_operand.vmem [shape: bf16[32,128], index: 4, kind: input, shape index: {}]
  %s5 = inlined_call_operand.vmem [shape: bf16[32,128], index: 5, kind: output, shape index: {}]
  %s6 = sld [smem:[#allocation0]]
  $region30: #{forward.18} parent=0
    _
  %s8 = ssub.s32 1, %s6
  %s9 = scalar_select 0, %s8, %s6
  // Predicated region
  $region2: #{forward.18} parent=0 // pred_check
    _
  $region3: #{forward.18} parent=0 // pred_check_branch
    %11 = sbr.rel (0) target = $region5
  $region4: #{forward.18} parent=0 // pred_region
    _
  $region5: #{forward.18} parent=0 // pred_fallthru
    _
  // Predicated region
  $region6: #{forward.18} parent=0 // pred_check
    _
  $region7: #{forward.18} parent=0 // pred_check_branch
    %13 = sbr.rel (0) target = $region9
  $region8: #{forward.18} parent=0 // pred_region
    _
  $region9: #{forward.18} parent=0 // pred_fallthru
    _
  // Predicated region
  $region10: #{forward.18} parent=0 // pred_check
    _
  $region11: #{forward.18} parent=0 // pred_check_branch
    %15 = sbr.rel (0) target = $region13
  $region12: #{forward.18} parent=0 // pred_region
    _
  $region13: #{forward.18} parent=0 // pred_fallthru
    _
  // Predicated region
  $region14: #{forward.18} parent=0 // pred_check
    _
  $region15: #{forward.18} parent=0 // pred_check_branch
    %17 = sbr.rel (0) target = $region17
  $region16: #{forward.18} parent=0 // pred_region
    _
  $region17: #{forward.18} parent=0 // pred_fallthru
    _
  // Predicated region
  $region18: #{forward.18} parent=0 // pred_check
    _
  $region19: #{forward.18} parent=0 // pred_check_branch
    %19 = sbr.rel (0) target = $region21
  $region20: #{forward.18} parent=0 // pred_region
    _
  $region21: #{forward.18} parent=0 // pred_fallthru
    _
  %v21 = vld [vmem:[%s0] sm:$0xff]
  %v22 = vld [vmem:[%s0 + $0x8] sm:$0xf]
  %v23 = vld [vmem:[%s0 + $0xc] sm:$0xff]
  %v24 = vld [vmem:[%s0 + $0x14] sm:$0xf]
  %v25 = vld [vmem:[%s0 + $0x18] sm:$0xff]
  %v26 = vld [vmem:[%s0 + $0x20] sm:$0xf]
  %v27 = vld [vmem:[%s0 + $0x24] sm:$0xff]
  %v28 = vld [vmem:[%s0 + $0x2c] sm:$0xf]
  %v29 = vld [vmem:[%s1] sm:$0xf]
  %v30 = vld [vmem:[%s1 + $0x4] sm:$0xf]
  %v31 = vld [vmem:[%s1 + $0x8] sm:$0xf]
  %v32 = vld [vmem:[%s1 + $0xc] sm:$0xf]
  %v33 = vld [vmem:[%s1 + $0x10] sm:$0xf]
  %v34 = vld [vmem:[%s1 + $0x14] sm:$0xf]
  %v35 = vld [vmem:[%s1 + $0x18] sm:$0xf]
  %v36 = vld [vmem:[%s1 + $0x1c] sm:$0xf]
  %v37 = vld [vmem:[%s1 + $0x20] sm:$0xf]
  %v38 = vld [vmem:[%s1 + $0x24] sm:$0xf]
  %v39 = vld [vmem:[%s1 + $0x28] sm:$0xf]
  %v40 = vld [vmem:[%s1 + $0x2c] sm:$0xf]
  %v41 = vld [vmem:[%s1 + $0x30] sm:$0xf]
  %v42 = vld [vmem:[%s1 + $0x34] sm:$0xf]
  %v43 = vld [vmem:[%s1 + $0x38] sm:$0xf]
  %v44 = vld [vmem:[%s1 + $0x3c] sm:$0xf]
  %v45 = vld [vmem:[%s1 + $0x40] sm:$0xf]
  %v46 = vld [vmem:[%s1 + $0x44] sm:$0xf]
  %v47 = vld [vmem:[%s1 + $0x48] sm:$0xf]
  %v48 = vld [vmem:[%s1 + $0x4c] sm:$0xf]
  %v49 = vld [vmem:[%s1 + $0x50] sm:$0xf]
  %v50 = vld [vmem:[%s1 + $0x54] sm:$0xf]
  %v51 = vld [vmem:[%s1 + $0x58] sm:$0xf]
  %v52 = vld [vmem:[%s1 + $0x5c] sm:$0xf]
  %v53 = vld [vmem:[%s1 + $0x60] sm:$0xf]
  %v54 = vld [vmem:[%s1 + $0x64] sm:$0xf]
  %v55 = vld [vmem:[%s1 + $0x68] sm:$0xf]
  %v56 = vld [vmem:[%s1 + $0x6c] sm:$0xf]
  %v57 = vld [vmem:[%s1 + $0x70] sm:$0xf]
  %v58 = vld [vmem:[%s1 + $0x74] sm:$0xf]
  %v59 = vld [vmem:[%s1 + $0x78] sm:$0xf]
  %v60 = vld [vmem:[%s1 + $0x7c] sm:$0xf]
  %v61 = vld [vmem:[%s1 + $0x80] sm:$0xf]
  %v62 = vld [vmem:[%s1 + $0x84] sm:$0xf]
  %v63 = vld [vmem:[%s1 + $0x88] sm:$0xf]
  %v64 = vld [vmem:[%s1 + $0x8c] sm:$0xf]
  %v73 = vunpack.c.l.b16 %v21
  %v74 = vunpack.c.h.b16 %v21
  %v75 = vunpack.c.l.b16 %v22
  %v76 = vunpack.c.l.b16 %v23
  %v77 = vunpack.c.h.b16 %v23
  %v78 = vunpack.c.l.b16 %v24
  %v79 = vunpack.c.l.b16 %v25
  %v80 = vunpack.c.h.b16 %v25
  %v81 = vunpack.c.l.b16 %v26
  %v82 = vunpack.c.l.b16 %v27
  %v83 = vunpack.c.h.b16 %v27
  %v84 = vunpack.c.l.b16 %v28
  %v85 = vpack.c.b16 %v76, %v73
  %v86 = vpack.c.b16 %v77, %v74
  %v87 = vpack.c.b16 %v78, %v75
  %v88 = vpack.c.b16 %v82, %v79
  %v89 = vpack.c.b16 %v83, %v80
  %v90 = vpack.c.b16 %v84, %v81
  %v131 = vunpack.c.l.b16 %v29
  %v132 = vunpack.c.l.b16 %v30
  %v133 = vunpack.c.l.b16 %v31
  %v134 = vunpack.c.l.b16 %v32
  %v135 = vunpack.c.l.b16 %v33
  %v136 = vunpack.c.l.b16 %v34
  %v137 = vunpack.c.l.b16 %v35
  %v138 = vunpack.c.l.b16 %v36
  %v139 = vunpack.c.l.b16 %v37
  %v140 = vunpack.c.l.b16 %v38
  %v141 = vunpack.c.l.b16 %v39
  %v142 = vunpack.c.l.b16 %v40
  %v143 = vunpack.c.l.b16 %v41
  %v144 = vunpack.c.l.b16 %v42
  %v145 = vunpack.c.l.b16 %v43
  %v146 = vunpack.c.l.b16 %v44
  %v147 = vunpack.c.l.b16 %v45
  %v148 = vunpack.c.l.b16 %v46
  %v149 = vunpack.c.l.b16 %v47
  %v150 = vunpack.c.l.b16 %v48
  %v151 = vunpack.c.l.b16 %v49
  %v152 = vunpack.c.l.b16 %v50
  %v153 = vunpack.c.l.b16 %v51
  %v154 = vunpack.c.l.b16 %v52
  %v155 = vunpack.c.l.b16 %v53
  %v156 = vunpack.c.l.b16 %v54
  %v157 = vunpack.c.l.b16 %v55
  %v158 = vunpack.c.l.b16 %v56
  %v159 = vunpack.c.l.b16 %v57
  %v160 = vunpack.c.l.b16 %v58
  %v161 = vunpack.c.l.b16 %v59
  %v162 = vunpack.c.l.b16 %v60
  %v163 = vunpack.c.l.b16 %v61
  %v164 = vunpack.c.l.b16 %v62
  %v165 = vunpack.c.l.b16 %v63
  %v166 = vunpack.c.l.b16 %v64
  %v167 = vpack.c.b16 %v132, %v131
  %v168 = vpack.c.b16 %v134, %v133
  %v169 = vpack.c.b16 %v136, %v135
  %v170 = vpack.c.b16 %v138, %v137
  %v171 = vpack.c.b16 %v140, %v139
  %v172 = vpack.c.b16 %v142, %v141
  %v173 = vpack.c.b16 %v144, %v143
  %v174 = vpack.c.b16 %v146, %v145
  %v175 = vpack.c.b16 %v148, %v147
  %v176 = vpack.c.b16 %v150, %v149
  %v177 = vpack.c.b16 %v152, %v151
  %v178 = vpack.c.b16 %v154, %v153
  %v179 = vpack.c.b16 %v156, %v155
  %v180 = vpack.c.b16 %v158, %v157
  %v181 = vpack.c.b16 %v160, %v159
  %v182 = vpack.c.b16 %v162, %v161
  %v183 = vpack.c.b16 %v164, %v163
  %v184 = vpack.c.b16 %v166, %v165
  %vm203 = vcmask 261120
  %v205 = vsel %vm203, %v87, 0
  %v208 = vsel %vm203, %v90, 0
  %210 = vmatprep.subr.bf16.mxu0 0
  %211 = vmatpush1.bf16.msra.mxu0 %v174
  %212 = vmatprep.subr.bf16.mxu0 0
  %213 = vmatpush1.bf16.msra.mxu0 %v173
  %214 = vmatprep.subr.bf16.mxu0 0
  %215 = vmatpush1.bf16.msra.mxu0 %v172
  %216 = vmatprep.subr.bf16.mxu0 0
  %217 = vmatpush1.bf16.msra.mxu0 %v171
  %218 = vmatprep.subr.bf16.mxu0 0
  %219 = vmatpush1.bf16.msra.mxu0 %v170
  %220 = vmatprep.subr.bf16.mxu0 0
  %221 = vmatpush1.bf16.msra.mxu0 %v169
  %222 = vmatprep.subr.bf16.mxu0 0
  %223 = vmatpush1.bf16.msra.mxu0 %v168
  %224 = vmatprep.subr.bf16.mxu0 0
  %225 = vmatpush1.bf16.msra.mxu0 %v167
  %226 = vmatprep.subr.bf16.mxu0 0
  %227 = vmatpush2.bf16.msra.mxu0 %v182
  %228 = vmatprep.subr.bf16.mxu0 0
  %229 = vmatpush2.bf16.msra.mxu0 %v181
  %230 = vmatprep.subr.bf16.mxu0 0
  %231 = vmatpush2.bf16.msra.mxu0 %v180
  %232 = vmatprep.subr.bf16.mxu0 0
  %233 = vmatpush2.bf16.msra.mxu0 %v179
  %234 = vmatprep.subr.bf16.mxu0 0
  %235 = vmatpush2.bf16.msra.mxu0 %v178
  %236 = vmatprep.subr.bf16.mxu0 0
  %237 = vmatpush2.bf16.msra.mxu0 %v177
  %238 = vmatprep.subr.bf16.mxu0 0
  %239 = vmatpush2.bf16.msra.mxu0 %v176
  %240 = vmatprep.subr.bf16.mxu0 0
  %241 = vmatpush2.bf16.msra.mxu0 %v175
  %242 = vmatprep.mubr.bf16.mxu0 %v86
  %243 = vmatmul.mubr.bf16.gmra.mxu0 %v85
  %v244 = vpop.f32.mrf.mxu0
  %v245 = vadd.f32 0.0, %v244
  %v246 = vpop.f32.mrf.mxu0
  %v247 = vpop.f32.mrf.mxu0
  %v248 = vadd.f32 0.0, %v247
  %v249 = vpop.f32.mrf.mxu0
  %250 = vmatprep.mubr.bf16.mxu0 %v89
  %251 = vmatmul.mubr.bf16.gmra.mxu0 %v88
  %v252 = vpop.f32.mrf.mxu0
  %v253 = vadd.f32 0.0, %v252
  %v254 = vpop.f32.mrf.mxu0
  %v255 = vpop.f32.mrf.mxu0
  %v256 = vadd.f32 0.0, %v255
  %v257 = vpop.f32.mrf.mxu0
  %258 = vdwg.mxu0
  %259 = vmatprep.subr.bf16.mxu0 0
  %260 = vmatpush1.bf16.msra.mxu0 0
  %261 = vmatprep.subr.bf16.mxu0 0
  %262 = vmatpush1.bf16.msra.mxu0 0
  %263 = vmatprep.subr.bf16.mxu0 0
  %264 = vmatpush1.bf16.msra.mxu0 0
  %265 = vmatprep.subr.bf16.mxu0 0
  %266 = vmatpush1.bf16.msra.mxu0 0
  %267 = vmatprep.subr.bf16.mxu0 0
  %268 = vmatpush1.bf16.msra.mxu0 0
  %269 = vmatprep.subr.bf16.mxu0 0
  %270 = vmatpush1.bf16.msra.mxu0 0
  %271 = vmatprep.subr.bf16.mxu0 0
  %272 = vmatpush1.bf16.msra.mxu0 %v184
  %273 = vmatprep.subr.bf16.mxu0 0
  %274 = vmatpush1.bf16.msra.mxu0 %v183
  %275 = vmatprep.subr.bf16.mxu0 0
  %276 = vmatpush2.bf16.msra.mxu0 0
  %277 = vmatprep.subr.bf16.mxu0 0
  %278 = vmatpush2.bf16.msra.mxu0 0
  %279 = vmatprep.subr.bf16.mxu0 0
  %280 = vmatpush2.bf16.msra.mxu0 0
  %281 = vmatprep.subr.bf16.mxu0 0
  %282 = vmatpush2.bf16.msra.mxu0 0
  %283 = vmatprep.subr.bf16.mxu0 0
  %284 = vmatpush2.bf16.msra.mxu0 0
  %285 = vmatprep.subr.bf16.mxu0 0
  %286 = vmatpush2.bf16.msra.mxu0 0
  %287 = vmatprep.subr.bf16.mxu0 0
  %288 = vmatpush2.bf16.msra.mxu0 0
  %289 = vmatprep.subr.bf16.mxu0 0
  %290 = vmatpush2.bf16.msra.mxu0 0
  %291 = vmatprep.mubr.bf16.mxu0 0
  %292 = vmatmul.mubr.bf16.gmra.mxu0 %v205
  %v293 = vpop.f32.mrf.mxu0
  %v294 = vadd.f32 %v245, %v293
  %v295 = vpop.f32.mrf.mxu0
  %v296 = vpop.f32.mrf.mxu0
  %v297 = vadd.f32 %v248, %v296
  %v298 = vpop.f32.mrf.mxu0
  %299 = vmatprep.mubr.bf16.mxu0 0
  %300 = vmatmul.mubr.bf16.gmra.mxu0 %v208
  %v301 = vpop.f32.mrf.mxu0
  %v302 = vadd.f32 %v253, %v301
  %v303 = vpop.f32.mrf.mxu0
  %v304 = vpop.f32.mrf.mxu0
  %v305 = vadd.f32 %v256, %v304
  %v306 = vpop.f32.mrf.mxu0
  %307 = vdwg.mxu0
  %v308 = vld [vmem:[%s2] sm:$0xff]
  %v309 = vld [vmem:[%s2 + $0x8] sm:$0xff]
  %v310 = vld [vmem:[%s2 + $0x10] sm:$0xff]
  %v311 = vld [vmem:[%s2 + $0x18] sm:$0xff]
  %313 = vset.pattern.permute.xlu0 0
  %314 = vperm.xlu0 %313, %v308
  %v315 = vpop.permute.xlu0 %314
  %318 = vset.pattern.permute.xlu0 0
  %319 = vperm.xlu0 %318, %v309
  %v320 = vpop.permute.xlu0 %319
  %323 = vset.pattern.permute.xlu0 0
  %324 = vperm.xlu0 %323, %v310
  %v325 = vpop.permute.xlu0 %324
  %328 = vset.pattern.permute.xlu0 0
  %329 = vperm.xlu0 %328, %v311
  %v330 = vpop.permute.xlu0 %329
  %v332 = vmul.f32 %v294, %v315
  %v333 = vmul.f32 %v297, %v320
  %v334 = vmul.f32 %v302, %v325
  %v335 = vmul.f32 %v305, %v330
  %v336 = vld [vmem:[%s3] sm:$0xff]
  %v337 = vld [vmem:[%s3 + $0x8] sm:$0xff]
  %v338 = vld [vmem:[%s3 + $0x10] sm:$0xff]
  %v339 = vld [vmem:[%s3 + $0x18] sm:$0xff]
  %341 = vset.pattern.permute.xlu0 0
  %342 = vperm.xlu0 %341, %v336
  %v343 = vpop.permute.xlu0 %342
  %346 = vset.pattern.permute.xlu0 0
  %347 = vperm.xlu0 %346, %v337
  %v348 = vpop.permute.xlu0 %347
  %351 = vset.pattern.permute.xlu0 0
  %352 = vperm.xlu0 %351, %v338
  %v353 = vpop.permute.xlu0 %352
  %356 = vset.pattern.permute.xlu0 0
  %357 = vperm.xlu0 %356, %v339
  %v358 = vpop.permute.xlu0 %357
  %v360 = vadd.f32 %v332, %v343
  %v361 = vadd.f32 %v333, %v348
  %v362 = vadd.f32 %v334, %v353
  %v363 = vadd.f32 %v335, %v358
  %v364 = vld [vmem:[%s4] sm:$0xf]
  %v365 = vld [vmem:[%s4 + $0x4] sm:$0xf]
  %v366 = vld [vmem:[%s4 + $0x8] sm:$0xf]
  %v367 = vld [vmem:[%s4 + $0xc] sm:$0xf]
  %v368 = vunpack.c.l.bf16 %v364
  %v369 = vunpack.c.l.bf16 %v365
  %v370 = vunpack.c.l.bf16 %v366
  %v371 = vunpack.c.l.bf16 %v367
  %v372 = vadd.f32 %v360, %v368
  %v373 = vadd.f32 %v361, %v369
  %v374 = vadd.f32 %v362, %v370
  %v375 = vadd.f32 %v363, %v371
  %v376 = vpack.c.bf16 %v373, %v372
  %v377 = vpack.c.bf16 %v375, %v374
  %v380 = vunpack.c.l.b16 %v376
  %v381 = vunpack.c.h.b16 %v376
  %v382 = vunpack.c.l.b16 %v377
  %v383 = vunpack.c.h.b16 %v377
  %v384 = vpack.c.b16 %v380, %v380
  %v385 = vpack.c.b16 %v381, %v381
  %v386 = vpack.c.b16 %v382, %v382
  %v387 = vpack.c.b16 %v383, %v383
  %392 = vst [vmem:[%s5] sm:$0xf] %v384
  %393 = vst [vmem:[%s5 + $0x4] sm:$0xf] %v385
  %394 = vst [vmem:[%s5 + $0x8] sm:$0xf] %v386
  %395 = vst [vmem:[%s5 + $0xc] sm:$0xf] %v387
  // Predicated region
  $region22: #{forward.18} parent=0 // pred_check
    _
  $region23: #{forward.18} parent=0 // pred_check_branch
    %397 = sbr.rel (0) target = $region25
  $region24: #{forward.18} parent=0 // pred_region
    _
  $region25: #{forward.18} parent=0 // pred_fallthru
    _
  // Predicated region
  $region26: #{forward.18} parent=0 // pred_check
    _
  $region27: #{forward.18} parent=0 // pred_check_branch
    %399 = sbr.rel (0) target = $region29
  $region28: #{forward.18} parent=0 // pred_region
    _
  $region29: #{forward.18} parent=0 // pred_fallthru
    _

// kernel: forward.21
$region0: #{forward.21}
  #allocation0 [shape = 'u32[]', space=smem, size = 0x4, offset = 0x4, fixed_abs, tag = 'smem constant byte address 0x4 - core index']
  #allocation1 [shape = 'u32[144,128]{1,0:T(1,128)}', space=vmem, size = 0x12000, scoped, tag = 'internal scratch']
  %s0 = inlined_call_operand.vmem [shape: bf16[16,288], index: 0, kind: input, shape index: {}]
  %s1 = inlined_call_operand.vmem [shape: bf16[288,512], index: 1, kind: input, shape index: {}]
  %s2 = inlined_call_operand.vmem [shape: f32[16,1], index: 2, kind: input, shape index: {}]
  %s3 = inlined_call_operand.vmem [shape: f32[16,1], index: 3, kind: input, shape index: {}]
  %s4 = inlined_call_operand.vmem [shape: bf16[16,512], index: 4, kind: output, shape index: {}]
  %s5 = sld [smem:[#allocation0]]
  $region121: #{forward.21} parent=0
    _
  %s7 = ssub.s32 1, %s5
  %s8 = scalar_select 0, %s7, %s5
  $region1: #{forward.21} parent=0
    #allocation2 [shape = 'u8[294912]{0}', space=vmem, size = 0x48000, scoped, tag = 'input window, operand 1']
    #allocation3 [shape = 'u8[16384]{0}', space=vmem, size = 0x4000, scoped, tag = 'output window, operand 0']
    loop: start=0, step=1, limit=4
    $region2: #{forward.21} parent=1 // loop_pre_header
      _
    $region3: #{forward.21} parent=1 // loop_header
      %s10 = sphi 0, %s14
      %p11 = scmp.ge.s32.totalorder %s10, 4
      %s18 = sphi 0, %s18
      %s20 = sphi 0, %s18
      %s21 = sphi 0, %s20
      %s35 = sphi 0, %s21
      %s41 = sphi 0, %s43
      %s44 = sphi 0, %s41
      %s45 = sphi 0, %s44
      %s61 = sphi 0, %s45
      %s65 = sphi 0, %s65
      %s67 = sphi 0, %s65
      %s68 = sphi 0, %s67
      %s82 = sphi 0, %s68
      %s86 = sphi 0, %s86
      %s88 = sphi 0, %s86
      %s89 = sphi 0, %s88
      %s103 = sphi 0, %s89
      %s109 = sphi 0, %s111
      %s112 = sphi 0, %s109
      %s113 = sphi 0, %s112
      %s129 = sphi 0, %s113
    $region4: #{forward.21} parent=1 // loop_header_branch
      %13 = sbr.rel (%p11) target = $region8
    $region5: #{forward.21} parent=1 // loop_body
      %s15 = ssub.s32 %s10, 1
      %s16 = ssub.s32 %s10, 2
      %s17 = sadd.s32 %s10, 1
      %s19 = sadd.s32 %s18, 1
      %p22 = scmp.eq.s32.totalorder %s10, 1
      %p23 = scmp.ne.s32.totalorder %s18, %s20
      %p24 = scmp.eq.s32.totalorder %s10, 0
      %p25 = por %p23, %p24
      %p26 = scmp.ne.s32.totalorder %s18, %s20
      %p27 = scmp.eq.s32.totalorder %s15, 1
      %p28 = por %p26, %p27
      %p29 = scmp.ne.s32.totalorder %s20, %s21
      %p30 = scmp.eq.s32.totalorder %s15, 0
      %p31 = por %p29, %p30
      %p32 = scmp.ne.s32.totalorder %s20, %s21
      %p33 = scmp.eq.s32.totalorder %s16, 1
      %p34 = por %p32, %p33
      %p36 = scmp.ne.s32.totalorder %s21, %s35
      %p37 = scmp.eq.s32.totalorder %s16, 0
      %p38 = por %p36, %p37
      %s39 = ssub.s32 %s10, %s17
      %p40 = scmp.eq.s32.totalorder %s39, 0
      %s42 = sadd.s32 %s41, 1
      %s43 = scalar_select %p40, %s41, %s42
      %p46 = pneg %p40
      %p47 = scmp.eq.s32.totalorder %s10, 1
      %p48 = por %p46, %p47
      %p49 = scmp.ne.s32.totalorder %s41, %s44
      %p50 = scmp.eq.s32.totalorder %s10, 0
      %p51 = por %p49, %p50
      %p52 = scmp.ne.s32.totalorder %s41, %s44
      %p53 = scmp.eq.s32.totalorder %s15, 1
      %p54 = por %p52, %p53
      %p55 = scmp.ne.s32.totalorder %s44, %s45
      %p56 = scmp.eq.s32.totalorder %s15, 0
      %p57 = por %p55, %p56
      %p58 = scmp.ne.s32.totalorder %s44, %s45
      %p59 = scmp.eq.s32.totalorder %s16, 1
      %p60 = por %p58, %p59
      %p62 = scmp.ne.s32.totalorder %s45, %s61
      %p63 = scmp.eq.s32.totalorder %s16, 0
      %p64 = por %p62, %p63
      %s66 = sadd.s32 %s65, 1
      %p69 = scmp.eq.s32.totalorder %s10, 1
      %p70 = scmp.ne.s32.totalorder %s65, %s67
      %p71 = scmp.eq.s32.totalorder %s10, 0
      %p72 = por %p70, %p71
      %p73 = scmp.ne.s32.totalorder %s65, %s67
      %p74 = scmp.eq.s32.totalorder %s15, 1
      %p75 = por %p73, %p74
      %p76 = scmp.ne.s32.totalorder %s67, %s68
      %p77 = scmp.eq.s32.totalorder %s15, 0
      %p78 = por %p76, %p77
      %p79 = scmp.ne.s32.totalorder %s67, %s68
      %p80 = scmp.eq.s32.totalorder %s16, 1
      %p81 = por %p79, %p80
      %p83 = scmp.ne.s32.totalorder %s68, %s82
      %p84 = scmp.eq.s32.totalorder %s16, 0
      %p85 = por %p83, %p84
      %s87 = sadd.s32 %s86, 1
      %p90 = scmp.eq.s32.totalorder %s10, 1
      %p91 = scmp.ne.s32.totalorder %s86, %s88
      %p92 = scmp.eq.s32.totalorder %s10, 0
      %p93 = por %p91, %p92
      %p94 = scmp.ne.s32.totalorder %s86, %s88
      %p95 = scmp.eq.s32.totalorder %s15, 1
      %p96 = por %p94, %p95
      %p97 = scmp.ne.s32.totalorder %s88, %s89
      %p98 = scmp.eq.s32.totalorder %s15, 0
      %p99 = por %p97, %p98
      %p100 = scmp.ne.s32.totalorder %s88, %s89
      %p101 = scmp.eq.s32.totalorder %s16, 1
      %p102 = por %p100, %p101
      %p104 = scmp.ne.s32.totalorder %s89, %s103
      %p105 = scmp.eq.s32.totalorder %s16, 0
      %p106 = por %p104, %p105
      %s107 = ssub.s32 %s10, %s17
      %p108 = scmp.eq.s32.totalorder %s107, 0
      %s110 = sadd.s32 %s109, 1
      %s111 = scalar_select %p108, %s109, %s110
      %p114 = pneg %p108
      %p115 = scmp.eq.s32.totalorder %s10, 1
      %p116 = por %p114, %p115
      %p117 = scmp.ne.s32.totalorder %s109, %s112
      %p118 = scmp.eq.s32.totalorder %s10, 0
      %p119 = por %p117, %p118
      %p120 = scmp.ne.s32.totalorder %s109, %s112
      %p121 = scmp.eq.s32.totalorder %s15, 1
      %p122 = por %p120, %p121
      %p123 = scmp.ne.s32.totalorder %s112, %s113
      %p124 = scmp.eq.s32.totalorder %s15, 0
      %p125 = por %p123, %p124
      %p126 = scmp.ne.s32.totalorder %s112, %s113
      %p127 = scmp.eq.s32.totalorder %s16, 1
      %p128 = por %p126, %p127
      %p130 = scmp.ne.s32.totalorder %s113, %s129
      %p131 = scmp.eq.s32.totalorder %s16, 0
      %p132 = por %p130, %p131
      %p133 = scmp.le.s32.totalorder 1, %s10
      %p134 = scmp.lt.s32.totalorder %s10, 3
      %p135 = pnand %p133, %p134
      %p136 = pneg %p135
      // Predicated region
      $region9: #{forward.21} parent=5 // pred_check
        _
      $region10: #{forward.21} parent=5 // pred_check_branch
        %138 = sbr.rel (%p135) target = $region12
      $region11: #{forward.21} parent=5 // pred_region
        %s139 = ssub.s32 %s10, 1
        // Predicated region
        $region13: #{forward.21} parent=11 // pred_check
          %p140 = pneg %p31
        $region14: #{forward.21} parent=11 // pred_check_branch
          %142 = sbr.rel (%p140) target = $region16
        $region15: #{forward.21} parent=11 // pred_region
          _
        $region16: #{forward.21} parent=11 // pred_fallthru
          _
        // Predicated region
        $region17: #{forward.21} parent=11 // pred_check
          %p143 = pneg %p78
        $region18: #{forward.21} parent=11 // pred_check_branch
          %145 = sbr.rel (%p143) target = $region20
        $region19: #{forward.21} parent=11 // pred_region
          _
        $region20: #{forward.21} parent=11 // pred_fallthru
          _
        // Predicated region
        $region21: #{forward.21} parent=11 // pred_check
          %p146 = pneg %p99
        $region22: #{forward.21} parent=11 // pred_check_branch
          %148 = sbr.rel (%p146) target = $region24
        $region23: #{forward.21} parent=11 // pred_region
          _
        $region24: #{forward.21} parent=11 // pred_fallthru
          _
      $region12: #{forward.21} parent=5 // pred_fallthru
        _
      %p149 = scmp.lt.s32.totalorder %s10, 2
      // Predicated region
      $region25: #{forward.21} parent=5 // pred_check
        %p150 = pneg %p149
      $region26: #{forward.21} parent=5 // pred_check_branch
        %152 = sbr.rel (%p150) target = $region28
      $region27: #{forward.21} parent=5 // pred_region
        // Predicated region
        $region29: #{forward.21} parent=27 // pred_check
          %p153 = pneg %p51
        $region30: #{forward.21} parent=27 // pred_check_branch
          %155 = sbr.rel (%p153) target = $region32
        $region31: #{forward.21} parent=27 // pred_region
          %s156 = sand.u32 %s41, 1
          %s157 = sand.u32 %s41, 1
          %s158 = smul.addr %s157, 288
          %s159 = scalar_lea.vmem [#allocation2], %s158
          %s160 = smul.u32 2, %s10
          %s161 = smul.addr %s160, 4
          %s162 = scalar_lea.vmem %s1, %s161
          // Predicated region
          $region33: #{forward.21} parent=31 // pred_check
            _
          $region34: #{forward.21} parent=31 // pred_check_branch
            %164 = sbr.rel (0) target = $region36
          $region35: #{forward.21} parent=31 // pred_region
            // Predicated region
            $region37: #{forward.21} parent=35 // pred_check
              _
            $region38: #{forward.21} parent=35 // pred_check_branch
              %166 = sbr.rel (0) target = $region40
            $region39: #{forward.21} parent=35 // pred_region
              // Predicated region
              $region52: #{forward.21} parent=39 // pred_check
                _
              $region53: #{forward.21} parent=39 // pred_check_branch
                %252 = sbr.rel (0) target = $region55
              $region54: #{forward.21} parent=39 // pred_region
                loop: start=0, step=1, limit=1
                $region56: #{forward.21} parent=54 // loop_pre_header
                  _
                $region57: #{forward.21} parent=54 // loop_header
                  %s254 = sphi 0, %s258
                  %p255 = scmp.ge.s32.totalorder %s254, 1
                  %s259 = sphi %s162, %s162
                  %s260 = sphi %s159, %s159
                $region58: #{forward.21} parent=54 // loop_header_branch
                  %257 = sbr.rel (%p255) target = $region62
                $region59: #{forward.21} parent=54 // loop_body
                  %v261 = vld [vmem:[%s259] sm:$0xff]
                  %262 = vst [vmem:[%s260] sm:$0xff] %v261
                  %v263 = vld [vmem:[%s259 + $0x10] sm:$0xff]
                  %264 = vst [vmem:[%s260 + $0x8] sm:$0xff] %v263
                  %v265 = vld [vmem:[%s259 + $0x20] sm:$0xff]
                  %266 = vst [vmem:[%s260 + $0x10] sm:$0xff] %v265
                  %v267 = vld [vmem:[%s259 + $0x30] sm:$0xff]
                  %268 = vst [vmem:[%s260 + $0x18] sm:$0xff] %v267
                  %v269 = vld [vmem:[%s259 + $0x40] sm:$0xff]
                  %270 = vst [vmem:[%s260 + $0x20] sm:$0xff] %v269
                  %v271 = vld [vmem:[%s259 + $0x50] sm:$0xff]
                  %272 = vst [vmem:[%s260 + $0x28] sm:$0xff] %v271
                  %v273 = vld [vmem:[%s259 + $0x60] sm:$0xff]
                  %274 = vst [vmem:[%s260 + $0x30] sm:$0xff] %v273
                  %v275 = vld [vmem:[%s259 + $0x70] sm:$0xff]
                  %276 = vst [vmem:[%s260 + $0x38] sm:$0xff] %v275
                  %v277 = vld [vmem:[%s259 + $0x80] sm:$0xff]
                  %278 = vst [vmem:[%s260 + $0x40] sm:$0xff] %v277
                  %v279 = vld [vmem:[%s259 + $0x90] sm:$0xff]
                  %280 = vst [vmem:[%s260 + $0x48] sm:$0xff] %v279
                  %v281 = vld [vmem:[%s259 + $0xa0] sm:$0xff]
                  %282 = vst [vmem:[%s260 + $0x50] sm:$0xff] %v281
                  %v283 = vld [vmem:[%s259 + $0xb0] sm:$0xff]
                  %284 = vst [vmem:[%s260 + $0x58] sm:$0xff] %v283
                  %v285 = vld [vmem:[%s259 + $0xc0] sm:$0xff]
                  %286 = vst [vmem:[%s260 + $0x60] sm:$0xff] %v285
                  %v287 = vld [vmem:[%s259 + $0xd0] sm:$0xff]
                  %288 = vst [vmem:[%s260 + $0x68] sm:$0xff] %v287
                  %v289 = vld [vmem:[%s259 + $0xe0] sm:$0xff]
                  %290 = vst [vmem:[%s260 + $0x70] sm:$0xff] %v289
                  %v291 = vld [vmem:[%s259 + $0xf0] sm:$0xff]
                  %292 = vst [vmem:[%s260 + $0x78] sm:$0xff] %v291
                  %v293 = vld [vmem:[%s259 + $0x100] sm:$0xff]
                  %294 = vst [vmem:[%s260 + $0x80] sm:$0xff] %v293
                  %v295 = vld [vmem:[%s259 + $0x110] sm:$0xff]
                  %296 = vst [vmem:[%s260 + $0x88] sm:$0xff] %v295
                  %v297 = vld [vmem:[%s259 + $0x120] sm:$0xff]
                  %298 = vst [vmem:[%s260 + $0x90] sm:$0xff] %v297
                  %v299 = vld [vmem:[%s259 + $0x130] sm:$0xff]
                  %300 = vst [vmem:[%s260 + $0x98] sm:$0xff] %v299
                  %v301 = vld [vmem:[%s259 + $0x140] sm:$0xff]
                  %302 = vst [vmem:[%s260 + $0xa0] sm:$0xff] %v301
                  %v303 = vld [vmem:[%s259 + $0x150] sm:$0xff]
                  %304 = vst [vmem:[%s260 + $0xa8] sm:$0xff] %v303
                  %v305 = vld [vmem:[%s259 + $0x160] sm:$0xff]
                  %306 = vst [vmem:[%s260 + $0xb0] sm:$0xff] %v305
                  %v307 = vld [vmem:[%s259 + $0x170] sm:$0xff]
                  %308 = vst [vmem:[%s260 + $0xb8] sm:$0xff] %v307
                  %v309 = vld [vmem:[%s259 + $0x180] sm:$0xff]
                  %310 = vst [vmem:[%s260 + $0xc0] sm:$0xff] %v309
                  %v311 = vld [vmem:[%s259 + $0x190] sm:$0xff]
                  %312 = vst [vmem:[%s260 + $0xc8] sm:$0xff] %v311
                  %v313 = vld [vmem:[%s259 + $0x1a0] sm:$0xff]
                  %314 = vst [vmem:[%s260 + $0xd0] sm:$0xff] %v313
                  %v315 = vld [vmem:[%s259 + $0x1b0] sm:$0xff]
                  %316 = vst [vmem:[%s260 + $0xd8] sm:$0xff] %v315
                  %v317 = vld [vmem:[%s259 + $0x1c0] sm:$0xff]
                  %318 = vst [vmem:[%s260 + $0xe0] sm:$0xff] %v317
                  %v319 = vld [vmem:[%s259 + $0x1d0] sm:$0xff]
                  %320 = vst [vmem:[%s260 + $0xe8] sm:$0xff] %v319
                  %v321 = vld [vmem:[%s259 + $0x1e0] sm:$0xff]
                  %322 = vst [vmem:[%s260 + $0xf0] sm:$0xff] %v321
                  %v323 = vld [vmem:[%s259 + $0x1f0] sm:$0xff]
                  %324 = vst [vmem:[%s260 + $0xf8] sm:$0xff] %v323
                  %v325 = vld [vmem:[%s259 + $0x200] sm:$0xff]
                  %326 = vst [vmem:[%s260 + $0x100] sm:$0xff] %v325
                  %v327 = vld [vmem:[%s259 + $0x210] sm:$0xff]
                  %328 = vst [vmem:[%s260 + $0x108] sm:$0xff] %v327
                  %v329 = vld [vmem:[%s259 + $0x220] sm:$0xff]
                  %330 = vst [vmem:[%s260 + $0x110] sm:$0xff] %v329
                  %v331 = vld [vmem:[%s259 + $0x230] sm:$0xff]
                  %332 = vst [vmem:[%s260 + $0x118] sm:$0xff] %v331
                $region60: #{forward.21} parent=54 // loop_footer
                  %s258 = sadd.s32 1, %s254
                $region61: #{forward.21} parent=54 // loop_footer_branch
                  %253 = sbr.rel target = $region57
                $region62: #{forward.21} parent=54 // loop_exit
                  _
              $region55: #{forward.21} parent=39 // pred_fallthru
                _
              // Predicated region
              $region63: #{forward.21} parent=39 // pred_check
                _
              $region64: #{forward.21} parent=39 // pred_check_branch
                %334 = sbr.rel target = $region66
              $region65: #{forward.21} parent=39 // pred_region
                _
              $region66: #{forward.21} parent=39 // pred_fallthru
                _
            $region40: #{forward.21} parent=35 // pred_fallthru
              _
            // Predicated region
            $region41: #{forward.21} parent=35 // pred_check
              _
            $region42: #{forward.21} parent=35 // pred_check_branch
              %168 = sbr.rel target = $region44
            $region43: #{forward.21} parent=35 // pred_region
              %s170 = ssub.s32 256, 1
              loop: start=0, step=1, limit=1
              $region45: #{forward.21} parent=43 // loop_pre_header
                _
              $region46: #{forward.21} parent=43 // loop_header
                %s172 = sphi 0, %s176
                %p173 = scmp.ge.s32.totalorder %s172, 1
                %s177 = sphi %s162, %s162
                %s178 = sphi %s159, %s159
              $region47: #{forward.21} parent=43 // loop_header_branch
                %175 = sbr.rel (%p173) target = $region51
              $region48: #{forward.21} parent=43 // loop_body
                %v179 = vld [vmem:[%s177] sm:%s170]
                %180 = vst [vmem:[%s178] sm:%s170] %v179
                %v181 = vld [vmem:[%s177 + $0x10] sm:%s170]
                %182 = vst [vmem:[%s178 + $0x8] sm:%s170] %v181
                %v183 = vld [vmem:[%s177 + $0x20] sm:%s170]
                %184 = vst [vmem:[%s178 + $0x10] sm:%s170] %v183
                %v185 = vld [vmem:[%s177 + $0x30] sm:%s170]
                %186 = vst [vmem:[%s178 + $0x18] sm:%s170] %v185
                %v187 = vld [vmem:[%s177 + $0x40] sm:%s170]
                %188 = vst [vmem:[%s178 + $0x20] sm:%s170] %v187
                %v189 = vld [vmem:[%s177 + $0x50] sm:%s170]
                %190 = vst [vmem:[%s178 + $0x28] sm:%s170] %v189
                %v191 = vld [vmem:[%s177 + $0x60] sm:%s170]
                %192 = vst [vmem:[%s178 + $0x30] sm:%s170] %v191
                %v193 = vld [vmem:[%s177 + $0x70] sm:%s170]
                %194 = vst [vmem:[%s178 + $0x38] sm:%s170] %v193
                %v195 = vld [vmem:[%s177 + $0x80] sm:%s170]
                %196 = vst [vmem:[%s178 + $0x40] sm:%s170] %v195
                %v197 = vld [vmem:[%s177 + $0x90] sm:%s170]
                %198 = vst [vmem:[%s178 + $0x48] sm:%s170] %v197
                %v199 = vld [vmem:[%s177 + $0xa0] sm:%s170]
                %200 = vst [vmem:[%s178 + $0x50] sm:%s170] %v199
                %v201 = vld [vmem:[%s177 + $0xb0] sm:%s170]
                %202 = vst [vmem:[%s178 + $0x58] sm:%s170] %v201
                %v203 = vld [vmem:[%s177 + $0xc0] sm:%s170]
                %204 = vst [vmem:[%s178 + $0x60] sm:%s170] %v203
                %v205 = vld [vmem:[%s177 + $0xd0] sm:%s170]
                %206 = vst [vmem:[%s178 + $0x68] sm:%s170] %v205
                %v207 = vld [vmem:[%s177 + $0xe0] sm:%s170]
                %208 = vst [vmem:[%s178 + $0x70] sm:%s170] %v207
                %v209 = vld [vmem:[%s177 + $0xf0] sm:%s170]
                %210 = vst [vmem:[%s178 + $0x78] sm:%s170] %v209
                %v211 = vld [vmem:[%s177 + $0x100] sm:%s170]
                %212 = vst [vmem:[%s178 + $0x80] sm:%s170] %v211
                %v213 = vld [vmem:[%s177 + $0x110] sm:%s170]
                %214 = vst [vmem:[%s178 + $0x88] sm:%s170] %v213
                %v215 = vld [vmem:[%s177 + $0x120] sm:%s170]
                %216 = vst [vmem:[%s178 + $0x90] sm:%s170] %v215
                %v217 = vld [vmem:[%s177 + $0x130] sm:%s170]
                %218 = vst [vmem:[%s178 + $0x98] sm:%s170] %v217
                %v219 = vld [vmem:[%s177 + $0x140] sm:%s170]
                %220 = vst [vmem:[%s178 + $0xa0] sm:%s170] %v219
                %v221 = vld [vmem:[%s177 + $0x150] sm:%s170]
                %222 = vst [vmem:[%s178 + $0xa8] sm:%s170] %v221
                %v223 = vld [vmem:[%s177 + $0x160] sm:%s170]
                %224 = vst [vmem:[%s178 + $0xb0] sm:%s170] %v223
                %v225 = vld [vmem:[%s177 + $0x170] sm:%s170]
                %226 = vst [vmem:[%s178 + $0xb8] sm:%s170] %v225
                %v227 = vld [vmem:[%s177 + $0x180] sm:%s170]
                %228 = vst [vmem:[%s178 + $0xc0] sm:%s170] %v227
                %v229 = vld [vmem:[%s177 + $0x190] sm:%s170]
                %230 = vst [vmem:[%s178 + $0xc8] sm:%s170] %v229
                %v231 = vld [vmem:[%s177 + $0x1a0] sm:%s170]
                %232 = vst [vmem:[%s178 + $0xd0] sm:%s170] %v231
                %v233 = vld [vmem:[%s177 + $0x1b0] sm:%s170]
                %234 = vst [vmem:[%s178 + $0xd8] sm:%s170] %v233
                %v235 = vld [vmem:[%s177 + $0x1c0] sm:%s170]
                %236 = vst [vmem:[%s178 + $0xe0] sm:%s170] %v235
                %v237 = vld [vmem:[%s177 + $0x1d0] sm:%s170]
                %238 = vst [vmem:[%s178 + $0xe8] sm:%s170] %v237
                %v239 = vld [vmem:[%s177 + $0x1e0] sm:%s170]
                %240 = vst [vmem:[%s178 + $0xf0] sm:%s170] %v239
                %v241 = vld [vmem:[%s177 + $0x1f0] sm:%s170]
                %242 = vst [vmem:[%s178 + $0xf8] sm:%s170] %v241
                %v243 = vld [vmem:[%s177 + $0x200] sm:%s170]
                %244 = vst [vmem:[%s178 + $0x100] sm:%s170] %v243
                %v245 = vld [vmem:[%s177 + $0x210] sm:%s170]
                %246 = vst [vmem:[%s178 + $0x108] sm:%s170] %v245
                %v247 = vld [vmem:[%s177 + $0x220] sm:%s170]
                %248 = vst [vmem:[%s178 + $0x110] sm:%s170] %v247
                %v249 = vld [vmem:[%s177 + $0x230] sm:%s170]
                %250 = vst [vmem:[%s178 + $0x118] sm:%s170] %v249
              $region49: #{forward.21} parent=43 // loop_footer
                %s176 = sadd.s32 1, %s172
              $region50: #{forward.21} parent=43 // loop_footer_branch
                %171 = sbr.rel target = $region46
              $region51: #{forward.21} parent=43 // loop_exit
                _
            $region44: #{forward.21} parent=35 // pred_fallthru
              _
          $region36: #{forward.21} parent=31 // pred_fallthru
            _
          %335 = vnop
        $region32: #{forward.21} parent=27 // pred_fallthru
          _
      $region28: #{forward.21} parent=5 // pred_fallthru
        _
      %p336 = scmp.le.s32.totalorder 1, %s10
      %p337 = scmp.lt.s32.totalorder %s10, 3
      %p338 = pnand %p336, %p337
      %p339 = pneg %p338
      // Predicated region
      $region67: #{forward.21} parent=5 // pred_check
        _
      $region68: #{forward.21} parent=5 // pred_check_branch
        %341 = sbr.rel (%p338) target = $region70
      $region69: #{forward.21} parent=5 // pred_region
        %s342 = ssub.s32 %s10, 1
        %s343 = sand.u32 %s44, 1
        %s344 = sand.u32 %s44, 1
        %s345 = smul.addr %s344, 288
        %s346 = scalar_lea.vmem [#allocation2], %s345
        // Predicated region
        $region71: #{forward.21} parent=69 // pred_check
          %p347 = pneg %p57
        $region72: #{forward.21} parent=69 // pred_check_branch
          %349 = sbr.rel (%p347) target = $region74
        $region73: #{forward.21} parent=69 // pred_region
          _
        $region74: #{forward.21} parent=69 // pred_fallthru
          _
        %p350 = pneg %p31
        %p351 = pneg %p28
        %s352 = sand.u32 %s44, 1
        %s353 = sand.u32 %s44, 1
        %s354 = smul.addr %s353, 288
        %s355 = scalar_lea.vmem [#allocation2], %s354
        %p356 = pneg %p57
        %p357 = pneg %p54
        %p358 = pneg %p78
        %p359 = pneg %p75
        %p360 = pneg %p99
        %p361 = pneg %p96
        %p362 = pneg %p125
        %p363 = pneg %p122
        %s364 = sand.u32 %s112, 1
        %s365 = sand.u32 %s112, 1
        %s366 = smul.addr %s365, 16
        %s367 = scalar_lea.vmem [#allocation3], %s366
        %s368 = smul.u32 2, %s15
        %s369 = smul.u32 2, %s15
        %v371 = vld [vmem:[%s0] sm:$0xff]
        %v372 = vld [vmem:[%s0 + $0x8] sm:$0xf]
        %v373 = vld [vmem:[%s0 + $0xc] sm:$0xff]
        %v374 = vld [vmem:[%s0 + $0x14] sm:$0xf]
        %v375 = vld [vmem:[%s346] sm:$0xff]
        %v376 = vld [vmem:[%s346 + $0x8] sm:$0xff]
        %v377 = vld [vmem:[%s346 + $0x10] sm:$0xff]
        %v378 = vld [vmem:[%s346 + $0x18] sm:$0xff]
        %v379 = vld [vmem:[%s346 + $0x20] sm:$0xff]
        %v380 = vld [vmem:[%s346 + $0x28] sm:$0xff]
        %v381 = vld [vmem:[%s346 + $0x30] sm:$0xff]
        %v382 = vld [vmem:[%s346 + $0x38] sm:$0xff]
        %v383 = vld [vmem:[%s346 + $0x40] sm:$0xff]
        %v384 = vld [vmem:[%s346 + $0x48] sm:$0xff]
        %v385 = vld [vmem:[%s346 + $0x50] sm:$0xff]
        %v386 = vld [vmem:[%s346 + $0x58] sm:$0xff]
        %v387 = vld [vmem:[%s346 + $0x60] sm:$0xff]
        %v388 = vld [vmem:[%s346 + $0x68] sm:$0xff]
        %v389 = vld [vmem:[%s346 + $0x70] sm:$0xff]
        %v390 = vld [vmem:[%s346 + $0x78] sm:$0xff]
        %v391 = vld [vmem:[%s346 + $0x80] sm:$0xff]
        %v392 = vld [vmem:[%s346 + $0x88] sm:$0xff]
        %v393 = vld [vmem:[%s346 + $0x90] sm:$0xff]
        %v394 = vld [vmem:[%s346 + $0x98] sm:$0xff]
        %v395 = vld [vmem:[%s346 + $0xa0] sm:$0xff]
        %v396 = vld [vmem:[%s346 + $0xa8] sm:$0xff]
        %v397 = vld [vmem:[%s346 + $0xb0] sm:$0xff]
        %v398 = vld [vmem:[%s346 + $0xb8] sm:$0xff]
        %v399 = vld [vmem:[%s346 + $0xc0] sm:$0xff]
        %v400 = vld [vmem:[%s346 + $0xc8] sm:$0xff]
        %v401 = vld [vmem:[%s346 + $0xd0] sm:$0xff]
        %v402 = vld [vmem:[%s346 + $0xd8] sm:$0xff]
        %v403 = vld [vmem:[%s346 + $0xe0] sm:$0xff]
        %v404 = vld [vmem:[%s346 + $0xe8] sm:$0xff]
        %v405 = vld [vmem:[%s346 + $0xf0] sm:$0xff]
        %v406 = vld [vmem:[%s346 + $0xf8] sm:$0xff]
        %v407 = vld [vmem:[%s346 + $0x100] sm:$0xff]
        %v408 = vld [vmem:[%s346 + $0x108] sm:$0xff]
        %v409 = vld [vmem:[%s346 + $0x110] sm:$0xff]
        %v410 = vld [vmem:[%s346 + $0x118] sm:$0xff]
        %v415 = vunpack.c.l.b16 %v371
        %v416 = vunpack.c.h.b16 %v371
        %v417 = vunpack.c.l.b16 %v372
        %v418 = vunpack.c.l.b16 %v373
        %v419 = vunpack.c.h.b16 %v373
        %v420 = vunpack.c.l.b16 %v374
        %v421 = vpack.c.b16 %v418, %v415
        %v422 = vpack.c.b16 %v419, %v416
        %v423 = vpack.c.b16 %v420, %v417
        %v462 = vunpack.c.l.b16 %v375
        %v463 = vunpack.c.h.b16 %v375
        %v464 = vunpack.c.l.b16 %v376
        %v465 = vunpack.c.h.b16 %v376
        %v466 = vunpack.c.l.b16 %v377
        %v467 = vunpack.c.h.b16 %v377
        %v468 = vunpack.c.l.b16 %v378
        %v469 = vunpack.c.h.b16 %v378
        %v470 = vunpack.c.l.b16 %v379
        %v471 = vunpack.c.h.b16 %v379
        %v472 = vunpack.c.l.b16 %v380
        %v473 = vunpack.c.h.b16 %v380
        %v474 = vunpack.c.l.b16 %v381
        %v475 = vunpack.c.h.b16 %v381
        %v476 = vunpack.c.l.b16 %v382
        %v477 = vunpack.c.h.b16 %v382
        %v478 = vunpack.c.l.b16 %v383
        %v479 = vunpack.c.h.b16 %v383
        %v480 = vunpack.c.l.b16 %v384
        %v481 = vunpack.c.h.b16 %v384
        %v482 = vunpack.c.l.b16 %v385
        %v483 = vunpack.c.h.b16 %v385
        %v484 = vunpack.c.l.b16 %v386
        %v485 = vunpack.c.h.b16 %v386
        %v486 = vunpack.c.l.b16 %v387
        %v487 = vunpack.c.h.b16 %v387
        %v488 = vunpack.c.l.b16 %v388
        %v489 = vunpack.c.h.b16 %v388
        %v490 = vunpack.c.l.b16 %v389
        %v491 = vunpack.c.h.b16 %v389
        %v492 = vunpack.c.l.b16 %v390
        %v493 = vunpack.c.h.b16 %v390
        %v494 = vunpack.c.l.b16 %v391
        %v495 = vunpack.c.h.b16 %v391
        %v496 = vunpack.c.l.b16 %v392
        %v497 = vunpack.c.h.b16 %v392
        %v498 = vunpack.c.l.b16 %v393
        %v499 = vunpack.c.h.b16 %v393
        %v500 = vunpack.c.l.b16 %v394
        %v501 = vunpack.c.h.b16 %v394
        %v502 = vunpack.c.l.b16 %v395
        %v503 = vunpack.c.h.b16 %v395
        %v504 = vunpack.c.l.b16 %v396
        %v505 = vunpack.c.h.b16 %v396
        %v506 = vunpack.c.l.b16 %v397
        %v507 = vunpack.c.h.b16 %v397
        %v508 = vunpack.c.l.b16 %v398
        %v509 = vunpack.c.h.b16 %v398
        %v510 = vunpack.c.l.b16 %v399
        %v511 = vunpack.c.h.b16 %v399
        %v512 = vunpack.c.l.b16 %v400
        %v513 = vunpack.c.h.b16 %v400
        %v514 = vunpack.c.l.b16 %v401
        %v515 = vunpack.c.h.b16 %v401
        %v516 = vunpack.c.l.b16 %v402
        %v517 = vunpack.c.h.b16 %v402
        %v518 = vunpack.c.l.b16 %v403
        %v519 = vunpack.c.h.b16 %v403
        %v520 = vunpack.c.l.b16 %v404
        %v521 = vunpack.c.h.b16 %v404
        %v522 = vunpack.c.l.b16 %v405
        %v523 = vunpack.c.h.b16 %v405
        %v524 = vunpack.c.l.b16 %v406
        %v525 = vunpack.c.h.b16 %v406
        %v526 = vunpack.c.l.b16 %v407
        %v527 = vunpack.c.h.b16 %v407
        %v528 = vunpack.c.l.b16 %v408
        %v529 = vunpack.c.h.b16 %v408
        %v530 = vunpack.c.l.b16 %v409
        %v531 = vunpack.c.h.b16 %v409
        %v532 = vunpack.c.l.b16 %v410
        %v533 = vunpack.c.h.b16 %v410
        %v534 = vpack.c.b16 %v464, %v462
        %v535 = vpack.c.b16 %v465, %v463
        %v536 = vpack.c.b16 %v468, %v466
        %v537 = vpack.c.b16 %v469, %v467
        %v538 = vpack.c.b16 %v472, %v470
        %v539 = vpack.c.b16 %v473, %v471
        %v540 = vpack.c.b16 %v476, %v474
        %v541 = vpack.c.b16 %v477, %v475
        %v542 = vpack.c.b16 %v480, %v478
        %v543 = vpack.c.b16 %v481, %v479
        %v544 = vpack.c.b16 %v484, %v482
        %v545 = vpack.c.b16 %v485, %v483
        %v546 = vpack.c.b16 %v488, %v486
        %v547 = vpack.c.b16 %v489, %v487
        %v548 = vpack.c.b16 %v492, %v490
        %v549 = vpack.c.b16 %v493, %v491
        %v550 = vpack.c.b16 %v496, %v494
        %v551 = vpack.c.b16 %v497, %v495
        %v552 = vpack.c.b16 %v500, %v498
        %v553 = vpack.c.b16 %v501, %v499
        %v554 = vpack.c.b16 %v504, %v502
        %v555 = vpack.c.b16 %v505, %v503
        %v556 = vpack.c.b16 %v508, %v506
        %v557 = vpack.c.b16 %v509, %v507
        %v558 = vpack.c.b16 %v512, %v510
        %v559 = vpack.c.b16 %v513, %v511
        %v560 = vpack.c.b16 %v516, %v514
        %v561 = vpack.c.b16 %v517, %v515
        %v562 = vpack.c.b16 %v520, %v518
        %v563 = vpack.c.b16 %v521, %v519
        %v564 = vpack.c.b16 %v524, %v522
        %v565 = vpack.c.b16 %v525, %v523
        %v566 = vpack.c.b16 %v528, %v526
        %v567 = vpack.c.b16 %v529, %v527
        %v568 = vpack.c.b16 %v532, %v530
        %v569 = vpack.c.b16 %v533, %v531
        %vm606 = vcmask 261120
        %v608 = vsel %vm606, %v423, 0
        %610 = vmatprep.subr.bf16.mxu0 %v549
        %611 = vmatpush1.bf16.msra.mxu0 %v548
        %612 = vmatprep.subr.bf16.mxu0 %v547
        %613 = vmatpush1.bf16.msra.mxu0 %v546
        %614 = vmatprep.subr.bf16.mxu0 %v545
        %615 = vmatpush1.bf16.msra.mxu0 %v544
        %616 = vmatprep.subr.bf16.mxu0 %v543
        %617 = vmatpush1.bf16.msra.mxu0 %v542
        %618 = vmatprep.subr.bf16.mxu0 %v541
        %619 = vmatpush1.bf16.msra.mxu0 %v540
        %620 = vmatprep.subr.bf16.mxu0 %v539
        %621 = vmatpush1.bf16.msra.mxu0 %v538
        %622 = vmatprep.subr.bf16.mxu0 %v537
        %623 = vmatpush1.bf16.msra.mxu0 %v536
        %624 = vmatprep.subr.bf16.mxu0 %v535
        %625 = vmatpush1.bf16.msra.mxu0 %v534
        %626 = vmatprep.subr.bf16.mxu0 %v565
        %627 = vmatpush2.bf16.msra.mxu0 %v564
        %628 = vmatprep.subr.bf16.mxu0 %v563
        %629 = vmatpush2.bf16.msra.mxu0 %v562
        %630 = vmatprep.subr.bf16.mxu0 %v561
        %631 = vmatpush2.bf16.msra.mxu0 %v560
        %632 = vmatprep.subr.bf16.mxu0 %v559
        %633 = vmatpush2.bf16.msra.mxu0 %v558
        %634 = vmatprep.subr.bf16.mxu0 %v557
        %635 = vmatpush2.bf16.msra.mxu0 %v556
        %636 = vmatprep.subr.bf16.mxu0 %v555
        %637 = vmatpush2.bf16.msra.mxu0 %v554
        %638 = vmatprep.subr.bf16.mxu0 %v553
        %639 = vmatpush2.bf16.msra.mxu0 %v552
        %640 = vmatprep.subr.bf16.mxu0 %v551
        %641 = vmatpush2.bf16.msra.mxu0 %v550
        %642 = vmatprep.mubr.bf16.mxu0 %v422
        %643 = vmatmul.mubr.bf16.gmra.mxu0 %v421
        %v644 = vpop.f32.mrf.mxu0
        %v645 = vadd.f32 0.0, %v644
        %v646 = vpop.f32.mrf.mxu0
        %v647 = vadd.f32 0.0, %v646
        %v648 = vpop.f32.mrf.mxu0
        %v649 = vadd.f32 0.0, %v648
        %v650 = vpop.f32.mrf.mxu0
        %v651 = vadd.f32 0.0, %v650
        %652 = vdwg.mxu0
        %653 = vmatprep.subr.bf16.mxu0 0
        %654 = vmatpush1.bf16.msra.mxu0 0
        %655 = vmatprep.subr.bf16.mxu0 0
        %656 = vmatpush1.bf16.msra.mxu0 0
        %657 = vmatprep.subr.bf16.mxu0 0
        %658 = vmatpush1.bf16.msra.mxu0 0
        %659 = vmatprep.subr.bf16.mxu0 0
        %660 = vmatpush1.bf16.msra.mxu0 0
        %661 = vmatprep.subr.bf16.mxu0 0
        %662 = vmatpush1.bf16.msra.mxu0 0
        %663 = vmatprep.subr.bf16.mxu0 0
        %664 = vmatpush1.bf16.msra.mxu0 0
        %665 = vmatprep.subr.bf16.mxu0 %v569
        %666 = vmatpush1.bf16.msra.mxu0 %v568
        %667 = vmatprep.subr.bf16.mxu0 %v567
        %668 = vmatpush1.bf16.msra.mxu0 %v566
        %669 = vmatprep.subr.bf16.mxu0 0
        %670 = vmatpush2.bf16.msra.mxu0 0
        %671 = vmatprep.subr.bf16.mxu0 0
        %672 = vmatpush2.bf16.msra.mxu0 0
        %673 = vmatprep.subr.bf16.mxu0 0
        %674 = vmatpush2.bf16.msra.mxu0 0
        %675 = vmatprep.subr.bf16.mxu0 0
        %676 = vmatpush2.bf16.msra.mxu0 0
        %677 = vmatprep.subr.bf16.mxu0 0
        %678 = vmatpush2.bf16.msra.mxu0 0
        %679 = vmatprep.subr.bf16.mxu0 0
        %680 = vmatpush2.bf16.msra.mxu0 0
        %681 = vmatprep.subr.bf16.mxu0 0
        %682 = vmatpush2.bf16.msra.mxu0 0
        %683 = vmatprep.subr.bf16.mxu0 0
        %684 = vmatpush2.bf16.msra.mxu0 0
        %685 = vmatprep.mubr.bf16.mxu0 0
        %686 = vmatmul.mubr.bf16.gmra.mxu0 %v608
        %v687 = vpop.f32.mrf.mxu0
        %v688 = vadd.f32 %v645, %v687
        %v689 = vpop.f32.mrf.mxu0
        %v690 = vadd.f32 %v647, %v689
        %v691 = vpop.f32.mrf.mxu0
        %v692 = vadd.f32 %v649, %v691
        %v693 = vpop.f32.mrf.mxu0
        %v694 = vadd.f32 %v651, %v693
        %695 = vdwg.mxu0
        %v696 = vld [vmem:[%s2] sm:$0xff]
        %v697 = vld [vmem:[%s2 + $0x8] sm:$0xff]
        %699 = vset.pattern.permute.xlu0 0
        %700 = vperm.xlu0 %699, %v696
        %v701 = vpop.permute.xlu0 %700
        %704 = vset.pattern.permute.xlu0 0
        %705 = vperm.xlu0 %704, %v697
        %v706 = vpop.permute.xlu0 %705
        %v708 = vmul.f32 %v688, %v701
        %v709 = vmul.f32 %v690, %v701
        %v710 = vmul.f32 %v692, %v706
        %v711 = vmul.f32 %v694, %v706
        %v712 = vld [vmem:[%s3] sm:$0xff]
        %v713 = vld [vmem:[%s3 + $0x8] sm:$0xff]
        %715 = vset.pattern.permute.xlu0 0
        %716 = vperm.xlu0 %715, %v712
        %v717 = vpop.permute.xlu0 %716
        %720 = vset.pattern.permute.xlu0 0
        %721 = vperm.xlu0 %720, %v713
        %v722 = vpop.permute.xlu0 %721
        %v724 = vadd.f32 %v708, %v717
        %v725 = vadd.f32 %v709, %v717
        %v726 = vadd.f32 %v710, %v722
        %v727 = vadd.f32 %v711, %v722
        %v728 = vmax.f32 %v724, 0.0
        %v729 = vmax.f32 %v725, 0.0
        %v730 = vmax.f32 %v726, 0.0
        %v731 = vmax.f32 %v727, 0.0
        %v732 = vpack.c.bf16 %v730, %v728
        %v733 = vpack.c.bf16 %v731, %v729
        %v736 = vunpack.c.l.b16 %v732
        %v737 = vunpack.c.l.b16 %v733
        %v738 = vunpack.c.h.b16 %v732
        %v739 = vunpack.c.h.b16 %v733
        %v740 = vpack.c.b16 %v737, %v736
        %v741 = vpack.c.b16 %v739, %v738
        %744 = vst [vmem:[%s367] sm:$0xff] %v740
        %745 = vst [vmem:[%s367 + $0x8] sm:$0xff] %v741
        %s746 = sand.u32 %s112, 1
        %s747 = sand.u32 %s112, 1
        %s748 = smul.addr %s747, 16
        %s749 = scalar_lea.vmem [#allocation3], %s748
        // Predicated region
        $region75: #{forward.21} parent=69 // pred_check
          %p750 = pneg %p122
        $region76: #{forward.21} parent=69 // pred_check_branch
          %752 = sbr.rel (%p750) target = $region78
        $region77: #{forward.21} parent=69 // pred_region
          %s753 = smul.u32 2, %s15
          %s754 = smul.addr %s753, 4
          %s755 = scalar_lea.vmem %s4, %s754
          // Predicated region
          $region79: #{forward.21} parent=77 // pred_check
            _
          $region80: #{forward.21} parent=77 // pred_check_branch
            %757 = sbr.rel (0) target = $region82
          $region81: #{forward.21} parent=77 // pred_region
            // Predicated region
            $region83: #{forward.21} parent=81 // pred_check
              _
            $region84: #{forward.21} parent=81 // pred_check_branch
              %759 = sbr.rel (0) target = $region86
            $region85: #{forward.21} parent=81 // pred_region
              // Predicated region
              $region98: #{forward.21} parent=85 // pred_check
                _
              $region99: #{forward.21} parent=85 // pred_check_branch
                %777 = sbr.rel (0) target = $region101
              $region100: #{forward.21} parent=85 // pred_region
                loop: start=0, step=1, limit=1
                $region102: #{forward.21} parent=100 // loop_pre_header
                  _
                $region103: #{forward.21} parent=100 // loop_header
                  %s779 = sphi 0, %s783
                  %p780 = scmp.ge.s32.totalorder %s779, 1
                  %s784 = sphi %s749, %s749
                  %s785 = sphi %s755, %s755
                $region104: #{forward.21} parent=100 // loop_header_branch
                  %782 = sbr.rel (%p780) target = $region108
                $region105: #{forward.21} parent=100 // loop_body
                  %v786 = vld [vmem:[%s784] sm:$0xff]
                  %787 = vst [vmem:[%s785] sm:$0xff] %v786
                  %v788 = vld [vmem:[%s784 + $0x8] sm:$0xff]
                  %789 = vst [vmem:[%s785 + $0x10] sm:$0xff] %v788
                $region106: #{forward.21} parent=100 // loop_footer
                  %s783 = sadd.s32 1, %s779
                $region107: #{forward.21} parent=100 // loop_footer_branch
                  %778 = sbr.rel target = $region103
                $region108: #{forward.21} parent=100 // loop_exit
                  _
              $region101: #{forward.21} parent=85 // pred_fallthru
                _
              // Predicated region
              $region109: #{forward.21} parent=85 // pred_check
                _
              $region110: #{forward.21} parent=85 // pred_check_branch
                %791 = sbr.rel target = $region112
              $region111: #{forward.21} parent=85 // pred_region
                _
              $region112: #{forward.21} parent=85 // pred_fallthru
                _
            $region86: #{forward.21} parent=81 // pred_fallthru
              _
            // Predicated region
            $region87: #{forward.21} parent=81 // pred_check
              _
            $region88: #{forward.21} parent=81 // pred_check_branch
              %761 = sbr.rel target = $region90
            $region89: #{forward.21} parent=81 // pred_region
              %s763 = ssub.s32 256, 1
              loop: start=0, step=1, limit=1
              $region91: #{forward.21} parent=89 // loop_pre_header
                _
              $region92: #{forward.21} parent=89 // loop_header
                %s765 = sphi 0, %s769
                %p766 = scmp.ge.s32.totalorder %s765, 1
                %s770 = sphi %s749, %s749
                %s771 = sphi %s755, %s755
              $region93: #{forward.21} parent=89 // loop_header_branch
                %768 = sbr.rel (%p766) target = $region97
              $region94: #{forward.21} parent=89 // loop_body
                %v772 = vld [vmem:[%s770] sm:%s763]
                %773 = vst [vmem:[%s771] sm:%s763] %v772
                %v774 = vld [vmem:[%s770 + $0x8] sm:%s763]
                %775 = vst [vmem:[%s771 + $0x10] sm:%s763] %v774
              $region95: #{forward.21} parent=89 // loop_footer
                %s769 = sadd.s32 1, %s765
              $region96: #{forward.21} parent=89 // loop_footer_branch
                %764 = sbr.rel target = $region92
              $region97: #{forward.21} parent=89 // loop_exit
                _
            $region90: #{forward.21} parent=81 // pred_fallthru
              _
          $region82: #{forward.21} parent=77 // pred_fallthru
            _
          %792 = vnop
        $region78: #{forward.21} parent=69 // pred_fallthru
          _
      $region70: #{forward.21} parent=5 // pred_fallthru
        _
      %p793 = scmp.le.s32.totalorder 2, %s10
      // Predicated region
      $region113: #{forward.21} parent=5 // pred_check
        %p794 = pneg %p793
      $region114: #{forward.21} parent=5 // pred_check_branch
        %796 = sbr.rel (%p794) target = $region116
      $region115: #{forward.21} parent=5 // pred_region
        %s797 = ssub.s32 %s10, 2
        // Predicated region
        $region117: #{forward.21} parent=115 // pred_check
          %p798 = pneg %p128
        $region118: #{forward.21} parent=115 // pred_check_branch
          %800 = sbr.rel (%p798) target = $region120
        $region119: #{forward.21} parent=115 // pred_region
          %s801 = sand.u32 %s113, 1
          %s802 = sand.u32 %s113, 1
          %s803 = smul.addr %s802, 16
          %s804 = scalar_lea.vmem [#allocation3], %s803
        $region120: #{forward.21} parent=115 // pred_fallthru
          _
      $region116: #{forward.21} parent=5 // pred_fallthru
        _
    $region6: #{forward.21} parent=1 // loop_footer
      %s14 = sadd.s32 1, %s10
    $region7: #{forward.21} parent=1 // loop_footer_branch
      %9 = sbr.rel target = $region3
    $region8: #{forward.21} parent=1 // loop_exit
      _

// kernel: forward.22
$region0: #{forward.22}
  #allocation0 [shape = 'u32[]', space=smem, size = 0x4, offset = 0x4, fixed_abs, tag = 'smem constant byte address 0x4 - core index']
  #allocation1 [shape = 'u32[144,128]{1,0:T(1,128)}', space=vmem, size = 0x12000, scoped, tag = 'internal scratch']
  %s0 = inlined_call_operand.vmem [shape: bf16[32,288], index: 0, kind: input, shape index: {}]
  %s1 = inlined_call_operand.vmem [shape: bf16[288,512], index: 1, kind: input, shape index: {}]
  %s2 = inlined_call_operand.vmem [shape: f32[32,1], index: 2, kind: input, shape index: {}]
  %s3 = inlined_call_operand.vmem [shape: f32[32,1], index: 3, kind: input, shape index: {}]
  %s4 = inlined_call_operand.vmem [shape: bf16[32,512], index: 4, kind: output, shape index: {}]
  %s5 = sld [smem:[#allocation0]]
  $region121: #{forward.22} parent=0
    _
  %s7 = ssub.s32 1, %s5
  %s8 = scalar_select 0, %s7, %s5
  $region1: #{forward.22} parent=0
    #allocation2 [shape = 'u8[294912]{0}', space=vmem, size = 0x48000, scoped, tag = 'input window, operand 1']
    #allocation3 [shape = 'u8[32768]{0}', space=vmem, size = 0x8000, scoped, tag = 'output window, operand 0']
    loop: start=0, step=1, limit=4
    $region2: #{forward.22} parent=1 // loop_pre_header
      _
    $region3: #{forward.22} parent=1 // loop_header
      %s10 = sphi 0, %s14
      %p11 = scmp.ge.s32.totalorder %s10, 4
      %s18 = sphi 0, %s18
      %s20 = sphi 0, %s18
      %s21 = sphi 0, %s20
      %s35 = sphi 0, %s21
      %s41 = sphi 0, %s43
      %s44 = sphi 0, %s41
      %s45 = sphi 0, %s44
      %s61 = sphi 0, %s45
      %s65 = sphi 0, %s65
      %s67 = sphi 0, %s65
      %s68 = sphi 0, %s67
      %s82 = sphi 0, %s68
      %s86 = sphi 0, %s86
      %s88 = sphi 0, %s86
      %s89 = sphi 0, %s88
      %s103 = sphi 0, %s89
      %s109 = sphi 0, %s111
      %s112 = sphi 0, %s109
      %s113 = sphi 0, %s112
      %s129 = sphi 0, %s113
    $region4: #{forward.22} parent=1 // loop_header_branch
      %13 = sbr.rel (%p11) target = $region8
    $region5: #{forward.22} parent=1 // loop_body
      %s15 = ssub.s32 %s10, 1
      %s16 = ssub.s32 %s10, 2
      %s17 = sadd.s32 %s10, 1
      %s19 = sadd.s32 %s18, 1
      %p22 = scmp.eq.s32.totalorder %s10, 1
      %p23 = scmp.ne.s32.totalorder %s18, %s20
      %p24 = scmp.eq.s32.totalorder %s10, 0
      %p25 = por %p23, %p24
      %p26 = scmp.ne.s32.totalorder %s18, %s20
      %p27 = scmp.eq.s32.totalorder %s15, 1
      %p28 = por %p26, %p27
      %p29 = scmp.ne.s32.totalorder %s20, %s21
      %p30 = scmp.eq.s32.totalorder %s15, 0
      %p31 = por %p29, %p30
      %p32 = scmp.ne.s32.totalorder %s20, %s21
      %p33 = scmp.eq.s32.totalorder %s16, 1
      %p34 = por %p32, %p33
      %p36 = scmp.ne.s32.totalorder %s21, %s35
      %p37 = scmp.eq.s32.totalorder %s16, 0
      %p38 = por %p36, %p37
      %s39 = ssub.s32 %s10, %s17
      %p40 = scmp.eq.s32.totalorder %s39, 0
      %s42 = sadd.s32 %s41, 1
      %s43 = scalar_select %p40, %s41, %s42
      %p46 = pneg %p40
      %p47 = scmp.eq.s32.totalorder %s10, 1
      %p48 = por %p46, %p47
      %p49 = scmp.ne.s32.totalorder %s41, %s44
      %p50 = scmp.eq.s32.totalorder %s10, 0
      %p51 = por %p49, %p50
      %p52 = scmp.ne.s32.totalorder %s41, %s44
      %p53 = scmp.eq.s32.totalorder %s15, 1
      %p54 = por %p52, %p53
      %p55 = scmp.ne.s32.totalorder %s44, %s45
      %p56 = scmp.eq.s32.totalorder %s15, 0
      %p57 = por %p55, %p56
      %p58 = scmp.ne.s32.totalorder %s44, %s45
      %p59 = scmp.eq.s32.totalorder %s16, 1
      %p60 = por %p58, %p59
      %p62 = scmp.ne.s32.totalorder %s45, %s61
      %p63 = scmp.eq.s32.totalorder %s16, 0
      %p64 = por %p62, %p63
      %s66 = sadd.s32 %s65, 1
      %p69 = scmp.eq.s32.totalorder %s10, 1
      %p70 = scmp.ne.s32.totalorder %s65, %s67
      %p71 = scmp.eq.s32.totalorder %s10, 0
      %p72 = por %p70, %p71
      %p73 = scmp.ne.s32.totalorder %s65, %s67
      %p74 = scmp.eq.s32.totalorder %s15, 1
      %p75 = por %p73, %p74
      %p76 = scmp.ne.s32.totalorder %s67, %s68
      %p77 = scmp.eq.s32.totalorder %s15, 0
      %p78 = por %p76, %p77
      %p79 = scmp.ne.s32.totalorder %s67, %s68
      %p80 = scmp.eq.s32.totalorder %s16, 1
      %p81 = por %p79, %p80
      %p83 = scmp.ne.s32.totalorder %s68, %s82
      %p84 = scmp.eq.s32.totalorder %s16, 0
      %p85 = por %p83, %p84
      %s87 = sadd.s32 %s86, 1
      %p90 = scmp.eq.s32.totalorder %s10, 1
      %p91 = scmp.ne.s32.totalorder %s86, %s88
      %p92 = scmp.eq.s32.totalorder %s10, 0
      %p93 = por %p91, %p92
      %p94 = scmp.ne.s32.totalorder %s86, %s88
      %p95 = scmp.eq.s32.totalorder %s15, 1
      %p96 = por %p94, %p95
      %p97 = scmp.ne.s32.totalorder %s88, %s89
      %p98 = scmp.eq.s32.totalorder %s15, 0
      %p99 = por %p97, %p98
      %p100 = scmp.ne.s32.totalorder %s88, %s89
      %p101 = scmp.eq.s32.totalorder %s16, 1
      %p102 = por %p100, %p101
      %p104 = scmp.ne.s32.totalorder %s89, %s103
      %p105 = scmp.eq.s32.totalorder %s16, 0
      %p106 = por %p104, %p105
      %s107 = ssub.s32 %s10, %s17
      %p108 = scmp.eq.s32.totalorder %s107, 0
      %s110 = sadd.s32 %s109, 1
      %s111 = scalar_select %p108, %s109, %s110
      %p114 = pneg %p108
      %p115 = scmp.eq.s32.totalorder %s10, 1
      %p116 = por %p114, %p115
      %p117 = scmp.ne.s32.totalorder %s109, %s112
      %p118 = scmp.eq.s32.totalorder %s10, 0
      %p119 = por %p117, %p118
      %p120 = scmp.ne.s32.totalorder %s109, %s112
      %p121 = scmp.eq.s32.totalorder %s15, 1
      %p122 = por %p120, %p121
      %p123 = scmp.ne.s32.totalorder %s112, %s113
      %p124 = scmp.eq.s32.totalorder %s15, 0
      %p125 = por %p123, %p124
      %p126 = scmp.ne.s32.totalorder %s112, %s113
      %p127 = scmp.eq.s32.totalorder %s16, 1
      %p128 = por %p126, %p127
      %p130 = scmp.ne.s32.totalorder %s113, %s129
      %p131 = scmp.eq.s32.totalorder %s16, 0
      %p132 = por %p130, %p131
      %p133 = scmp.le.s32.totalorder 1, %s10
      %p134 = scmp.lt.s32.totalorder %s10, 3
      %p135 = pnand %p133, %p134
      %p136 = pneg %p135
      // Predicated region
      $region9: #{forward.22} parent=5 // pred_check
        _
      $region10: #{forward.22} parent=5 // pred_check_branch
        %138 = sbr.rel (%p135) target = $region12
      $region11: #{forward.22} parent=5 // pred_region
        %s139 = ssub.s32 %s10, 1
        // Predicated region
        $region13: #{forward.22} parent=11 // pred_check
          %p140 = pneg %p31
        $region14: #{forward.22} parent=11 // pred_check_branch
          %142 = sbr.rel (%p140) target = $region16
        $region15: #{forward.22} parent=11 // pred_region
          _
        $region16: #{forward.22} parent=11 // pred_fallthru
          _
        // Predicated region
        $region17: #{forward.22} parent=11 // pred_check
          %p143 = pneg %p78
        $region18: #{forward.22} parent=11 // pred_check_branch
          %145 = sbr.rel (%p143) target = $region20
        $region19: #{forward.22} parent=11 // pred_region
          _
        $region20: #{forward.22} parent=11 // pred_fallthru
          _
        // Predicated region
        $region21: #{forward.22} parent=11 // pred_check
          %p146 = pneg %p99
        $region22: #{forward.22} parent=11 // pred_check_branch
          %148 = sbr.rel (%p146) target = $region24
        $region23: #{forward.22} parent=11 // pred_region
          _
        $region24: #{forward.22} parent=11 // pred_fallthru
          _
      $region12: #{forward.22} parent=5 // pred_fallthru
        _
      %p149 = scmp.lt.s32.totalorder %s10, 2
      // Predicated region
      $region25: #{forward.22} parent=5 // pred_check
        %p150 = pneg %p149
      $region26: #{forward.22} parent=5 // pred_check_branch
        %152 = sbr.rel (%p150) target = $region28
      $region27: #{forward.22} parent=5 // pred_region
        // Predicated region
        $region29: #{forward.22} parent=27 // pred_check
          %p153 = pneg %p51
        $region30: #{forward.22} parent=27 // pred_check_branch
          %155 = sbr.rel (%p153) target = $region32
        $region31: #{forward.22} parent=27 // pred_region
          %s156 = sand.u32 %s41, 1
          %s157 = sand.u32 %s41, 1
          %s158 = smul.addr %s157, 288
          %s159 = scalar_lea.vmem [#allocation2], %s158
          %s160 = smul.u32 2, %s10
          %s161 = smul.addr %s160, 4
          %s162 = scalar_lea.vmem %s1, %s161
          // Predicated region
          $region33: #{forward.22} parent=31 // pred_check
            _
          $region34: #{forward.22} parent=31 // pred_check_branch
            %164 = sbr.rel (0) target = $region36
          $region35: #{forward.22} parent=31 // pred_region
            // Predicated region
            $region37: #{forward.22} parent=35 // pred_check
              _
            $region38: #{forward.22} parent=35 // pred_check_branch
              %166 = sbr.rel (0) target = $region40
            $region39: #{forward.22} parent=35 // pred_region
              // Predicated region
              $region52: #{forward.22} parent=39 // pred_check
                _
              $region53: #{forward.22} parent=39 // pred_check_branch
                %252 = sbr.rel (0) target = $region55
              $region54: #{forward.22} parent=39 // pred_region
                loop: start=0, step=1, limit=1
                $region56: #{forward.22} parent=54 // loop_pre_header
                  _
                $region57: #{forward.22} parent=54 // loop_header
                  %s254 = sphi 0, %s258
                  %p255 = scmp.ge.s32.totalorder %s254, 1
                  %s259 = sphi %s162, %s162
                  %s260 = sphi %s159, %s159
                $region58: #{forward.22} parent=54 // loop_header_branch
                  %257 = sbr.rel (%p255) target = $region62
                $region59: #{forward.22} parent=54 // loop_body
                  %v261 = vld [vmem:[%s259] sm:$0xff]
                  %262 = vst [vmem:[%s260] sm:$0xff] %v261
                  %v263 = vld [vmem:[%s259 + $0x10] sm:$0xff]
                  %264 = vst [vmem:[%s260 + $0x8] sm:$0xff] %v263
                  %v265 = vld [vmem:[%s259 + $0x20] sm:$0xff]
                  %266 = vst [vmem:[%s260 + $0x10] sm:$0xff] %v265
                  %v267 = vld [vmem:[%s259 + $0x30] sm:$0xff]
                  %268 = vst [vmem:[%s260 + $0x18] sm:$0xff] %v267
                  %v269 = vld [vmem:[%s259 + $0x40] sm:$0xff]
                  %270 = vst [vmem:[%s260 + $0x20] sm:$0xff] %v269
                  %v271 = vld [vmem:[%s259 + $0x50] sm:$0xff]
                  %272 = vst [vmem:[%s260 + $0x28] sm:$0xff] %v271
                  %v273 = vld [vmem:[%s259 + $0x60] sm:$0xff]
                  %274 = vst [vmem:[%s260 + $0x30] sm:$0xff] %v273
                  %v275 = vld [vmem:[%s259 + $0x70] sm:$0xff]
                  %276 = vst [vmem:[%s260 + $0x38] sm:$0xff] %v275
                  %v277 = vld [vmem:[%s259 + $0x80] sm:$0xff]
                  %278 = vst [vmem:[%s260 + $0x40] sm:$0xff] %v277
                  %v279 = vld [vmem:[%s259 + $0x90] sm:$0xff]
                  %280 = vst [vmem:[%s260 + $0x48] sm:$0xff] %v279
                  %v281 = vld [vmem:[%s259 + $0xa0] sm:$0xff]
                  %282 = vst [vmem:[%s260 + $0x50] sm:$0xff] %v281
                  %v283 = vld [vmem:[%s259 + $0xb0] sm:$0xff]
                  %284 = vst [vmem:[%s260 + $0x58] sm:$0xff] %v283
                  %v285 = vld [vmem:[%s259 + $0xc0] sm:$0xff]
                  %286 = vst [vmem:[%s260 + $0x60] sm:$0xff] %v285
                  %v287 = vld [vmem:[%s259 + $0xd0] sm:$0xff]
                  %288 = vst [vmem:[%s260 + $0x68] sm:$0xff] %v287
                  %v289 = vld [vmem:[%s259 + $0xe0] sm:$0xff]
                  %290 = vst [vmem:[%s260 + $0x70] sm:$0xff] %v289
                  %v291 = vld [vmem:[%s259 + $0xf0] sm:$0xff]
                  %292 = vst [vmem:[%s260 + $0x78] sm:$0xff] %v291
                  %v293 = vld [vmem:[%s259 + $0x100] sm:$0xff]
                  %294 = vst [vmem:[%s260 + $0x80] sm:$0xff] %v293
                  %v295 = vld [vmem:[%s259 + $0x110] sm:$0xff]
                  %296 = vst [vmem:[%s260 + $0x88] sm:$0xff] %v295
                  %v297 = vld [vmem:[%s259 + $0x120] sm:$0xff]
                  %298 = vst [vmem:[%s260 + $0x90] sm:$0xff] %v297
                  %v299 = vld [vmem:[%s259 + $0x130] sm:$0xff]
                  %300 = vst [vmem:[%s260 + $0x98] sm:$0xff] %v299
                  %v301 = vld [vmem:[%s259 + $0x140] sm:$0xff]
                  %302 = vst [vmem:[%s260 + $0xa0] sm:$0xff] %v301
                  %v303 = vld [vmem:[%s259 + $0x150] sm:$0xff]
                  %304 = vst [vmem:[%s260 + $0xa8] sm:$0xff] %v303
                  %v305 = vld [vmem:[%s259 + $0x160] sm:$0xff]
                  %306 = vst [vmem:[%s260 + $0xb0] sm:$0xff] %v305
                  %v307 = vld [vmem:[%s259 + $0x170] sm:$0xff]
                  %308 = vst [vmem:[%s260 + $0xb8] sm:$0xff] %v307
                  %v309 = vld [vmem:[%s259 + $0x180] sm:$0xff]
                  %310 = vst [vmem:[%s260 + $0xc0] sm:$0xff] %v309
                  %v311 = vld [vmem:[%s259 + $0x190] sm:$0xff]
                  %312 = vst [vmem:[%s260 + $0xc8] sm:$0xff] %v311
                  %v313 = vld [vmem:[%s259 + $0x1a0] sm:$0xff]
                  %314 = vst [vmem:[%s260 + $0xd0] sm:$0xff] %v313
                  %v315 = vld [vmem:[%s259 + $0x1b0] sm:$0xff]
                  %316 = vst [vmem:[%s260 + $0xd8] sm:$0xff] %v315
                  %v317 = vld [vmem:[%s259 + $0x1c0] sm:$0xff]
                  %318 = vst [vmem:[%s260 + $0xe0] sm:$0xff] %v317
                  %v319 = vld [vmem:[%s259 + $0x1d0] sm:$0xff]
                  %320 = vst [vmem:[%s260 + $0xe8] sm:$0xff] %v319
                  %v321 = vld [vmem:[%s259 + $0x1e0] sm:$0xff]
                  %322 = vst [vmem:[%s260 + $0xf0] sm:$0xff] %v321
                  %v323 = vld [vmem:[%s259 + $0x1f0] sm:$0xff]
                  %324 = vst [vmem:[%s260 + $0xf8] sm:$0xff] %v323
                  %v325 = vld [vmem:[%s259 + $0x200] sm:$0xff]
                  %326 = vst [vmem:[%s260 + $0x100] sm:$0xff] %v325
                  %v327 = vld [vmem:[%s259 + $0x210] sm:$0xff]
                  %328 = vst [vmem:[%s260 + $0x108] sm:$0xff] %v327
                  %v329 = vld [vmem:[%s259 + $0x220] sm:$0xff]
                  %330 = vst [vmem:[%s260 + $0x110] sm:$0xff] %v329
                  %v331 = vld [vmem:[%s259 + $0x230] sm:$0xff]
                  %332 = vst [vmem:[%s260 + $0x118] sm:$0xff] %v331
                $region60: #{forward.22} parent=54 // loop_footer
                  %s258 = sadd.s32 1, %s254
                $region61: #{forward.22} parent=54 // loop_footer_branch
                  %253 = sbr.rel target = $region57
                $region62: #{forward.22} parent=54 // loop_exit
                  _
              $region55: #{forward.22} parent=39 // pred_fallthru
                _
              // Predicated region
              $region63: #{forward.22} parent=39 // pred_check
                _
              $region64: #{forward.22} parent=39 // pred_check_branch
                %334 = sbr.rel target = $region66
              $region65: #{forward.22} parent=39 // pred_region
                _
              $region66: #{forward.22} parent=39 // pred_fallthru
                _
            $region40: #{forward.22} parent=35 // pred_fallthru
              _
            // Predicated region
            $region41: #{forward.22} parent=35 // pred_check
              _
            $region42: #{forward.22} parent=35 // pred_check_branch
              %168 = sbr.rel target = $region44
            $region43: #{forward.22} parent=35 // pred_region
              %s170 = ssub.s32 256, 1
              loop: start=0, step=1, limit=1
              $region45: #{forward.22} parent=43 // loop_pre_header
                _
              $region46: #{forward.22} parent=43 // loop_header
                %s172 = sphi 0, %s176
                %p173 = scmp.ge.s32.totalorder %s172, 1
                %s177 = sphi %s162, %s162
                %s178 = sphi %s159, %s159
              $region47: #{forward.22} parent=43 // loop_header_branch
                %175 = sbr.rel (%p173) target = $region51
              $region48: #{forward.22} parent=43 // loop_body
                %v179 = vld [vmem:[%s177] sm:%s170]
                %180 = vst [vmem:[%s178] sm:%s170] %v179
                %v181 = vld [vmem:[%s177 + $0x10] sm:%s170]
                %182 = vst [vmem:[%s178 + $0x8] sm:%s170] %v181
                %v183 = vld [vmem:[%s177 + $0x20] sm:%s170]
                %184 = vst [vmem:[%s178 + $0x10] sm:%s170] %v183
                %v185 = vld [vmem:[%s177 + $0x30] sm:%s170]
                %186 = vst [vmem:[%s178 + $0x18] sm:%s170] %v185
                %v187 = vld [vmem:[%s177 + $0x40] sm:%s170]
                %188 = vst [vmem:[%s178 + $0x20] sm:%s170] %v187
                %v189 = vld [vmem:[%s177 + $0x50] sm:%s170]
                %190 = vst [vmem:[%s178 + $0x28] sm:%s170] %v189
                %v191 = vld [vmem:[%s177 + $0x60] sm:%s170]
                %192 = vst [vmem:[%s178 + $0x30] sm:%s170] %v191
                %v193 = vld [vmem:[%s177 + $0x70] sm:%s170]
                %194 = vst [vmem:[%s178 + $0x38] sm:%s170] %v193
                %v195 = vld [vmem:[%s177 + $0x80] sm:%s170]
                %196 = vst [vmem:[%s178 + $0x40] sm:%s170] %v195
                %v197 = vld [vmem:[%s177 + $0x90] sm:%s170]
                %198 = vst [vmem:[%s178 + $0x48] sm:%s170] %v197
                %v199 = vld [vmem:[%s177 + $0xa0] sm:%s170]
                %200 = vst [vmem:[%s178 + $0x50] sm:%s170] %v199
                %v201 = vld [vmem:[%s177 + $0xb0] sm:%s170]
                %202 = vst [vmem:[%s178 + $0x58] sm:%s170] %v201
                %v203 = vld [vmem:[%s177 + $0xc0] sm:%s170]
                %204 = vst [vmem:[%s178 + $0x60] sm:%s170] %v203
                %v205 = vld [vmem:[%s177 + $0xd0] sm:%s170]
                %206 = vst [vmem:[%s178 + $0x68] sm:%s170] %v205
                %v207 = vld [vmem:[%s177 + $0xe0] sm:%s170]
                %208 = vst [vmem:[%s178 + $0x70] sm:%s170] %v207
                %v209 = vld [vmem:[%s177 + $0xf0] sm:%s170]
                %210 = vst [vmem:[%s178 + $0x78] sm:%s170] %v209
                %v211 = vld [vmem:[%s177 + $0x100] sm:%s170]
                %212 = vst [vmem:[%s178 + $0x80] sm:%s170] %v211
                %v213 = vld [vmem:[%s177 + $0x110] sm:%s170]
                %214 = vst [vmem:[%s178 + $0x88] sm:%s170] %v213
                %v215 = vld [vmem:[%s177 + $0x120] sm:%s170]
                %216 = vst [vmem:[%s178 + $0x90] sm:%s170] %v215
                %v217 = vld [vmem:[%s177 + $0x130] sm:%s170]
                %218 = vst [vmem:[%s178 + $0x98] sm:%s170] %v217
                %v219 = vld [vmem:[%s177 + $0x140] sm:%s170]
                %220 = vst [vmem:[%s178 + $0xa0] sm:%s170] %v219
                %v221 = vld [vmem:[%s177 + $0x150] sm:%s170]
                %222 = vst [vmem:[%s178 + $0xa8] sm:%s170] %v221
                %v223 = vld [vmem:[%s177 + $0x160] sm:%s170]
                %224 = vst [vmem:[%s178 + $0xb0] sm:%s170] %v223
                %v225 = vld [vmem:[%s177 + $0x170] sm:%s170]
                %226 = vst [vmem:[%s178 + $0xb8] sm:%s170] %v225
                %v227 = vld [vmem:[%s177 + $0x180] sm:%s170]
                %228 = vst [vmem:[%s178 + $0xc0] sm:%s170] %v227
                %v229 = vld [vmem:[%s177 + $0x190] sm:%s170]
                %230 = vst [vmem:[%s178 + $0xc8] sm:%s170] %v229
                %v231 = vld [vmem:[%s177 + $0x1a0] sm:%s170]
                %232 = vst [vmem:[%s178 + $0xd0] sm:%s170] %v231
                %v233 = vld [vmem:[%s177 + $0x1b0] sm:%s170]
                %234 = vst [vmem:[%s178 + $0xd8] sm:%s170] %v233
                %v235 = vld [vmem:[%s177 + $0x1c0] sm:%s170]
                %236 = vst [vmem:[%s178 + $0xe0] sm:%s170] %v235
                %v237 = vld [vmem:[%s177 + $0x1d0] sm:%s170]
                %238 = vst [vmem:[%s178 + $0xe8] sm:%s170] %v237
                %v239 = vld [vmem:[%s177 + $0x1e0] sm:%s170]
                %240 = vst [vmem:[%s178 + $0xf0] sm:%s170] %v239
                %v241 = vld [vmem:[%s177 + $0x1f0] sm:%s170]
                %242 = vst [vmem:[%s178 + $0xf8] sm:%s170] %v241
                %v243 = vld [vmem:[%s177 + $0x200] sm:%s170]
                %244 = vst [vmem:[%s178 + $0x100] sm:%s170] %v243
                %v245 = vld [vmem:[%s177 + $0x210] sm:%s170]
                %246 = vst [vmem:[%s178 + $0x108] sm:%s170] %v245
                %v247 = vld [vmem:[%s177 + $0x220] sm:%s170]
                %248 = vst [vmem:[%s178 + $0x110] sm:%s170] %v247
                %v249 = vld [vmem:[%s177 + $0x230] sm:%s170]
                %250 = vst [vmem:[%s178 + $0x118] sm:%s170] %v249
              $region49: #{forward.22} parent=43 // loop_footer
                %s176 = sadd.s32 1, %s172
              $region50: #{forward.22} parent=43 // loop_footer_branch
                %171 = sbr.rel target = $region46
              $region51: #{forward.22} parent=43 // loop_exit
                _
            $region44: #{forward.22} parent=35 // pred_fallthru
              _
          $region36: #{forward.22} parent=31 // pred_fallthru
            _
          %335 = vnop
        $region32: #{forward.22} parent=27 // pred_fallthru
          _
      $region28: #{forward.22} parent=5 // pred_fallthru
        _
      %p336 = scmp.le.s32.totalorder 1, %s10
      %p337 = scmp.lt.s32.totalorder %s10, 3
      %p338 = pnand %p336, %p337
      %p339 = pneg %p338
      // Predicated region
      $region67: #{forward.22} parent=5 // pred_check
        _
      $region68: #{forward.22} parent=5 // pred_check_branch
        %341 = sbr.rel (%p338) target = $region70
      $region69: #{forward.22} parent=5 // pred_region
        %s342 = ssub.s32 %s10, 1
        %s343 = sand.u32 %s44, 1
        %s344 = sand.u32 %s44, 1
        %s345 = smul.addr %s344, 288
        %s346 = scalar_lea.vmem [#allocation2], %s345
        // Predicated region
        $region71: #{forward.22} parent=69 // pred_check
          %p347 = pneg %p57
        $region72: #{forward.22} parent=69 // pred_check_branch
          %349 = sbr.rel (%p347) target = $region74
        $region73: #{forward.22} parent=69 // pred_region
          _
        $region74: #{forward.22} parent=69 // pred_fallthru
          _
        %p350 = pneg %p31
        %p351 = pneg %p28
        %s352 = sand.u32 %s44, 1
        %s353 = sand.u32 %s44, 1
        %s354 = smul.addr %s353, 288
        %s355 = scalar_lea.vmem [#allocation2], %s354
        %p356 = pneg %p57
        %p357 = pneg %p54
        %p358 = pneg %p78
        %p359 = pneg %p75
        %p360 = pneg %p99
        %p361 = pneg %p96
        %p362 = pneg %p125
        %p363 = pneg %p122
        %s364 = sand.u32 %s112, 1
        %s365 = sand.u32 %s112, 1
        %s366 = smul.addr %s365, 32
        %s367 = scalar_lea.vmem [#allocation3], %s366
        %s368 = smul.u32 2, %s15
        %s369 = smul.u32 2, %s15
        %v371 = vld [vmem:[%s0] sm:$0xff]
        %v372 = vld [vmem:[%s0 + $0x8] sm:$0xf]
        %v373 = vld [vmem:[%s0 + $0xc] sm:$0xff]
        %v374 = vld [vmem:[%s0 + $0x14] sm:$0xf]
        %v375 = vld [vmem:[%s0 + $0x18] sm:$0xff]
        %v376 = vld [vmem:[%s0 + $0x20] sm:$0xf]
        %v377 = vld [vmem:[%s0 + $0x24] sm:$0xff]
        %v378 = vld [vmem:[%s0 + $0x2c] sm:$0xf]
        %v379 = vld [vmem:[%s346] sm:$0xff]
        %v380 = vld [vmem:[%s346 + $0x8] sm:$0xff]
        %v381 = vld [vmem:[%s346 + $0x10] sm:$0xff]
        %v382 = vld [vmem:[%s346 + $0x18] sm:$0xff]
        %v383 = vld [vmem:[%s346 + $0x20] sm:$0xff]
        %v384 = vld [vmem:[%s346 + $0x28] sm:$0xff]
        %v385 = vld [vmem:[%s346 + $0x30] sm:$0xff]
        %v386 = vld [vmem:[%s346 + $0x38] sm:$0xff]
        %v387 = vld [vmem:[%s346 + $0x40] sm:$0xff]
        %v388 = vld [vmem:[%s346 + $0x48] sm:$0xff]
        %v389 = vld [vmem:[%s346 + $0x50] sm:$0xff]
        %v390 = vld [vmem:[%s346 + $0x58] sm:$0xff]
        %v391 = vld [vmem:[%s346 + $0x60] sm:$0xff]
        %v392 = vld [vmem:[%s346 + $0x68] sm:$0xff]
        %v393 = vld [vmem:[%s346 + $0x70] sm:$0xff]
        %v394 = vld [vmem:[%s346 + $0x78] sm:$0xff]
        %v395 = vld [vmem:[%s346 + $0x80] sm:$0xff]
        %v396 = vld [vmem:[%s346 + $0x88] sm:$0xff]
        %v397 = vld [vmem:[%s346 + $0x90] sm:$0xff]
        %v398 = vld [vmem:[%s346 + $0x98] sm:$0xff]
        %v399 = vld [vmem:[%s346 + $0xa0] sm:$0xff]
        %v400 = vld [vmem:[%s346 + $0xa8] sm:$0xff]
        %v401 = vld [vmem:[%s346 + $0xb0] sm:$0xff]
        %v402 = vld [vmem:[%s346 + $0xb8] sm:$0xff]
        %v403 = vld [vmem:[%s346 + $0xc0] sm:$0xff]
        %v404 = vld [vmem:[%s346 + $0xc8] sm:$0xff]
        %v405 = vld [vmem:[%s346 + $0xd0] sm:$0xff]
        %v406 = vld [vmem:[%s346 + $0xd8] sm:$0xff]
        %v407 = vld [vmem:[%s346 + $0xe0] sm:$0xff]
        %v408 = vld [vmem:[%s346 + $0xe8] sm:$0xff]
        %v409 = vld [vmem:[%s346 + $0xf0] sm:$0xff]
        %v410 = vld [vmem:[%s346 + $0xf8] sm:$0xff]
        %v411 = vld [vmem:[%s346 + $0x100] sm:$0xff]
        %v412 = vld [vmem:[%s346 + $0x108] sm:$0xff]
        %v413 = vld [vmem:[%s346 + $0x110] sm:$0xff]
        %v414 = vld [vmem:[%s346 + $0x118] sm:$0xff]
        %v423 = vunpack.c.l.b16 %v371
        %v424 = vunpack.c.h.b16 %v371
        %v425 = vunpack.c.l.b16 %v372
        %v426 = vunpack.c.l.b16 %v373
        %v427 = vunpack.c.h.b16 %v373
        %v428 = vunpack.c.l.b16 %v374
        %v429 = vunpack.c.l.b16 %v375
        %v430 = vunpack.c.h.b16 %v375
        %v431 = vunpack.c.l.b16 %v376
        %v432 = vunpack.c.l.b16 %v377
        %v433 = vunpack.c.h.b16 %v377
        %v434 = vunpack.c.l.b16 %v378
        %v435 = vpack.c.b16 %v426, %v423
        %v436 = vpack.c.b16 %v427, %v424
        %v437 = vpack.c.b16 %v428, %v425
        %v438 = vpack.c.b16 %v432, %v429
        %v439 = vpack.c.b16 %v433, %v430
        %v440 = vpack.c.b16 %v434, %v431
        %v481 = vunpack.c.l.b16 %v379
        %v482 = vunpack.c.h.b16 %v379
        %v483 = vunpack.c.l.b16 %v380
        %v484 = vunpack.c.h.b16 %v380
        %v485 = vunpack.c.l.b16 %v381
        %v486 = vunpack.c.h.b16 %v381
        %v487 = vunpack.c.l.b16 %v382
        %v488 = vunpack.c.h.b16 %v382
        %v489 = vunpack.c.l.b16 %v383
        %v490 = vunpack.c.h.b16 %v383
        %v491 = vunpack.c.l.b16 %v384
        %v492 = vunpack.c.h.b16 %v384
        %v493 = vunpack.c.l.b16 %v385
        %v494 = vunpack.c.h.b16 %v385
        %v495 = vunpack.c.l.b16 %v386
        %v496 = vunpack.c.h.b16 %v386
        %v497 = vunpack.c.l.b16 %v387
        %v498 = vunpack.c.h.b16 %v387
        %v499 = vunpack.c.l.b16 %v388
        %v500 = vunpack.c.h.b16 %v388
        %v501 = vunpack.c.l.b16 %v389
        %v502 = vunpack.c.h.b16 %v389
        %v503 = vunpack.c.l.b16 %v390
        %v504 = vunpack.c.h.b16 %v390
        %v505 = vunpack.c.l.b16 %v391
        %v506 = vunpack.c.h.b16 %v391
        %v507 = vunpack.c.l.b16 %v392
        %v508 = vunpack.c.h.b16 %v392
        %v509 = vunpack.c.l.b16 %v393
        %v510 = vunpack.c.h.b16 %v393
        %v511 = vunpack.c.l.b16 %v394
        %v512 = vunpack.c.h.b16 %v394
        %v513 = vunpack.c.l.b16 %v395
        %v514 = vunpack.c.h.b16 %v395
        %v515 = vunpack.c.l.b16 %v396
        %v516 = vunpack.c.h.b16 %v396
        %v517 = vunpack.c.l.b16 %v397
        %v518 = vunpack.c.h.b16 %v397
        %v519 = vunpack.c.l.b16 %v398
        %v520 = vunpack.c.h.b16 %v398
        %v521 = vunpack.c.l.b16 %v399
        %v522 = vunpack.c.h.b16 %v399
        %v523 = vunpack.c.l.b16 %v400
        %v524 = vunpack.c.h.b16 %v400
        %v525 = vunpack.c.l.b16 %v401
        %v526 = vunpack.c.h.b16 %v401
        %v527 = vunpack.c.l.b16 %v402
        %v528 = vunpack.c.h.b16 %v402
        %v529 = vunpack.c.l.b16 %v403
        %v530 = vunpack.c.h.b16 %v403
        %v531 = vunpack.c.l.b16 %v404
        %v532 = vunpack.c.h.b16 %v404
        %v533 = vunpack.c.l.b16 %v405
        %v534 = vunpack.c.h.b16 %v405
        %v535 = vunpack.c.l.b16 %v406
        %v536 = vunpack.c.h.b16 %v406
        %v537 = vunpack.c.l.b16 %v407
        %v538 = vunpack.c.h.b16 %v407
        %v539 = vunpack.c.l.b16 %v408
        %v540 = vunpack.c.h.b16 %v408
        %v541 = vunpack.c.l.b16 %v409
        %v542 = vunpack.c.h.b16 %v409
        %v543 = vunpack.c.l.b16 %v410
        %v544 = vunpack.c.h.b16 %v410
        %v545 = vunpack.c.l.b16 %v411
        %v546 = vunpack.c.h.b16 %v411
        %v547 = vunpack.c.l.b16 %v412
        %v548 = vunpack.c.h.b16 %v412
        %v549 = vunpack.c.l.b16 %v413
        %v550 = vunpack.c.h.b16 %v413
        %v551 = vunpack.c.l.b16 %v414
        %v552 = vunpack.c.h.b16 %v414
        %v553 = vpack.c.b16 %v483, %v481
        %v554 = vpack.c.b16 %v484, %v482
        %v555 = vpack.c.b16 %v487, %v485
        %v556 = vpack.c.b16 %v488, %v486
        %v557 = vpack.c.b16 %v491, %v489
        %v558 = vpack.c.b16 %v492, %v490
        %v559 = vpack.c.b16 %v495, %v493
        %v560 = vpack.c.b16 %v496, %v494
        %v561 = vpack.c.b16 %v499, %v497
        %v562 = vpack.c.b16 %v500, %v498
        %v563 = vpack.c.b16 %v503, %v501
        %v564 = vpack.c.b16 %v504, %v502
        %v565 = vpack.c.b16 %v507, %v505
        %v566 = vpack.c.b16 %v508, %v506
        %v567 = vpack.c.b16 %v511, %v509
        %v568 = vpack.c.b16 %v512, %v510
        %v569 = vpack.c.b16 %v515, %v513
        %v570 = vpack.c.b16 %v516, %v514
        %v571 = vpack.c.b16 %v519, %v517
        %v572 = vpack.c.b16 %v520, %v518
        %v573 = vpack.c.b16 %v523, %v521
        %v574 = vpack.c.b16 %v524, %v522
        %v575 = vpack.c.b16 %v527, %v525
        %v576 = vpack.c.b16 %v528, %v526
        %v577 = vpack.c.b16 %v531, %v529
        %v578 = vpack.c.b16 %v532, %v530
        %v579 = vpack.c.b16 %v535, %v533
        %v580 = vpack.c.b16 %v536, %v534
        %v581 = vpack.c.b16 %v539, %v537
        %v582 = vpack.c.b16 %v540, %v538
        %v583 = vpack.c.b16 %v543, %v541
        %v584 = vpack.c.b16 %v544, %v542
        %v585 = vpack.c.b16 %v547, %v545
        %v586 = vpack.c.b16 %v548, %v546
        %v587 = vpack.c.b16 %v551, %v549
        %v588 = vpack.c.b16 %v552, %v550
        %vm625 = vcmask 261120
        %v627 = vsel %vm625, %v437, 0
        %v630 = vsel %vm625, %v440, 0
        %632 = vmatprep.subr.bf16.mxu0 %v568
        %633 = vmatpush1.bf16.msra.mxu0 %v567
        %634 = vmatprep.subr.bf16.mxu0 %v566
        %635 = vmatpush1.bf16.msra.mxu0 %v565
        %636 = vmatprep.subr.bf16.mxu0 %v564
        %637 = vmatpush1.bf16.msra.mxu0 %v563
        %638 = vmatprep.subr.bf16.mxu0 %v562
        %639 = vmatpush1.bf16.msra.mxu0 %v561
        %640 = vmatprep.subr.bf16.mxu0 %v560
        %641 = vmatpush1.bf16.msra.mxu0 %v559
        %642 = vmatprep.subr.bf16.mxu0 %v558
        %643 = vmatpush1.bf16.msra.mxu0 %v557
        %644 = vmatprep.subr.bf16.mxu0 %v556
        %645 = vmatpush1.bf16.msra.mxu0 %v555
        %646 = vmatprep.subr.bf16.mxu0 %v554
        %647 = vmatpush1.bf16.msra.mxu0 %v553
        %648 = vmatprep.subr.bf16.mxu0 %v584
        %649 = vmatpush2.bf16.msra.mxu0 %v583
        %650 = vmatprep.subr.bf16.mxu0 %v582
        %651 = vmatpush2.bf16.msra.mxu0 %v581
        %652 = vmatprep.subr.bf16.mxu0 %v580
        %653 = vmatpush2.bf16.msra.mxu0 %v579
        %654 = vmatprep.subr.bf16.mxu0 %v578
        %655 = vmatpush2.bf16.msra.mxu0 %v577
        %656 = vmatprep.subr.bf16.mxu0 %v576
        %657 = vmatpush2.bf16.msra.mxu0 %v575
        %658 = vmatprep.subr.bf16.mxu0 %v574
        %659 = vmatpush2.bf16.msra.mxu0 %v573
        %660 = vmatprep.subr.bf16.mxu0 %v572
        %661 = vmatpush2.bf16.msra.mxu0 %v571
        %662 = vmatprep.subr.bf16.mxu0 %v570
        %663 = vmatpush2.bf16.msra.mxu0 %v569
        %664 = vmatprep.mubr.bf16.mxu0 %v436
        %665 = vmatmul.mubr.bf16.gmra.mxu0 %v435
        %v666 = vpop.f32.mrf.mxu0
        %v667 = vadd.f32 0.0, %v666
        %v668 = vpop.f32.mrf.mxu0
        %v669 = vadd.f32 0.0, %v668
        %v670 = vpop.f32.mrf.mxu0
        %v671 = vadd.f32 0.0, %v670
        %v672 = vpop.f32.mrf.mxu0
        %v673 = vadd.f32 0.0, %v672
        %674 = vmatprep.mubr.bf16.mxu0 %v439
        %675 = vmatmul.mubr.bf16.gmra.mxu0 %v438
        %v676 = vpop.f32.mrf.mxu0
        %v677 = vadd.f32 0.0, %v676
        %v678 = vpop.f32.mrf.mxu0
        %v679 = vadd.f32 0.0, %v678
        %v680 = vpop.f32.mrf.mxu0
        %v681 = vadd.f32 0.0, %v680
        %v682 = vpop.f32.mrf.mxu0
        %v683 = vadd.f32 0.0, %v682
        %684 = vdwg.mxu0
        %685 = vmatprep.subr.bf16.mxu0 0
        %686 = vmatpush1.bf16.msra.mxu0 0
        %687 = vmatprep.subr.bf16.mxu0 0
        %688 = vmatpush1.bf16.msra.mxu0 0
        %689 = vmatprep.subr.bf16.mxu0 0
        %690 = vmatpush1.bf16.msra.mxu0 0
        %691 = vmatprep.subr.bf16.mxu0 0
        %692 = vmatpush1.bf16.msra.mxu0 0
        %693 = vmatprep.subr.bf16.mxu0 0
        %694 = vmatpush1.bf16.msra.mxu0 0
        %695 = vmatprep.subr.bf16.mxu0 0
        %696 = vmatpush1.bf16.msra.mxu0 0
        %697 = vmatprep.subr.bf16.mxu0 %v588
        %698 = vmatpush1.bf16.msra.mxu0 %v587
        %699 = vmatprep.subr.bf16.mxu0 %v586
        %700 = vmatpush1.bf16.msra.mxu0 %v585
        %701 = vmatprep.subr.bf16.mxu0 0
        %702 = vmatpush2.bf16.msra.mxu0 0
        %703 = vmatprep.subr.bf16.mxu0 0
        %704 = vmatpush2.bf16.msra.mxu0 0
        %705 = vmatprep.subr.bf16.mxu0 0
        %706 = vmatpush2.bf16.msra.mxu0 0
        %707 = vmatprep.subr.bf16.mxu0 0
        %708 = vmatpush2.bf16.msra.mxu0 0
        %709 = vmatprep.subr.bf16.mxu0 0
        %710 = vmatpush2.bf16.msra.mxu0 0
        %711 = vmatprep.subr.bf16.mxu0 0
        %712 = vmatpush2.bf16.msra.mxu0 0
        %713 = vmatprep.subr.bf16.mxu0 0
        %714 = vmatpush2.bf16.msra.mxu0 0
        %715 = vmatprep.subr.bf16.mxu0 0
        %716 = vmatpush2.bf16.msra.mxu0 0
        %717 = vmatprep.mubr.bf16.mxu0 0
        %718 = vmatmul.mubr.bf16.gmra.mxu0 %v627
        %v719 = vpop.f32.mrf.mxu0
        %v720 = vadd.f32 %v667, %v719
        %v721 = vpop.f32.mrf.mxu0
        %v722 = vadd.f32 %v669, %v721
        %v723 = vpop.f32.mrf.mxu0
        %v724 = vadd.f32 %v671, %v723
        %v725 = vpop.f32.mrf.mxu0
        %v726 = vadd.f32 %v673, %v725
        %727 = vmatprep.mubr.bf16.mxu0 0
        %728 = vmatmul.mubr.bf16.gmra.mxu0 %v630
        %v729 = vpop.f32.mrf.mxu0
        %v730 = vadd.f32 %v677, %v729
        %v731 = vpop.f32.mrf.mxu0
        %v732 = vadd.f32 %v679, %v731
        %v733 = vpop.f32.mrf.mxu0
        %v734 = vadd.f32 %v681, %v733
        %v735 = vpop.f32.mrf.mxu0
        %v736 = vadd.f32 %v683, %v735
        %737 = vdwg.mxu0
        %v738 = vld [vmem:[%s2] sm:$0xff]
        %v739 = vld [vmem:[%s2 + $0x8] sm:$0xff]
        %v740 = vld [vmem:[%s2 + $0x10] sm:$0xff]
        %v741 = vld [vmem:[%s2 + $0x18] sm:$0xff]
        %743 = vset.pattern.permute.xlu0 0
        %744 = vperm.xlu0 %743, %v738
        %v745 = vpop.permute.xlu0 %744
        %748 = vset.pattern.permute.xlu0 0
        %749 = vperm.xlu0 %748, %v739
        %v750 = vpop.permute.xlu0 %749
        %753 = vset.pattern.permute.xlu0 0
        %754 = vperm.xlu0 %753, %v740
        %v755 = vpop.permute.xlu0 %754
        %758 = vset.pattern.permute.xlu0 0
        %759 = vperm.xlu0 %758, %v741
        %v760 = vpop.permute.xlu0 %759
        %v762 = vmul.f32 %v720, %v745
        %v763 = vmul.f32 %v722, %v745
        %v764 = vmul.f32 %v724, %v750
        %v765 = vmul.f32 %v726, %v750
        %v766 = vmul.f32 %v730, %v755
        %v767 = vmul.f32 %v732, %v755
        %v768 = vmul.f32 %v734, %v760
        %v769 = vmul.f32 %v736, %v760
        %v770 = vld [vmem:[%s3] sm:$0xff]
        %v771 = vld [vmem:[%s3 + $0x8] sm:$0xff]
        %v772 = vld [vmem:[%s3 + $0x10] sm:$0xff]
        %v773 = vld [vmem:[%s3 + $0x18] sm:$0xff]
        %775 = vset.pattern.permute.xlu0 0
        %776 = vperm.xlu0 %775, %v770
        %v777 = vpop.permute.xlu0 %776
        %780 = vset.pattern.permute.xlu0 0
        %781 = vperm.xlu0 %780, %v771
        %v782 = vpop.permute.xlu0 %781
        %785 = vset.pattern.permute.xlu0 0
        %786 = vperm.xlu0 %785, %v772
        %v787 = vpop.permute.xlu0 %786
        %790 = vset.pattern.permute.xlu0 0
        %791 = vperm.xlu0 %790, %v773
        %v792 = vpop.permute.xlu0 %791
        %v794 = vadd.f32 %v762, %v777
        %v795 = vadd.f32 %v763, %v777
        %v796 = vadd.f32 %v764, %v782
        %v797 = vadd.f32 %v765, %v782
        %v798 = vadd.f32 %v766, %v787
        %v799 = vadd.f32 %v767, %v787
        %v800 = vadd.f32 %v768, %v792
        %v801 = vadd.f32 %v769, %v792
        %v802 = vmax.f32 %v794, 0.0
        %v803 = vmax.f32 %v795, 0.0
        %v804 = vmax.f32 %v796, 0.0
        %v805 = vmax.f32 %v797, 0.0
        %v806 = vmax.f32 %v798, 0.0
        %v807 = vmax.f32 %v799, 0.0
        %v808 = vmax.f32 %v800, 0.0
        %v809 = vmax.f32 %v801, 0.0
        %v810 = vpack.c.bf16 %v804, %v802
        %v811 = vpack.c.bf16 %v805, %v803
        %v812 = vpack.c.bf16 %v808, %v806
        %v813 = vpack.c.bf16 %v809, %v807
        %v818 = vunpack.c.l.b16 %v810
        %v819 = vunpack.c.l.b16 %v811
        %v820 = vunpack.c.h.b16 %v810
        %v821 = vunpack.c.h.b16 %v811
        %v822 = vunpack.c.l.b16 %v812
        %v823 = vunpack.c.l.b16 %v813
        %v824 = vunpack.c.h.b16 %v812
        %v825 = vunpack.c.h.b16 %v813
        %v826 = vpack.c.b16 %v819, %v818
        %v827 = vpack.c.b16 %v821, %v820
        %v828 = vpack.c.b16 %v823, %v822
        %v829 = vpack.c.b16 %v825, %v824
        %834 = vst [vmem:[%s367] sm:$0xff] %v826
        %835 = vst [vmem:[%s367 + $0x8] sm:$0xff] %v827
        %836 = vst [vmem:[%s367 + $0x10] sm:$0xff] %v828
        %837 = vst [vmem:[%s367 + $0x18] sm:$0xff] %v829
        %s838 = sand.u32 %s112, 1
        %s839 = sand.u32 %s112, 1
        %s840 = smul.addr %s839, 32
        %s841 = scalar_lea.vmem [#allocation3], %s840
        // Predicated region
        $region75: #{forward.22} parent=69 // pred_check
          %p842 = pneg %p122
        $region76: #{forward.22} parent=69 // pred_check_branch
          %844 = sbr.rel (%p842) target = $region78
        $region77: #{forward.22} parent=69 // pred_region
          %s845 = smul.u32 2, %s15
          %s846 = smul.addr %s845, 4
          %s847 = scalar_lea.vmem %s4, %s846
          // Predicated region
          $region79: #{forward.22} parent=77 // pred_check
            _
          $region80: #{forward.22} parent=77 // pred_check_branch
            %849 = sbr.rel (0) target = $region82
          $region81: #{forward.22} parent=77 // pred_region
            // Predicated region
            $region83: #{forward.22} parent=81 // pred_check
              _
            $region84: #{forward.22} parent=81 // pred_check_branch
              %851 = sbr.rel (0) target = $region86
            $region85: #{forward.22} parent=81 // pred_region
              // Predicated region
              $region98: #{forward.22} parent=85 // pred_check
                _
              $region99: #{forward.22} parent=85 // pred_check_branch
                %873 = sbr.rel (0) target = $region101
              $region100: #{forward.22} parent=85 // pred_region
                loop: start=0, step=1, limit=1
                $region102: #{forward.22} parent=100 // loop_pre_header
                  _
                $region103: #{forward.22} parent=100 // loop_header
                  %s875 = sphi 0, %s879
                  %p876 = scmp.ge.s32.totalorder %s875, 1
                  %s880 = sphi %s841, %s841
                  %s881 = sphi %s847, %s847
                $region104: #{forward.22} parent=100 // loop_header_branch
                  %878 = sbr.rel (%p876) target = $region108
                $region105: #{forward.22} parent=100 // loop_body
                  %v882 = vld [vmem:[%s880] sm:$0xff]
                  %883 = vst [vmem:[%s881] sm:$0xff] %v882
                  %v884 = vld [vmem:[%s880 + $0x8] sm:$0xff]
                  %885 = vst [vmem:[%s881 + $0x10] sm:$0xff] %v884
                  %v886 = vld [vmem:[%s880 + $0x10] sm:$0xff]
                  %887 = vst [vmem:[%s881 + $0x20] sm:$0xff] %v886
                  %v888 = vld [vmem:[%s880 + $0x18] sm:$0xff]
                  %889 = vst [vmem:[%s881 + $0x30] sm:$0xff] %v888
                $region106: #{forward.22} parent=100 // loop_footer
                  %s879 = sadd.s32 1, %s875
                $region107: #{forward.22} parent=100 // loop_footer_branch
                  %874 = sbr.rel target = $region103
                $region108: #{forward.22} parent=100 // loop_exit
                  _
              $region101: #{forward.22} parent=85 // pred_fallthru
                _
              // Predicated region
              $region109: #{forward.22} parent=85 // pred_check
                _
              $region110: #{forward.22} parent=85 // pred_check_branch
                %891 = sbr.rel target = $region112
              $region111: #{forward.22} parent=85 // pred_region
                _
              $region112: #{forward.22} parent=85 // pred_fallthru
                _
            $region86: #{forward.22} parent=81 // pred_fallthru
              _
            // Predicated region
            $region87: #{forward.22} parent=81 // pred_check
              _
            $region88: #{forward.22} parent=81 // pred_check_branch
              %853 = sbr.rel target = $region90
            $region89: #{forward.22} parent=81 // pred_region
              %s855 = ssub.s32 256, 1
              loop: start=0, step=1, limit=1
              $region91: #{forward.22} parent=89 // loop_pre_header
                _
              $region92: #{forward.22} parent=89 // loop_header
                %s857 = sphi 0, %s861
                %p858 = scmp.ge.s32.totalorder %s857, 1
                %s862 = sphi %s841, %s841
                %s863 = sphi %s847, %s847
              $region93: #{forward.22} parent=89 // loop_header_branch
                %860 = sbr.rel (%p858) target = $region97
              $region94: #{forward.22} parent=89 // loop_body
                %v864 = vld [vmem:[%s862] sm:%s855]
                %865 = vst [vmem:[%s863] sm:%s855] %v864
                %v866 = vld [vmem:[%s862 + $0x8] sm:%s855]
                %867 = vst [vmem:[%s863 + $0x10] sm:%s855] %v866
                %v868 = vld [vmem:[%s862 + $0x10] sm:%s855]
                %869 = vst [vmem:[%s863 + $0x20] sm:%s855] %v868
                %v870 = vld [vmem:[%s862 + $0x18] sm:%s855]
                %871 = vst [vmem:[%s863 + $0x30] sm:%s855] %v870
              $region95: #{forward.22} parent=89 // loop_footer
                %s861 = sadd.s32 1, %s857
              $region96: #{forward.22} parent=89 // loop_footer_branch
                %856 = sbr.rel target = $region92
              $region97: #{forward.22} parent=89 // loop_exit
                _
            $region90: #{forward.22} parent=81 // pred_fallthru
              _
          $region82: #{forward.22} parent=77 // pred_fallthru
            _
          %892 = vnop
        $region78: #{forward.22} parent=69 // pred_fallthru
          _
      $region70: #{forward.22} parent=5 // pred_fallthru
        _
      %p893 = scmp.le.s32.totalorder 2, %s10
      // Predicated region
      $region113: #{forward.22} parent=5 // pred_check
        %p894 = pneg %p893
      $region114: #{forward.22} parent=5 // pred_check_branch
        %896 = sbr.rel (%p894) target = $region116
      $region115: #{forward.22} parent=5 // pred_region
        %s897 = ssub.s32 %s10, 2
        // Predicated region
        $region117: #{forward.22} parent=115 // pred_check
          %p898 = pneg %p128
        $region118: #{forward.22} parent=115 // pred_check_branch
          %900 = sbr.rel (%p898) target = $region120
        $region119: #{forward.22} parent=115 // pred_region
          %s901 = sand.u32 %s113, 1
          %s902 = sand.u32 %s113, 1
          %s903 = smul.addr %s902, 32
          %s904 = scalar_lea.vmem [#allocation3], %s903
        $region120: #{forward.22} parent=115 // pred_fallthru
          _
      $region116: #{forward.22} parent=5 // pred_fallthru
        _
    $region6: #{forward.22} parent=1 // loop_footer
      %s14 = sadd.s32 1, %s10
    $region7: #{forward.22} parent=1 // loop_footer_branch
      %9 = sbr.rel target = $region3
    $region8: #{forward.22} parent=1 // loop_exit
      _

// kernel: forward.23
$region0: #{forward.23}
  #allocation0 [shape = 'u32[]', space=smem, size = 0x4, offset = 0x4, fixed_abs, tag = 'smem constant byte address 0x4 - core index']
  #allocation1 [shape = 'u32[144,128]{1,0:T(1,128)}', space=vmem, size = 0x12000, scoped, tag = 'internal scratch']
  %s0 = inlined_call_operand.vmem [shape: bf16[32,288], index: 0, kind: input, shape index: {}]
  %s1 = inlined_call_operand.vmem [shape: bf16[288,512], index: 1, kind: input, shape index: {}]
  %s2 = inlined_call_operand.vmem [shape: f32[32,1], index: 2, kind: input, shape index: {}]
  %s3 = inlined_call_operand.vmem [shape: f32[32,1], index: 3, kind: input, shape index: {}]
  %s4 = inlined_call_operand.vmem [shape: bf16[32,512], index: 4, kind: input, shape index: {}]
  %s5 = inlined_call_operand.vmem [shape: bf16[32,512], index: 5, kind: output, shape index: {}]
  %s6 = sld [smem:[#allocation0]]
  $region163: #{forward.23} parent=0
    _
  %s8 = ssub.s32 1, %s6
  %s9 = scalar_select 0, %s8, %s6
  $region1: #{forward.23} parent=0
    #allocation2 [shape = 'u8[294912]{0}', space=vmem, size = 0x48000, scoped, tag = 'input window, operand 1']
    #allocation3 [shape = 'u8[32768]{0}', space=vmem, size = 0x8000, scoped, tag = 'input window, operand 4']
    #allocation4 [shape = 'u8[32768]{0}', space=vmem, size = 0x8000, scoped, tag = 'output window, operand 0']
    loop: start=0, step=1, limit=4
    $region2: #{forward.23} parent=1 // loop_pre_header
      _
    $region3: #{forward.23} parent=1 // loop_header
      %s11 = sphi 0, %s15
      %p12 = scmp.ge.s32.totalorder %s11, 4
      %s19 = sphi 0, %s19
      %s21 = sphi 0, %s19
      %s22 = sphi 0, %s21
      %s36 = sphi 0, %s22
      %s42 = sphi 0, %s44
      %s45 = sphi 0, %s42
      %s46 = sphi 0, %s45
      %s62 = sphi 0, %s46
      %s66 = sphi 0, %s66
      %s68 = sphi 0, %s66
      %s69 = sphi 0, %s68
      %s83 = sphi 0, %s69
      %s87 = sphi 0, %s87
      %s89 = sphi 0, %s87
      %s90 = sphi 0, %s89
      %s104 = sphi 0, %s90
      %s110 = sphi 0, %s112
      %s113 = sphi 0, %s110
      %s114 = sphi 0, %s113
      %s130 = sphi 0, %s114
      %s136 = sphi 0, %s138
      %s139 = sphi 0, %s136
      %s140 = sphi 0, %s139
      %s156 = sphi 0, %s140
    $region4: #{forward.23} parent=1 // loop_header_branch
      %14 = sbr.rel (%p12) target = $region8
    $region5: #{forward.23} parent=1 // loop_body
      %s16 = ssub.s32 %s11, 1
      %s17 = ssub.s32 %s11, 2
      %s18 = sadd.s32 %s11, 1
      %s20 = sadd.s32 %s19, 1
      %p23 = scmp.eq.s32.totalorder %s11, 1
      %p24 = scmp.ne.s32.totalorder %s19, %s21
      %p25 = scmp.eq.s32.totalorder %s11, 0
      %p26 = por %p24, %p25
      %p27 = scmp.ne.s32.totalorder %s19, %s21
      %p28 = scmp.eq.s32.totalorder %s16, 1
      %p29 = por %p27, %p28
      %p30 = scmp.ne.s32.totalorder %s21, %s22
      %p31 = scmp.eq.s32.totalorder %s16, 0
      %p32 = por %p30, %p31
      %p33 = scmp.ne.s32.totalorder %s21, %s22
      %p34 = scmp.eq.s32.totalorder %s17, 1
      %p35 = por %p33, %p34
      %p37 = scmp.ne.s32.totalorder %s22, %s36
      %p38 = scmp.eq.s32.totalorder %s17, 0
      %p39 = por %p37, %p38
      %s40 = ssub.s32 %s11, %s18
      %p41 = scmp.eq.s32.totalorder %s40, 0
      %s43 = sadd.s32 %s42, 1
      %s44 = scalar_select %p41, %s42, %s43
      %p47 = pneg %p41
      %p48 = scmp.eq.s32.totalorder %s11, 1
      %p49 = por %p47, %p48
      %p50 = scmp.ne.s32.totalorder %s42, %s45
      %p51 = scmp.eq.s32.totalorder %s11, 0
      %p52 = por %p50, %p51
      %p53 = scmp.ne.s32.totalorder %s42, %s45
      %p54 = scmp.eq.s32.totalorder %s16, 1
      %p55 = por %p53, %p54
      %p56 = scmp.ne.s32.totalorder %s45, %s46
      %p57 = scmp.eq.s32.totalorder %s16, 0
      %p58 = por %p56, %p57
      %p59 = scmp.ne.s32.totalorder %s45, %s46
      %p60 = scmp.eq.s32.totalorder %s17, 1
      %p61 = por %p59, %p60
      %p63 = scmp.ne.s32.totalorder %s46, %s62
      %p64 = scmp.eq.s32.totalorder %s17, 0
      %p65 = por %p63, %p64
      %s67 = sadd.s32 %s66, 1
      %p70 = scmp.eq.s32.totalorder %s11, 1
      %p71 = scmp.ne.s32.totalorder %s66, %s68
      %p72 = scmp.eq.s32.totalorder %s11, 0
      %p73 = por %p71, %p72
      %p74 = scmp.ne.s32.totalorder %s66, %s68
      %p75 = scmp.eq.s32.totalorder %s16, 1
      %p76 = por %p74, %p75
      %p77 = scmp.ne.s32.totalorder %s68, %s69
      %p78 = scmp.eq.s32.totalorder %s16, 0
      %p79 = por %p77, %p78
      %p80 = scmp.ne.s32.totalorder %s68, %s69
      %p81 = scmp.eq.s32.totalorder %s17, 1
      %p82 = por %p80, %p81
      %p84 = scmp.ne.s32.totalorder %s69, %s83
      %p85 = scmp.eq.s32.totalorder %s17, 0
      %p86 = por %p84, %p85
      %s88 = sadd.s32 %s87, 1
      %p91 = scmp.eq.s32.totalorder %s11, 1
      %p92 = scmp.ne.s32.totalorder %s87, %s89
      %p93 = scmp.eq.s32.totalorder %s11, 0
      %p94 = por %p92, %p93
      %p95 = scmp.ne.s32.totalorder %s87, %s89
      %p96 = scmp.eq.s32.totalorder %s16, 1
      %p97 = por %p95, %p96
      %p98 = scmp.ne.s32.totalorder %s89, %s90
      %p99 = scmp.eq.s32.totalorder %s16, 0
      %p100 = por %p98, %p99
      %p101 = scmp.ne.s32.totalorder %s89, %s90
      %p102 = scmp.eq.s32.totalorder %s17, 1
      %p103 = por %p101, %p102
      %p105 = scmp.ne.s32.totalorder %s90, %s104
      %p106 = scmp.eq.s32.totalorder %s17, 0
      %p107 = por %p105, %p106
      %s108 = ssub.s32 %s11, %s18
      %p109 = scmp.eq.s32.totalorder %s108, 0
      %s111 = sadd.s32 %s110, 1
      %s112 = scalar_select %p109, %s110, %s111
      %p115 = pneg %p109
      %p116 = scmp.eq.s32.totalorder %s11, 1
      %p117 = por %p115, %p116
      %p118 = scmp.ne.s32.totalorder %s110, %s113
      %p119 = scmp.eq.s32.totalorder %s11, 0
      %p120 = por %p118, %p119
      %p121 = scmp.ne.s32.totalorder %s110, %s113
      %p122 = scmp.eq.s32.totalorder %s16, 1
      %p123 = por %p121, %p122
      %p124 = scmp.ne.s32.totalorder %s113, %s114
      %p125 = scmp.eq.s32.totalorder %s16, 0
      %p126 = por %p124, %p125
      %p127 = scmp.ne.s32.totalorder %s113, %s114
      %p128 = scmp.eq.s32.totalorder %s17, 1
      %p129 = por %p127, %p128
      %p131 = scmp.ne.s32.totalorder %s114, %s130
      %p132 = scmp.eq.s32.totalorder %s17, 0
      %p133 = por %p131, %p132
      %s134 = ssub.s32 %s11, %s18
      %p135 = scmp.eq.s32.totalorder %s134, 0
      %s137 = sadd.s32 %s136, 1
      %s138 = scalar_select %p135, %s136, %s137
      %p141 = pneg %p135
      %p142 = scmp.eq.s32.totalorder %s11, 1
      %p143 = por %p141, %p142
      %p144 = scmp.ne.s32.totalorder %s136, %s139
      %p145 = scmp.eq.s32.totalorder %s11, 0
      %p146 = por %p144, %p145
      %p147 = scmp.ne.s32.totalorder %s136, %s139
      %p148 = scmp.eq.s32.totalorder %s16, 1
      %p149 = por %p147, %p148
      %p150 = scmp.ne.s32.totalorder %s139, %s140
      %p151 = scmp.eq.s32.totalorder %s16, 0
      %p152 = por %p150, %p151
      %p153 = scmp.ne.s32.totalorder %s139, %s140
      %p154 = scmp.eq.s32.totalorder %s17, 1
      %p155 = por %p153, %p154
      %p157 = scmp.ne.s32.totalorder %s140, %s156
      %p158 = scmp.eq.s32.totalorder %s17, 0
      %p159 = por %p157, %p158
      %p160 = scmp.le.s32.totalorder 1, %s11
      %p161 = scmp.lt.s32.totalorder %s11, 3
      %p162 = pnand %p160, %p161
      %p163 = pneg %p162
      // Predicated region
      $region9: #{forward.23} parent=5 // pred_check
        _
      $region10: #{forward.23} parent=5 // pred_check_branch
        %165 = sbr.rel (%p162) target = $region12
      $region11: #{forward.23} parent=5 // pred_region
        %s166 = ssub.s32 %s11, 1
        // Predicated region
        $region13: #{forward.23} parent=11 // pred_check
          %p167 = pneg %p32
        $region14: #{forward.23} parent=11 // pred_check_branch
          %169 = sbr.rel (%p167) target = $region16
        $region15: #{forward.23} parent=11 // pred_region
          _
        $region16: #{forward.23} parent=11 // pred_fallthru
          _
        // Predicated region
        $region17: #{forward.23} parent=11 // pred_check
          %p170 = pneg %p79
        $region18: #{forward.23} parent=11 // pred_check_branch
          %172 = sbr.rel (%p170) target = $region20
        $region19: #{forward.23} parent=11 // pred_region
          _
        $region20: #{forward.23} parent=11 // pred_fallthru
          _
        // Predicated region
        $region21: #{forward.23} parent=11 // pred_check
          %p173 = pneg %p100
        $region22: #{forward.23} parent=11 // pred_check_branch
          %175 = sbr.rel (%p173) target = $region24
        $region23: #{forward.23} parent=11 // pred_region
          _
        $region24: #{forward.23} parent=11 // pred_fallthru
          _
      $region12: #{forward.23} parent=5 // pred_fallthru
        _
      %p176 = scmp.lt.s32.totalorder %s11, 2
      // Predicated region
      $region25: #{forward.23} parent=5 // pred_check
        %p177 = pneg %p176
      $region26: #{forward.23} parent=5 // pred_check_branch
        %179 = sbr.rel (%p177) target = $region28
      $region27: #{forward.23} parent=5 // pred_region
        // Predicated region
        $region29: #{forward.23} parent=27 // pred_check
          %p180 = pneg %p52
        $region30: #{forward.23} parent=27 // pred_check_branch
          %182 = sbr.rel (%p180) target = $region32
        $region31: #{forward.23} parent=27 // pred_region
          %s183 = sand.u32 %s42, 1
          %s184 = sand.u32 %s42, 1
          %s185 = smul.addr %s184, 288
          %s186 = scalar_lea.vmem [#allocation2], %s185
          %s187 = smul.u32 2, %s11
          %s188 = smul.addr %s187, 4
          %s189 = scalar_lea.vmem %s1, %s188
          // Predicated region
          $region33: #{forward.23} parent=31 // pred_check
            _
          $region34: #{forward.23} parent=31 // pred_check_branch
            %191 = sbr.rel (0) target = $region36
          $region35: #{forward.23} parent=31 // pred_region
            // Predicated region
            $region37: #{forward.23} parent=35 // pred_check
              _
            $region38: #{forward.23} parent=35 // pred_check_branch
              %193 = sbr.rel (0) target = $region40
            $region39: #{forward.23} parent=35 // pred_region
              // Predicated region
              $region52: #{forward.23} parent=39 // pred_check
                _
              $region53: #{forward.23} parent=39 // pred_check_branch
                %279 = sbr.rel (0) target = $region55
              $region54: #{forward.23} parent=39 // pred_region
                loop: start=0, step=1, limit=1
                $region56: #{forward.23} parent=54 // loop_pre_header
                  _
                $region57: #{forward.23} parent=54 // loop_header
                  %s281 = sphi 0, %s285
                  %p282 = scmp.ge.s32.totalorder %s281, 1
                  %s286 = sphi %s189, %s189
                  %s287 = sphi %s186, %s186
                $region58: #{forward.23} parent=54 // loop_header_branch
                  %284 = sbr.rel (%p282) target = $region62
                $region59: #{forward.23} parent=54 // loop_body
                  %v288 = vld [vmem:[%s286] sm:$0xff]
                  %289 = vst [vmem:[%s287] sm:$0xff] %v288
                  %v290 = vld [vmem:[%s286 + $0x10] sm:$0xff]
                  %291 = vst [vmem:[%s287 + $0x8] sm:$0xff] %v290
                  %v292 = vld [vmem:[%s286 + $0x20] sm:$0xff]
                  %293 = vst [vmem:[%s287 + $0x10] sm:$0xff] %v292
                  %v294 = vld [vmem:[%s286 + $0x30] sm:$0xff]
                  %295 = vst [vmem:[%s287 + $0x18] sm:$0xff] %v294
                  %v296 = vld [vmem:[%s286 + $0x40] sm:$0xff]
                  %297 = vst [vmem:[%s287 + $0x20] sm:$0xff] %v296
                  %v298 = vld [vmem:[%s286 + $0x50] sm:$0xff]
                  %299 = vst [vmem:[%s287 + $0x28] sm:$0xff] %v298
                  %v300 = vld [vmem:[%s286 + $0x60] sm:$0xff]
                  %301 = vst [vmem:[%s287 + $0x30] sm:$0xff] %v300
                  %v302 = vld [vmem:[%s286 + $0x70] sm:$0xff]
                  %303 = vst [vmem:[%s287 + $0x38] sm:$0xff] %v302
                  %v304 = vld [vmem:[%s286 + $0x80] sm:$0xff]
                  %305 = vst [vmem:[%s287 + $0x40] sm:$0xff] %v304
                  %v306 = vld [vmem:[%s286 + $0x90] sm:$0xff]
                  %307 = vst [vmem:[%s287 + $0x48] sm:$0xff] %v306
                  %v308 = vld [vmem:[%s286 + $0xa0] sm:$0xff]
                  %309 = vst [vmem:[%s287 + $0x50] sm:$0xff] %v308
                  %v310 = vld [vmem:[%s286 + $0xb0] sm:$0xff]
                  %311 = vst [vmem:[%s287 + $0x58] sm:$0xff] %v310
                  %v312 = vld [vmem:[%s286 + $0xc0] sm:$0xff]
                  %313 = vst [vmem:[%s287 + $0x60] sm:$0xff] %v312
                  %v314 = vld [vmem:[%s286 + $0xd0] sm:$0xff]
                  %315 = vst [vmem:[%s287 + $0x68] sm:$0xff] %v314
                  %v316 = vld [vmem:[%s286 + $0xe0] sm:$0xff]
                  %317 = vst [vmem:[%s287 + $0x70] sm:$0xff] %v316
                  %v318 = vld [vmem:[%s286 + $0xf0] sm:$0xff]
                  %319 = vst [vmem:[%s287 + $0x78] sm:$0xff] %v318
                  %v320 = vld [vmem:[%s286 + $0x100] sm:$0xff]
                  %321 = vst [vmem:[%s287 + $0x80] sm:$0xff] %v320
                  %v322 = vld [vmem:[%s286 + $0x110] sm:$0xff]
                  %323 = vst [vmem:[%s287 + $0x88] sm:$0xff] %v322
                  %v324 = vld [vmem:[%s286 + $0x120] sm:$0xff]
                  %325 = vst [vmem:[%s287 + $0x90] sm:$0xff] %v324
                  %v326 = vld [vmem:[%s286 + $0x130] sm:$0xff]
                  %327 = vst [vmem:[%s287 + $0x98] sm:$0xff] %v326
                  %v328 = vld [vmem:[%s286 + $0x140] sm:$0xff]
                  %329 = vst [vmem:[%s287 + $0xa0] sm:$0xff] %v328
                  %v330 = vld [vmem:[%s286 + $0x150] sm:$0xff]
                  %331 = vst [vmem:[%s287 + $0xa8] sm:$0xff] %v330
                  %v332 = vld [vmem:[%s286 + $0x160] sm:$0xff]
                  %333 = vst [vmem:[%s287 + $0xb0] sm:$0xff] %v332
                  %v334 = vld [vmem:[%s286 + $0x170] sm:$0xff]
                  %335 = vst [vmem:[%s287 + $0xb8] sm:$0xff] %v334
                  %v336 = vld [vmem:[%s286 + $0x180] sm:$0xff]
                  %337 = vst [vmem:[%s287 + $0xc0] sm:$0xff] %v336
                  %v338 = vld [vmem:[%s286 + $0x190] sm:$0xff]
                  %339 = vst [vmem:[%s287 + $0xc8] sm:$0xff] %v338
                  %v340 = vld [vmem:[%s286 + $0x1a0] sm:$0xff]
                  %341 = vst [vmem:[%s287 + $0xd0] sm:$0xff] %v340
                  %v342 = vld [vmem:[%s286 + $0x1b0] sm:$0xff]
                  %343 = vst [vmem:[%s287 + $0xd8] sm:$0xff] %v342
                  %v344 = vld [vmem:[%s286 + $0x1c0] sm:$0xff]
                  %345 = vst [vmem:[%s287 + $0xe0] sm:$0xff] %v344
                  %v346 = vld [vmem:[%s286 + $0x1d0] sm:$0xff]
                  %347 = vst [vmem:[%s287 + $0xe8] sm:$0xff] %v346
                  %v348 = vld [vmem:[%s286 + $0x1e0] sm:$0xff]
                  %349 = vst [vmem:[%s287 + $0xf0] sm:$0xff] %v348
                  %v350 = vld [vmem:[%s286 + $0x1f0] sm:$0xff]
                  %351 = vst [vmem:[%s287 + $0xf8] sm:$0xff] %v350
                  %v352 = vld [vmem:[%s286 + $0x200] sm:$0xff]
                  %353 = vst [vmem:[%s287 + $0x100] sm:$0xff] %v352
                  %v354 = vld [vmem:[%s286 + $0x210] sm:$0xff]
                  %355 = vst [vmem:[%s287 + $0x108] sm:$0xff] %v354
                  %v356 = vld [vmem:[%s286 + $0x220] sm:$0xff]
                  %357 = vst [vmem:[%s287 + $0x110] sm:$0xff] %v356
                  %v358 = vld [vmem:[%s286 + $0x230] sm:$0xff]
                  %359 = vst [vmem:[%s287 + $0x118] sm:$0xff] %v358
                $region60: #{forward.23} parent=54 // loop_footer
                  %s285 = sadd.s32 1, %s281
                $region61: #{forward.23} parent=54 // loop_footer_branch
                  %280 = sbr.rel target = $region57
                $region62: #{forward.23} parent=54 // loop_exit
                  _
              $region55: #{forward.23} parent=39 // pred_fallthru
                _
              // Predicated region
              $region63: #{forward.23} parent=39 // pred_check
                _
              $region64: #{forward.23} parent=39 // pred_check_branch
                %361 = sbr.rel target = $region66
              $region65: #{forward.23} parent=39 // pred_region
                _
              $region66: #{forward.23} parent=39 // pred_fallthru
                _
            $region40: #{forward.23} parent=35 // pred_fallthru
              _
            // Predicated region
            $region41: #{forward.23} parent=35 // pred_check
              _
            $region42: #{forward.23} parent=35 // pred_check_branch
              %195 = sbr.rel target = $region44
            $region43: #{forward.23} parent=35 // pred_region
              %s197 = ssub.s32 256, 1
              loop: start=0, step=1, limit=1
              $region45: #{forward.23} parent=43 // loop_pre_header
                _
              $region46: #{forward.23} parent=43 // loop_header
                %s199 = sphi 0, %s203
                %p200 = scmp.ge.s32.totalorder %s199, 1
                %s204 = sphi %s189, %s189
                %s205 = sphi %s186, %s186
              $region47: #{forward.23} parent=43 // loop_header_branch
                %202 = sbr.rel (%p200) target = $region51
              $region48: #{forward.23} parent=43 // loop_body
                %v206 = vld [vmem:[%s204] sm:%s197]
                %207 = vst [vmem:[%s205] sm:%s197] %v206
                %v208 = vld [vmem:[%s204 + $0x10] sm:%s197]
                %209 = vst [vmem:[%s205 + $0x8] sm:%s197] %v208
                %v210 = vld [vmem:[%s204 + $0x20] sm:%s197]
                %211 = vst [vmem:[%s205 + $0x10] sm:%s197] %v210
                %v212 = vld [vmem:[%s204 + $0x30] sm:%s197]
                %213 = vst [vmem:[%s205 + $0x18] sm:%s197] %v212
                %v214 = vld [vmem:[%s204 + $0x40] sm:%s197]
                %215 = vst [vmem:[%s205 + $0x20] sm:%s197] %v214
                %v216 = vld [vmem:[%s204 + $0x50] sm:%s197]
                %217 = vst [vmem:[%s205 + $0x28] sm:%s197] %v216
                %v218 = vld [vmem:[%s204 + $0x60] sm:%s197]
                %219 = vst [vmem:[%s205 + $0x30] sm:%s197] %v218
                %v220 = vld [vmem:[%s204 + $0x70] sm:%s197]
                %221 = vst [vmem:[%s205 + $0x38] sm:%s197] %v220
                %v222 = vld [vmem:[%s204 + $0x80] sm:%s197]
                %223 = vst [vmem:[%s205 + $0x40] sm:%s197] %v222
                %v224 = vld [vmem:[%s204 + $0x90] sm:%s197]
                %225 = vst [vmem:[%s205 + $0x48] sm:%s197] %v224
                %v226 = vld [vmem:[%s204 + $0xa0] sm:%s197]
                %227 = vst [vmem:[%s205 + $0x50] sm:%s197] %v226
                %v228 = vld [vmem:[%s204 + $0xb0] sm:%s197]
                %229 = vst [vmem:[%s205 + $0x58] sm:%s197] %v228
                %v230 = vld [vmem:[%s204 + $0xc0] sm:%s197]
                %231 = vst [vmem:[%s205 + $0x60] sm:%s197] %v230
                %v232 = vld [vmem:[%s204 + $0xd0] sm:%s197]
                %233 = vst [vmem:[%s205 + $0x68] sm:%s197] %v232
                %v234 = vld [vmem:[%s204 + $0xe0] sm:%s197]
                %235 = vst [vmem:[%s205 + $0x70] sm:%s197] %v234
                %v236 = vld [vmem:[%s204 + $0xf0] sm:%s197]
                %237 = vst [vmem:[%s205 + $0x78] sm:%s197] %v236
                %v238 = vld [vmem:[%s204 + $0x100] sm:%s197]
                %239 = vst [vmem:[%s205 + $0x80] sm:%s197] %v238
                %v240 = vld [vmem:[%s204 + $0x110] sm:%s197]
                %241 = vst [vmem:[%s205 + $0x88] sm:%s197] %v240
                %v242 = vld [vmem:[%s204 + $0x120] sm:%s197]
                %243 = vst [vmem:[%s205 + $0x90] sm:%s197] %v242
                %v244 = vld [vmem:[%s204 + $0x130] sm:%s197]
                %245 = vst [vmem:[%s205 + $0x98] sm:%s197] %v244
                %v246 = vld [vmem:[%s204 + $0x140] sm:%s197]
                %247 = vst [vmem:[%s205 + $0xa0] sm:%s197] %v246
                %v248 = vld [vmem:[%s204 + $0x150] sm:%s197]
                %249 = vst [vmem:[%s205 + $0xa8] sm:%s197] %v248
                %v250 = vld [vmem:[%s204 + $0x160] sm:%s197]
                %251 = vst [vmem:[%s205 + $0xb0] sm:%s197] %v250
                %v252 = vld [vmem:[%s204 + $0x170] sm:%s197]
                %253 = vst [vmem:[%s205 + $0xb8] sm:%s197] %v252
                %v254 = vld [vmem:[%s204 + $0x180] sm:%s197]
                %255 = vst [vmem:[%s205 + $0xc0] sm:%s197] %v254
                %v256 = vld [vmem:[%s204 + $0x190] sm:%s197]
                %257 = vst [vmem:[%s205 + $0xc8] sm:%s197] %v256
                %v258 = vld [vmem:[%s204 + $0x1a0] sm:%s197]
                %259 = vst [vmem:[%s205 + $0xd0] sm:%s197] %v258
                %v260 = vld [vmem:[%s204 + $0x1b0] sm:%s197]
                %261 = vst [vmem:[%s205 + $0xd8] sm:%s197] %v260
                %v262 = vld [vmem:[%s204 + $0x1c0] sm:%s197]
                %263 = vst [vmem:[%s205 + $0xe0] sm:%s197] %v262
                %v264 = vld [vmem:[%s204 + $0x1d0] sm:%s197]
                %265 = vst [vmem:[%s205 + $0xe8] sm:%s197] %v264
                %v266 = vld [vmem:[%s204 + $0x1e0] sm:%s197]
                %267 = vst [vmem:[%s205 + $0xf0] sm:%s197] %v266
                %v268 = vld [vmem:[%s204 + $0x1f0] sm:%s197]
                %269 = vst [vmem:[%s205 + $0xf8] sm:%s197] %v268
                %v270 = vld [vmem:[%s204 + $0x200] sm:%s197]
                %271 = vst [vmem:[%s205 + $0x100] sm:%s197] %v270
                %v272 = vld [vmem:[%s204 + $0x210] sm:%s197]
                %273 = vst [vmem:[%s205 + $0x108] sm:%s197] %v272
                %v274 = vld [vmem:[%s204 + $0x220] sm:%s197]
                %275 = vst [vmem:[%s205 + $0x110] sm:%s197] %v274
                %v276 = vld [vmem:[%s204 + $0x230] sm:%s197]
                %277 = vst [vmem:[%s205 + $0x118] sm:%s197] %v276
              $region49: #{forward.23} parent=43 // loop_footer
                %s203 = sadd.s32 1, %s199
              $region50: #{forward.23} parent=43 // loop_footer_branch
                %198 = sbr.rel target = $region46
              $region51: #{forward.23} parent=43 // loop_exit
                _
            $region44: #{forward.23} parent=35 // pred_fallthru
              _
          $region36: #{forward.23} parent=31 // pred_fallthru
            _
          %362 = vnop
        $region32: #{forward.23} parent=27 // pred_fallthru
          _
        // Predicated region
        $region67: #{forward.23} parent=27 // pred_check
          %p363 = pneg %p120
        $region68: #{forward.23} parent=27 // pred_check_branch
          %365 = sbr.rel (%p363) target = $region70
        $region69: #{forward.23} parent=27 // pred_region
          %s366 = sand.u32 %s110, 1
          %s367 = sand.u32 %s110, 1
          %s368 = smul.addr %s367, 32
          %s369 = scalar_lea.vmem [#allocation3], %s368
          %s370 = smul.u32 2, %s11
          %s371 = smul.addr %s370, 4
          %s372 = scalar_lea.vmem %s4, %s371
          // Predicated region
          $region71: #{forward.23} parent=69 // pred_check
            _
          $region72: #{forward.23} parent=69 // pred_check_branch
            %374 = sbr.rel (0) target = $region74
          $region73: #{forward.23} parent=69 // pred_region
            // Predicated region
            $region75: #{forward.23} parent=73 // pred_check
              _
            $region76: #{forward.23} parent=73 // pred_check_branch
              %376 = sbr.rel (0) target = $region78
            $region77: #{forward.23} parent=73 // pred_region
              // Predicated region
              $region90: #{forward.23} parent=77 // pred_check
                _
              $region91: #{forward.23} parent=77 // pred_check_branch
                %398 = sbr.rel (0) target = $region93
              $region92: #{forward.23} parent=77 // pred_region
                loop: start=0, step=1, limit=1
                $region94: #{forward.23} parent=92 // loop_pre_header
                  _
                $region95: #{forward.23} parent=92 // loop_header
                  %s400 = sphi 0, %s404
                  %p401 = scmp.ge.s32.totalorder %s400, 1
                  %s405 = sphi %s372, %s372
                  %s406 = sphi %s369, %s369
                $region96: #{forward.23} parent=92 // loop_header_branch
                  %403 = sbr.rel (%p401) target = $region100
                $region97: #{forward.23} parent=92 // loop_body
                  %v407 = vld [vmem:[%s405] sm:$0xff]
                  %408 = vst [vmem:[%s406] sm:$0xff] %v407
                  %v409 = vld [vmem:[%s405 + $0x10] sm:$0xff]
                  %410 = vst [vmem:[%s406 + $0x8] sm:$0xff] %v409
                  %v411 = vld [vmem:[%s405 + $0x20] sm:$0xff]
                  %412 = vst [vmem:[%s406 + $0x10] sm:$0xff] %v411
                  %v413 = vld [vmem:[%s405 + $0x30] sm:$0xff]
                  %414 = vst [vmem:[%s406 + $0x18] sm:$0xff] %v413
                $region98: #{forward.23} parent=92 // loop_footer
                  %s404 = sadd.s32 1, %s400
                $region99: #{forward.23} parent=92 // loop_footer_branch
                  %399 = sbr.rel target = $region95
                $region100: #{forward.23} parent=92 // loop_exit
                  _
              $region93: #{forward.23} parent=77 // pred_fallthru
                _
              // Predicated region
              $region101: #{forward.23} parent=77 // pred_check
                _
              $region102: #{forward.23} parent=77 // pred_check_branch
                %416 = sbr.rel target = $region104
              $region103: #{forward.23} parent=77 // pred_region
                _
              $region104: #{forward.23} parent=77 // pred_fallthru
                _
            $region78: #{forward.23} parent=73 // pred_fallthru
              _
            // Predicated region
            $region79: #{forward.23} parent=73 // pred_check
              _
            $region80: #{forward.23} parent=73 // pred_check_branch
              %378 = sbr.rel target = $region82
            $region81: #{forward.23} parent=73 // pred_region
              %s380 = ssub.s32 256, 1
              loop: start=0, step=1, limit=1
              $region83: #{forward.23} parent=81 // loop_pre_header
                _
              $region84: #{forward.23} parent=81 // loop_header
                %s382 = sphi 0, %s386
                %p383 = scmp.ge.s32.totalorder %s382, 1
                %s387 = sphi %s372, %s372
                %s388 = sphi %s369, %s369
              $region85: #{forward.23} parent=81 // loop_header_branch
                %385 = sbr.rel (%p383) target = $region89
              $region86: #{forward.23} parent=81 // loop_body
                %v389 = vld [vmem:[%s387] sm:%s380]
                %390 = vst [vmem:[%s388] sm:%s380] %v389
                %v391 = vld [vmem:[%s387 + $0x10] sm:%s380]
                %392 = vst [vmem:[%s388 + $0x8] sm:%s380] %v391
                %v393 = vld [vmem:[%s387 + $0x20] sm:%s380]
                %394 = vst [vmem:[%s388 + $0x10] sm:%s380] %v393
                %v395 = vld [vmem:[%s387 + $0x30] sm:%s380]
                %396 = vst [vmem:[%s388 + $0x18] sm:%s380] %v395
              $region87: #{forward.23} parent=81 // loop_footer
                %s386 = sadd.s32 1, %s382
              $region88: #{forward.23} parent=81 // loop_footer_branch
                %381 = sbr.rel target = $region84
              $region89: #{forward.23} parent=81 // loop_exit
                _
            $region82: #{forward.23} parent=73 // pred_fallthru
              _
          $region74: #{forward.23} parent=69 // pred_fallthru
            _
          %417 = vnop
        $region70: #{forward.23} parent=27 // pred_fallthru
          _
      $region28: #{forward.23} parent=5 // pred_fallthru
        _
      %p418 = scmp.le.s32.totalorder 1, %s11
      %p419 = scmp.lt.s32.totalorder %s11, 3
      %p420 = pnand %p418, %p419
      %p421 = pneg %p420
      // Predicated region
      $region105: #{forward.23} parent=5 // pred_check
        _
      $region106: #{forward.23} parent=5 // pred_check_branch
        %423 = sbr.rel (%p420) target = $region108
      $region107: #{forward.23} parent=5 // pred_region
        %s424 = ssub.s32 %s11, 1
        %s425 = sand.u32 %s45, 1
        %s426 = sand.u32 %s45, 1
        %s427 = smul.addr %s426, 288
        %s428 = scalar_lea.vmem [#allocation2], %s427
        // Predicated region
        $region109: #{forward.23} parent=107 // pred_check
          %p429 = pneg %p58
        $region110: #{forward.23} parent=107 // pred_check_branch
          %431 = sbr.rel (%p429) target = $region112
        $region111: #{forward.23} parent=107 // pred_region
          _
        $region112: #{forward.23} parent=107 // pred_fallthru
          _
        %s432 = sand.u32 %s113, 1
        %s433 = sand.u32 %s113, 1
        %s434 = smul.addr %s433, 32
        %s435 = scalar_lea.vmem [#allocation3], %s434
        // Predicated region
        $region113: #{forward.23} parent=107 // pred_check
          %p436 = pneg %p126
        $region114: #{forward.23} parent=107 // pred_check_branch
          %438 = sbr.rel (%p436) target = $region116
        $region115: #{forward.23} parent=107 // pred_region
          _
        $region116: #{forward.23} parent=107 // pred_fallthru
          _
        %p439 = pneg %p32
        %p440 = pneg %p29
        %s441 = sand.u32 %s45, 1
        %s442 = sand.u32 %s45, 1
        %s443 = smul.addr %s442, 288
        %s444 = scalar_lea.vmem [#allocation2], %s443
        %p445 = pneg %p58
        %p446 = pneg %p55
        %p447 = pneg %p79
        %p448 = pneg %p76
        %p449 = pneg %p100
        %p450 = pneg %p97
        %s451 = sand.u32 %s113, 1
        %s452 = sand.u32 %s113, 1
        %s453 = smul.addr %s452, 32
        %s454 = scalar_lea.vmem [#allocation3], %s453
        %p455 = pneg %p126
        %p456 = pneg %p123
        %p457 = pneg %p152
        %p458 = pneg %p149
        %s459 = sand.u32 %s139, 1
        %s460 = sand.u32 %s139, 1
        %s461 = smul.addr %s460, 32
        %s462 = scalar_lea.vmem [#allocation4], %s461
        %s463 = smul.u32 2, %s16
        %s464 = smul.u32 2, %s16
        %s465 = smul.u32 2, %s16
        %v467 = vld [vmem:[%s0] sm:$0xff]
        %v468 = vld [vmem:[%s0 + $0x8] sm:$0xf]
        %v469 = vld [vmem:[%s0 + $0xc] sm:$0xff]
        %v470 = vld [vmem:[%s0 + $0x14] sm:$0xf]
        %v471 = vld [vmem:[%s0 + $0x18] sm:$0xff]
        %v472 = vld [vmem:[%s0 + $0x20] sm:$0xf]
        %v473 = vld [vmem:[%s0 + $0x24] sm:$0xff]
        %v474 = vld [vmem:[%s0 + $0x2c] sm:$0xf]
        %v475 = vld [vmem:[%s428] sm:$0xff]
        %v476 = vld [vmem:[%s428 + $0x8] sm:$0xff]
        %v477 = vld [vmem:[%s428 + $0x10] sm:$0xff]
        %v478 = vld [vmem:[%s428 + $0x18] sm:$0xff]
        %v479 = vld [vmem:[%s428 + $0x20] sm:$0xff]
        %v480 = vld [vmem:[%s428 + $0x28] sm:$0xff]
        %v481 = vld [vmem:[%s428 + $0x30] sm:$0xff]
        %v482 = vld [vmem:[%s428 + $0x38] sm:$0xff]
        %v483 = vld [vmem:[%s428 + $0x40] sm:$0xff]
        %v484 = vld [vmem:[%s428 + $0x48] sm:$0xff]
        %v485 = vld [vmem:[%s428 + $0x50] sm:$0xff]
        %v486 = vld [vmem:[%s428 + $0x58] sm:$0xff]
        %v487 = vld [vmem:[%s428 + $0x60] sm:$0xff]
        %v488 = vld [vmem:[%s428 + $0x68] sm:$0xff]
        %v489 = vld [vmem:[%s428 + $0x70] sm:$0xff]
        %v490 = vld [vmem:[%s428 + $0x78] sm:$0xff]
        %v491 = vld [vmem:[%s428 + $0x80] sm:$0xff]
        %v492 = vld [vmem:[%s428 + $0x88] sm:$0xff]
        %v493 = vld [vmem:[%s428 + $0x90] sm:$0xff]
        %v494 = vld [vmem:[%s428 + $0x98] sm:$0xff]
        %v495 = vld [vmem:[%s428 + $0xa0] sm:$0xff]
        %v496 = vld [vmem:[%s428 + $0xa8] sm:$0xff]
        %v497 = vld [vmem:[%s428 + $0xb0] sm:$0xff]
        %v498 = vld [vmem:[%s428 + $0xb8] sm:$0xff]
        %v499 = vld [vmem:[%s428 + $0xc0] sm:$0xff]
        %v500 = vld [vmem:[%s428 + $0xc8] sm:$0xff]
        %v501 = vld [vmem:[%s428 + $0xd0] sm:$0xff]
        %v502 = vld [vmem:[%s428 + $0xd8] sm:$0xff]
        %v503 = vld [vmem:[%s428 + $0xe0] sm:$0xff]
        %v504 = vld [vmem:[%s428 + $0xe8] sm:$0xff]
        %v505 = vld [vmem:[%s428 + $0xf0] sm:$0xff]
        %v506 = vld [vmem:[%s428 + $0xf8] sm:$0xff]
        %v507 = vld [vmem:[%s428 + $0x100] sm:$0xff]
        %v508 = vld [vmem:[%s428 + $0x108] sm:$0xff]
        %v509 = vld [vmem:[%s428 + $0x110] sm:$0xff]
        %v510 = vld [vmem:[%s428 + $0x118] sm:$0xff]
        %v519 = vunpack.c.l.b16 %v467
        %v520 = vunpack.c.h.b16 %v467
        %v521 = vunpack.c.l.b16 %v468
        %v522 = vunpack.c.l.b16 %v469
        %v523 = vunpack.c.h.b16 %v469
        %v524 = vunpack.c.l.b16 %v470
        %v525 = vunpack.c.l.b16 %v471
        %v526 = vunpack.c.h.b16 %v471
        %v527 = vunpack.c.l.b16 %v472
        %v528 = vunpack.c.l.b16 %v473
        %v529 = vunpack.c.h.b16 %v473
        %v530 = vunpack.c.l.b16 %v474
        %v531 = vpack.c.b16 %v522, %v519
        %v532 = vpack.c.b16 %v523, %v520
        %v533 = vpack.c.b16 %v524, %v521
        %v534 = vpack.c.b16 %v528, %v525
        %v535 = vpack.c.b16 %v529, %v526
        %v536 = vpack.c.b16 %v530, %v527
        %v577 = vunpack.c.l.b16 %v475
        %v578 = vunpack.c.h.b16 %v475
        %v579 = vunpack.c.l.b16 %v476
        %v580 = vunpack.c.h.b16 %v476
        %v581 = vunpack.c.l.b16 %v477
        %v582 = vunpack.c.h.b16 %v477
        %v583 = vunpack.c.l.b16 %v478
        %v584 = vunpack.c.h.b16 %v478
        %v585 = vunpack.c.l.b16 %v479
        %v586 = vunpack.c.h.b16 %v479
        %v587 = vunpack.c.l.b16 %v480
        %v588 = vunpack.c.h.b16 %v480
        %v589 = vunpack.c.l.b16 %v481
        %v590 = vunpack.c.h.b16 %v481
        %v591 = vunpack.c.l.b16 %v482
        %v592 = vunpack.c.h.b16 %v482
        %v593 = vunpack.c.l.b16 %v483
        %v594 = vunpack.c.h.b16 %v483
        %v595 = vunpack.c.l.b16 %v484
        %v596 = vunpack.c.h.b16 %v484
        %v597 = vunpack.c.l.b16 %v485
        %v598 = vunpack.c.h.b16 %v485
        %v599 = vunpack.c.l.b16 %v486
        %v600 = vunpack.c.h.b16 %v486
        %v601 = vunpack.c.l.b16 %v487
        %v602 = vunpack.c.h.b16 %v487
        %v603 = vunpack.c.l.b16 %v488
        %v604 = vunpack.c.h.b16 %v488
        %v605 = vunpack.c.l.b16 %v489
        %v606 = vunpack.c.h.b16 %v489
        %v607 = vunpack.c.l.b16 %v490
        %v608 = vunpack.c.h.b16 %v490
        %v609 = vunpack.c.l.b16 %v491
        %v610 = vunpack.c.h.b16 %v491
        %v611 = vunpack.c.l.b16 %v492
        %v612 = vunpack.c.h.b16 %v492
        %v613 = vunpack.c.l.b16 %v493
        %v614 = vunpack.c.h.b16 %v493
        %v615 = vunpack.c.l.b16 %v494
        %v616 = vunpack.c.h.b16 %v494
        %v617 = vunpack.c.l.b16 %v495
        %v618 = vunpack.c.h.b16 %v495
        %v619 = vunpack.c.l.b16 %v496
        %v620 = vunpack.c.h.b16 %v496
        %v621 = vunpack.c.l.b16 %v497
        %v622 = vunpack.c.h.b16 %v497
        %v623 = vunpack.c.l.b16 %v498
        %v624 = vunpack.c.h.b16 %v498
        %v625 = vunpack.c.l.b16 %v499
        %v626 = vunpack.c.h.b16 %v499
        %v627 = vunpack.c.l.b16 %v500
        %v628 = vunpack.c.h.b16 %v500
        %v629 = vunpack.c.l.b16 %v501
        %v630 = vunpack.c.h.b16 %v501
        %v631 = vunpack.c.l.b16 %v502
        %v632 = vunpack.c.h.b16 %v502
        %v633 = vunpack.c.l.b16 %v503
        %v634 = vunpack.c.h.b16 %v503
        %v635 = vunpack.c.l.b16 %v504
        %v636 = vunpack.c.h.b16 %v504
        %v637 = vunpack.c.l.b16 %v505
        %v638 = vunpack.c.h.b16 %v505
        %v639 = vunpack.c.l.b16 %v506
        %v640 = vunpack.c.h.b16 %v506
        %v641 = vunpack.c.l.b16 %v507
        %v642 = vunpack.c.h.b16 %v507
        %v643 = vunpack.c.l.b16 %v508
        %v644 = vunpack.c.h.b16 %v508
        %v645 = vunpack.c.l.b16 %v509
        %v646 = vunpack.c.h.b16 %v509
        %v647 = vunpack.c.l.b16 %v510
        %v648 = vunpack.c.h.b16 %v510
        %v649 = vpack.c.b16 %v579, %v577
        %v650 = vpack.c.b16 %v580, %v578
        %v651 = vpack.c.b16 %v583, %v581
        %v652 = vpack.c.b16 %v584, %v582
        %v653 = vpack.c.b16 %v587, %v585
        %v654 = vpack.c.b16 %v588, %v586
        %v655 = vpack.c.b16 %v591, %v589
        %v656 = vpack.c.b16 %v592, %v590
        %v657 = vpack.c.b16 %v595, %v593
        %v658 = vpack.c.b16 %v596, %v594
        %v659 = vpack.c.b16 %v599, %v597
        %v660 = vpack.c.b16 %v600, %v598
        %v661 = vpack.c.b16 %v603, %v601
        %v662 = vpack.c.b16 %v604, %v602
        %v663 = vpack.c.b16 %v607, %v605
        %v664 = vpack.c.b16 %v608, %v606
        %v665 = vpack.c.b16 %v611, %v609
        %v666 = vpack.c.b16 %v612, %v610
        %v667 = vpack.c.b16 %v615, %v613
        %v668 = vpack.c.b16 %v616, %v614
        %v669 = vpack.c.b16 %v619, %v617
        %v670 = vpack.c.b16 %v620, %v618
        %v671 = vpack.c.b16 %v623, %v621
        %v672 = vpack.c.b16 %v624, %v622
        %v673 = vpack.c.b16 %v627, %v625
        %v674 = vpack.c.b16 %v628, %v626
        %v675 = vpack.c.b16 %v631, %v629
        %v676 = vpack.c.b16 %v632, %v630
        %v677 = vpack.c.b16 %v635, %v633
        %v678 = vpack.c.b16 %v636, %v634
        %v679 = vpack.c.b16 %v639, %v637
        %v680 = vpack.c.b16 %v640, %v638
        %v681 = vpack.c.b16 %v643, %v641
        %v682 = vpack.c.b16 %v644, %v642
        %v683 = vpack.c.b16 %v647, %v645
        %v684 = vpack.c.b16 %v648, %v646
        %vm721 = vcmask 261120
        %v723 = vsel %vm721, %v533, 0
        %v726 = vsel %vm721, %v536, 0
        %728 = vmatprep.subr.bf16.mxu0 %v664
        %729 = vmatpush1.bf16.msra.mxu0 %v663
        %730 = vmatprep.subr.bf16.mxu0 %v662
        %731 = vmatpush1.bf16.msra.mxu0 %v661
        %732 = vmatprep.subr.bf16.mxu0 %v660
        %733 = vmatpush1.bf16.msra.mxu0 %v659
        %734 = vmatprep.subr.bf16.mxu0 %v658
        %735 = vmatpush1.bf16.msra.mxu0 %v657
        %736 = vmatprep.subr.bf16.mxu0 %v656
        %737 = vmatpush1.bf16.msra.mxu0 %v655
        %738 = vmatprep.subr.bf16.mxu0 %v654
        %739 = vmatpush1.bf16.msra.mxu0 %v653
        %740 = vmatprep.subr.bf16.mxu0 %v652
        %741 = vmatpush1.bf16.msra.mxu0 %v651
        %742 = vmatprep.subr.bf16.mxu0 %v650
        %743 = vmatpush1.bf16.msra.mxu0 %v649
        %744 = vmatprep.subr.bf16.mxu0 %v680
        %745 = vmatpush2.bf16.msra.mxu0 %v679
        %746 = vmatprep.subr.bf16.mxu0 %v678
        %747 = vmatpush2.bf16.msra.mxu0 %v677
        %748 = vmatprep.subr.bf16.mxu0 %v676
        %749 = vmatpush2.bf16.msra.mxu0 %v675
        %750 = vmatprep.subr.bf16.mxu0 %v674
        %751 = vmatpush2.bf16.msra.mxu0 %v673
        %752 = vmatprep.subr.bf16.mxu0 %v672
        %753 = vmatpush2.bf16.msra.mxu0 %v671
        %754 = vmatprep.subr.bf16.mxu0 %v670
        %755 = vmatpush2.bf16.msra.mxu0 %v669
        %756 = vmatprep.subr.bf16.mxu0 %v668
        %757 = vmatpush2.bf16.msra.mxu0 %v667
        %758 = vmatprep.subr.bf16.mxu0 %v666
        %759 = vmatpush2.bf16.msra.mxu0 %v665
        %760 = vmatprep.mubr.bf16.mxu0 %v532
        %761 = vmatmul.mubr.bf16.gmra.mxu0 %v531
        %v762 = vpop.f32.mrf.mxu0
        %v763 = vadd.f32 0.0, %v762
        %v764 = vpop.f32.mrf.mxu0
        %v765 = vadd.f32 0.0, %v764
        %v766 = vpop.f32.mrf.mxu0
        %v767 = vadd.f32 0.0, %v766
        %v768 = vpop.f32.mrf.mxu0
        %v769 = vadd.f32 0.0, %v768
        %770 = vmatprep.mubr.bf16.mxu0 %v535
        %771 = vmatmul.mubr.bf16.gmra.mxu0 %v534
        %v772 = vpop.f32.mrf.mxu0
        %v773 = vadd.f32 0.0, %v772
        %v774 = vpop.f32.mrf.mxu0
        %v775 = vadd.f32 0.0, %v774
        %v776 = vpop.f32.mrf.mxu0
        %v777 = vadd.f32 0.0, %v776
        %v778 = vpop.f32.mrf.mxu0
        %v779 = vadd.f32 0.0, %v778
        %780 = vdwg.mxu0
        %781 = vmatprep.subr.bf16.mxu0 0
        %782 = vmatpush1.bf16.msra.mxu0 0
        %783 = vmatprep.subr.bf16.mxu0 0
        %784 = vmatpush1.bf16.msra.mxu0 0
        %785 = vmatprep.subr.bf16.mxu0 0
        %786 = vmatpush1.bf16.msra.mxu0 0
        %787 = vmatprep.subr.bf16.mxu0 0
        %788 = vmatpush1.bf16.msra.mxu0 0
        %789 = vmatprep.subr.bf16.mxu0 0
        %790 = vmatpush1.bf16.msra.mxu0 0
        %791 = vmatprep.subr.bf16.mxu0 0
        %792 = vmatpush1.bf16.msra.mxu0 0
        %793 = vmatprep.subr.bf16.mxu0 %v684
        %794 = vmatpush1.bf16.msra.mxu0 %v683
        %795 = vmatprep.subr.bf16.mxu0 %v682
        %796 = vmatpush1.bf16.msra.mxu0 %v681
        %797 = vmatprep.subr.bf16.mxu0 0
        %798 = vmatpush2.bf16.msra.mxu0 0
        %799 = vmatprep.subr.bf16.mxu0 0
        %800 = vmatpush2.bf16.msra.mxu0 0
        %801 = vmatprep.subr.bf16.mxu0 0
        %802 = vmatpush2.bf16.msra.mxu0 0
        %803 = vmatprep.subr.bf16.mxu0 0
        %804 = vmatpush2.bf16.msra.mxu0 0
        %805 = vmatprep.subr.bf16.mxu0 0
        %806 = vmatpush2.bf16.msra.mxu0 0
        %807 = vmatprep.subr.bf16.mxu0 0
        %808 = vmatpush2.bf16.msra.mxu0 0
        %809 = vmatprep.subr.bf16.mxu0 0
        %810 = vmatpush2.bf16.msra.mxu0 0
        %811 = vmatprep.subr.bf16.mxu0 0
        %812 = vmatpush2.bf16.msra.mxu0 0
        %813 = vmatprep.mubr.bf16.mxu0 0
        %814 = vmatmul.mubr.bf16.gmra.mxu0 %v723
        %v815 = vpop.f32.mrf.mxu0
        %v816 = vadd.f32 %v763, %v815
        %v817 = vpop.f32.mrf.mxu0
        %v818 = vadd.f32 %v765, %v817
        %v819 = vpop.f32.mrf.mxu0
        %v820 = vadd.f32 %v767, %v819
        %v821 = vpop.f32.mrf.mxu0
        %v822 = vadd.f32 %v769, %v821
        %823 = vmatprep.mubr.bf16.mxu0 0
        %824 = vmatmul.mubr.bf16.gmra.mxu0 %v726
        %v825 = vpop.f32.mrf.mxu0
        %v826 = vadd.f32 %v773, %v825
        %v827 = vpop.f32.mrf.mxu0
        %v828 = vadd.f32 %v775, %v827
        %v829 = vpop.f32.mrf.mxu0
        %v830 = vadd.f32 %v777, %v829
        %v831 = vpop.f32.mrf.mxu0
        %v832 = vadd.f32 %v779, %v831
        %833 = vdwg.mxu0
        %v834 = vld [vmem:[%s2] sm:$0xff]
        %v835 = vld [vmem:[%s2 + $0x8] sm:$0xff]
        %v836 = vld [vmem:[%s2 + $0x10] sm:$0xff]
        %v837 = vld [vmem:[%s2 + $0x18] sm:$0xff]
        %839 = vset.pattern.permute.xlu0 0
        %840 = vperm.xlu0 %839, %v834
        %v841 = vpop.permute.xlu0 %840
        %844 = vset.pattern.permute.xlu0 0
        %845 = vperm.xlu0 %844, %v835
        %v846 = vpop.permute.xlu0 %845
        %849 = vset.pattern.permute.xlu0 0
        %850 = vperm.xlu0 %849, %v836
        %v851 = vpop.permute.xlu0 %850
        %854 = vset.pattern.permute.xlu0 0
        %855 = vperm.xlu0 %854, %v837
        %v856 = vpop.permute.xlu0 %855
        %v858 = vmul.f32 %v816, %v841
        %v859 = vmul.f32 %v818, %v841
        %v860 = vmul.f32 %v820, %v846
        %v861 = vmul.f32 %v822, %v846
        %v862 = vmul.f32 %v826, %v851
        %v863 = vmul.f32 %v828, %v851
        %v864 = vmul.f32 %v830, %v856
        %v865 = vmul.f32 %v832, %v856
        %v866 = vld [vmem:[%s3] sm:$0xff]
        %v867 = vld [vmem:[%s3 + $0x8] sm:$0xff]
        %v868 = vld [vmem:[%s3 + $0x10] sm:$0xff]
        %v869 = vld [vmem:[%s3 + $0x18] sm:$0xff]
        %871 = vset.pattern.permute.xlu0 0
        %872 = vperm.xlu0 %871, %v866
        %v873 = vpop.permute.xlu0 %872
        %876 = vset.pattern.permute.xlu0 0
        %877 = vperm.xlu0 %876, %v867
        %v878 = vpop.permute.xlu0 %877
        %881 = vset.pattern.permute.xlu0 0
        %882 = vperm.xlu0 %881, %v868
        %v883 = vpop.permute.xlu0 %882
        %886 = vset.pattern.permute.xlu0 0
        %887 = vperm.xlu0 %886, %v869
        %v888 = vpop.permute.xlu0 %887
        %v890 = vadd.f32 %v858, %v873
        %v891 = vadd.f32 %v859, %v873
        %v892 = vadd.f32 %v860, %v878
        %v893 = vadd.f32 %v861, %v878
        %v894 = vadd.f32 %v862, %v883
        %v895 = vadd.f32 %v863, %v883
        %v896 = vadd.f32 %v864, %v888
        %v897 = vadd.f32 %v865, %v888
        %v898 = vld [vmem:[%s435] sm:$0xff]
        %v899 = vld [vmem:[%s435 + $0x8] sm:$0xff]
        %v900 = vld [vmem:[%s435 + $0x10] sm:$0xff]
        %v901 = vld [vmem:[%s435 + $0x18] sm:$0xff]
        %v902 = vunpack.c.l.bf16 %v898
        %v903 = vunpack.c.h.bf16 %v898
        %v904 = vunpack.c.l.bf16 %v899
        %v905 = vunpack.c.h.bf16 %v899
        %v906 = vunpack.c.l.bf16 %v900
        %v907 = vunpack.c.h.bf16 %v900
        %v908 = vunpack.c.l.bf16 %v901
        %v909 = vunpack.c.h.bf16 %v901
        %v910 = vadd.f32 %v890, %v902
        %v911 = vadd.f32 %v891, %v903
        %v912 = vadd.f32 %v892, %v904
        %v913 = vadd.f32 %v893, %v905
        %v914 = vadd.f32 %v894, %v906
        %v915 = vadd.f32 %v895, %v907
        %v916 = vadd.f32 %v896, %v908
        %v917 = vadd.f32 %v897, %v909
        %v918 = vpack.c.bf16 %v912, %v910
        %v919 = vpack.c.bf16 %v913, %v911
        %v920 = vpack.c.bf16 %v916, %v914
        %v921 = vpack.c.bf16 %v917, %v915
        %v926 = vunpack.c.l.b16 %v918
        %v927 = vunpack.c.l.b16 %v919
        %v928 = vunpack.c.h.b16 %v918
        %v929 = vunpack.c.h.b16 %v919
        %v930 = vunpack.c.l.b16 %v920
        %v931 = vunpack.c.l.b16 %v921
        %v932 = vunpack.c.h.b16 %v920
        %v933 = vunpack.c.h.b16 %v921
        %v934 = vpack.c.b16 %v927, %v926
        %v935 = vpack.c.b16 %v929, %v928
        %v936 = vpack.c.b16 %v931, %v930
        %v937 = vpack.c.b16 %v933, %v932
        %942 = vst [vmem:[%s462] sm:$0xff] %v934
        %943 = vst [vmem:[%s462 + $0x8] sm:$0xff] %v935
        %944 = vst [vmem:[%s462 + $0x10] sm:$0xff] %v936
        %945 = vst [vmem:[%s462 + $0x18] sm:$0xff] %v937
        %s946 = sand.u32 %s139, 1
        %s947 = sand.u32 %s139, 1
        %s948 = smul.addr %s947, 32
        %s949 = scalar_lea.vmem [#allocation4], %s948
        // Predicated region
        $region117: #{forward.23} parent=107 // pred_check
          %p950 = pneg %p149
        $region118: #{forward.23} parent=107 // pred_check_branch
          %952 = sbr.rel (%p950) target = $region120
        $region119: #{forward.23} parent=107 // pred_region
          %s953 = smul.u32 2, %s16
          %s954 = smul.addr %s953, 4
          %s955 = scalar_lea.vmem %s5, %s954
          // Predicated region
          $region121: #{forward.23} parent=119 // pred_check
            _
          $region122: #{forward.23} parent=119 // pred_check_branch
            %957 = sbr.rel (0) target = $region124
          $region123: #{forward.23} parent=119 // pred_region
            // Predicated region
            $region125: #{forward.23} parent=123 // pred_check
              _
            $region126: #{forward.23} parent=123 // pred_check_branch
              %959 = sbr.rel (0) target = $region128
            $region127: #{forward.23} parent=123 // pred_region
              // Predicated region
              $region140: #{forward.23} parent=127 // pred_check
                _
              $region141: #{forward.23} parent=127 // pred_check_branch
                %981 = sbr.rel (0) target = $region143
              $region142: #{forward.23} parent=127 // pred_region
                loop: start=0, step=1, limit=1
                $region144: #{forward.23} parent=142 // loop_pre_header
                  _
                $region145: #{forward.23} parent=142 // loop_header
                  %s983 = sphi 0, %s987
                  %p984 = scmp.ge.s32.totalorder %s983, 1
                  %s988 = sphi %s949, %s949
                  %s989 = sphi %s955, %s955
                $region146: #{forward.23} parent=142 // loop_header_branch
                  %986 = sbr.rel (%p984) target = $region150
                $region147: #{forward.23} parent=142 // loop_body
                  %v990 = vld [vmem:[%s988] sm:$0xff]
                  %991 = vst [vmem:[%s989] sm:$0xff] %v990
                  %v992 = vld [vmem:[%s988 + $0x8] sm:$0xff]
                  %993 = vst [vmem:[%s989 + $0x10] sm:$0xff] %v992
                  %v994 = vld [vmem:[%s988 + $0x10] sm:$0xff]
                  %995 = vst [vmem:[%s989 + $0x20] sm:$0xff] %v994
                  %v996 = vld [vmem:[%s988 + $0x18] sm:$0xff]
                  %997 = vst [vmem:[%s989 + $0x30] sm:$0xff] %v996
                $region148: #{forward.23} parent=142 // loop_footer
                  %s987 = sadd.s32 1, %s983
                $region149: #{forward.23} parent=142 // loop_footer_branch
                  %982 = sbr.rel target = $region145
                $region150: #{forward.23} parent=142 // loop_exit
                  _
              $region143: #{forward.23} parent=127 // pred_fallthru
                _
              // Predicated region
              $region151: #{forward.23} parent=127 // pred_check
                _
              $region152: #{forward.23} parent=127 // pred_check_branch
                %999 = sbr.rel target = $region154
              $region153: #{forward.23} parent=127 // pred_region
                _
              $region154: #{forward.23} parent=127 // pred_fallthru
                _
            $region128: #{forward.23} parent=123 // pred_fallthru
              _
            // Predicated region
            $region129: #{forward.23} parent=123 // pred_check
              _
            $region130: #{forward.23} parent=123 // pred_check_branch
              %961 = sbr.rel target = $region132
            $region131: #{forward.23} parent=123 // pred_region
              %s963 = ssub.s32 256, 1
              loop: start=0, step=1, limit=1
              $region133: #{forward.23} parent=131 // loop_pre_header
                _
              $region134: #{forward.23} parent=131 // loop_header
                %s965 = sphi 0, %s969
                %p966 = scmp.ge.s32.totalorder %s965, 1
                %s970 = sphi %s949, %s949
                %s971 = sphi %s955, %s955
              $region135: #{forward.23} parent=131 // loop_header_branch
                %968 = sbr.rel (%p966) target = $region139
              $region136: #{forward.23} parent=131 // loop_body
                %v972 = vld [vmem:[%s970] sm:%s963]
                %973 = vst [vmem:[%s971] sm:%s963] %v972
                %v974 = vld [vmem:[%s970 + $0x8] sm:%s963]
                %975 = vst [vmem:[%s971 + $0x10] sm:%s963] %v974
                %v976 = vld [vmem:[%s970 + $0x10] sm:%s963]
                %977 = vst [vmem:[%s971 + $0x20] sm:%s963] %v976
                %v978 = vld [vmem:[%s970 + $0x18] sm:%s963]
                %979 = vst [vmem:[%s971 + $0x30] sm:%s963] %v978
              $region137: #{forward.23} parent=131 // loop_footer
                %s969 = sadd.s32 1, %s965
              $region138: #{forward.23} parent=131 // loop_footer_branch
                %964 = sbr.rel target = $region134
              $region139: #{forward.23} parent=131 // loop_exit
                _
            $region132: #{forward.23} parent=123 // pred_fallthru
              _
          $region124: #{forward.23} parent=119 // pred_fallthru
            _
          %1000 = vnop
        $region120: #{forward.23} parent=107 // pred_fallthru
          _
      $region108: #{forward.23} parent=5 // pred_fallthru
        _
      %p1001 = scmp.le.s32.totalorder 2, %s11
      // Predicated region
      $region155: #{forward.23} parent=5 // pred_check
        %p1002 = pneg %p1001
      $region156: #{forward.23} parent=5 // pred_check_branch
        %1004 = sbr.rel (%p1002) target = $region158
      $region157: #{forward.23} parent=5 // pred_region
        %s1005 = ssub.s32 %s11, 2
        // Predicated region
        $region159: #{forward.23} parent=157 // pred_check
          %p1006 = pneg %p155
        $region160: #{forward.23} parent=157 // pred_check_branch
          %1008 = sbr.rel (%p1006) target = $region162
        $region161: #{forward.23} parent=157 // pred_region
          %s1009 = sand.u32 %s140, 1
          %s1010 = sand.u32 %s140, 1
          %s1011 = smul.addr %s1010, 32
          %s1012 = scalar_lea.vmem [#allocation4], %s1011
        $region162: #{forward.23} parent=157 // pred_fallthru
          _
      $region158: #{forward.23} parent=5 // pred_fallthru
        _
    $region6: #{forward.23} parent=1 // loop_footer
      %s15 = sadd.s32 1, %s11
    $region7: #{forward.23} parent=1 // loop_footer_branch
      %10 = sbr.rel target = $region3
    $region8: #{forward.23} parent=1 // loop_exit
      _

// kernel: forward.26
$region0: #{forward.26}
  #allocation0 [shape = 'u32[]', space=smem, size = 0x4, offset = 0x4, fixed_abs, tag = 'smem constant byte address 0x4 - core index']
  #allocation1 [shape = 'u32[144,128]{1,0:T(1,128)}', space=vmem, size = 0x12000, scoped, tag = 'internal scratch']
  %s0 = inlined_call_operand.vmem [shape: bf16[8,288], index: 0, kind: input, shape index: {}]
  %s1 = inlined_call_operand.vmem [shape: bf16[288,2048], index: 1, kind: input, shape index: {}]
  %s2 = inlined_call_operand.vmem [shape: f32[8,1], index: 2, kind: input, shape index: {}]
  %s3 = inlined_call_operand.vmem [shape: f32[8,1], index: 3, kind: input, shape index: {}]
  %s4 = inlined_call_operand.vmem [shape: bf16[8,2048], index: 4, kind: output, shape index: {}]
  %s5 = sld [smem:[#allocation0]]
  $region72: #{forward.26} parent=0
    _
  %s7 = ssub.s32 1, %s5
  %s8 = scalar_select 0, %s7, %s5
  $region1: #{forward.26} parent=0
    #allocation2 [shape = 'u8[1179648]{0}', space=vmem, size = 0x120000, scoped, tag = 'input window, operand 1']
    loop: start=0, step=1, limit=4
    $region2: #{forward.26} parent=1 // loop_pre_header
      _
    $region3: #{forward.26} parent=1 // loop_header
      %s10 = sphi 0, %s14
      %p11 = scmp.ge.s32.totalorder %s10, 4
      %s18 = sphi 0, %s18
      %s20 = sphi 0, %s18
      %s21 = sphi 0, %s20
      %s35 = sphi 0, %s21
      %s41 = sphi 0, %s43
      %s44 = sphi 0, %s41
      %s45 = sphi 0, %s44
      %s61 = sphi 0, %s45
      %s65 = sphi 0, %s65
      %s67 = sphi 0, %s65
      %s68 = sphi 0, %s67
      %s82 = sphi 0, %s68
      %s86 = sphi 0, %s86
      %s88 = sphi 0, %s86
      %s89 = sphi 0, %s88
      %s103 = sphi 0, %s89
      %s109 = sphi 0, %s111
      %s112 = sphi 0, %s109
      %s113 = sphi 0, %s112
      %s129 = sphi 0, %s113
    $region4: #{forward.26} parent=1 // loop_header_branch
      %13 = sbr.rel (%p11) target = $region8
    $region5: #{forward.26} parent=1 // loop_body
      %s15 = ssub.s32 %s10, 1
      %s16 = ssub.s32 %s10, 2
      %s17 = sadd.s32 %s10, 1
      %s19 = sadd.s32 %s18, 1
      %p22 = scmp.eq.s32.totalorder %s10, 1
      %p23 = scmp.ne.s32.totalorder %s18, %s20
      %p24 = scmp.eq.s32.totalorder %s10, 0
      %p25 = por %p23, %p24
      %p26 = scmp.ne.s32.totalorder %s18, %s20
      %p27 = scmp.eq.s32.totalorder %s15, 1
      %p28 = por %p26, %p27
      %p29 = scmp.ne.s32.totalorder %s20, %s21
      %p30 = scmp.eq.s32.totalorder %s15, 0
      %p31 = por %p29, %p30
      %p32 = scmp.ne.s32.totalorder %s20, %s21
      %p33 = scmp.eq.s32.totalorder %s16, 1
      %p34 = por %p32, %p33
      %p36 = scmp.ne.s32.totalorder %s21, %s35
      %p37 = scmp.eq.s32.totalorder %s16, 0
      %p38 = por %p36, %p37
      %s39 = ssub.s32 %s10, %s17
      %p40 = scmp.eq.s32.totalorder %s39, 0
      %s42 = sadd.s32 %s41, 1
      %s43 = scalar_select %p40, %s41, %s42
      %p46 = pneg %p40
      %p47 = scmp.eq.s32.totalorder %s10, 1
      %p48 = por %p46, %p47
      %p49 = scmp.ne.s32.totalorder %s41, %s44
      %p50 = scmp.eq.s32.totalorder %s10, 0
      %p51 = por %p49, %p50
      %p52 = scmp.ne.s32.totalorder %s41, %s44
      %p53 = scmp.eq.s32.totalorder %s15, 1
      %p54 = por %p52, %p53
      %p55 = scmp.ne.s32.totalorder %s44, %s45
      %p56 = scmp.eq.s32.totalorder %s15, 0
      %p57 = por %p55, %p56
      %p58 = scmp.ne.s32.totalorder %s44, %s45
      %p59 = scmp.eq.s32.totalorder %s16, 1
      %p60 = por %p58, %p59
      %p62 = scmp.ne.s32.totalorder %s45, %s61
      %p63 = scmp.eq.s32.totalorder %s16, 0
      %p64 = por %p62, %p63
      %s66 = sadd.s32 %s65, 1
      %p69 = scmp.eq.s32.totalorder %s10, 1
      %p70 = scmp.ne.s32.totalorder %s65, %s67
      %p71 = scmp.eq.s32.totalorder %s10, 0
      %p72 = por %p70, %p71
      %p73 = scmp.ne.s32.totalorder %s65, %s67
      %p74 = scmp.eq.s32.totalorder %s15, 1
      %p75 = por %p73, %p74
      %p76 = scmp.ne.s32.totalorder %s67, %s68
      %p77 = scmp.eq.s32.totalorder %s15, 0
      %p78 = por %p76, %p77
      %p79 = scmp.ne.s32.totalorder %s67, %s68
      %p80 = scmp.eq.s32.totalorder %s16, 1
      %p81 = por %p79, %p80
      %p83 = scmp.ne.s32.totalorder %s68, %s82
      %p84 = scmp.eq.s32.totalorder %s16, 0
      %p85 = por %p83, %p84
      %s87 = sadd.s32 %s86, 1
      %p90 = scmp.eq.s32.totalorder %s10, 1
      %p91 = scmp.ne.s32.totalorder %s86, %s88
      %p92 = scmp.eq.s32.totalorder %s10, 0
      %p93 = por %p91, %p92
      %p94 = scmp.ne.s32.totalorder %s86, %s88
      %p95 = scmp.eq.s32.totalorder %s15, 1
      %p96 = por %p94, %p95
      %p97 = scmp.ne.s32.totalorder %s88, %s89
      %p98 = scmp.eq.s32.totalorder %s15, 0
      %p99 = por %p97, %p98
      %p100 = scmp.ne.s32.totalorder %s88, %s89
      %p101 = scmp.eq.s32.totalorder %s16, 1
      %p102 = por %p100, %p101
      %p104 = scmp.ne.s32.totalorder %s89, %s103
      %p105 = scmp.eq.s32.totalorder %s16, 0
      %p106 = por %p104, %p105
      %s107 = ssub.s32 %s10, %s17
      %p108 = scmp.eq.s32.totalorder %s107, 0
      %s110 = sadd.s32 %s109, 1
      %s111 = scalar_select %p108, %s109, %s110
      %p114 = pneg %p108
      %p115 = scmp.eq.s32.totalorder %s10, 1
      %p116 = por %p114, %p115
      %p117 = scmp.ne.s32.totalorder %s109, %s112
      %p118 = scmp.eq.s32.totalorder %s10, 0
      %p119 = por %p117, %p118
      %p120 = scmp.ne.s32.totalorder %s109, %s112
      %p121 = scmp.eq.s32.totalorder %s15, 1
      %p122 = por %p120, %p121
      %p123 = scmp.ne.s32.totalorder %s112, %s113
      %p124 = scmp.eq.s32.totalorder %s15, 0
      %p125 = por %p123, %p124
      %p126 = scmp.ne.s32.totalorder %s112, %s113
      %p127 = scmp.eq.s32.totalorder %s16, 1
      %p128 = por %p126, %p127
      %p130 = scmp.ne.s32.totalorder %s113, %s129
      %p131 = scmp.eq.s32.totalorder %s16, 0
      %p132 = por %p130, %p131
      %p133 = scmp.le.s32.totalorder 1, %s10
      %p134 = scmp.lt.s32.totalorder %s10, 3
      %p135 = pnand %p133, %p134
      %p136 = pneg %p135
      // Predicated region
      $region9: #{forward.26} parent=5 // pred_check
        _
      $region10: #{forward.26} parent=5 // pred_check_branch
        %138 = sbr.rel (%p135) target = $region12
      $region11: #{forward.26} parent=5 // pred_region
        %s139 = ssub.s32 %s10, 1
        // Predicated region
        $region13: #{forward.26} parent=11 // pred_check
          %p140 = pneg %p31
        $region14: #{forward.26} parent=11 // pred_check_branch
          %142 = sbr.rel (%p140) target = $region16
        $region15: #{forward.26} parent=11 // pred_region
          _
        $region16: #{forward.26} parent=11 // pred_fallthru
          _
        // Predicated region
        $region17: #{forward.26} parent=11 // pred_check
          %p143 = pneg %p78
        $region18: #{forward.26} parent=11 // pred_check_branch
          %145 = sbr.rel (%p143) target = $region20
        $region19: #{forward.26} parent=11 // pred_region
          _
        $region20: #{forward.26} parent=11 // pred_fallthru
          _
        // Predicated region
        $region21: #{forward.26} parent=11 // pred_check
          %p146 = pneg %p99
        $region22: #{forward.26} parent=11 // pred_check_branch
          %148 = sbr.rel (%p146) target = $region24
        $region23: #{forward.26} parent=11 // pred_region
          _
        $region24: #{forward.26} parent=11 // pred_fallthru
          _
      $region12: #{forward.26} parent=5 // pred_fallthru
        _
      %p149 = scmp.lt.s32.totalorder %s10, 2
      // Predicated region
      $region25: #{forward.26} parent=5 // pred_check
        %p150 = pneg %p149
      $region26: #{forward.26} parent=5 // pred_check_branch
        %152 = sbr.rel (%p150) target = $region28
      $region27: #{forward.26} parent=5 // pred_region
        // Predicated region
        $region29: #{forward.26} parent=27 // pred_check
          %p153 = pneg %p51
        $region30: #{forward.26} parent=27 // pred_check_branch
          %155 = sbr.rel (%p153) target = $region32
        $region31: #{forward.26} parent=27 // pred_region
          %s156 = sand.u32 %s41, 1
          %s157 = sand.u32 %s41, 1
          %s158 = smul.addr %s157, 1152
          %s159 = scalar_lea.vmem [#allocation2], %s158
          %s160 = smul.u32 8, %s10
          %s161 = smul.addr %s160, 4
          %s162 = scalar_lea.vmem %s1, %s161
          // Predicated region
          $region33: #{forward.26} parent=31 // pred_check
            _
          $region34: #{forward.26} parent=31 // pred_check_branch
            %164 = sbr.rel (0) target = $region36
          $region35: #{forward.26} parent=31 // pred_region
            // Predicated region
            $region37: #{forward.26} parent=35 // pred_check
              _
            $region38: #{forward.26} parent=35 // pred_check_branch
              %166 = sbr.rel (0) target = $region40
            $region39: #{forward.26} parent=35 // pred_region
              loop: start=0, step=1, limit=1
              $region41: #{forward.26} parent=39 // loop_pre_header
                _
              $region42: #{forward.26} parent=39 // loop_header
                %s168 = sphi 0, %s172
                %p169 = scmp.ge.s32.totalorder %s168, 1
                %s173 = sphi %s162, %s162
                %s174 = sphi %s159, %s159
              $region43: #{forward.26} parent=39 // loop_header_branch
                %171 = sbr.rel (%p169) target = $region47
              $region44: #{forward.26} parent=39 // loop_body
                %v175 = vld [vmem:[%s173] sm:$0xff]
                %176 = vst [vmem:[%s174] sm:$0xff] %v175
                %v177 = vld [vmem:[%s173 + $0x8] sm:$0xff]
                %178 = vst [vmem:[%s174 + $0x8] sm:$0xff] %v177
                %v179 = vld [vmem:[%s173 + $0x10] sm:$0xff]
                %180 = vst [vmem:[%s174 + $0x10] sm:$0xff] %v179
                %v181 = vld [vmem:[%s173 + $0x18] sm:$0xff]
                %182 = vst [vmem:[%s174 + $0x18] sm:$0xff] %v181
                %v183 = vld [vmem:[%s173 + $0x40] sm:$0xff]
                %184 = vst [vmem:[%s174 + $0x20] sm:$0xff] %v183
                %v185 = vld [vmem:[%s173 + $0x48] sm:$0xff]
                %186 = vst [vmem:[%s174 + $0x28] sm:$0xff] %v185
                %v187 = vld [vmem:[%s173 + $0x50] sm:$0xff]
                %188 = vst [vmem:[%s174 + $0x30] sm:$0xff] %v187
                %v189 = vld [vmem:[%s173 + $0x58] sm:$0xff]
                %190 = vst [vmem:[%s174 + $0x38] sm:$0xff] %v189
                %v191 = vld [vmem:[%s173 + $0x80] sm:$0xff]
                %192 = vst [vmem:[%s174 + $0x40] sm:$0xff] %v191
                %v193 = vld [vmem:[%s173 + $0x88] sm:$0xff]
                %194 = vst [vmem:[%s174 + $0x48] sm:$0xff] %v193
                %v195 = vld [vmem:[%s173 + $0x90] sm:$0xff]
                %196 = vst [vmem:[%s174 + $0x50] sm:$0xff] %v195
                %v197 = vld [vmem:[%s173 + $0x98] sm:$0xff]
                %198 = vst [vmem:[%s174 + $0x58] sm:$0xff] %v197
                %v199 = vld [vmem:[%s173 + $0xc0] sm:$0xff]
                %200 = vst [vmem:[%s174 + $0x60] sm:$0xff] %v199
                %v201 = vld [vmem:[%s173 + $0xc8] sm:$0xff]
                %202 = vst [vmem:[%s174 + $0x68] sm:$0xff] %v201
                %v203 = vld [vmem:[%s173 + $0xd0] sm:$0xff]
                %204 = vst [vmem:[%s174 + $0x70] sm:$0xff] %v203
                %v205 = vld [vmem:[%s173 + $0xd8] sm:$0xff]
                %206 = vst [vmem:[%s174 + $0x78] sm:$0xff] %v205
                %v207 = vld [vmem:[%s173 + $0x100] sm:$0xff]
                %208 = vst [vmem:[%s174 + $0x80] sm:$0xff] %v207
                %v209 = vld [vmem:[%s173 + $0x108] sm:$0xff]
                %210 = vst [vmem:[%s174 + $0x88] sm:$0xff] %v209
                %v211 = vld [vmem:[%s173 + $0x110] sm:$0xff]
                %212 = vst [vmem:[%s174 + $0x90] sm:$0xff] %v211
                %v213 = vld [vmem:[%s173 + $0x118] sm:$0xff]
                %214 = vst [vmem:[%s174 + $0x98] sm:$0xff] %v213
                %v215 = vld [vmem:[%s173 + $0x140] sm:$0xff]
                %216 = vst [vmem:[%s174 + $0xa0] sm:$0xff] %v215
                %v217 = vld [vmem:[%s173 + $0x148] sm:$0xff]
                %218 = vst [vmem:[%s174 + $0xa8] sm:$0xff] %v217
                %v219 = vld [vmem:[%s173 + $0x150] sm:$0xff]
                %220 = vst [vmem:[%s174 + $0xb0] sm:$0xff] %v219
                %v221 = vld [vmem:[%s173 + $0x158] sm:$0xff]
                %222 = vst [vmem:[%s174 + $0xb8] sm:$0xff] %v221
                %v223 = vld [vmem:[%s173 + $0x180] sm:$0xff]
                %224 = vst [vmem:[%s174 + $0xc0] sm:$0xff] %v223
                %v225 = vld [vmem:[%s173 + $0x188] sm:$0xff]
                %226 = vst [vmem:[%s174 + $0xc8] sm:$0xff] %v225
                %v227 = vld [vmem:[%s173 + $0x190] sm:$0xff]
                %228 = vst [vmem:[%s174 + $0xd0] sm:$0xff] %v227
                %v229 = vld [vmem:[%s173 + $0x198] sm:$0xff]
                %230 = vst [vmem:[%s174 + $0xd8] sm:$0xff] %v229
                %v231 = vld [vmem:[%s173 + $0x1c0] sm:$0xff]
                %232 = vst [vmem:[%s174 + $0xe0] sm:$0xff] %v231
                %v233 = vld [vmem:[%s173 + $0x1c8] sm:$0xff]
                %234 = vst [vmem:[%s174 + $0xe8] sm:$0xff] %v233
                %v235 = vld [vmem:[%s173 + $0x1d0] sm:$0xff]
                %236 = vst [vmem:[%s174 + $0xf0] sm:$0xff] %v235
                %v237 = vld [vmem:[%s173 + $0x1d8] sm:$0xff]
                %238 = vst [vmem:[%s174 + $0xf8] sm:$0xff] %v237
                %v239 = vld [vmem:[%s173 + $0x200] sm:$0xff]
                %240 = vst [vmem:[%s174 + $0x100] sm:$0xff] %v239
                %v241 = vld [vmem:[%s173 + $0x208] sm:$0xff]
                %242 = vst [vmem:[%s174 + $0x108] sm:$0xff] %v241
                %v243 = vld [vmem:[%s173 + $0x210] sm:$0xff]
                %244 = vst [vmem:[%s174 + $0x110] sm:$0xff] %v243
                %v245 = vld [vmem:[%s173 + $0x218] sm:$0xff]
                %246 = vst [vmem:[%s174 + $0x118] sm:$0xff] %v245
                %v247 = vld [vmem:[%s173 + $0x240] sm:$0xff]
                %248 = vst [vmem:[%s174 + $0x120] sm:$0xff] %v247
                %v249 = vld [vmem:[%s173 + $0x248] sm:$0xff]
                %250 = vst [vmem:[%s174 + $0x128] sm:$0xff] %v249
                %v251 = vld [vmem:[%s173 + $0x250] sm:$0xff]
                %252 = vst [vmem:[%s174 + $0x130] sm:$0xff] %v251
                %v253 = vld [vmem:[%s173 + $0x258] sm:$0xff]
                %254 = vst [vmem:[%s174 + $0x138] sm:$0xff] %v253
                %v255 = vld [vmem:[%s173 + $0x280] sm:$0xff]
                %256 = vst [vmem:[%s174 + $0x140] sm:$0xff] %v255
                %v257 = vld [vmem:[%s173 + $0x288] sm:$0xff]
                %258 = vst [vmem:[%s174 + $0x148] sm:$0xff] %v257
                %v259 = vld [vmem:[%s173 + $0x290] sm:$0xff]
                %260 = vst [vmem:[%s174 + $0x150] sm:$0xff] %v259
                %v261 = vld [vmem:[%s173 + $0x298] sm:$0xff]
                %262 = vst [vmem:[%s174 + $0x158] sm:$0xff] %v261
                %v263 = vld [vmem:[%s173 + $0x2c0] sm:$0xff]
                %264 = vst [vmem:[%s174 + $0x160] sm:$0xff] %v263
                %v265 = vld [vmem:[%s173 + $0x2c8] sm:$0xff]
                %266 = vst [vmem:[%s174 + $0x168] sm:$0xff] %v265
                %v267 = vld [vmem:[%s173 + $0x2d0] sm:$0xff]
                %268 = vst [vmem:[%s174 + $0x170] sm:$0xff] %v267
                %v269 = vld [vmem:[%s173 + $0x2d8] sm:$0xff]
                %270 = vst [vmem:[%s174 + $0x178] sm:$0xff] %v269
                %v271 = vld [vmem:[%s173 + $0x300] sm:$0xff]
                %272 = vst [vmem:[%s174 + $0x180] sm:$0xff] %v271
                %v273 = vld [vmem:[%s173 + $0x308] sm:$0xff]
                %274 = vst [vmem:[%s174 + $0x188] sm:$0xff] %v273
                %v275 = vld [vmem:[%s173 + $0x310] sm:$0xff]
                %276 = vst [vmem:[%s174 + $0x190] sm:$0xff] %v275
                %v277 = vld [vmem:[%s173 + $0x318] sm:$0xff]
                %278 = vst [vmem:[%s174 + $0x198] sm:$0xff] %v277
                %v279 = vld [vmem:[%s173 + $0x340] sm:$0xff]
                %280 = vst [vmem:[%s174 + $0x1a0] sm:$0xff] %v279
                %v281 = vld [vmem:[%s173 + $0x348] sm:$0xff]
                %282 = vst [vmem:[%s174 + $0x1a8] sm:$0xff] %v281
                %v283 = vld [vmem:[%s173 + $0x350] sm:$0xff]
                %284 = vst [vmem:[%s174 + $0x1b0] sm:$0xff] %v283
                %v285 = vld [vmem:[%s173 + $0x358] sm:$0xff]
                %286 = vst [vmem:[%s174 + $0x1b8] sm:$0xff] %v285
                %v287 = vld [vmem:[%s173 + $0x380] sm:$0xff]
                %288 = vst [vmem:[%s174 + $0x1c0] sm:$0xff] %v287
                %v289 = vld [vmem:[%s173 + $0x388] sm:$0xff]
                %290 = vst [vmem:[%s174 + $0x1c8] sm:$0xff] %v289
                %v291 = vld [vmem:[%s173 + $0x390] sm:$0xff]
                %292 = vst [vmem:[%s174 + $0x1d0] sm:$0xff] %v291
                %v293 = vld [vmem:[%s173 + $0x398] sm:$0xff]
                %294 = vst [vmem:[%s174 + $0x1d8] sm:$0xff] %v293
                %v295 = vld [vmem:[%s173 + $0x3c0] sm:$0xff]
                %296 = vst [vmem:[%s174 + $0x1e0] sm:$0xff] %v295
                %v297 = vld [vmem:[%s173 + $0x3c8] sm:$0xff]
                %298 = vst [vmem:[%s174 + $0x1e8] sm:$0xff] %v297
                %v299 = vld [vmem:[%s173 + $0x3d0] sm:$0xff]
                %300 = vst [vmem:[%s174 + $0x1f0] sm:$0xff] %v299
                %v301 = vld [vmem:[%s173 + $0x3d8] sm:$0xff]
                %302 = vst [vmem:[%s174 + $0x1f8] sm:$0xff] %v301
                %v303 = vld [vmem:[%s173 + $0x400] sm:$0xff]
                %304 = vst [vmem:[%s174 + $0x200] sm:$0xff] %v303
                %v305 = vld [vmem:[%s173 + $0x408] sm:$0xff]
                %306 = vst [vmem:[%s174 + $0x208] sm:$0xff] %v305
                %v307 = vld [vmem:[%s173 + $0x410] sm:$0xff]
                %308 = vst [vmem:[%s174 + $0x210] sm:$0xff] %v307
                %v309 = vld [vmem:[%s173 + $0x418] sm:$0xff]
                %310 = vst [vmem:[%s174 + $0x218] sm:$0xff] %v309
                %v311 = vld [vmem:[%s173 + $0x440] sm:$0xff]
                %312 = vst [vmem:[%s174 + $0x220] sm:$0xff] %v311
                %v313 = vld [vmem:[%s173 + $0x448] sm:$0xff]
                %314 = vst [vmem:[%s174 + $0x228] sm:$0xff] %v313
                %v315 = vld [vmem:[%s173 + $0x450] sm:$0xff]
                %316 = vst [vmem:[%s174 + $0x230] sm:$0xff] %v315
                %v317 = vld [vmem:[%s173 + $0x458] sm:$0xff]
                %318 = vst [vmem:[%s174 + $0x238] sm:$0xff] %v317
                %v319 = vld [vmem:[%s173 + $0x480] sm:$0xff]
                %320 = vst [vmem:[%s174 + $0x240] sm:$0xff] %v319
                %v321 = vld [vmem:[%s173 + $0x488] sm:$0xff]
                %322 = vst [vmem:[%s174 + $0x248] sm:$0xff] %v321
                %v323 = vld [vmem:[%s173 + $0x490] sm:$0xff]
                %324 = vst [vmem:[%s174 + $0x250] sm:$0xff] %v323
                %v325 = vld [vmem:[%s173 + $0x498] sm:$0xff]
                %326 = vst [vmem:[%s174 + $0x258] sm:$0xff] %v325
                %v327 = vld [vmem:[%s173 + $0x4c0] sm:$0xff]
                %328 = vst [vmem:[%s174 + $0x260] sm:$0xff] %v327
                %v329 = vld [vmem:[%s173 + $0x4c8] sm:$0xff]
                %330 = vst [vmem:[%s174 + $0x268] sm:$0xff] %v329
                %v331 = vld [vmem:[%s173 + $0x4d0] sm:$0xff]
                %332 = vst [vmem:[%s174 + $0x270] sm:$0xff] %v331
                %v333 = vld [vmem:[%s173 + $0x4d8] sm:$0xff]
                %334 = vst [vmem:[%s174 + $0x278] sm:$0xff] %v333
                %v335 = vld [vmem:[%s173 + $0x500] sm:$0xff]
                %336 = vst [vmem:[%s174 + $0x280] sm:$0xff] %v335
                %v337 = vld [vmem:[%s173 + $0x508] sm:$0xff]
                %338 = vst [vmem:[%s174 + $0x288] sm:$0xff] %v337
                %v339 = vld [vmem:[%s173 + $0x510] sm:$0xff]
                %340 = vst [vmem:[%s174 + $0x290] sm:$0xff] %v339
                %v341 = vld [vmem:[%s173 + $0x518] sm:$0xff]
                %342 = vst [vmem:[%s174 + $0x298] sm:$0xff] %v341
                %v343 = vld [vmem:[%s173 + $0x540] sm:$0xff]
                %344 = vst [vmem:[%s174 + $0x2a0] sm:$0xff] %v343
                %v345 = vld [vmem:[%s173 + $0x548] sm:$0xff]
                %346 = vst [vmem:[%s174 + $0x2a8] sm:$0xff] %v345
                %v347 = vld [vmem:[%s173 + $0x550] sm:$0xff]
                %348 = vst [vmem:[%s174 + $0x2b0] sm:$0xff] %v347
                %v349 = vld [vmem:[%s173 + $0x558] sm:$0xff]
                %350 = vst [vmem:[%s174 + $0x2b8] sm:$0xff] %v349
                %v351 = vld [vmem:[%s173 + $0x580] sm:$0xff]
                %352 = vst [vmem:[%s174 + $0x2c0] sm:$0xff] %v351
                %v353 = vld [vmem:[%s173 + $0x588] sm:$0xff]
                %354 = vst [vmem:[%s174 + $0x2c8] sm:$0xff] %v353
                %v355 = vld [vmem:[%s173 + $0x590] sm:$0xff]
                %356 = vst [vmem:[%s174 + $0x2d0] sm:$0xff] %v355
                %v357 = vld [vmem:[%s173 + $0x598] sm:$0xff]
                %358 = vst [vmem:[%s174 + $0x2d8] sm:$0xff] %v357
                %v359 = vld [vmem:[%s173 + $0x5c0] sm:$0xff]
                %360 = vst [vmem:[%s174 + $0x2e0] sm:$0xff] %v359
                %v361 = vld [vmem:[%s173 + $0x5c8] sm:$0xff]
                %362 = vst [vmem:[%s174 + $0x2e8] sm:$0xff] %v361
                %v363 = vld [vmem:[%s173 + $0x5d0] sm:$0xff]
                %364 = vst [vmem:[%s174 + $0x2f0] sm:$0xff] %v363
                %v365 = vld [vmem:[%s173 + $0x5d8] sm:$0xff]
                %366 = vst [vmem:[%s174 + $0x2f8] sm:$0xff] %v365
                %v367 = vld [vmem:[%s173 + $0x600] sm:$0xff]
                %368 = vst [vmem:[%s174 + $0x300] sm:$0xff] %v367
                %v369 = vld [vmem:[%s173 + $0x608] sm:$0xff]
                %370 = vst [vmem:[%s174 + $0x308] sm:$0xff] %v369
                %v371 = vld [vmem:[%s173 + $0x610] sm:$0xff]
                %372 = vst [vmem:[%s174 + $0x310] sm:$0xff] %v371
                %v373 = vld [vmem:[%s173 + $0x618] sm:$0xff]
                %374 = vst [vmem:[%s174 + $0x318] sm:$0xff] %v373
                %v375 = vld [vmem:[%s173 + $0x640] sm:$0xff]
                %376 = vst [vmem:[%s174 + $0x320] sm:$0xff] %v375
                %v377 = vld [vmem:[%s173 + $0x648] sm:$0xff]
                %378 = vst [vmem:[%s174 + $0x328] sm:$0xff] %v377
                %v379 = vld [vmem:[%s173 + $0x650] sm:$0xff]
                %380 = vst [vmem:[%s174 + $0x330] sm:$0xff] %v379
                %v381 = vld [vmem:[%s173 + $0x658] sm:$0xff]
                %382 = vst [vmem:[%s174 + $0x338] sm:$0xff] %v381
                %v383 = vld [vmem:[%s173 + $0x680] sm:$0xff]
                %384 = vst [vmem:[%s174 + $0x340] sm:$0xff] %v383
                %v385 = vld [vmem:[%s173 + $0x688] sm:$0xff]
                %386 = vst [vmem:[%s174 + $0x348] sm:$0xff] %v385
                %v387 = vld [vmem:[%s173 + $0x690] sm:$0xff]
                %388 = vst [vmem:[%s174 + $0x350] sm:$0xff] %v387
                %v389 = vld [vmem:[%s173 + $0x698] sm:$0xff]
                %390 = vst [vmem:[%s174 + $0x358] sm:$0xff] %v389
                %v391 = vld [vmem:[%s173 + $0x6c0] sm:$0xff]
                %392 = vst [vmem:[%s174 + $0x360] sm:$0xff] %v391
                %v393 = vld [vmem:[%s173 + $0x6c8] sm:$0xff]
                %394 = vst [vmem:[%s174 + $0x368] sm:$0xff] %v393
                %v395 = vld [vmem:[%s173 + $0x6d0] sm:$0xff]
                %396 = vst [vmem:[%s174 + $0x370] sm:$0xff] %v395
                %v397 = vld [vmem:[%s173 + $0x6d8] sm:$0xff]
                %398 = vst [vmem:[%s174 + $0x378] sm:$0xff] %v397
                %v399 = vld [vmem:[%s173 + $0x700] sm:$0xff]
                %400 = vst [vmem:[%s174 + $0x380] sm:$0xff] %v399
                %v401 = vld [vmem:[%s173 + $0x708] sm:$0xff]
                %402 = vst [vmem:[%s174 + $0x388] sm:$0xff] %v401
                %v403 = vld [vmem:[%s173 + $0x710] sm:$0xff]
                %404 = vst [vmem:[%s174 + $0x390] sm:$0xff] %v403
                %v405 = vld [vmem:[%s173 + $0x718] sm:$0xff]
                %406 = vst [vmem:[%s174 + $0x398] sm:$0xff] %v405
                %v407 = vld [vmem:[%s173 + $0x740] sm:$0xff]
                %408 = vst [vmem:[%s174 + $0x3a0] sm:$0xff] %v407
                %v409 = vld [vmem:[%s173 + $0x748] sm:$0xff]
                %410 = vst [vmem:[%s174 + $0x3a8] sm:$0xff] %v409
                %v411 = vld [vmem:[%s173 + $0x750] sm:$0xff]
                %412 = vst [vmem:[%s174 + $0x3b0] sm:$0xff] %v411
                %v413 = vld [vmem:[%s173 + $0x758] sm:$0xff]
                %414 = vst [vmem:[%s174 + $0x3b8] sm:$0xff] %v413
                %v415 = vld [vmem:[%s173 + $0x780] sm:$0xff]
                %416 = vst [vmem:[%s174 + $0x3c0] sm:$0xff] %v415
                %v417 = vld [vmem:[%s173 + $0x788] sm:$0xff]
                %418 = vst [vmem:[%s174 + $0x3c8] sm:$0xff] %v417
                %v419 = vld [vmem:[%s173 + $0x790] sm:$0xff]
                %420 = vst [vmem:[%s174 + $0x3d0] sm:$0xff] %v419
                %v421 = vld [vmem:[%s173 + $0x798] sm:$0xff]
                %422 = vst [vmem:[%s174 + $0x3d8] sm:$0xff] %v421
                %v423 = vld [vmem:[%s173 + $0x7c0] sm:$0xff]
                %424 = vst [vmem:[%s174 + $0x3e0] sm:$0xff] %v423
                %v425 = vld [vmem:[%s173 + $0x7c8] sm:$0xff]
                %426 = vst [vmem:[%s174 + $0x3e8] sm:$0xff] %v425
                %v427 = vld [vmem:[%s173 + $0x7d0] sm:$0xff]
                %428 = vst [vmem:[%s174 + $0x3f0] sm:$0xff] %v427
                %v429 = vld [vmem:[%s173 + $0x7d8] sm:$0xff]
                %430 = vst [vmem:[%s174 + $0x3f8] sm:$0xff] %v429
                %v431 = vld [vmem:[%s173 + $0x800] sm:$0xff]
                %432 = vst [vmem:[%s174 + $0x400] sm:$0xff] %v431
                %v433 = vld [vmem:[%s173 + $0x808] sm:$0xff]
                %434 = vst [vmem:[%s174 + $0x408] sm:$0xff] %v433
                %v435 = vld [vmem:[%s173 + $0x810] sm:$0xff]
                %436 = vst [vmem:[%s174 + $0x410] sm:$0xff] %v435
                %v437 = vld [vmem:[%s173 + $0x818] sm:$0xff]
                %438 = vst [vmem:[%s174 + $0x418] sm:$0xff] %v437
                %v439 = vld [vmem:[%s173 + $0x840] sm:$0xff]
                %440 = vst [vmem:[%s174 + $0x420] sm:$0xff] %v439
                %v441 = vld [vmem:[%s173 + $0x848] sm:$0xff]
                %442 = vst [vmem:[%s174 + $0x428] sm:$0xff] %v441
                %v443 = vld [vmem:[%s173 + $0x850] sm:$0xff]
                %444 = vst [vmem:[%s174 + $0x430] sm:$0xff] %v443
                %v445 = vld [vmem:[%s173 + $0x858] sm:$0xff]
                %446 = vst [vmem:[%s174 + $0x438] sm:$0xff] %v445
                %v447 = vld [vmem:[%s173 + $0x880] sm:$0xff]
                %448 = vst [vmem:[%s174 + $0x440] sm:$0xff] %v447
                %v449 = vld [vmem:[%s173 + $0x888] sm:$0xff]
                %450 = vst [vmem:[%s174 + $0x448] sm:$0xff] %v449
                %v451 = vld [vmem:[%s173 + $0x890] sm:$0xff]
                %452 = vst [vmem:[%s174 + $0x450] sm:$0xff] %v451
                %v453 = vld [vmem:[%s173 + $0x898] sm:$0xff]
                %454 = vst [vmem:[%s174 + $0x458] sm:$0xff] %v453
                %v455 = vld [vmem:[%s173 + $0x8c0] sm:$0xff]
                %456 = vst [vmem:[%s174 + $0x460] sm:$0xff] %v455
                %v457 = vld [vmem:[%s173 + $0x8c8] sm:$0xff]
                %458 = vst [vmem:[%s174 + $0x468] sm:$0xff] %v457
                %v459 = vld [vmem:[%s173 + $0x8d0] sm:$0xff]
                %460 = vst [vmem:[%s174 + $0x470] sm:$0xff] %v459
                %v461 = vld [vmem:[%s173 + $0x8d8] sm:$0xff]
                %462 = vst [vmem:[%s174 + $0x478] sm:$0xff] %v461
              $region45: #{forward.26} parent=39 // loop_footer
                %s172 = sadd.s32 1, %s168
              $region46: #{forward.26} parent=39 // loop_footer_branch
                %167 = sbr.rel target = $region42
              $region47: #{forward.26} parent=39 // loop_exit
                _
            $region40: #{forward.26} parent=35 // pred_fallthru
              _
            // Predicated region
            $region48: #{forward.26} parent=35 // pred_check
              _
            $region49: #{forward.26} parent=35 // pred_check_branch
              %464 = sbr.rel target = $region51
            $region50: #{forward.26} parent=35 // pred_region
              _
            $region51: #{forward.26} parent=35 // pred_fallthru
              _
          $region36: #{forward.26} parent=31 // pred_fallthru
            _
          %465 = vnop
        $region32: #{forward.26} parent=27 // pred_fallthru
          _
      $region28: #{forward.26} parent=5 // pred_fallthru
        _
      %p466 = scmp.le.s32.totalorder 1, %s10
      %p467 = scmp.lt.s32.totalorder %s10, 3
      %p468 = pnand %p466, %p467
      %p469 = pneg %p468
      // Predicated region
      $region52: #{forward.26} parent=5 // pred_check
        _
      $region53: #{forward.26} parent=5 // pred_check_branch
        %471 = sbr.rel (%p468) target = $region55
      $region54: #{forward.26} parent=5 // pred_region
        %s472 = ssub.s32 %s10, 1
        %s473 = sand.u32 %s44, 1
        %s474 = sand.u32 %s44, 1
        %s475 = smul.addr %s474, 1152
        %s476 = scalar_lea.vmem [#allocation2], %s475
        // Predicated region
        $region56: #{forward.26} parent=54 // pred_check
          %p477 = pneg %p57
        $region57: #{forward.26} parent=54 // pred_check_branch
          %479 = sbr.rel (%p477) target = $region59
        $region58: #{forward.26} parent=54 // pred_region
          _
        $region59: #{forward.26} parent=54 // pred_fallthru
          _
        %p480 = pneg %p31
        %p481 = pneg %p28
        %s482 = sand.u32 %s44, 1
        %s483 = sand.u32 %s44, 1
        %s484 = smul.addr %s483, 1152
        %s485 = scalar_lea.vmem [#allocation2], %s484
        %p486 = pneg %p57
        %p487 = pneg %p54
        %p488 = pneg %p78
        %p489 = pneg %p75
        %p490 = pneg %p99
        %p491 = pneg %p96
        %p492 = pneg %p125
        %p493 = pneg %p122
        %s494 = smul.u32 8, %s15
        %p495 = scmp.lt.s32.totalorder %s494, 15
        %s496 = scalar_select %p495, %s494, 15
        %s497 = smul.addr %s496, 4
        %s498 = scalar_lea.vmem %s4, %s497
        %s499 = smul.u32 8, %s15
        %s500 = smul.u32 8, %s15
        %p501 = scmp.lt.s32.totalorder %s500, 15
        %s502 = scalar_select %p501, %s500, 15
        %s503 = smul.addr %s502, 4
        %s504 = scalar_lea.vmem %s4, %s503
        %s505 = smul.u32 8, %s15
        %v507 = vld [vmem:[%s0] sm:$0xff]
        %v508 = vld [vmem:[%s0 + $0x8] sm:$0xf]
        %v509 = vld [vmem:[%s476] sm:$0xff]
        %v510 = vld [vmem:[%s476 + $0x8] sm:$0xff]
        %v511 = vld [vmem:[%s476 + $0x10] sm:$0xff]
        %v512 = vld [vmem:[%s476 + $0x18] sm:$0xff]
        %v513 = vld [vmem:[%s476 + $0x20] sm:$0xff]
        %v514 = vld [vmem:[%s476 + $0x28] sm:$0xff]
        %v515 = vld [vmem:[%s476 + $0x30] sm:$0xff]
        %v516 = vld [vmem:[%s476 + $0x38] sm:$0xff]
        %v517 = vld [vmem:[%s476 + $0x40] sm:$0xff]
        %v518 = vld [vmem:[%s476 + $0x48] sm:$0xff]
        %v519 = vld [vmem:[%s476 + $0x50] sm:$0xff]
        %v520 = vld [vmem:[%s476 + $0x58] sm:$0xff]
        %v521 = vld [vmem:[%s476 + $0x60] sm:$0xff]
        %v522 = vld [vmem:[%s476 + $0x68] sm:$0xff]
        %v523 = vld [vmem:[%s476 + $0x70] sm:$0xff]
        %v524 = vld [vmem:[%s476 + $0x78] sm:$0xff]
        %v525 = vld [vmem:[%s476 + $0x80] sm:$0xff]
        %v526 = vld [vmem:[%s476 + $0x88] sm:$0xff]
        %v527 = vld [vmem:[%s476 + $0x90] sm:$0xff]
        %v528 = vld [vmem:[%s476 + $0x98] sm:$0xff]
        %v529 = vld [vmem:[%s476 + $0xa0] sm:$0xff]
        %v530 = vld [vmem:[%s476 + $0xa8] sm:$0xff]
        %v531 = vld [vmem:[%s476 + $0xb0] sm:$0xff]
        %v532 = vld [vmem:[%s476 + $0xb8] sm:$0xff]
        %v533 = vld [vmem:[%s476 + $0xc0] sm:$0xff]
        %v534 = vld [vmem:[%s476 + $0xc8] sm:$0xff]
        %v535 = vld [vmem:[%s476 + $0xd0] sm:$0xff]
        %v536 = vld [vmem:[%s476 + $0xd8] sm:$0xff]
        %v537 = vld [vmem:[%s476 + $0xe0] sm:$0xff]
        %v538 = vld [vmem:[%s476 + $0xe8] sm:$0xff]
        %v539 = vld [vmem:[%s476 + $0xf0] sm:$0xff]
        %v540 = vld [vmem:[%s476 + $0xf8] sm:$0xff]
        %v541 = vld [vmem:[%s476 + $0x100] sm:$0xff]
        %v542 = vld [vmem:[%s476 + $0x108] sm:$0xff]
        %v543 = vld [vmem:[%s476 + $0x110] sm:$0xff]
        %v544 = vld [vmem:[%s476 + $0x118] sm:$0xff]
        %v545 = vld [vmem:[%s476 + $0x120] sm:$0xff]
        %v546 = vld [vmem:[%s476 + $0x128] sm:$0xff]
        %v547 = vld [vmem:[%s476 + $0x130] sm:$0xff]
        %v548 = vld [vmem:[%s476 + $0x138] sm:$0xff]
        %v549 = vld [vmem:[%s476 + $0x140] sm:$0xff]
        %v550 = vld [vmem:[%s476 + $0x148] sm:$0xff]
        %v551 = vld [vmem:[%s476 + $0x150] sm:$0xff]
        %v552 = vld [vmem:[%s476 + $0x158] sm:$0xff]
        %v553 = vld [vmem:[%s476 + $0x160] sm:$0xff]
        %v554 = vld [vmem:[%s476 + $0x168] sm:$0xff]
        %v555 = vld [vmem:[%s476 + $0x170] sm:$0xff]
        %v556 = vld [vmem:[%s476 + $0x178] sm:$0xff]
        %v557 = vld [vmem:[%s476 + $0x180] sm:$0xff]
        %v558 = vld [vmem:[%s476 + $0x188] sm:$0xff]
        %v559 = vld [vmem:[%s476 + $0x190] sm:$0xff]
        %v560 = vld [vmem:[%s476 + $0x198] sm:$0xff]
        %v561 = vld [vmem:[%s476 + $0x1a0] sm:$0xff]
        %v562 = vld [vmem:[%s476 + $0x1a8] sm:$0xff]
        %v563 = vld [vmem:[%s476 + $0x1b0] sm:$0xff]
        %v564 = vld [vmem:[%s476 + $0x1b8] sm:$0xff]
        %v565 = vld [vmem:[%s476 + $0x1c0] sm:$0xff]
        %v566 = vld [vmem:[%s476 + $0x1c8] sm:$0xff]
        %v567 = vld [vmem:[%s476 + $0x1d0] sm:$0xff]
        %v568 = vld [vmem:[%s476 + $0x1d8] sm:$0xff]
        %v569 = vld [vmem:[%s476 + $0x1e0] sm:$0xff]
        %v570 = vld [vmem:[%s476 + $0x1e8] sm:$0xff]
        %v571 = vld [vmem:[%s476 + $0x1f0] sm:$0xff]
        %v572 = vld [vmem:[%s476 + $0x1f8] sm:$0xff]
        %v573 = vld [vmem:[%s476 + $0x200] sm:$0xff]
        %v574 = vld [vmem:[%s476 + $0x208] sm:$0xff]
        %v575 = vld [vmem:[%s476 + $0x210] sm:$0xff]
        %v576 = vld [vmem:[%s476 + $0x218] sm:$0xff]
        %v577 = vld [vmem:[%s476 + $0x220] sm:$0xff]
        %v578 = vld [vmem:[%s476 + $0x228] sm:$0xff]
        %v579 = vld [vmem:[%s476 + $0x230] sm:$0xff]
        %v580 = vld [vmem:[%s476 + $0x238] sm:$0xff]
        %v581 = vld [vmem:[%s476 + $0x240] sm:$0xff]
        %v582 = vld [vmem:[%s476 + $0x248] sm:$0xff]
        %v583 = vld [vmem:[%s476 + $0x250] sm:$0xff]
        %v584 = vld [vmem:[%s476 + $0x258] sm:$0xff]
        %v585 = vld [vmem:[%s476 + $0x260] sm:$0xff]
        %v586 = vld [vmem:[%s476 + $0x268] sm:$0xff]
        %v587 = vld [vmem:[%s476 + $0x270] sm:$0xff]
        %v588 = vld [vmem:[%s476 + $0x278] sm:$0xff]
        %v589 = vld [vmem:[%s476 + $0x280] sm:$0xff]
        %v590 = vld [vmem:[%s476 + $0x288] sm:$0xff]
        %v591 = vld [vmem:[%s476 + $0x290] sm:$0xff]
        %v592 = vld [vmem:[%s476 + $0x298] sm:$0xff]
        %v593 = vld [vmem:[%s476 + $0x2a0] sm:$0xff]
        %v594 = vld [vmem:[%s476 + $0x2a8] sm:$0xff]
        %v595 = vld [vmem:[%s476 + $0x2b0] sm:$0xff]
        %v596 = vld [vmem:[%s476 + $0x2b8] sm:$0xff]
        %v597 = vld [vmem:[%s476 + $0x2c0] sm:$0xff]
        %v598 = vld [vmem:[%s476 + $0x2c8] sm:$0xff]
        %v599 = vld [vmem:[%s476 + $0x2d0] sm:$0xff]
        %v600 = vld [vmem:[%s476 + $0x2d8] sm:$0xff]
        %v601 = vld [vmem:[%s476 + $0x2e0] sm:$0xff]
        %v602 = vld [vmem:[%s476 + $0x2e8] sm:$0xff]
        %v603 = vld [vmem:[%s476 + $0x2f0] sm:$0xff]
        %v604 = vld [vmem:[%s476 + $0x2f8] sm:$0xff]
        %v605 = vld [vmem:[%s476 + $0x300] sm:$0xff]
        %v606 = vld [vmem:[%s476 + $0x308] sm:$0xff]
        %v607 = vld [vmem:[%s476 + $0x310] sm:$0xff]
        %v608 = vld [vmem:[%s476 + $0x318] sm:$0xff]
        %v609 = vld [vmem:[%s476 + $0x320] sm:$0xff]
        %v610 = vld [vmem:[%s476 + $0x328] sm:$0xff]
        %v611 = vld [vmem:[%s476 + $0x330] sm:$0xff]
        %v612 = vld [vmem:[%s476 + $0x338] sm:$0xff]
        %v613 = vld [vmem:[%s476 + $0x340] sm:$0xff]
        %v614 = vld [vmem:[%s476 + $0x348] sm:$0xff]
        %v615 = vld [vmem:[%s476 + $0x350] sm:$0xff]
        %v616 = vld [vmem:[%s476 + $0x358] sm:$0xff]
        %v617 = vld [vmem:[%s476 + $0x360] sm:$0xff]
        %v618 = vld [vmem:[%s476 + $0x368] sm:$0xff]
        %v619 = vld [vmem:[%s476 + $0x370] sm:$0xff]
        %v620 = vld [vmem:[%s476 + $0x378] sm:$0xff]
        %v621 = vld [vmem:[%s476 + $0x380] sm:$0xff]
        %v622 = vld [vmem:[%s476 + $0x388] sm:$0xff]
        %v623 = vld [vmem:[%s476 + $0x390] sm:$0xff]
        %v624 = vld [vmem:[%s476 + $0x398] sm:$0xff]
        %v625 = vld [vmem:[%s476 + $0x3a0] sm:$0xff]
        %v626 = vld [vmem:[%s476 + $0x3a8] sm:$0xff]
        %v627 = vld [vmem:[%s476 + $0x3b0] sm:$0xff]
        %v628 = vld [vmem:[%s476 + $0x3b8] sm:$0xff]
        %v629 = vld [vmem:[%s476 + $0x3c0] sm:$0xff]
        %v630 = vld [vmem:[%s476 + $0x3c8] sm:$0xff]
        %v631 = vld [vmem:[%s476 + $0x3d0] sm:$0xff]
        %v632 = vld [vmem:[%s476 + $0x3d8] sm:$0xff]
        %v633 = vld [vmem:[%s476 + $0x3e0] sm:$0xff]
        %v634 = vld [vmem:[%s476 + $0x3e8] sm:$0xff]
        %v635 = vld [vmem:[%s476 + $0x3f0] sm:$0xff]
        %v636 = vld [vmem:[%s476 + $0x3f8] sm:$0xff]
        %v637 = vld [vmem:[%s476 + $0x400] sm:$0xff]
        %v638 = vld [vmem:[%s476 + $0x408] sm:$0xff]
        %v639 = vld [vmem:[%s476 + $0x410] sm:$0xff]
        %v640 = vld [vmem:[%s476 + $0x418] sm:$0xff]
        %v641 = vld [vmem:[%s476 + $0x420] sm:$0xff]
        %v642 = vld [vmem:[%s476 + $0x428] sm:$0xff]
        %v643 = vld [vmem:[%s476 + $0x430] sm:$0xff]
        %v644 = vld [vmem:[%s476 + $0x438] sm:$0xff]
        %v645 = vld [vmem:[%s476 + $0x440] sm:$0xff]
        %v646 = vld [vmem:[%s476 + $0x448] sm:$0xff]
        %v647 = vld [vmem:[%s476 + $0x450] sm:$0xff]
        %v648 = vld [vmem:[%s476 + $0x458] sm:$0xff]
        %v649 = vld [vmem:[%s476 + $0x460] sm:$0xff]
        %v650 = vld [vmem:[%s476 + $0x468] sm:$0xff]
        %v651 = vld [vmem:[%s476 + $0x470] sm:$0xff]
        %v652 = vld [vmem:[%s476 + $0x478] sm:$0xff]
        %v655 = vunpack.c.l.b16 %v507
        %v656 = vunpack.c.h.b16 %v507
        %v657 = vunpack.c.l.b16 %v508
        %v658 = vpack.c.b16 %v655, %v655
        %v659 = vpack.c.b16 %v656, %v656
        %v660 = vpack.c.b16 %v657, %v657
        %v807 = vunpack.c.l.b16 %v509
        %v808 = vunpack.c.h.b16 %v509
        %v809 = vunpack.c.l.b16 %v510
        %v810 = vunpack.c.h.b16 %v510
        %v811 = vunpack.c.l.b16 %v511
        %v812 = vunpack.c.h.b16 %v511
        %v813 = vunpack.c.l.b16 %v512
        %v814 = vunpack.c.h.b16 %v512
        %v815 = vunpack.c.l.b16 %v513
        %v816 = vunpack.c.h.b16 %v513
        %v817 = vunpack.c.l.b16 %v514
        %v818 = vunpack.c.h.b16 %v514
        %v819 = vunpack.c.l.b16 %v515
        %v820 = vunpack.c.h.b16 %v515
        %v821 = vunpack.c.l.b16 %v516
        %v822 = vunpack.c.h.b16 %v516
        %v823 = vunpack.c.l.b16 %v517
        %v824 = vunpack.c.h.b16 %v517
        %v825 = vunpack.c.l.b16 %v518
        %v826 = vunpack.c.h.b16 %v518
        %v827 = vunpack.c.l.b16 %v519
        %v828 = vunpack.c.h.b16 %v519
        %v829 = vunpack.c.l.b16 %v520
        %v830 = vunpack.c.h.b16 %v520
        %v831 = vunpack.c.l.b16 %v521
        %v832 = vunpack.c.h.b16 %v521
        %v833 = vunpack.c.l.b16 %v522
        %v834 = vunpack.c.h.b16 %v522
        %v835 = vunpack.c.l.b16 %v523
        %v836 = vunpack.c.h.b16 %v523
        %v837 = vunpack.c.l.b16 %v524
        %v838 = vunpack.c.h.b16 %v524
        %v839 = vunpack.c.l.b16 %v525
        %v840 = vunpack.c.h.b16 %v525
        %v841 = vunpack.c.l.b16 %v526
        %v842 = vunpack.c.h.b16 %v526
        %v843 = vunpack.c.l.b16 %v527
        %v844 = vunpack.c.h.b16 %v527
        %v845 = vunpack.c.l.b16 %v528
        %v846 = vunpack.c.h.b16 %v528
        %v847 = vunpack.c.l.b16 %v529
        %v848 = vunpack.c.h.b16 %v529
        %v849 = vunpack.c.l.b16 %v530
        %v850 = vunpack.c.h.b16 %v530
        %v851 = vunpack.c.l.b16 %v531
        %v852 = vunpack.c.h.b16 %v531
        %v853 = vunpack.c.l.b16 %v532
        %v854 = vunpack.c.h.b16 %v532
        %v855 = vunpack.c.l.b16 %v533
        %v856 = vunpack.c.h.b16 %v533
        %v857 = vunpack.c.l.b16 %v534
        %v858 = vunpack.c.h.b16 %v534
        %v859 = vunpack.c.l.b16 %v535
        %v860 = vunpack.c.h.b16 %v535
        %v861 = vunpack.c.l.b16 %v536
        %v862 = vunpack.c.h.b16 %v536
        %v863 = vunpack.c.l.b16 %v537
        %v864 = vunpack.c.h.b16 %v537
        %v865 = vunpack.c.l.b16 %v538
        %v866 = vunpack.c.h.b16 %v538
        %v867 = vunpack.c.l.b16 %v539
        %v868 = vunpack.c.h.b16 %v539
        %v869 = vunpack.c.l.b16 %v540
        %v870 = vunpack.c.h.b16 %v540
        %v871 = vunpack.c.l.b16 %v541
        %v872 = vunpack.c.h.b16 %v541
        %v873 = vunpack.c.l.b16 %v542
        %v874 = vunpack.c.h.b16 %v542
        %v875 = vunpack.c.l.b16 %v543
        %v876 = vunpack.c.h.b16 %v543
        %v877 = vunpack.c.l.b16 %v544
        %v878 = vunpack.c.h.b16 %v544
        %v879 = vunpack.c.l.b16 %v545
        %v880 = vunpack.c.h.b16 %v545
        %v881 = vunpack.c.l.b16 %v546
        %v882 = vunpack.c.h.b16 %v546
        %v883 = vunpack.c.l.b16 %v547
        %v884 = vunpack.c.h.b16 %v547
        %v885 = vunpack.c.l.b16 %v548
        %v886 = vunpack.c.h.b16 %v548
        %v887 = vunpack.c.l.b16 %v549
        %v888 = vunpack.c.h.b16 %v549
        %v889 = vunpack.c.l.b16 %v550
        %v890 = vunpack.c.h.b16 %v550
        %v891 = vunpack.c.l.b16 %v551
        %v892 = vunpack.c.h.b16 %v551
        %v893 = vunpack.c.l.b16 %v552
        %v894 = vunpack.c.h.b16 %v552
        %v895 = vunpack.c.l.b16 %v553
        %v896 = vunpack.c.h.b16 %v553
        %v897 = vunpack.c.l.b16 %v554
        %v898 = vunpack.c.h.b16 %v554
        %v899 = vunpack.c.l.b16 %v555
        %v900 = vunpack.c.h.b16 %v555
        %v901 = vunpack.c.l.b16 %v556
        %v902 = vunpack.c.h.b16 %v556
        %v903 = vunpack.c.l.b16 %v557
        %v904 = vunpack.c.h.b16 %v557
        %v905 = vunpack.c.l.b16 %v558
        %v906 = vunpack.c.h.b16 %v558
        %v907 = vunpack.c.l.b16 %v559
        %v908 = vunpack.c.h.b16 %v559
        %v909 = vunpack.c.l.b16 %v560
        %v910 = vunpack.c.h.b16 %v560
        %v911 = vunpack.c.l.b16 %v561
        %v912 = vunpack.c.h.b16 %v561
        %v913 = vunpack.c.l.b16 %v562
        %v914 = vunpack.c.h.b16 %v562
        %v915 = vunpack.c.l.b16 %v563
        %v916 = vunpack.c.h.b16 %v563
        %v917 = vunpack.c.l.b16 %v564
        %v918 = vunpack.c.h.b16 %v564
        %v919 = vunpack.c.l.b16 %v565
        %v920 = vunpack.c.h.b16 %v565
        %v921 = vunpack.c.l.b16 %v566
        %v922 = vunpack.c.h.b16 %v566
        %v923 = vunpack.c.l.b16 %v567
        %v924 = vunpack.c.h.b16 %v567
        %v925 = vunpack.c.l.b16 %v568
        %v926 = vunpack.c.h.b16 %v568
        %v927 = vunpack.c.l.b16 %v569
        %v928 = vunpack.c.h.b16 %v569
        %v929 = vunpack.c.l.b16 %v570
        %v930 = vunpack.c.h.b16 %v570
        %v931 = vunpack.c.l.b16 %v571
        %v932 = vunpack.c.h.b16 %v571
        %v933 = vunpack.c.l.b16 %v572
        %v934 = vunpack.c.h.b16 %v572
        %v935 = vunpack.c.l.b16 %v573
        %v936 = vunpack.c.h.b16 %v573
        %v937 = vunpack.c.l.b16 %v574
        %v938 = vunpack.c.h.b16 %v574
        %v939 = vunpack.c.l.b16 %v575
        %v940 = vunpack.c.h.b16 %v575
        %v941 = vunpack.c.l.b16 %v576
        %v942 = vunpack.c.h.b16 %v576
        %v943 = vunpack.c.l.b16 %v577
        %v944 = vunpack.c.h.b16 %v577
        %v945 = vunpack.c.l.b16 %v578
        %v946 = vunpack.c.h.b16 %v578
        %v947 = vunpack.c.l.b16 %v579
        %v948 = vunpack.c.h.b16 %v579
        %v949 = vunpack.c.l.b16 %v580
        %v950 = vunpack.c.h.b16 %v580
        %v951 = vunpack.c.l.b16 %v581
        %v952 = vunpack.c.h.b16 %v581
        %v953 = vunpack.c.l.b16 %v582
        %v954 = vunpack.c.h.b16 %v582
        %v955 = vunpack.c.l.b16 %v583
        %v956 = vunpack.c.h.b16 %v583
        %v957 = vunpack.c.l.b16 %v584
        %v958 = vunpack.c.h.b16 %v584
        %v959 = vunpack.c.l.b16 %v585
        %v960 = vunpack.c.h.b16 %v585
        %v961 = vunpack.c.l.b16 %v586
        %v962 = vunpack.c.h.b16 %v586
        %v963 = vunpack.c.l.b16 %v587
        %v964 = vunpack.c.h.b16 %v587
        %v965 = vunpack.c.l.b16 %v588
        %v966 = vunpack.c.h.b16 %v588
        %v967 = vunpack.c.l.b16 %v589
        %v968 = vunpack.c.h.b16 %v589
        %v969 = vunpack.c.l.b16 %v590
        %v970 = vunpack.c.h.b16 %v590
        %v971 = vunpack.c.l.b16 %v591
        %v972 = vunpack.c.h.b16 %v591
        %v973 = vunpack.c.l.b16 %v592
        %v974 = vunpack.c.h.b16 %v592
        %v975 = vunpack.c.l.b16 %v593
        %v976 = vunpack.c.h.b16 %v593
        %v977 = vunpack.c.l.b16 %v594
        %v978 = vunpack.c.h.b16 %v594
        %v979 = vunpack.c.l.b16 %v595
        %v980 = vunpack.c.h.b16 %v595
        %v981 = vunpack.c.l.b16 %v596
        %v982 = vunpack.c.h.b16 %v596
        %v983 = vunpack.c.l.b16 %v597
        %v984 = vunpack.c.h.b16 %v597
        %v985 = vunpack.c.l.b16 %v598
        %v986 = vunpack.c.h.b16 %v598
        %v987 = vunpack.c.l.b16 %v599
        %v988 = vunpack.c.h.b16 %v599
        %v989 = vunpack.c.l.b16 %v600
        %v990 = vunpack.c.h.b16 %v600
        %v991 = vunpack.c.l.b16 %v601
        %v992 = vunpack.c.h.b16 %v601
        %v993 = vunpack.c.l.b16 %v602
        %v994 = vunpack.c.h.b16 %v602
        %v995 = vunpack.c.l.b16 %v603
        %v996 = vunpack.c.h.b16 %v603
        %v997 = vunpack.c.l.b16 %v604
        %v998 = vunpack.c.h.b16 %v604
        %v999 = vunpack.c.l.b16 %v605
        %v1000 = vunpack.c.h.b16 %v605
        %v1001 = vunpack.c.l.b16 %v606
        %v1002 = vunpack.c.h.b16 %v606
        %v1003 = vunpack.c.l.b16 %v607
        %v1004 = vunpack.c.h.b16 %v607
        %v1005 = vunpack.c.l.b16 %v608
        %v1006 = vunpack.c.h.b16 %v608
        %v1007 = vunpack.c.l.b16 %v609
        %v1008 = vunpack.c.h.b16 %v609
        %v1009 = vunpack.c.l.b16 %v610
        %v1010 = vunpack.c.h.b16 %v610
        %v1011 = vunpack.c.l.b16 %v611
        %v1012 = vunpack.c.h.b16 %v611
        %v1013 = vunpack.c.l.b16 %v612
        %v1014 = vunpack.c.h.b16 %v612
        %v1015 = vunpack.c.l.b16 %v613
        %v1016 = vunpack.c.h.b16 %v613
        %v1017 = vunpack.c.l.b16 %v614
        %v1018 = vunpack.c.h.b16 %v614
        %v1019 = vunpack.c.l.b16 %v615
        %v1020 = vunpack.c.h.b16 %v615
        %v1021 = vunpack.c.l.b16 %v616
        %v1022 = vunpack.c.h.b16 %v616
        %v1023 = vunpack.c.l.b16 %v617
        %v1024 = vunpack.c.h.b16 %v617
        %v1025 = vunpack.c.l.b16 %v618
        %v1026 = vunpack.c.h.b16 %v618
        %v1027 = vunpack.c.l.b16 %v619
        %v1028 = vunpack.c.h.b16 %v619
        %v1029 = vunpack.c.l.b16 %v620
        %v1030 = vunpack.c.h.b16 %v620
        %v1031 = vunpack.c.l.b16 %v621
        %v1032 = vunpack.c.h.b16 %v621
        %v1033 = vunpack.c.l.b16 %v622
        %v1034 = vunpack.c.h.b16 %v622
        %v1035 = vunpack.c.l.b16 %v623
        %v1036 = vunpack.c.h.b16 %v623
        %v1037 = vunpack.c.l.b16 %v624
        %v1038 = vunpack.c.h.b16 %v624
        %v1039 = vunpack.c.l.b16 %v625
        %v1040 = vunpack.c.h.b16 %v625
        %v1041 = vunpack.c.l.b16 %v626
        %v1042 = vunpack.c.h.b16 %v626
        %v1043 = vunpack.c.l.b16 %v627
        %v1044 = vunpack.c.h.b16 %v627
        %v1045 = vunpack.c.l.b16 %v628
        %v1046 = vunpack.c.h.b16 %v628
        %v1047 = vunpack.c.l.b16 %v629
        %v1048 = vunpack.c.h.b16 %v629
        %v1049 = vunpack.c.l.b16 %v630
        %v1050 = vunpack.c.h.b16 %v630
        %v1051 = vunpack.c.l.b16 %v631
        %v1052 = vunpack.c.h.b16 %v631
        %v1053 = vunpack.c.l.b16 %v632
        %v1054 = vunpack.c.h.b16 %v632
        %v1055 = vunpack.c.l.b16 %v633
        %v1056 = vunpack.c.h.b16 %v633
        %v1057 = vunpack.c.l.b16 %v634
        %v1058 = vunpack.c.h.b16 %v634
        %v1059 = vunpack.c.l.b16 %v635
        %v1060 = vunpack.c.h.b16 %v635
        %v1061 = vunpack.c.l.b16 %v636
        %v1062 = vunpack.c.h.b16 %v636
        %v1063 = vunpack.c.l.b16 %v637
        %v1064 = vunpack.c.h.b16 %v637
        %v1065 = vunpack.c.l.b16 %v638
        %v1066 = vunpack.c.h.b16 %v638
        %v1067 = vunpack.c.l.b16 %v639
        %v1068 = vunpack.c.h.b16 %v639
        %v1069 = vunpack.c.l.b16 %v640
        %v1070 = vunpack.c.h.b16 %v640
        %v1071 = vunpack.c.l.b16 %v641
        %v1072 = vunpack.c.h.b16 %v641
        %v1073 = vunpack.c.l.b16 %v642
        %v1074 = vunpack.c.h.b16 %v642
        %v1075 = vunpack.c.l.b16 %v643
        %v1076 = vunpack.c.h.b16 %v643
        %v1077 = vunpack.c.l.b16 %v644
        %v1078 = vunpack.c.h.b16 %v644
        %v1079 = vunpack.c.l.b16 %v645
        %v1080 = vunpack.c.h.b16 %v645
        %v1081 = vunpack.c.l.b16 %v646
        %v1082 = vunpack.c.h.b16 %v646
        %v1083 = vunpack.c.l.b16 %v647
        %v1084 = vunpack.c.h.b16 %v647
        %v1085 = vunpack.c.l.b16 %v648
        %v1086 = vunpack.c.h.b16 %v648
        %v1087 = vunpack.c.l.b16 %v649
        %v1088 = vunpack.c.h.b16 %v649
        %v1089 = vunpack.c.l.b16 %v650
        %v1090 = vunpack.c.h.b16 %v650
        %v1091 = vunpack.c.l.b16 %v651
        %v1092 = vunpack.c.h.b16 %v651
        %v1093 = vunpack.c.l.b16 %v652
        %v1094 = vunpack.c.h.b16 %v652
        %v1095 = vpack.c.b16 %v815, %v807
        %v1096 = vpack.c.b16 %v816, %v808
        %v1097 = vpack.c.b16 %v817, %v809
        %v1098 = vpack.c.b16 %v818, %v810
        %v1099 = vpack.c.b16 %v819, %v811
        %v1100 = vpack.c.b16 %v820, %v812
        %v1101 = vpack.c.b16 %v821, %v813
        %v1102 = vpack.c.b16 %v822, %v814
        %v1103 = vpack.c.b16 %v831, %v823
        %v1104 = vpack.c.b16 %v832, %v824
        %v1105 = vpack.c.b16 %v833, %v825
        %v1106 = vpack.c.b16 %v834, %v826
        %v1107 = vpack.c.b16 %v835, %v827
        %v1108 = vpack.c.b16 %v836, %v828
        %v1109 = vpack.c.b16 %v837, %v829
        %v1110 = vpack.c.b16 %v838, %v830
        %v1111 = vpack.c.b16 %v847, %v839
        %v1112 = vpack.c.b16 %v848, %v840
        %v1113 = vpack.c.b16 %v849, %v841
        %v1114 = vpack.c.b16 %v850, %v842
        %v1115 = vpack.c.b16 %v851, %v843
        %v1116 = vpack.c.b16 %v852, %v844
        %v1117 = vpack.c.b16 %v853, %v845
        %v1118 = vpack.c.b16 %v854, %v846
        %v1119 = vpack.c.b16 %v863, %v855
        %v1120 = vpack.c.b16 %v864, %v856
        %v1121 = vpack.c.b16 %v865, %v857
        %v1122 = vpack.c.b16 %v866, %v858
        %v1123 = vpack.c.b16 %v867, %v859
        %v1124 = vpack.c.b16 %v868, %v860
        %v1125 = vpack.c.b16 %v869, %v861
        %v1126 = vpack.c.b16 %v870, %v862
        %v1127 = vpack.c.b16 %v879, %v871
        %v1128 = vpack.c.b16 %v880, %v872
        %v1129 = vpack.c.b16 %v881, %v873
        %v1130 = vpack.c.b16 %v882, %v874
        %v1131 = vpack.c.b16 %v883, %v875
        %v1132 = vpack.c.b16 %v884, %v876
        %v1133 = vpack.c.b16 %v885, %v877
        %v1134 = vpack.c.b16 %v886, %v878
        %v1135 = vpack.c.b16 %v895, %v887
        %v1136 = vpack.c.b16 %v896, %v888
        %v1137 = vpack.c.b16 %v897, %v889
        %v1138 = vpack.c.b16 %v898, %v890
        %v1139 = vpack.c.b16 %v899, %v891
        %v1140 = vpack.c.b16 %v900, %v892
        %v1141 = vpack.c.b16 %v901, %v893
        %v1142 = vpack.c.b16 %v902, %v894
        %v1143 = vpack.c.b16 %v911, %v903
        %v1144 = vpack.c.b16 %v912, %v904
        %v1145 = vpack.c.b16 %v913, %v905
        %v1146 = vpack.c.b16 %v914, %v906
        %v1147 = vpack.c.b16 %v915, %v907
        %v1148 = vpack.c.b16 %v916, %v908
        %v1149 = vpack.c.b16 %v917, %v909
        %v1150 = vpack.c.b16 %v918, %v910
        %v1151 = vpack.c.b16 %v927, %v919
        %v1152 = vpack.c.b16 %v928, %v920
        %v1153 = vpack.c.b16 %v929, %v921
        %v1154 = vpack.c.b16 %v930, %v922
        %v1155 = vpack.c.b16 %v931, %v923
        %v1156 = vpack.c.b16 %v932, %v924
        %v1157 = vpack.c.b16 %v933, %v925
        %v1158 = vpack.c.b16 %v934, %v926
        %v1159 = vpack.c.b16 %v943, %v935
        %v1160 = vpack.c.b16 %v944, %v936
        %v1161 = vpack.c.b16 %v945, %v937
        %v1162 = vpack.c.b16 %v946, %v938
        %v1163 = vpack.c.b16 %v947, %v939
        %v1164 = vpack.c.b16 %v948, %v940
        %v1165 = vpack.c.b16 %v949, %v941
        %v1166 = vpack.c.b16 %v950, %v942
        %v1167 = vpack.c.b16 %v959, %v951
        %v1168 = vpack.c.b16 %v960, %v952
        %v1169 = vpack.c.b16 %v961, %v953
        %v1170 = vpack.c.b16 %v962, %v954
        %v1171 = vpack.c.b16 %v963, %v955
        %v1172 = vpack.c.b16 %v964, %v956
        %v1173 = vpack.c.b16 %v965, %v957
        %v1174 = vpack.c.b16 %v966, %v958
        %v1175 = vpack.c.b16 %v975, %v967
        %v1176 = vpack.c.b16 %v976, %v968
        %v1177 = vpack.c.b16 %v977, %v969
        %v1178 = vpack.c.b16 %v978, %v970
        %v1179 = vpack.c.b16 %v979, %v971
        %v1180 = vpack.c.b16 %v980, %v972
        %v1181 = vpack.c.b16 %v981, %v973
        %v1182 = vpack.c.b16 %v982, %v974
        %v1183 = vpack.c.b16 %v991, %v983
        %v1184 = vpack.c.b16 %v992, %v984
        %v1185 = vpack.c.b16 %v993, %v985
        %v1186 = vpack.c.b16 %v994, %v986
        %v1187 = vpack.c.b16 %v995, %v987
        %v1188 = vpack.c.b16 %v996, %v988
        %v1189 = vpack.c.b16 %v997, %v989
        %v1190 = vpack.c.b16 %v998, %v990
        %v1191 = vpack.c.b16 %v1007, %v999
        %v1192 = vpack.c.b16 %v1008, %v1000
        %v1193 = vpack.c.b16 %v1009, %v1001
        %v1194 = vpack.c.b16 %v1010, %v1002
        %v1195 = vpack.c.b16 %v1011, %v1003
        %v1196 = vpack.c.b16 %v1012, %v1004
        %v1197 = vpack.c.b16 %v1013, %v1005
        %v1198 = vpack.c.b16 %v1014, %v1006
        %v1199 = vpack.c.b16 %v1023, %v1015
        %v1200 = vpack.c.b16 %v1024, %v1016
        %v1201 = vpack.c.b16 %v1025, %v1017
        %v1202 = vpack.c.b16 %v1026, %v1018
        %v1203 = vpack.c.b16 %v1027, %v1019
        %v1204 = vpack.c.b16 %v1028, %v1020
        %v1205 = vpack.c.b16 %v1029, %v1021
        %v1206 = vpack.c.b16 %v1030, %v1022
        %v1207 = vpack.c.b16 %v1039, %v1031
        %v1208 = vpack.c.b16 %v1040, %v1032
        %v1209 = vpack.c.b16 %v1041, %v1033
        %v1210 = vpack.c.b16 %v1042, %v1034
        %v1211 = vpack.c.b16 %v1043, %v1035
        %v1212 = vpack.c.b16 %v1044, %v1036
        %v1213 = vpack.c.b16 %v1045, %v1037
        %v1214 = vpack.c.b16 %v1046, %v1038
        %v1215 = vpack.c.b16 %v1055, %v1047
        %v1216 = vpack.c.b16 %v1056, %v1048
        %v1217 = vpack.c.b16 %v1057, %v1049
        %v1218 = vpack.c.b16 %v1058, %v1050
        %v1219 = vpack.c.b16 %v1059, %v1051
        %v1220 = vpack.c.b16 %v1060, %v1052
        %v1221 = vpack.c.b16 %v1061, %v1053
        %v1222 = vpack.c.b16 %v1062, %v1054
        %v1223 = vpack.c.b16 %v1071, %v1063
        %v1224 = vpack.c.b16 %v1072, %v1064
        %v1225 = vpack.c.b16 %v1073, %v1065
        %v1226 = vpack.c.b16 %v1074, %v1066
        %v1227 = vpack.c.b16 %v1075, %v1067
        %v1228 = vpack.c.b16 %v1076, %v1068
        %v1229 = vpack.c.b16 %v1077, %v1069
        %v1230 = vpack.c.b16 %v1078, %v1070
        %v1231 = vpack.c.b16 %v1087, %v1079
        %v1232 = vpack.c.b16 %v1088, %v1080
        %v1233 = vpack.c.b16 %v1089, %v1081
        %v1234 = vpack.c.b16 %v1090, %v1082
        %v1235 = vpack.c.b16 %v1091, %v1083
        %v1236 = vpack.c.b16 %v1092, %v1084
        %v1237 = vpack.c.b16 %v1093, %v1085
        %v1238 = vpack.c.b16 %v1094, %v1086
        %vm1383 = vcmask 261120
        %v1385 = vsel %vm1383, %v660, 0
        %1387 = vmatprep.subr.bf16.mxu0 %v1152
        %1388 = vmatpush1.bf16.msra.mxu0 %v1151
        %1389 = vmatprep.subr.bf16.mxu0 %v1144
        %1390 = vmatpush1.bf16.msra.mxu0 %v1143
        %1391 = vmatprep.subr.bf16.mxu0 %v1136
        %1392 = vmatpush1.bf16.msra.mxu0 %v1135
        %1393 = vmatprep.subr.bf16.mxu0 %v1128
        %1394 = vmatpush1.bf16.msra.mxu0 %v1127
        %1395 = vmatprep.subr.bf16.mxu0 %v1120
        %1396 = vmatpush1.bf16.msra.mxu0 %v1119
        %1397 = vmatprep.subr.bf16.mxu0 %v1112
        %1398 = vmatpush1.bf16.msra.mxu0 %v1111
        %1399 = vmatprep.subr.bf16.mxu0 %v1104
        %1400 = vmatpush1.bf16.msra.mxu0 %v1103
        %1401 = vmatprep.subr.bf16.mxu0 %v1096
        %1402 = vmatpush1.bf16.msra.mxu0 %v1095
        %1403 = vmatprep.subr.bf16.mxu0 %v1216
        %1404 = vmatpush2.bf16.msra.mxu0 %v1215
        %1405 = vmatprep.subr.bf16.mxu0 %v1208
        %1406 = vmatpush2.bf16.msra.mxu0 %v1207
        %1407 = vmatprep.subr.bf16.mxu0 %v1200
        %1408 = vmatpush2.bf16.msra.mxu0 %v1199
        %1409 = vmatprep.subr.bf16.mxu0 %v1192
        %1410 = vmatpush2.bf16.msra.mxu0 %v1191
        %1411 = vmatprep.subr.bf16.mxu0 %v1184
        %1412 = vmatpush2.bf16.msra.mxu0 %v1183
        %1413 = vmatprep.subr.bf16.mxu0 %v1176
        %1414 = vmatpush2.bf16.msra.mxu0 %v1175
        %1415 = vmatprep.subr.bf16.mxu0 %v1168
        %1416 = vmatpush2.bf16.msra.mxu0 %v1167
        %1417 = vmatprep.subr.bf16.mxu0 %v1160
        %1418 = vmatpush2.bf16.msra.mxu0 %v1159
        %1419 = vmatprep.mubr.bf16.mxu0 %v659
        %1420 = vmatmul.mubr.bf16.gmra.mxu0 %v658
        %v1421 = vpop.f32.mrf.mxu0
        %v1422 = vadd.f32 0.0, %v1421
        %v1423 = vpop.f32.mrf.mxu0
        %v1424 = vadd.f32 0.0, %v1423
        %v1425 = vpop.f32.mrf.mxu0
        %v1426 = vpop.f32.mrf.mxu0
        %1427 = vdwg.mxu0
        %1428 = vmatprep.subr.bf16.mxu0 0
        %1429 = vmatpush1.bf16.msra.mxu0 0
        %1430 = vmatprep.subr.bf16.mxu0 0
        %1431 = vmatpush1.bf16.msra.mxu0 0
        %1432 = vmatprep.subr.bf16.mxu0 0
        %1433 = vmatpush1.bf16.msra.mxu0 0
        %1434 = vmatprep.subr.bf16.mxu0 0
        %1435 = vmatpush1.bf16.msra.mxu0 0
        %1436 = vmatprep.subr.bf16.mxu0 0
        %1437 = vmatpush1.bf16.msra.mxu0 0
        %1438 = vmatprep.subr.bf16.mxu0 0
        %1439 = vmatpush1.bf16.msra.mxu0 0
        %1440 = vmatprep.subr.bf16.mxu0 %v1232
        %1441 = vmatpush1.bf16.msra.mxu0 %v1231
        %1442 = vmatprep.subr.bf16.mxu0 %v1224
        %1443 = vmatpush1.bf16.msra.mxu0 %v1223
        %1444 = vmatprep.subr.bf16.mxu0 0
        %1445 = vmatpush2.bf16.msra.mxu0 0
        %1446 = vmatprep.subr.bf16.mxu0 0
        %1447 = vmatpush2.bf16.msra.mxu0 0
        %1448 = vmatprep.subr.bf16.mxu0 0
        %1449 = vmatpush2.bf16.msra.mxu0 0
        %1450 = vmatprep.subr.bf16.mxu0 0
        %1451 = vmatpush2.bf16.msra.mxu0 0
        %1452 = vmatprep.subr.bf16.mxu0 0
        %1453 = vmatpush2.bf16.msra.mxu0 0
        %1454 = vmatprep.subr.bf16.mxu0 0
        %1455 = vmatpush2.bf16.msra.mxu0 0
        %1456 = vmatprep.subr.bf16.mxu0 0
        %1457 = vmatpush2.bf16.msra.mxu0 0
        %1458 = vmatprep.subr.bf16.mxu0 0
        %1459 = vmatpush2.bf16.msra.mxu0 0
        %1460 = vmatprep.mubr.bf16.mxu0 0
        %1461 = vmatmul.mubr.bf16.gmra.mxu0 %v1385
        %v1462 = vpop.f32.mrf.mxu0
        %v1463 = vadd.f32 %v1422, %v1462
        %v1464 = vpop.f32.mrf.mxu0
        %v1465 = vadd.f32 %v1424, %v1464
        %v1466 = vpop.f32.mrf.mxu0
        %v1467 = vpop.f32.mrf.mxu0
        %1468 = vdwg.mxu0
        %1469 = vmatprep.subr.bf16.mxu0 %v1154
        %1470 = vmatpush1.bf16.msra.mxu0 %v1153
        %1471 = vmatprep.subr.bf16.mxu0 %v1146
        %1472 = vmatpush1.bf16.msra.mxu0 %v1145
        %1473 = vmatprep.subr.bf16.mxu0 %v1138
        %1474 = vmatpush1.bf16.msra.mxu0 %v1137
        %1475 = vmatprep.subr.bf16.mxu0 %v1130
        %1476 = vmatpush1.bf16.msra.mxu0 %v1129
        %1477 = vmatprep.subr.bf16.mxu0 %v1122
        %1478 = vmatpush1.bf16.msra.mxu0 %v1121
        %1479 = vmatprep.subr.bf16.mxu0 %v1114
        %1480 = vmatpush1.bf16.msra.mxu0 %v1113
        %1481 = vmatprep.subr.bf16.mxu0 %v1106
        %1482 = vmatpush1.bf16.msra.mxu0 %v1105
        %1483 = vmatprep.subr.bf16.mxu0 %v1098
        %1484 = vmatpush1.bf16.msra.mxu0 %v1097
        %1485 = vmatprep.subr.bf16.mxu0 %v1218
        %1486 = vmatpush2.bf16.msra.mxu0 %v1217
        %1487 = vmatprep.subr.bf16.mxu0 %v1210
        %1488 = vmatpush2.bf16.msra.mxu0 %v1209
        %1489 = vmatprep.subr.bf16.mxu0 %v1202
        %1490 = vmatpush2.bf16.msra.mxu0 %v1201
        %1491 = vmatprep.subr.bf16.mxu0 %v1194
        %1492 = vmatpush2.bf16.msra.mxu0 %v1193
        %1493 = vmatprep.subr.bf16.mxu0 %v1186
        %1494 = vmatpush2.bf16.msra.mxu0 %v1185
        %1495 = vmatprep.subr.bf16.mxu0 %v1178
        %1496 = vmatpush2.bf16.msra.mxu0 %v1177
        %1497 = vmatprep.subr.bf16.mxu0 %v1170
        %1498 = vmatpush2.bf16.msra.mxu0 %v1169
        %1499 = vmatprep.subr.bf16.mxu0 %v1162
        %1500 = vmatpush2.bf16.msra.mxu0 %v1161
        %1501 = vmatprep.mubr.bf16.mxu0 %v659
        %1502 = vmatmul.mubr.bf16.gmra.mxu0 %v658
        %v1503 = vpop.f32.mrf.mxu0
        %v1504 = vadd.f32 0.0, %v1503
        %v1505 = vpop.f32.mrf.mxu0
        %v1506 = vadd.f32 0.0, %v1505
        %v1507 = vpop.f32.mrf.mxu0
        %v1508 = vpop.f32.mrf.mxu0
        %1509 = vdwg.mxu0
        %1510 = vmatprep.subr.bf16.mxu0 0
        %1511 = vmatpush1.bf16.msra.mxu0 0
        %1512 = vmatprep.subr.bf16.mxu0 0
        %1513 = vmatpush1.bf16.msra.mxu0 0
        %1514 = vmatprep.subr.bf16.mxu0 0
        %1515 = vmatpush1.bf16.msra.mxu0 0
        %1516 = vmatprep.subr.bf16.mxu0 0
        %1517 = vmatpush1.bf16.msra.mxu0 0
        %1518 = vmatprep.subr.bf16.mxu0 0
        %1519 = vmatpush1.bf16.msra.mxu0 0
        %1520 = vmatprep.subr.bf16.mxu0 0
        %1521 = vmatpush1.bf16.msra.mxu0 0
        %1522 = vmatprep.subr.bf16.mxu0 %v1234
        %1523 = vmatpush1.bf16.msra.mxu0 %v1233
        %1524 = vmatprep.subr.bf16.mxu0 %v1226
        %1525 = vmatpush1.bf16.msra.mxu0 %v1225
        %1526 = vmatprep.subr.bf16.mxu0 0
        %1527 = vmatpush2.bf16.msra.mxu0 0
        %1528 = vmatprep.subr.bf16.mxu0 0
        %1529 = vmatpush2.bf16.msra.mxu0 0
        %1530 = vmatprep.subr.bf16.mxu0 0
        %1531 = vmatpush2.bf16.msra.mxu0 0
        %1532 = vmatprep.subr.bf16.mxu0 0
        %1533 = vmatpush2.bf16.msra.mxu0 0
        %1534 = vmatprep.subr.bf16.mxu0 0
        %1535 = vmatpush2.bf16.msra.mxu0 0
        %1536 = vmatprep.subr.bf16.mxu0 0
        %1537 = vmatpush2.bf16.msra.mxu0 0
        %1538 = vmatprep.subr.bf16.mxu0 0
        %1539 = vmatpush2.bf16.msra.mxu0 0
        %1540 = vmatprep.subr.bf16.mxu0 0
        %1541 = vmatpush2.bf16.msra.mxu0 0
        %1542 = vmatprep.mubr.bf16.mxu0 0
        %1543 = vmatmul.mubr.bf16.gmra.mxu0 %v1385
        %v1544 = vpop.f32.mrf.mxu0
        %v1545 = vadd.f32 %v1504, %v1544
        %v1546 = vpop.f32.mrf.mxu0
        %v1547 = vadd.f32 %v1506, %v1546
        %v1548 = vpop.f32.mrf.mxu0
        %v1549 = vpop.f32.mrf.mxu0
        %1550 = vdwg.mxu0
        %1551 = vmatprep.subr.bf16.mxu0 %v1156
        %1552 = vmatpush1.bf16.msra.mxu0 %v1155
        %1553 = vmatprep.subr.bf16.mxu0 %v1148
        %1554 = vmatpush1.bf16.msra.mxu0 %v1147
        %1555 = vmatprep.subr.bf16.mxu0 %v1140
        %1556 = vmatpush1.bf16.msra.mxu0 %v1139
        %1557 = vmatprep.subr.bf16.mxu0 %v1132
        %1558 = vmatpush1.bf16.msra.mxu0 %v1131
        %1559 = vmatprep.subr.bf16.mxu0 %v1124
        %1560 = vmatpush1.bf16.msra.mxu0 %v1123
        %1561 = vmatprep.subr.bf16.mxu0 %v1116
        %1562 = vmatpush1.bf16.msra.mxu0 %v1115
        %1563 = vmatprep.subr.bf16.mxu0 %v1108
        %1564 = vmatpush1.bf16.msra.mxu0 %v1107
        %1565 = vmatprep.subr.bf16.mxu0 %v1100
        %1566 = vmatpush1.bf16.msra.mxu0 %v1099
        %1567 = vmatprep.subr.bf16.mxu0 %v1220
        %1568 = vmatpush2.bf16.msra.mxu0 %v1219
        %1569 = vmatprep.subr.bf16.mxu0 %v1212
        %1570 = vmatpush2.bf16.msra.mxu0 %v1211
        %1571 = vmatprep.subr.bf16.mxu0 %v1204
        %1572 = vmatpush2.bf16.msra.mxu0 %v1203
        %1573 = vmatprep.subr.bf16.mxu0 %v1196
        %1574 = vmatpush2.bf16.msra.mxu0 %v1195
        %1575 = vmatprep.subr.bf16.mxu0 %v1188
        %1576 = vmatpush2.bf16.msra.mxu0 %v1187
        %1577 = vmatprep.subr.bf16.mxu0 %v1180
        %1578 = vmatpush2.bf16.msra.mxu0 %v1179
        %1579 = vmatprep.subr.bf16.mxu0 %v1172
        %1580 = vmatpush2.bf16.msra.mxu0 %v1171
        %1581 = vmatprep.subr.bf16.mxu0 %v1164
        %1582 = vmatpush2.bf16.msra.mxu0 %v1163
        %1583 = vmatprep.mubr.bf16.mxu0 %v659
        %1584 = vmatmul.mubr.bf16.gmra.mxu0 %v658
        %v1585 = vpop.f32.mrf.mxu0
        %v1586 = vadd.f32 0.0, %v1585
        %v1587 = vpop.f32.mrf.mxu0
        %v1588 = vadd.f32 0.0, %v1587
        %v1589 = vpop.f32.mrf.mxu0
        %v1590 = vpop.f32.mrf.mxu0
        %1591 = vdwg.mxu0
        %1592 = vmatprep.subr.bf16.mxu0 0
        %1593 = vmatpush1.bf16.msra.mxu0 0
        %1594 = vmatprep.subr.bf16.mxu0 0
        %1595 = vmatpush1.bf16.msra.mxu0 0
        %1596 = vmatprep.subr.bf16.mxu0 0
        %1597 = vmatpush1.bf16.msra.mxu0 0
        %1598 = vmatprep.subr.bf16.mxu0 0
        %1599 = vmatpush1.bf16.msra.mxu0 0
        %1600 = vmatprep.subr.bf16.mxu0 0
        %1601 = vmatpush1.bf16.msra.mxu0 0
        %1602 = vmatprep.subr.bf16.mxu0 0
        %1603 = vmatpush1.bf16.msra.mxu0 0
        %1604 = vmatprep.subr.bf16.mxu0 %v1236
        %1605 = vmatpush1.bf16.msra.mxu0 %v1235
        %1606 = vmatprep.subr.bf16.mxu0 %v1228
        %1607 = vmatpush1.bf16.msra.mxu0 %v1227
        %1608 = vmatprep.subr.bf16.mxu0 0
        %1609 = vmatpush2.bf16.msra.mxu0 0
        %1610 = vmatprep.subr.bf16.mxu0 0
        %1611 = vmatpush2.bf16.msra.mxu0 0
        %1612 = vmatprep.subr.bf16.mxu0 0
        %1613 = vmatpush2.bf16.msra.mxu0 0
        %1614 = vmatprep.subr.bf16.mxu0 0
        %1615 = vmatpush2.bf16.msra.mxu0 0
        %1616 = vmatprep.subr.bf16.mxu0 0
        %1617 = vmatpush2.bf16.msra.mxu0 0
        %1618 = vmatprep.subr.bf16.mxu0 0
        %1619 = vmatpush2.bf16.msra.mxu0 0
        %1620 = vmatprep.subr.bf16.mxu0 0
        %1621 = vmatpush2.bf16.msra.mxu0 0
        %1622 = vmatprep.subr.bf16.mxu0 0
        %1623 = vmatpush2.bf16.msra.mxu0 0
        %1624 = vmatprep.mubr.bf16.mxu0 0
        %1625 = vmatmul.mubr.bf16.gmra.mxu0 %v1385
        %v1626 = vpop.f32.mrf.mxu0
        %v1627 = vadd.f32 %v1586, %v1626
        %v1628 = vpop.f32.mrf.mxu0
        %v1629 = vadd.f32 %v1588, %v1628
        %v1630 = vpop.f32.mrf.mxu0
        %v1631 = vpop.f32.mrf.mxu0
        %1632 = vdwg.mxu0
        %1633 = vmatprep.subr.bf16.mxu0 %v1158
        %1634 = vmatpush1.bf16.msra.mxu0 %v1157
        %1635 = vmatprep.subr.bf16.mxu0 %v1150
        %1636 = vmatpush1.bf16.msra.mxu0 %v1149
        %1637 = vmatprep.subr.bf16.mxu0 %v1142
        %1638 = vmatpush1.bf16.msra.mxu0 %v1141
        %1639 = vmatprep.subr.bf16.mxu0 %v1134
        %1640 = vmatpush1.bf16.msra.mxu0 %v1133
        %1641 = vmatprep.subr.bf16.mxu0 %v1126
        %1642 = vmatpush1.bf16.msra.mxu0 %v1125
        %1643 = vmatprep.subr.bf16.mxu0 %v1118
        %1644 = vmatpush1.bf16.msra.mxu0 %v1117
        %1645 = vmatprep.subr.bf16.mxu0 %v1110
        %1646 = vmatpush1.bf16.msra.mxu0 %v1109
        %1647 = vmatprep.subr.bf16.mxu0 %v1102
        %1648 = vmatpush1.bf16.msra.mxu0 %v1101
        %1649 = vmatprep.subr.bf16.mxu0 %v1222
        %1650 = vmatpush2.bf16.msra.mxu0 %v1221
        %1651 = vmatprep.subr.bf16.mxu0 %v1214
        %1652 = vmatpush2.bf16.msra.mxu0 %v1213
        %1653 = vmatprep.subr.bf16.mxu0 %v1206
        %1654 = vmatpush2.bf16.msra.mxu0 %v1205
        %1655 = vmatprep.subr.bf16.mxu0 %v1198
        %1656 = vmatpush2.bf16.msra.mxu0 %v1197
        %1657 = vmatprep.subr.bf16.mxu0 %v1190
        %1658 = vmatpush2.bf16.msra.mxu0 %v1189
        %1659 = vmatprep.subr.bf16.mxu0 %v1182
        %1660 = vmatpush2.bf16.msra.mxu0 %v1181
        %1661 = vmatprep.subr.bf16.mxu0 %v1174
        %1662 = vmatpush2.bf16.msra.mxu0 %v1173
        %1663 = vmatprep.subr.bf16.mxu0 %v1166
        %1664 = vmatpush2.bf16.msra.mxu0 %v1165
        %1665 = vmatprep.mubr.bf16.mxu0 %v659
        %1666 = vmatmul.mubr.bf16.gmra.mxu0 %v658
        %v1667 = vpop.f32.mrf.mxu0
        %v1668 = vadd.f32 0.0, %v1667
        %v1669 = vpop.f32.mrf.mxu0
        %v1670 = vadd.f32 0.0, %v1669
        %v1671 = vpop.f32.mrf.mxu0
        %v1672 = vpop.f32.mrf.mxu0
        %1673 = vdwg.mxu0
        %1674 = vmatprep.subr.bf16.mxu0 0
        %1675 = vmatpush1.bf16.msra.mxu0 0
        %1676 = vmatprep.subr.bf16.mxu0 0
        %1677 = vmatpush1.bf16.msra.mxu0 0
        %1678 = vmatprep.subr.bf16.mxu0 0
        %1679 = vmatpush1.bf16.msra.mxu0 0
        %1680 = vmatprep.subr.bf16.mxu0 0
        %1681 = vmatpush1.bf16.msra.mxu0 0
        %1682 = vmatprep.subr.bf16.mxu0 0
        %1683 = vmatpush1.bf16.msra.mxu0 0
        %1684 = vmatprep.subr.bf16.mxu0 0
        %1685 = vmatpush1.bf16.msra.mxu0 0
        %1686 = vmatprep.subr.bf16.mxu0 %v1238
        %1687 = vmatpush1.bf16.msra.mxu0 %v1237
        %1688 = vmatprep.subr.bf16.mxu0 %v1230
        %1689 = vmatpush1.bf16.msra.mxu0 %v1229
        %1690 = vmatprep.subr.bf16.mxu0 0
        %1691 = vmatpush2.bf16.msra.mxu0 0
        %1692 = vmatprep.subr.bf16.mxu0 0
        %1693 = vmatpush2.bf16.msra.mxu0 0
        %1694 = vmatprep.subr.bf16.mxu0 0
        %1695 = vmatpush2.bf16.msra.mxu0 0
        %1696 = vmatprep.subr.bf16.mxu0 0
        %1697 = vmatpush2.bf16.msra.mxu0 0
        %1698 = vmatprep.subr.bf16.mxu0 0
        %1699 = vmatpush2.bf16.msra.mxu0 0
        %1700 = vmatprep.subr.bf16.mxu0 0
        %1701 = vmatpush2.bf16.msra.mxu0 0
        %1702 = vmatprep.subr.bf16.mxu0 0
        %1703 = vmatpush2.bf16.msra.mxu0 0
        %1704 = vmatprep.subr.bf16.mxu0 0
        %1705 = vmatpush2.bf16.msra.mxu0 0
        %1706 = vmatprep.mubr.bf16.mxu0 0
        %1707 = vmatmul.mubr.bf16.gmra.mxu0 %v1385
        %v1708 = vpop.f32.mrf.mxu0
        %v1709 = vadd.f32 %v1668, %v1708
        %v1710 = vpop.f32.mrf.mxu0
        %v1711 = vadd.f32 %v1670, %v1710
        %v1712 = vpop.f32.mrf.mxu0
        %v1713 = vpop.f32.mrf.mxu0
        %1714 = vdwg.mxu0
        %v1715 = vld [vmem:[%s2] sm:$0xff]
        %1717 = vset.pattern.permute.xlu0 0
        %1718 = vperm.xlu0 %1717, %v1715
        %v1719 = vpop.permute.xlu0 %1718
        %v1721 = vmul.f32 %v1463, %v1719
        %v1722 = vmul.f32 %v1465, %v1719
        %v1723 = vmul.f32 %v1545, %v1719
        %v1724 = vmul.f32 %v1547, %v1719
        %v1725 = vmul.f32 %v1627, %v1719
        %v1726 = vmul.f32 %v1629, %v1719
        %v1727 = vmul.f32 %v1709, %v1719
        %v1728 = vmul.f32 %v1711, %v1719
        %v1729 = vld [vmem:[%s3] sm:$0xff]
        %1731 = vset.pattern.permute.xlu0 0
        %1732 = vperm.xlu0 %1731, %v1729
        %v1733 = vpop.permute.xlu0 %1732
        %v1735 = vadd.f32 %v1721, %v1733
        %v1736 = vadd.f32 %v1722, %v1733
        %v1737 = vadd.f32 %v1723, %v1733
        %v1738 = vadd.f32 %v1724, %v1733
        %v1739 = vadd.f32 %v1725, %v1733
        %v1740 = vadd.f32 %v1726, %v1733
        %v1741 = vadd.f32 %v1727, %v1733
        %v1742 = vadd.f32 %v1728, %v1733
        %v1743 = vmax.f32 %v1735, 0.0
        %v1744 = vmax.f32 %v1736, 0.0
        %v1745 = vmax.f32 %v1737, 0.0
        %v1746 = vmax.f32 %v1738, 0.0
        %v1747 = vmax.f32 %v1739, 0.0
        %v1748 = vmax.f32 %v1740, 0.0
        %v1749 = vmax.f32 %v1741, 0.0
        %v1750 = vmax.f32 %v1742, 0.0
        %v1751 = vpack.c.bf16 %v1743, %v1743
        %v1752 = vpack.c.bf16 %v1744, %v1744
        %v1753 = vpack.c.bf16 %v1745, %v1745
        %v1754 = vpack.c.bf16 %v1746, %v1746
        %v1755 = vpack.c.bf16 %v1747, %v1747
        %v1756 = vpack.c.bf16 %v1748, %v1748
        %v1757 = vpack.c.bf16 %v1749, %v1749
        %v1758 = vpack.c.bf16 %v1750, %v1750
        %v1767 = vunpack.c.l.b16 %v1751
        %v1768 = vunpack.c.l.b16 %v1752
        %v1769 = vunpack.c.l.b16 %v1753
        %v1770 = vunpack.c.l.b16 %v1754
        %v1771 = vunpack.c.l.b16 %v1755
        %v1772 = vunpack.c.l.b16 %v1756
        %v1773 = vunpack.c.l.b16 %v1757
        %v1774 = vunpack.c.l.b16 %v1758
        %v1775 = vpack.c.b16 %v1768, %v1767
        %v1776 = vpack.c.b16 %v1770, %v1769
        %v1777 = vpack.c.b16 %v1772, %v1771
        %v1778 = vpack.c.b16 %v1774, %v1773
        %1783 = vst [vmem:[%s504] sm:$0xff] %v1775
        %1784 = vst [vmem:[%s504 + $0x8] sm:$0xff] %v1776
        %1785 = vst [vmem:[%s504 + $0x10] sm:$0xff] %v1777
        %1786 = vst [vmem:[%s504 + $0x18] sm:$0xff] %v1778
        %s1787 = smul.u32 8, %s15
        %p1788 = scmp.lt.s32.totalorder %s1787, 15
        %s1789 = scalar_select %p1788, %s1787, 15
        %s1790 = smul.addr %s1789, 4
        %s1791 = scalar_lea.vmem %s4, %s1790
        // Predicated region
        $region60: #{forward.26} parent=54 // pred_check
          %p1792 = pneg %p122
        $region61: #{forward.26} parent=54 // pred_check_branch
          %1794 = sbr.rel (%p1792) target = $region63
        $region62: #{forward.26} parent=54 // pred_region
          %s1795 = smul.u32 8, %s15
        $region63: #{forward.26} parent=54 // pred_fallthru
          _
      $region55: #{forward.26} parent=5 // pred_fallthru
        _
      %p1796 = scmp.le.s32.totalorder 2, %s10
      // Predicated region
      $region64: #{forward.26} parent=5 // pred_check
        %p1797 = pneg %p1796
      $region65: #{forward.26} parent=5 // pred_check_branch
        %1799 = sbr.rel (%p1797) target = $region67
      $region66: #{forward.26} parent=5 // pred_region
        %s1800 = ssub.s32 %s10, 2
        // Predicated region
        $region68: #{forward.26} parent=66 // pred_check
          %p1801 = pneg %p128
        $region69: #{forward.26} parent=66 // pred_check_branch
          %1803 = sbr.rel (%p1801) target = $region71
        $region70: #{forward.26} parent=66 // pred_region
          %s1804 = smul.u32 8, %s16
          %p1805 = scmp.lt.s32.totalorder %s1804, 15
          %s1806 = scalar_select %p1805, %s1804, 15
          %s1807 = smul.addr %s1806, 4
          %s1808 = scalar_lea.vmem %s4, %s1807
        $region71: #{forward.26} parent=66 // pred_fallthru
          _
      $region67: #{forward.26} parent=5 // pred_fallthru
        _
    $region6: #{forward.26} parent=1 // loop_footer
      %s14 = sadd.s32 1, %s10
    $region7: #{forward.26} parent=1 // loop_footer_branch
      %9 = sbr.rel target = $region3
    $region8: #{forward.26} parent=1 // loop_exit
      _

// kernel: forward.27
$region0: #{forward.27}
  #allocation0 [shape = 'u32[]', space=smem, size = 0x4, offset = 0x4, fixed_abs, tag = 'smem constant byte address 0x4 - core index']
  #allocation1 [shape = 'u32[144,128]{1,0:T(1,128)}', space=vmem, size = 0x12000, scoped, tag = 'internal scratch']
  %s0 = inlined_call_operand.vmem [shape: bf16[2,3,392], index: 0, kind: input, shape index: {}]
  %s1 = inlined_call_operand.vmem [shape: f32[2,3,1], index: 1, kind: input, shape index: {}]
  %s2 = inlined_call_operand.vmem [shape: bf16[392,2048], index: 2, kind: input, shape index: {}]
  %s3 = inlined_call_operand.vmem [shape: f32[1,2048], index: 3, kind: input, shape index: {}]
  %s4 = inlined_call_operand.vmem [shape: bf16[3,2048], index: 4, kind: input, shape index: {}]
  %s5 = inlined_call_operand.vmem [shape: f32[3,2048], index: 5, kind: output, shape index: {}]
  %s6 = sld [smem:[#allocation0]]
  $region76: #{forward.27} parent=0
    _
  %s8 = ssub.s32 1, %s6
  %s9 = scalar_select 0, %s8, %s6
  $region1: #{forward.27} parent=0
    #allocation2 [shape = 'u8[1605632]{0}', space=vmem, size = 0x188000, scoped, tag = 'input window, operand 2']
    loop: start=0, step=1, limit=4
    $region2: #{forward.27} parent=1 // loop_pre_header
      _
    $region3: #{forward.27} parent=1 // loop_header
      %s11 = sphi 0, %s15
      %p12 = scmp.ge.s32.totalorder %s11, 4
      %s18 = sphi 0, %s30
      %s19 = sphi 0, %s26
      %s20 = sphi 0, %s18
      %s21 = sphi 0, %s19
      %s22 = sphi 0, %s20
      %s23 = sphi 0, %s21
      %s33 = sphi 0, %s35
      %s36 = sphi 0, %s33
      %s37 = sphi 0, %s36
      %s53 = sphi 0, %s37
      %s59 = sphi 0, %s61
      %s62 = sphi 0, %s59
      %s63 = sphi 0, %s62
      %s79 = sphi 0, %s63
      %s87 = sphi 0, %s89
      %s90 = sphi 0, %s87
      %s91 = sphi 0, %s90
      %s107 = sphi 0, %s91
      %s115 = sphi 0, %s117
      %s118 = sphi 0, %s115
      %s119 = sphi 0, %s118
      %s135 = sphi 0, %s119
      %s143 = sphi 0, %s145
      %s146 = sphi 0, %s143
      %s147 = sphi 0, %s146
      %s163 = sphi 0, %s147
      %s171 = sphi 0, %s173
      %s174 = sphi 0, %s171
      %s175 = sphi 0, %s174
      %s191 = sphi 0, %s175
    $region4: #{forward.27} parent=1 // loop_header_branch
      %14 = sbr.rel (%p12) target = $region8
    $region5: #{forward.27} parent=1 // loop_body
      %s16 = ssub.s32 %s11, 1
      %s17 = ssub.s32 %s11, 2
      %s24 = sadd.s32 1, %s19
      %p25 = scmp.ge.s32.totalorder %s24, 1
      %s26 = scalar_select %p25, 0, %s24
      %s27 = sadd.s32 1, %s18
      %s28 = scalar_select %p25, %s27, %s18
      %p29 = scmp.ge.s32.totalorder %s28, 2
      %s30 = scalar_select %p29, 0, %s28
      %s31 = ssub.s32 %s18, %s30
      %p32 = scmp.eq.s32.totalorder %s31, 0
      %s34 = sadd.s32 %s33, 1
      %s35 = scalar_select %p32, %s33, %s34
      %p38 = pneg %p32
      %p39 = scmp.eq.s32.totalorder %s11, 1
      %p40 = por %p38, %p39
      %p41 = scmp.ne.s32.totalorder %s33, %s36
      %p42 = scmp.eq.s32.totalorder %s11, 0
      %p43 = por %p41, %p42
      %p44 = scmp.ne.s32.totalorder %s33, %s36
      %p45 = scmp.eq.s32.totalorder %s16, 1
      %p46 = por %p44, %p45
      %p47 = scmp.ne.s32.totalorder %s36, %s37
      %p48 = scmp.eq.s32.totalorder %s16, 0
      %p49 = por %p47, %p48
      %p50 = scmp.ne.s32.totalorder %s36, %s37
      %p51 = scmp.eq.s32.totalorder %s17, 1
      %p52 = por %p50, %p51
      %p54 = scmp.ne.s32.totalorder %s37, %s53
      %p55 = scmp.eq.s32.totalorder %s17, 0
      %p56 = por %p54, %p55
      %s57 = ssub.s32 %s18, %s30
      %p58 = scmp.eq.s32.totalorder %s57, 0
      %s60 = sadd.s32 %s59, 1
      %s61 = scalar_select %p58, %s59, %s60
      %p64 = pneg %p58
      %p65 = scmp.eq.s32.totalorder %s11, 1
      %p66 = por %p64, %p65
      %p67 = scmp.ne.s32.totalorder %s59, %s62
      %p68 = scmp.eq.s32.totalorder %s11, 0
      %p69 = por %p67, %p68
      %p70 = scmp.ne.s32.totalorder %s59, %s62
      %p71 = scmp.eq.s32.totalorder %s16, 1
      %p72 = por %p70, %p71
      %p73 = scmp.ne.s32.totalorder %s62, %s63
      %p74 = scmp.eq.s32.totalorder %s16, 0
      %p75 = por %p73, %p74
      %p76 = scmp.ne.s32.totalorder %s62, %s63
      %p77 = scmp.eq.s32.totalorder %s17, 1
      %p78 = por %p76, %p77
      %p80 = scmp.ne.s32.totalorder %s63, %s79
      %p81 = scmp.eq.s32.totalorder %s17, 0
      %p82 = por %p80, %p81
      %s83 = sadd.s32 %s18, %s19
      %s84 = sadd.s32 %s30, %s26
      %s85 = ssub.s32 %s83, %s84
      %p86 = scmp.eq.s32.totalorder %s85, 0
      %s88 = sadd.s32 %s87, 1
      %s89 = scalar_select %p86, %s87, %s88
      %p92 = pneg %p86
      %p93 = scmp.eq.s32.totalorder %s11, 1
      %p94 = por %p92, %p93
      %p95 = scmp.ne.s32.totalorder %s87, %s90
      %p96 = scmp.eq.s32.totalorder %s11, 0
      %p97 = por %p95, %p96
      %p98 = scmp.ne.s32.totalorder %s87, %s90
      %p99 = scmp.eq.s32.totalorder %s16, 1
      %p100 = por %p98, %p99
      %p101 = scmp.ne.s32.totalorder %s90, %s91
      %p102 = scmp.eq.s32.totalorder %s16, 0
      %p103 = por %p101, %p102
      %p104 = scmp.ne.s32.totalorder %s90, %s91
      %p105 = scmp.eq.s32.totalorder %s17, 1
      %p106 = por %p104, %p105
      %p108 = scmp.ne.s32.totalorder %s91, %s107
      %p109 = scmp.eq.s32.totalorder %s17, 0
      %p110 = por %p108, %p109
      %s111 = sadd.s32 %s18, %s19
      %s112 = sadd.s32 %s30, %s26
      %s113 = ssub.s32 %s111, %s112
      %p114 = scmp.eq.s32.totalorder %s113, 0
      %s116 = sadd.s32 %s115, 1
      %s117 = scalar_select %p114, %s115, %s116
      %p120 = pneg %p114
      %p121 = scmp.eq.s32.totalorder %s11, 1
      %p122 = por %p120, %p121
      %p123 = scmp.ne.s32.totalorder %s115, %s118
      %p124 = scmp.eq.s32.totalorder %s11, 0
      %p125 = por %p123, %p124
      %p126 = scmp.ne.s32.totalorder %s115, %s118
      %p127 = scmp.eq.s32.totalorder %s16, 1
      %p128 = por %p126, %p127
      %p129 = scmp.ne.s32.totalorder %s118, %s119
      %p130 = scmp.eq.s32.totalorder %s16, 0
      %p131 = por %p129, %p130
      %p132 = scmp.ne.s32.totalorder %s118, %s119
      %p133 = scmp.eq.s32.totalorder %s17, 1
      %p134 = por %p132, %p133
      %p136 = scmp.ne.s32.totalorder %s119, %s135
      %p137 = scmp.eq.s32.totalorder %s17, 0
      %p138 = por %p136, %p137
      %s139 = sadd.s32 %s18, %s19
      %s140 = sadd.s32 %s30, %s26
      %s141 = ssub.s32 %s139, %s140
      %p142 = scmp.eq.s32.totalorder %s141, 0
      %s144 = sadd.s32 %s143, 1
      %s145 = scalar_select %p142, %s143, %s144
      %p148 = pneg %p142
      %p149 = scmp.eq.s32.totalorder %s11, 1
      %p150 = por %p148, %p149
      %p151 = scmp.ne.s32.totalorder %s143, %s146
      %p152 = scmp.eq.s32.totalorder %s11, 0
      %p153 = por %p151, %p152
      %p154 = scmp.ne.s32.totalorder %s143, %s146
      %p155 = scmp.eq.s32.totalorder %s16, 1
      %p156 = por %p154, %p155
      %p157 = scmp.ne.s32.totalorder %s146, %s147
      %p158 = scmp.eq.s32.totalorder %s16, 0
      %p159 = por %p157, %p158
      %p160 = scmp.ne.s32.totalorder %s146, %s147
      %p161 = scmp.eq.s32.totalorder %s17, 1
      %p162 = por %p160, %p161
      %p164 = scmp.ne.s32.totalorder %s147, %s163
      %p165 = scmp.eq.s32.totalorder %s17, 0
      %p166 = por %p164, %p165
      %s167 = sadd.s32 %s18, %s19
      %s168 = sadd.s32 %s30, %s26
      %s169 = ssub.s32 %s167, %s168
      %p170 = scmp.eq.s32.totalorder %s169, 0
      %s172 = sadd.s32 %s171, 1
      %s173 = scalar_select %p170, %s171, %s172
      %p176 = pneg %p170
      %p177 = scmp.eq.s32.totalorder %s11, 1
      %p178 = por %p176, %p177
      %p179 = scmp.ne.s32.totalorder %s171, %s174
      %p180 = scmp.eq.s32.totalorder %s11, 0
      %p181 = por %p179, %p180
      %p182 = scmp.ne.s32.totalorder %s171, %s174
      %p183 = scmp.eq.s32.totalorder %s16, 1
      %p184 = por %p182, %p183
      %p185 = scmp.ne.s32.totalorder %s174, %s175
      %p186 = scmp.eq.s32.totalorder %s16, 0
      %p187 = por %p185, %p186
      %p188 = scmp.ne.s32.totalorder %s174, %s175
      %p189 = scmp.eq.s32.totalorder %s17, 1
      %p190 = por %p188, %p189
      %p192 = scmp.ne.s32.totalorder %s175, %s191
      %p193 = scmp.eq.s32.totalorder %s17, 0
      %p194 = por %p192, %p193
      %p195 = scmp.le.s32.totalorder 1, %s11
      %p196 = scmp.lt.s32.totalorder %s11, 3
      %p197 = pnand %p195, %p196
      %p198 = pneg %p197
      // Predicated region
      $region9: #{forward.27} parent=5 // pred_check
        _
      $region10: #{forward.27} parent=5 // pred_check_branch
        %200 = sbr.rel (%p197) target = $region12
      $region11: #{forward.27} parent=5 // pred_region
        %s201 = ssub.s32 %s11, 1
      $region12: #{forward.27} parent=5 // pred_fallthru
        _
      %p202 = scmp.lt.s32.totalorder %s11, 2
      // Predicated region
      $region13: #{forward.27} parent=5 // pred_check
        %p203 = pneg %p202
      $region14: #{forward.27} parent=5 // pred_check_branch
        %205 = sbr.rel (%p203) target = $region16
      $region15: #{forward.27} parent=5 // pred_region
        // Predicated region
        $region17: #{forward.27} parent=15 // pred_check
          %p206 = pneg %p43
        $region18: #{forward.27} parent=15 // pred_check_branch
          %208 = sbr.rel (%p206) target = $region20
        $region19: #{forward.27} parent=15 // pred_region
          %p209 = scmp.lt.s32.totalorder %s18, 1
          %s210 = scalar_select %p209, %s18, 1
          %s211 = smul.addr %s210, 4
          %s212 = smul.addr %s211, 2
          %s213 = scalar_lea.vmem %s0, %s212
        $region20: #{forward.27} parent=15 // pred_fallthru
          _
        // Predicated region
        $region21: #{forward.27} parent=15 // pred_check
          %p214 = pneg %p69
        $region22: #{forward.27} parent=15 // pred_check_branch
          %216 = sbr.rel (%p214) target = $region24
        $region23: #{forward.27} parent=15 // pred_region
          %p217 = scmp.lt.s32.totalorder %s18, 1
          %s218 = scalar_select %p217, %s18, 1
          %s219 = smul.addr %s218, 4
          %s220 = scalar_lea.vmem %s1, %s219
        $region24: #{forward.27} parent=15 // pred_fallthru
          _
        // Predicated region
        $region25: #{forward.27} parent=15 // pred_check
          %p221 = pneg %p97
        $region26: #{forward.27} parent=15 // pred_check_branch
          %223 = sbr.rel (%p221) target = $region28
        $region27: #{forward.27} parent=15 // pred_region
          %s224 = sand.u32 %s87, 1
          %s225 = sand.u32 %s87, 1
          %s226 = smul.addr %s225, 1568
          %s227 = scalar_lea.vmem [#allocation2], %s226
          %s228 = sadd.s32 %s18, %s19
          %s229 = smul.u32 8, %s228
          %s230 = smul.addr %s229, 4
          %s231 = scalar_lea.vmem %s2, %s230
          // Predicated region
          $region29: #{forward.27} parent=27 // pred_check
            _
          $region30: #{forward.27} parent=27 // pred_check_branch
            %233 = sbr.rel (0) target = $region32
          $region31: #{forward.27} parent=27 // pred_region
            // Predicated region
            $region33: #{forward.27} parent=31 // pred_check
              _
            $region34: #{forward.27} parent=31 // pred_check_branch
              %235 = sbr.rel (0) target = $region36
            $region35: #{forward.27} parent=31 // pred_region
              loop: start=0, step=1, limit=1
              $region37: #{forward.27} parent=35 // loop_pre_header
                _
              $region38: #{forward.27} parent=35 // loop_header
                %s237 = sphi 0, %s241
                %p238 = scmp.ge.s32.totalorder %s237, 1
                %s242 = sphi %s231, %s231
                %s243 = sphi %s227, %s227
              $region39: #{forward.27} parent=35 // loop_header_branch
                %240 = sbr.rel (%p238) target = $region43
              $region40: #{forward.27} parent=35 // loop_body
                %v244 = vld [vmem:[%s242] sm:$0xff]
                %245 = vst [vmem:[%s243] sm:$0xff] %v244
                %v246 = vld [vmem:[%s242 + $0x8] sm:$0xff]
                %247 = vst [vmem:[%s243 + $0x8] sm:$0xff] %v246
                %v248 = vld [vmem:[%s242 + $0x10] sm:$0xff]
                %249 = vst [vmem:[%s243 + $0x10] sm:$0xff] %v248
                %v250 = vld [vmem:[%s242 + $0x18] sm:$0xff]
                %251 = vst [vmem:[%s243 + $0x18] sm:$0xff] %v250
                %v252 = vld [vmem:[%s242 + $0x40] sm:$0xff]
                %253 = vst [vmem:[%s243 + $0x20] sm:$0xff] %v252
                %v254 = vld [vmem:[%s242 + $0x48] sm:$0xff]
                %255 = vst [vmem:[%s243 + $0x28] sm:$0xff] %v254
                %v256 = vld [vmem:[%s242 + $0x50] sm:$0xff]
                %257 = vst [vmem:[%s243 + $0x30] sm:$0xff] %v256
                %v258 = vld [vmem:[%s242 + $0x58] sm:$0xff]
                %259 = vst [vmem:[%s243 + $0x38] sm:$0xff] %v258
                %v260 = vld [vmem:[%s242 + $0x80] sm:$0xff]
                %261 = vst [vmem:[%s243 + $0x40] sm:$0xff] %v260
                %v262 = vld [vmem:[%s242 + $0x88] sm:$0xff]
                %263 = vst [vmem:[%s243 + $0x48] sm:$0xff] %v262
                %v264 = vld [vmem:[%s242 + $0x90] sm:$0xff]
                %265 = vst [vmem:[%s243 + $0x50] sm:$0xff] %v264
                %v266 = vld [vmem:[%s242 + $0x98] sm:$0xff]
                %267 = vst [vmem:[%s243 + $0x58] sm:$0xff] %v266
                %v268 = vld [vmem:[%s242 + $0xc0] sm:$0xff]
                %269 = vst [vmem:[%s243 + $0x60] sm:$0xff] %v268
                %v270 = vld [vmem:[%s242 + $0xc8] sm:$0xff]
                %271 = vst [vmem:[%s243 + $0x68] sm:$0xff] %v270
                %v272 = vld [vmem:[%s242 + $0xd0] sm:$0xff]
                %273 = vst [vmem:[%s243 + $0x70] sm:$0xff] %v272
                %v274 = vld [vmem:[%s242 + $0xd8] sm:$0xff]
                %275 = vst [vmem:[%s243 + $0x78] sm:$0xff] %v274
                %v276 = vld [vmem:[%s242 + $0x100] sm:$0xff]
                %277 = vst [vmem:[%s243 + $0x80] sm:$0xff] %v276
                %v278 = vld [vmem:[%s242 + $0x108] sm:$0xff]
                %279 = vst [vmem:[%s243 + $0x88] sm:$0xff] %v278
                %v280 = vld [vmem:[%s242 + $0x110] sm:$0xff]
                %281 = vst [vmem:[%s243 + $0x90] sm:$0xff] %v280
                %v282 = vld [vmem:[%s242 + $0x118] sm:$0xff]
                %283 = vst [vmem:[%s243 + $0x98] sm:$0xff] %v282
                %v284 = vld [vmem:[%s242 + $0x140] sm:$0xff]
                %285 = vst [vmem:[%s243 + $0xa0] sm:$0xff] %v284
                %v286 = vld [vmem:[%s242 + $0x148] sm:$0xff]
                %287 = vst [vmem:[%s243 + $0xa8] sm:$0xff] %v286
                %v288 = vld [vmem:[%s242 + $0x150] sm:$0xff]
                %289 = vst [vmem:[%s243 + $0xb0] sm:$0xff] %v288
                %v290 = vld [vmem:[%s242 + $0x158] sm:$0xff]
                %291 = vst [vmem:[%s243 + $0xb8] sm:$0xff] %v290
                %v292 = vld [vmem:[%s242 + $0x180] sm:$0xff]
                %293 = vst [vmem:[%s243 + $0xc0] sm:$0xff] %v292
                %v294 = vld [vmem:[%s242 + $0x188] sm:$0xff]
                %295 = vst [vmem:[%s243 + $0xc8] sm:$0xff] %v294
                %v296 = vld [vmem:[%s242 + $0x190] sm:$0xff]
                %297 = vst [vmem:[%s243 + $0xd0] sm:$0xff] %v296
                %v298 = vld [vmem:[%s242 + $0x198] sm:$0xff]
                %299 = vst [vmem:[%s243 + $0xd8] sm:$0xff] %v298
                %v300 = vld [vmem:[%s242 + $0x1c0] sm:$0xff]
                %301 = vst [vmem:[%s243 + $0xe0] sm:$0xff] %v300
                %v302 = vld [vmem:[%s242 + $0x1c8] sm:$0xff]
                %303 = vst [vmem:[%s243 + $0xe8] sm:$0xff] %v302
                %v304 = vld [vmem:[%s242 + $0x1d0] sm:$0xff]
                %305 = vst [vmem:[%s243 + $0xf0] sm:$0xff] %v304
                %v306 = vld [vmem:[%s242 + $0x1d8] sm:$0xff]
                %307 = vst [vmem:[%s243 + $0xf8] sm:$0xff] %v306
                %v308 = vld [vmem:[%s242 + $0x200] sm:$0xff]
                %309 = vst [vmem:[%s243 + $0x100] sm:$0xff] %v308
                %v310 = vld [vmem:[%s242 + $0x208] sm:$0xff]
                %311 = vst [vmem:[%s243 + $0x108] sm:$0xff] %v310
                %v312 = vld [vmem:[%s242 + $0x210] sm:$0xff]
                %313 = vst [vmem:[%s243 + $0x110] sm:$0xff] %v312
                %v314 = vld [vmem:[%s242 + $0x218] sm:$0xff]
                %315 = vst [vmem:[%s243 + $0x118] sm:$0xff] %v314
                %v316 = vld [vmem:[%s242 + $0x240] sm:$0xff]
                %317 = vst [vmem:[%s243 + $0x120] sm:$0xff] %v316
                %v318 = vld [vmem:[%s242 + $0x248] sm:$0xff]
                %319 = vst [vmem:[%s243 + $0x128] sm:$0xff] %v318
                %v320 = vld [vmem:[%s242 + $0x250] sm:$0xff]
                %321 = vst [vmem:[%s243 + $0x130] sm:$0xff] %v320
                %v322 = vld [vmem:[%s242 + $0x258] sm:$0xff]
                %323 = vst [vmem:[%s243 + $0x138] sm:$0xff] %v322
                %v324 = vld [vmem:[%s242 + $0x280] sm:$0xff]
                %325 = vst [vmem:[%s243 + $0x140] sm:$0xff] %v324
                %v326 = vld [vmem:[%s242 + $0x288] sm:$0xff]
                %327 = vst [vmem:[%s243 + $0x148] sm:$0xff] %v326
                %v328 = vld [vmem:[%s242 + $0x290] sm:$0xff]
                %329 = vst [vmem:[%s243 + $0x150] sm:$0xff] %v328
                %v330 = vld [vmem:[%s242 + $0x298] sm:$0xff]
                %331 = vst [vmem:[%s243 + $0x158] sm:$0xff] %v330
                %v332 = vld [vmem:[%s242 + $0x2c0] sm:$0xff]
                %333 = vst [vmem:[%s243 + $0x160] sm:$0xff] %v332
                %v334 = vld [vmem:[%s242 + $0x2c8] sm:$0xff]
                %335 = vst [vmem:[%s243 + $0x168] sm:$0xff] %v334
                %v336 = vld [vmem:[%s242 + $0x2d0] sm:$0xff]
                %337 = vst [vmem:[%s243 + $0x170] sm:$0xff] %v336
                %v338 = vld [vmem:[%s242 + $0x2d8] sm:$0xff]
                %339 = vst [vmem:[%s243 + $0x178] sm:$0xff] %v338
                %v340 = vld [vmem:[%s242 + $0x300] sm:$0xff]
                %341 = vst [vmem:[%s243 + $0x180] sm:$0xff] %v340
                %v342 = vld [vmem:[%s242 + $0x308] sm:$0xff]
                %343 = vst [vmem:[%s243 + $0x188] sm:$0xff] %v342
                %v344 = vld [vmem:[%s242 + $0x310] sm:$0xff]
                %345 = vst [vmem:[%s243 + $0x190] sm:$0xff] %v344
                %v346 = vld [vmem:[%s242 + $0x318] sm:$0xff]
                %347 = vst [vmem:[%s243 + $0x198] sm:$0xff] %v346
                %v348 = vld [vmem:[%s242 + $0x340] sm:$0xff]
                %349 = vst [vmem:[%s243 + $0x1a0] sm:$0xff] %v348
                %v350 = vld [vmem:[%s242 + $0x348] sm:$0xff]
                %351 = vst [vmem:[%s243 + $0x1a8] sm:$0xff] %v350
                %v352 = vld [vmem:[%s242 + $0x350] sm:$0xff]
                %353 = vst [vmem:[%s243 + $0x1b0] sm:$0xff] %v352
                %v354 = vld [vmem:[%s242 + $0x358] sm:$0xff]
                %355 = vst [vmem:[%s243 + $0x1b8] sm:$0xff] %v354
                %v356 = vld [vmem:[%s242 + $0x380] sm:$0xff]
                %357 = vst [vmem:[%s243 + $0x1c0] sm:$0xff] %v356
                %v358 = vld [vmem:[%s242 + $0x388] sm:$0xff]
                %359 = vst [vmem:[%s243 + $0x1c8] sm:$0xff] %v358
                %v360 = vld [vmem:[%s242 + $0x390] sm:$0xff]
                %361 = vst [vmem:[%s243 + $0x1d0] sm:$0xff] %v360
                %v362 = vld [vmem:[%s242 + $0x398] sm:$0xff]
                %363 = vst [vmem:[%s243 + $0x1d8] sm:$0xff] %v362
                %v364 = vld [vmem:[%s242 + $0x3c0] sm:$0xff]
                %365 = vst [vmem:[%s243 + $0x1e0] sm:$0xff] %v364
                %v366 = vld [vmem:[%s242 + $0x3c8] sm:$0xff]
                %367 = vst [vmem:[%s243 + $0x1e8] sm:$0xff] %v366
                %v368 = vld [vmem:[%s242 + $0x3d0] sm:$0xff]
                %369 = vst [vmem:[%s243 + $0x1f0] sm:$0xff] %v368
                %v370 = vld [vmem:[%s242 + $0x3d8] sm:$0xff]
                %371 = vst [vmem:[%s243 + $0x1f8] sm:$0xff] %v370
                %v372 = vld [vmem:[%s242 + $0x400] sm:$0xff]
                %373 = vst [vmem:[%s243 + $0x200] sm:$0xff] %v372
                %v374 = vld [vmem:[%s242 + $0x408] sm:$0xff]
                %375 = vst [vmem:[%s243 + $0x208] sm:$0xff] %v374
                %v376 = vld [vmem:[%s242 + $0x410] sm:$0xff]
                %377 = vst [vmem:[%s243 + $0x210] sm:$0xff] %v376
                %v378 = vld [vmem:[%s242 + $0x418] sm:$0xff]
                %379 = vst [vmem:[%s243 + $0x218] sm:$0xff] %v378
                %v380 = vld [vmem:[%s242 + $0x440] sm:$0xff]
                %381 = vst [vmem:[%s243 + $0x220] sm:$0xff] %v380
                %v382 = vld [vmem:[%s242 + $0x448] sm:$0xff]
                %383 = vst [vmem:[%s243 + $0x228] sm:$0xff] %v382
                %v384 = vld [vmem:[%s242 + $0x450] sm:$0xff]
                %385 = vst [vmem:[%s243 + $0x230] sm:$0xff] %v384
                %v386 = vld [vmem:[%s242 + $0x458] sm:$0xff]
                %387 = vst [vmem:[%s243 + $0x238] sm:$0xff] %v386
                %v388 = vld [vmem:[%s242 + $0x480] sm:$0xff]
                %389 = vst [vmem:[%s243 + $0x240] sm:$0xff] %v388
                %v390 = vld [vmem:[%s242 + $0x488] sm:$0xff]
                %391 = vst [vmem:[%s243 + $0x248] sm:$0xff] %v390
                %v392 = vld [vmem:[%s242 + $0x490] sm:$0xff]
                %393 = vst [vmem:[%s243 + $0x250] sm:$0xff] %v392
                %v394 = vld [vmem:[%s242 + $0x498] sm:$0xff]
                %395 = vst [vmem:[%s243 + $0x258] sm:$0xff] %v394
                %v396 = vld [vmem:[%s242 + $0x4c0] sm:$0xff]
                %397 = vst [vmem:[%s243 + $0x260] sm:$0xff] %v396
                %v398 = vld [vmem:[%s242 + $0x4c8] sm:$0xff]
                %399 = vst [vmem:[%s243 + $0x268] sm:$0xff] %v398
                %v400 = vld [vmem:[%s242 + $0x4d0] sm:$0xff]
                %401 = vst [vmem:[%s243 + $0x270] sm:$0xff] %v400
                %v402 = vld [vmem:[%s242 + $0x4d8] sm:$0xff]
                %403 = vst [vmem:[%s243 + $0x278] sm:$0xff] %v402
                %v404 = vld [vmem:[%s242 + $0x500] sm:$0xff]
                %405 = vst [vmem:[%s243 + $0x280] sm:$0xff] %v404
                %v406 = vld [vmem:[%s242 + $0x508] sm:$0xff]
                %407 = vst [vmem:[%s243 + $0x288] sm:$0xff] %v406
                %v408 = vld [vmem:[%s242 + $0x510] sm:$0xff]
                %409 = vst [vmem:[%s243 + $0x290] sm:$0xff] %v408
                %v410 = vld [vmem:[%s242 + $0x518] sm:$0xff]
                %411 = vst [vmem:[%s243 + $0x298] sm:$0xff] %v410
                %v412 = vld [vmem:[%s242 + $0x540] sm:$0xff]
                %413 = vst [vmem:[%s243 + $0x2a0] sm:$0xff] %v412
                %v414 = vld [vmem:[%s242 + $0x548] sm:$0xff]
                %415 = vst [vmem:[%s243 + $0x2a8] sm:$0xff] %v414
                %v416 = vld [vmem:[%s242 + $0x550] sm:$0xff]
                %417 = vst [vmem:[%s243 + $0x2b0] sm:$0xff] %v416
                %v418 = vld [vmem:[%s242 + $0x558] sm:$0xff]
                %419 = vst [vmem:[%s243 + $0x2b8] sm:$0xff] %v418
                %v420 = vld [vmem:[%s242 + $0x580] sm:$0xff]
                %421 = vst [vmem:[%s243 + $0x2c0] sm:$0xff] %v420
                %v422 = vld [vmem:[%s242 + $0x588] sm:$0xff]
                %423 = vst [vmem:[%s243 + $0x2c8] sm:$0xff] %v422
                %v424 = vld [vmem:[%s242 + $0x590] sm:$0xff]
                %425 = vst [vmem:[%s243 + $0x2d0] sm:$0xff] %v424
                %v426 = vld [vmem:[%s242 + $0x598] sm:$0xff]
                %427 = vst [vmem:[%s243 + $0x2d8] sm:$0xff] %v426
                %v428 = vld [vmem:[%s242 + $0x5c0] sm:$0xff]
                %429 = vst [vmem:[%s243 + $0x2e0] sm:$0xff] %v428
                %v430 = vld [vmem:[%s242 + $0x5c8] sm:$0xff]
                %431 = vst [vmem:[%s243 + $0x2e8] sm:$0xff] %v430
                %v432 = vld [vmem:[%s242 + $0x5d0] sm:$0xff]
                %433 = vst [vmem:[%s243 + $0x2f0] sm:$0xff] %v432
                %v434 = vld [vmem:[%s242 + $0x5d8] sm:$0xff]
                %435 = vst [vmem:[%s243 + $0x2f8] sm:$0xff] %v434
                %v436 = vld [vmem:[%s242 + $0x600] sm:$0xff]
                %437 = vst [vmem:[%s243 + $0x300] sm:$0xff] %v436
                %v438 = vld [vmem:[%s242 + $0x608] sm:$0xff]
                %439 = vst [vmem:[%s243 + $0x308] sm:$0xff] %v438
                %v440 = vld [vmem:[%s242 + $0x610] sm:$0xff]
                %441 = vst [vmem:[%s243 + $0x310] sm:$0xff] %v440
                %v442 = vld [vmem:[%s242 + $0x618] sm:$0xff]
                %443 = vst [vmem:[%s243 + $0x318] sm:$0xff] %v442
                %v444 = vld [vmem:[%s242 + $0x640] sm:$0xff]
                %445 = vst [vmem:[%s243 + $0x320] sm:$0xff] %v444
                %v446 = vld [vmem:[%s242 + $0x648] sm:$0xff]
                %447 = vst [vmem:[%s243 + $0x328] sm:$0xff] %v446
                %v448 = vld [vmem:[%s242 + $0x650] sm:$0xff]
                %449 = vst [vmem:[%s243 + $0x330] sm:$0xff] %v448
                %v450 = vld [vmem:[%s242 + $0x658] sm:$0xff]
                %451 = vst [vmem:[%s243 + $0x338] sm:$0xff] %v450
                %v452 = vld [vmem:[%s242 + $0x680] sm:$0xff]
                %453 = vst [vmem:[%s243 + $0x340] sm:$0xff] %v452
                %v454 = vld [vmem:[%s242 + $0x688] sm:$0xff]
                %455 = vst [vmem:[%s243 + $0x348] sm:$0xff] %v454
                %v456 = vld [vmem:[%s242 + $0x690] sm:$0xff]
                %457 = vst [vmem:[%s243 + $0x350] sm:$0xff] %v456
                %v458 = vld [vmem:[%s242 + $0x698] sm:$0xff]
                %459 = vst [vmem:[%s243 + $0x358] sm:$0xff] %v458
                %v460 = vld [vmem:[%s242 + $0x6c0] sm:$0xff]
                %461 = vst [vmem:[%s243 + $0x360] sm:$0xff] %v460
                %v462 = vld [vmem:[%s242 + $0x6c8] sm:$0xff]
                %463 = vst [vmem:[%s243 + $0x368] sm:$0xff] %v462
                %v464 = vld [vmem:[%s242 + $0x6d0] sm:$0xff]
                %465 = vst [vmem:[%s243 + $0x370] sm:$0xff] %v464
                %v466 = vld [vmem:[%s242 + $0x6d8] sm:$0xff]
                %467 = vst [vmem:[%s243 + $0x378] sm:$0xff] %v466
                %v468 = vld [vmem:[%s242 + $0x700] sm:$0xff]
                %469 = vst [vmem:[%s243 + $0x380] sm:$0xff] %v468
                %v470 = vld [vmem:[%s242 + $0x708] sm:$0xff]
                %471 = vst [vmem:[%s243 + $0x388] sm:$0xff] %v470
                %v472 = vld [vmem:[%s242 + $0x710] sm:$0xff]
                %473 = vst [vmem:[%s243 + $0x390] sm:$0xff] %v472
                %v474 = vld [vmem:[%s242 + $0x718] sm:$0xff]
                %475 = vst [vmem:[%s243 + $0x398] sm:$0xff] %v474
                %v476 = vld [vmem:[%s242 + $0x740] sm:$0xff]
                %477 = vst [vmem:[%s243 + $0x3a0] sm:$0xff] %v476
                %v478 = vld [vmem:[%s242 + $0x748] sm:$0xff]
                %479 = vst [vmem:[%s243 + $0x3a8] sm:$0xff] %v478
                %v480 = vld [vmem:[%s242 + $0x750] sm:$0xff]
                %481 = vst [vmem:[%s243 + $0x3b0] sm:$0xff] %v480
                %v482 = vld [vmem:[%s242 + $0x758] sm:$0xff]
                %483 = vst [vmem:[%s243 + $0x3b8] sm:$0xff] %v482
                %v484 = vld [vmem:[%s242 + $0x780] sm:$0xff]
                %485 = vst [vmem:[%s243 + $0x3c0] sm:$0xff] %v484
                %v486 = vld [vmem:[%s242 + $0x788] sm:$0xff]
                %487 = vst [vmem:[%s243 + $0x3c8] sm:$0xff] %v486
                %v488 = vld [vmem:[%s242 + $0x790] sm:$0xff]
                %489 = vst [vmem:[%s243 + $0x3d0] sm:$0xff] %v488
                %v490 = vld [vmem:[%s242 + $0x798] sm:$0xff]
                %491 = vst [vmem:[%s243 + $0x3d8] sm:$0xff] %v490
                %v492 = vld [vmem:[%s242 + $0x7c0] sm:$0xff]
                %493 = vst [vmem:[%s243 + $0x3e0] sm:$0xff] %v492
                %v494 = vld [vmem:[%s242 + $0x7c8] sm:$0xff]
                %495 = vst [vmem:[%s243 + $0x3e8] sm:$0xff] %v494
                %v496 = vld [vmem:[%s242 + $0x7d0] sm:$0xff]
                %497 = vst [vmem:[%s243 + $0x3f0] sm:$0xff] %v496
                %v498 = vld [vmem:[%s242 + $0x7d8] sm:$0xff]
                %499 = vst [vmem:[%s243 + $0x3f8] sm:$0xff] %v498
                %v500 = vld [vmem:[%s242 + $0x800] sm:$0xff]
                %501 = vst [vmem:[%s243 + $0x400] sm:$0xff] %v500
                %v502 = vld [vmem:[%s242 + $0x808] sm:$0xff]
                %503 = vst [vmem:[%s243 + $0x408] sm:$0xff] %v502
                %v504 = vld [vmem:[%s242 + $0x810] sm:$0xff]
                %505 = vst [vmem:[%s243 + $0x410] sm:$0xff] %v504
                %v506 = vld [vmem:[%s242 + $0x818] sm:$0xff]
                %507 = vst [vmem:[%s243 + $0x418] sm:$0xff] %v506
                %v508 = vld [vmem:[%s242 + $0x840] sm:$0xff]
                %509 = vst [vmem:[%s243 + $0x420] sm:$0xff] %v508
                %v510 = vld [vmem:[%s242 + $0x848] sm:$0xff]
                %511 = vst [vmem:[%s243 + $0x428] sm:$0xff] %v510
                %v512 = vld [vmem:[%s242 + $0x850] sm:$0xff]
                %513 = vst [vmem:[%s243 + $0x430] sm:$0xff] %v512
                %v514 = vld [vmem:[%s242 + $0x858] sm:$0xff]
                %515 = vst [vmem:[%s243 + $0x438] sm:$0xff] %v514
                %v516 = vld [vmem:[%s242 + $0x880] sm:$0xff]
                %517 = vst [vmem:[%s243 + $0x440] sm:$0xff] %v516
                %v518 = vld [vmem:[%s242 + $0x888] sm:$0xff]
                %519 = vst [vmem:[%s243 + $0x448] sm:$0xff] %v518
                %v520 = vld [vmem:[%s242 + $0x890] sm:$0xff]
                %521 = vst [vmem:[%s243 + $0x450] sm:$0xff] %v520
                %v522 = vld [vmem:[%s242 + $0x898] sm:$0xff]
                %523 = vst [vmem:[%s243 + $0x458] sm:$0xff] %v522
                %v524 = vld [vmem:[%s242 + $0x8c0] sm:$0xff]
                %525 = vst [vmem:[%s243 + $0x460] sm:$0xff] %v524
                %v526 = vld [vmem:[%s242 + $0x8c8] sm:$0xff]
                %527 = vst [vmem:[%s243 + $0x468] sm:$0xff] %v526
                %v528 = vld [vmem:[%s242 + $0x8d0] sm:$0xff]
                %529 = vst [vmem:[%s243 + $0x470] sm:$0xff] %v528
                %v530 = vld [vmem:[%s242 + $0x8d8] sm:$0xff]
                %531 = vst [vmem:[%s243 + $0x478] sm:$0xff] %v530
                %v532 = vld [vmem:[%s242 + $0x900] sm:$0xff]
                %533 = vst [vmem:[%s243 + $0x480] sm:$0xff] %v532
                %v534 = vld [vmem:[%s242 + $0x908] sm:$0xff]
                %535 = vst [vmem:[%s243 + $0x488] sm:$0xff] %v534
                %v536 = vld [vmem:[%s242 + $0x910] sm:$0xff]
                %537 = vst [vmem:[%s243 + $0x490] sm:$0xff] %v536
                %v538 = vld [vmem:[%s242 + $0x918] sm:$0xff]
                %539 = vst [vmem:[%s243 + $0x498] sm:$0xff] %v538
                %v540 = vld [vmem:[%s242 + $0x940] sm:$0xff]
                %541 = vst [vmem:[%s243 + $0x4a0] sm:$0xff] %v540
                %v542 = vld [vmem:[%s242 + $0x948] sm:$0xff]
                %543 = vst [vmem:[%s243 + $0x4a8] sm:$0xff] %v542
                %v544 = vld [vmem:[%s242 + $0x950] sm:$0xff]
                %545 = vst [vmem:[%s243 + $0x4b0] sm:$0xff] %v544
                %v546 = vld [vmem:[%s242 + $0x958] sm:$0xff]
                %547 = vst [vmem:[%s243 + $0x4b8] sm:$0xff] %v546
                %v548 = vld [vmem:[%s242 + $0x980] sm:$0xff]
                %549 = vst [vmem:[%s243 + $0x4c0] sm:$0xff] %v548
                %v550 = vld [vmem:[%s242 + $0x988] sm:$0xff]
                %551 = vst [vmem:[%s243 + $0x4c8] sm:$0xff] %v550
                %v552 = vld [vmem:[%s242 + $0x990] sm:$0xff]
                %553 = vst [vmem:[%s243 + $0x4d0] sm:$0xff] %v552
                %v554 = vld [vmem:[%s242 + $0x998] sm:$0xff]
                %555 = vst [vmem:[%s243 + $0x4d8] sm:$0xff] %v554
                %v556 = vld [vmem:[%s242 + $0x9c0] sm:$0xff]
                %557 = vst [vmem:[%s243 + $0x4e0] sm:$0xff] %v556
                %v558 = vld [vmem:[%s242 + $0x9c8] sm:$0xff]
                %559 = vst [vmem:[%s243 + $0x4e8] sm:$0xff] %v558
                %v560 = vld [vmem:[%s242 + $0x9d0] sm:$0xff]
                %561 = vst [vmem:[%s243 + $0x4f0] sm:$0xff] %v560
                %v562 = vld [vmem:[%s242 + $0x9d8] sm:$0xff]
                %563 = vst [vmem:[%s243 + $0x4f8] sm:$0xff] %v562
                %v564 = vld [vmem:[%s242 + $0xa00] sm:$0xff]
                %565 = vst [vmem:[%s243 + $0x500] sm:$0xff] %v564
                %v566 = vld [vmem:[%s242 + $0xa08] sm:$0xff]
                %567 = vst [vmem:[%s243 + $0x508] sm:$0xff] %v566
                %v568 = vld [vmem:[%s242 + $0xa10] sm:$0xff]
                %569 = vst [vmem:[%s243 + $0x510] sm:$0xff] %v568
                %v570 = vld [vmem:[%s242 + $0xa18] sm:$0xff]
                %571 = vst [vmem:[%s243 + $0x518] sm:$0xff] %v570
                %v572 = vld [vmem:[%s242 + $0xa40] sm:$0xff]
                %573 = vst [vmem:[%s243 + $0x520] sm:$0xff] %v572
                %v574 = vld [vmem:[%s242 + $0xa48] sm:$0xff]
                %575 = vst [vmem:[%s243 + $0x528] sm:$0xff] %v574
                %v576 = vld [vmem:[%s242 + $0xa50] sm:$0xff]
                %577 = vst [vmem:[%s243 + $0x530] sm:$0xff] %v576
                %v578 = vld [vmem:[%s242 + $0xa58] sm:$0xff]
                %579 = vst [vmem:[%s243 + $0x538] sm:$0xff] %v578
                %v580 = vld [vmem:[%s242 + $0xa80] sm:$0xff]
                %581 = vst [vmem:[%s243 + $0x540] sm:$0xff] %v580
                %v582 = vld [vmem:[%s242 + $0xa88] sm:$0xff]
                %583 = vst [vmem:[%s243 + $0x548] sm:$0xff] %v582
                %v584 = vld [vmem:[%s242 + $0xa90] sm:$0xff]
                %585 = vst [vmem:[%s243 + $0x550] sm:$0xff] %v584
                %v586 = vld [vmem:[%s242 + $0xa98] sm:$0xff]
                %587 = vst [vmem:[%s243 + $0x558] sm:$0xff] %v586
                %v588 = vld [vmem:[%s242 + $0xac0] sm:$0xff]
                %589 = vst [vmem:[%s243 + $0x560] sm:$0xff] %v588
                %v590 = vld [vmem:[%s242 + $0xac8] sm:$0xff]
                %591 = vst [vmem:[%s243 + $0x568] sm:$0xff] %v590
                %v592 = vld [vmem:[%s242 + $0xad0] sm:$0xff]
                %593 = vst [vmem:[%s243 + $0x570] sm:$0xff] %v592
                %v594 = vld [vmem:[%s242 + $0xad8] sm:$0xff]
                %595 = vst [vmem:[%s243 + $0x578] sm:$0xff] %v594
                %v596 = vld [vmem:[%s242 + $0xb00] sm:$0xff]
                %597 = vst [vmem:[%s243 + $0x580] sm:$0xff] %v596
                %v598 = vld [vmem:[%s242 + $0xb08] sm:$0xff]
                %599 = vst [vmem:[%s243 + $0x588] sm:$0xff] %v598
                %v600 = vld [vmem:[%s242 + $0xb10] sm:$0xff]
                %601 = vst [vmem:[%s243 + $0x590] sm:$0xff] %v600
                %v602 = vld [vmem:[%s242 + $0xb18] sm:$0xff]
                %603 = vst [vmem:[%s243 + $0x598] sm:$0xff] %v602
                %v604 = vld [vmem:[%s242 + $0xb40] sm:$0xff]
                %605 = vst [vmem:[%s243 + $0x5a0] sm:$0xff] %v604
                %v606 = vld [vmem:[%s242 + $0xb48] sm:$0xff]
                %607 = vst [vmem:[%s243 + $0x5a8] sm:$0xff] %v606
                %v608 = vld [vmem:[%s242 + $0xb50] sm:$0xff]
                %609 = vst [vmem:[%s243 + $0x5b0] sm:$0xff] %v608
                %v610 = vld [vmem:[%s242 + $0xb58] sm:$0xff]
                %611 = vst [vmem:[%s243 + $0x5b8] sm:$0xff] %v610
                %v612 = vld [vmem:[%s242 + $0xb80] sm:$0xff]
                %613 = vst [vmem:[%s243 + $0x5c0] sm:$0xff] %v612
                %v614 = vld [vmem:[%s242 + $0xb88] sm:$0xff]
                %615 = vst [vmem:[%s243 + $0x5c8] sm:$0xff] %v614
                %v616 = vld [vmem:[%s242 + $0xb90] sm:$0xff]
                %617 = vst [vmem:[%s243 + $0x5d0] sm:$0xff] %v616
                %v618 = vld [vmem:[%s242 + $0xb98] sm:$0xff]
                %619 = vst [vmem:[%s243 + $0x5d8] sm:$0xff] %v618
                %v620 = vld [vmem:[%s242 + $0xbc0] sm:$0xff]
                %621 = vst [vmem:[%s243 + $0x5e0] sm:$0xff] %v620
                %v622 = vld [vmem:[%s242 + $0xbc8] sm:$0xff]
                %623 = vst [vmem:[%s243 + $0x5e8] sm:$0xff] %v622
                %v624 = vld [vmem:[%s242 + $0xbd0] sm:$0xff]
                %625 = vst [vmem:[%s243 + $0x5f0] sm:$0xff] %v624
                %v626 = vld [vmem:[%s242 + $0xbd8] sm:$0xff]
                %627 = vst [vmem:[%s243 + $0x5f8] sm:$0xff] %v626
                %v628 = vld [vmem:[%s242 + $0xc00] sm:$0xff]
                %629 = vst [vmem:[%s243 + $0x600] sm:$0xff] %v628
                %v630 = vld [vmem:[%s242 + $0xc08] sm:$0xff]
                %631 = vst [vmem:[%s243 + $0x608] sm:$0xff] %v630
                %v632 = vld [vmem:[%s242 + $0xc10] sm:$0xff]
                %633 = vst [vmem:[%s243 + $0x610] sm:$0xff] %v632
                %v634 = vld [vmem:[%s242 + $0xc18] sm:$0xff]
                %635 = vst [vmem:[%s243 + $0x618] sm:$0xff] %v634
              $region41: #{forward.27} parent=35 // loop_footer
                %s241 = sadd.s32 1, %s237
              $region42: #{forward.27} parent=35 // loop_footer_branch
                %236 = sbr.rel target = $region38
              $region43: #{forward.27} parent=35 // loop_exit
                _
            $region36: #{forward.27} parent=31 // pred_fallthru
              _
            // Predicated region
            $region44: #{forward.27} parent=31 // pred_check
              _
            $region45: #{forward.27} parent=31 // pred_check_branch
              %637 = sbr.rel target = $region47
            $region46: #{forward.27} parent=31 // pred_region
              _
            $region47: #{forward.27} parent=31 // pred_fallthru
              _
          $region32: #{forward.27} parent=27 // pred_fallthru
            _
          %638 = vnop
        $region28: #{forward.27} parent=15 // pred_fallthru
          _
        // Predicated region
        $region48: #{forward.27} parent=15 // pred_check
          %p639 = pneg %p125
        $region49: #{forward.27} parent=15 // pred_check_branch
          %641 = sbr.rel (%p639) target = $region51
        $region50: #{forward.27} parent=15 // pred_region
          %s642 = sadd.s32 %s18, %s19
          %s643 = smul.u32 8, %s642
          %p644 = scmp.lt.s32.totalorder %s643, 15
          %s645 = scalar_select %p644, %s643, 15
          %s646 = scalar_lea.vmem %s3, %s645
          %s647 = sadd.s32 %s18, %s19
          %s648 = smul.u32 8, %s647
        $region51: #{forward.27} parent=15 // pred_fallthru
          _
        // Predicated region
        $region52: #{forward.27} parent=15 // pred_check
          %p649 = pneg %p153
        $region53: #{forward.27} parent=15 // pred_check_branch
          %651 = sbr.rel (%p649) target = $region55
        $region54: #{forward.27} parent=15 // pred_region
          %s652 = sadd.s32 %s18, %s19
          %s653 = smul.u32 8, %s652
          %p654 = scmp.lt.s32.totalorder %s653, 15
          %s655 = scalar_select %p654, %s653, 15
          %s656 = smul.addr %s655, 2
          %s657 = scalar_lea.vmem %s4, %s656
          %s658 = sadd.s32 %s18, %s19
          %s659 = smul.u32 8, %s658
        $region55: #{forward.27} parent=15 // pred_fallthru
          _
      $region16: #{forward.27} parent=5 // pred_fallthru
        _
      %p660 = scmp.le.s32.totalorder 1, %s11
      %p661 = scmp.lt.s32.totalorder %s11, 3
      %p662 = pnand %p660, %p661
      %p663 = pneg %p662
      // Predicated region
      $region56: #{forward.27} parent=5 // pred_check
        _
      $region57: #{forward.27} parent=5 // pred_check_branch
        %665 = sbr.rel (%p662) target = $region59
      $region58: #{forward.27} parent=5 // pred_region
        %s666 = ssub.s32 %s11, 1
        %s667 = sand.u32 %s90, 1
        %s668 = sand.u32 %s90, 1
        %s669 = smul.addr %s668, 1568
        %s670 = scalar_lea.vmem [#allocation2], %s669
        // Predicated region
        $region60: #{forward.27} parent=58 // pred_check
          %p671 = pneg %p103
        $region61: #{forward.27} parent=58 // pred_check_branch
          %673 = sbr.rel (%p671) target = $region63
        $region62: #{forward.27} parent=58 // pred_region
          _
        $region63: #{forward.27} parent=58 // pred_fallthru
          _
        %p674 = scmp.lt.s32.totalorder %s20, 1
        %s675 = scalar_select %p674, %s20, 1
        %s676 = smul.addr %s675, 4
        %s677 = smul.addr %s676, 2
        %s678 = scalar_lea.vmem %s0, %s677
        %p679 = pneg %p49
        %p680 = pneg %p46
        %p681 = scmp.lt.s32.totalorder %s20, 1
        %s682 = scalar_select %p681, %s20, 1
        %s683 = smul.addr %s682, 4
        %s684 = scalar_lea.vmem %s1, %s683
        %p685 = pneg %p75
        %p686 = pneg %p72
        %s687 = sand.u32 %s90, 1
        %s688 = sand.u32 %s90, 1
        %s689 = smul.addr %s688, 1568
        %s690 = scalar_lea.vmem [#allocation2], %s689
        %p691 = pneg %p103
        %p692 = pneg %p100
        %s693 = sadd.s32 %s20, %s21
        %s694 = smul.u32 8, %s693
        %p695 = scmp.lt.s32.totalorder %s694, 15
        %s696 = scalar_select %p695, %s694, 15
        %s697 = scalar_lea.vmem %s3, %s696
        %p698 = pneg %p131
        %p699 = pneg %p128
        %s700 = sadd.s32 %s20, %s21
        %s701 = smul.u32 8, %s700
        %p702 = scmp.lt.s32.totalorder %s701, 15
        %s703 = scalar_select %p702, %s701, 15
        %s704 = smul.addr %s703, 2
        %s705 = scalar_lea.vmem %s4, %s704
        %p706 = pneg %p159
        %p707 = pneg %p156
        %p708 = pneg %p187
        %p709 = pneg %p184
        %s710 = sadd.s32 %s20, %s21
        %s711 = smul.u32 8, %s710
        %p712 = scmp.lt.s32.totalorder %s711, 15
        %s713 = scalar_select %p712, %s711, 15
        %s714 = smul.addr %s713, 4
        %s715 = scalar_lea.vmem %s5, %s714
        %p716 = scmp.lt.s32.totalorder %s20, 1
        %s717 = scalar_select %p716, %s20, 1
        %s718 = smul.addr %s717, 4
        %s719 = smul.addr %s718, 2
        %s720 = scalar_lea.vmem %s0, %s719
        %p721 = scmp.lt.s32.totalorder %s20, 1
        %s722 = scalar_select %p721, %s20, 1
        %s723 = smul.addr %s722, 4
        %s724 = scalar_lea.vmem %s1, %s723
        %s725 = sadd.s32 %s20, %s21
        %s726 = smul.u32 8, %s725
        %s727 = sadd.s32 %s20, %s21
        %s728 = smul.u32 8, %s727
        %p729 = scmp.lt.s32.totalorder %s728, 15
        %s730 = scalar_select %p729, %s728, 15
        %s731 = scalar_lea.vmem %s3, %s730
        %s732 = sadd.s32 %s20, %s21
        %s733 = smul.u32 8, %s732
        %s734 = sadd.s32 %s20, %s21
        %s735 = smul.u32 8, %s734
        %p736 = scmp.lt.s32.totalorder %s735, 15
        %s737 = scalar_select %p736, %s735, 15
        %s738 = smul.addr %s737, 2
        %s739 = scalar_lea.vmem %s4, %s738
        %s740 = sadd.s32 %s20, %s21
        %s741 = smul.u32 8, %s740
        %s742 = sadd.s32 %s20, %s21
        %s743 = smul.u32 8, %s742
        %p744 = scmp.lt.s32.totalorder %s743, 15
        %s745 = scalar_select %p744, %s743, 15
        %s746 = smul.addr %s745, 4
        %s747 = scalar_lea.vmem %s5, %s746
        %s748 = sadd.s32 %s20, %s21
        %s749 = smul.u32 8, %s748
        %v751 = vld [vmem:[%s720] sm:$0xff]
        %v752 = vld [vmem:[%s670] sm:$0xff]
        %v753 = vld [vmem:[%s670 + $0x8] sm:$0xff]
        %v754 = vld [vmem:[%s670 + $0x10] sm:$0xff]
        %v755 = vld [vmem:[%s670 + $0x18] sm:$0xff]
        %v756 = vld [vmem:[%s670 + $0x20] sm:$0xff]
        %v757 = vld [vmem:[%s670 + $0x28] sm:$0xff]
        %v758 = vld [vmem:[%s670 + $0x30] sm:$0xff]
        %v759 = vld [vmem:[%s670 + $0x38] sm:$0xff]
        %v760 = vld [vmem:[%s670 + $0x40] sm:$0xff]
        %v761 = vld [vmem:[%s670 + $0x48] sm:$0xff]
        %v762 = vld [vmem:[%s670 + $0x50] sm:$0xff]
        %v763 = vld [vmem:[%s670 + $0x58] sm:$0xff]
        %v764 = vld [vmem:[%s670 + $0x60] sm:$0xff]
        %v765 = vld [vmem:[%s670 + $0x68] sm:$0xff]
        %v766 = vld [vmem:[%s670 + $0x70] sm:$0xff]
        %v767 = vld [vmem:[%s670 + $0x78] sm:$0xff]
        %v768 = vld [vmem:[%s670 + $0x80] sm:$0xff]
        %v769 = vld [vmem:[%s670 + $0x88] sm:$0xff]
        %v770 = vld [vmem:[%s670 + $0x90] sm:$0xff]
        %v771 = vld [vmem:[%s670 + $0x98] sm:$0xff]
        %v772 = vld [vmem:[%s670 + $0xa0] sm:$0xff]
        %v773 = vld [vmem:[%s670 + $0xa8] sm:$0xff]
        %v774 = vld [vmem:[%s670 + $0xb0] sm:$0xff]
        %v775 = vld [vmem:[%s670 + $0xb8] sm:$0xff]
        %v776 = vld [vmem:[%s670 + $0xc0] sm:$0xff]
        %v777 = vld [vmem:[%s670 + $0xc8] sm:$0xff]
        %v778 = vld [vmem:[%s670 + $0xd0] sm:$0xff]
        %v779 = vld [vmem:[%s670 + $0xd8] sm:$0xff]
        %v780 = vld [vmem:[%s670 + $0xe0] sm:$0xff]
        %v781 = vld [vmem:[%s670 + $0xe8] sm:$0xff]
        %v782 = vld [vmem:[%s670 + $0xf0] sm:$0xff]
        %v783 = vld [vmem:[%s670 + $0xf8] sm:$0xff]
        %v784 = vld [vmem:[%s670 + $0x100] sm:$0xff]
        %v785 = vld [vmem:[%s670 + $0x108] sm:$0xff]
        %v786 = vld [vmem:[%s670 + $0x110] sm:$0xff]
        %v787 = vld [vmem:[%s670 + $0x118] sm:$0xff]
        %v788 = vld [vmem:[%s670 + $0x120] sm:$0xff]
        %v789 = vld [vmem:[%s670 + $0x128] sm:$0xff]
        %v790 = vld [vmem:[%s670 + $0x130] sm:$0xff]
        %v791 = vld [vmem:[%s670 + $0x138] sm:$0xff]
        %v792 = vld [vmem:[%s670 + $0x140] sm:$0xff]
        %v793 = vld [vmem:[%s670 + $0x148] sm:$0xff]
        %v794 = vld [vmem:[%s670 + $0x150] sm:$0xff]
        %v795 = vld [vmem:[%s670 + $0x158] sm:$0xff]
        %v796 = vld [vmem:[%s670 + $0x160] sm:$0xff]
        %v797 = vld [vmem:[%s670 + $0x168] sm:$0xff]
        %v798 = vld [vmem:[%s670 + $0x170] sm:$0xff]
        %v799 = vld [vmem:[%s670 + $0x178] sm:$0xff]
        %v800 = vld [vmem:[%s670 + $0x180] sm:$0xff]
        %v801 = vld [vmem:[%s670 + $0x188] sm:$0xff]
        %v802 = vld [vmem:[%s670 + $0x190] sm:$0xff]
        %v803 = vld [vmem:[%s670 + $0x198] sm:$0xff]
        %v804 = vld [vmem:[%s670 + $0x1a0] sm:$0xff]
        %v805 = vld [vmem:[%s670 + $0x1a8] sm:$0xff]
        %v806 = vld [vmem:[%s670 + $0x1b0] sm:$0xff]
        %v807 = vld [vmem:[%s670 + $0x1b8] sm:$0xff]
        %v808 = vld [vmem:[%s670 + $0x1c0] sm:$0xff]
        %v809 = vld [vmem:[%s670 + $0x1c8] sm:$0xff]
        %v810 = vld [vmem:[%s670 + $0x1d0] sm:$0xff]
        %v811 = vld [vmem:[%s670 + $0x1d8] sm:$0xff]
        %v812 = vld [vmem:[%s670 + $0x1e0] sm:$0xff]
        %v813 = vld [vmem:[%s670 + $0x1e8] sm:$0xff]
        %v814 = vld [vmem:[%s670 + $0x1f0] sm:$0xff]
        %v815 = vld [vmem:[%s670 + $0x1f8] sm:$0xff]
        %v816 = vld [vmem:[%s670 + $0x200] sm:$0xff]
        %v817 = vld [vmem:[%s670 + $0x208] sm:$0xff]
        %v818 = vld [vmem:[%s670 + $0x210] sm:$0xff]
        %v819 = vld [vmem:[%s670 + $0x218] sm:$0xff]
        %v820 = vld [vmem:[%s670 + $0x220] sm:$0xff]
        %v821 = vld [vmem:[%s670 + $0x228] sm:$0xff]
        %v822 = vld [vmem:[%s670 + $0x230] sm:$0xff]
        %v823 = vld [vmem:[%s670 + $0x238] sm:$0xff]
        %v824 = vld [vmem:[%s670 + $0x240] sm:$0xff]
        %v825 = vld [vmem:[%s670 + $0x248] sm:$0xff]
        %v826 = vld [vmem:[%s670 + $0x250] sm:$0xff]
        %v827 = vld [vmem:[%s670 + $0x258] sm:$0xff]
        %v828 = vld [vmem:[%s670 + $0x260] sm:$0xff]
        %v829 = vld [vmem:[%s670 + $0x268] sm:$0xff]
        %v830 = vld [vmem:[%s670 + $0x270] sm:$0xff]
        %v831 = vld [vmem:[%s670 + $0x278] sm:$0xff]
        %v832 = vld [vmem:[%s670 + $0x280] sm:$0xff]
        %v833 = vld [vmem:[%s670 + $0x288] sm:$0xff]
        %v834 = vld [vmem:[%s670 + $0x290] sm:$0xff]
        %v835 = vld [vmem:[%s670 + $0x298] sm:$0xff]
        %v836 = vld [vmem:[%s670 + $0x2a0] sm:$0xff]
        %v837 = vld [vmem:[%s670 + $0x2a8] sm:$0xff]
        %v838 = vld [vmem:[%s670 + $0x2b0] sm:$0xff]
        %v839 = vld [vmem:[%s670 + $0x2b8] sm:$0xff]
        %v840 = vld [vmem:[%s670 + $0x2c0] sm:$0xff]
        %v841 = vld [vmem:[%s670 + $0x2c8] sm:$0xff]
        %v842 = vld [vmem:[%s670 + $0x2d0] sm:$0xff]
        %v843 = vld [vmem:[%s670 + $0x2d8] sm:$0xff]
        %v844 = vld [vmem:[%s670 + $0x2e0] sm:$0xff]
        %v845 = vld [vmem:[%s670 + $0x2e8] sm:$0xff]
        %v846 = vld [vmem:[%s670 + $0x2f0] sm:$0xff]
        %v847 = vld [vmem:[%s670 + $0x2f8] sm:$0xff]
        %v848 = vld [vmem:[%s670 + $0x300] sm:$0xff]
        %v849 = vld [vmem:[%s670 + $0x308] sm:$0xff]
        %v850 = vld [vmem:[%s670 + $0x310] sm:$0xff]
        %v851 = vld [vmem:[%s670 + $0x318] sm:$0xff]
        %v852 = vld [vmem:[%s670 + $0x320] sm:$0xff]
        %v853 = vld [vmem:[%s670 + $0x328] sm:$0xff]
        %v854 = vld [vmem:[%s670 + $0x330] sm:$0xff]
        %v855 = vld [vmem:[%s670 + $0x338] sm:$0xff]
        %v856 = vld [vmem:[%s670 + $0x340] sm:$0xff]
        %v857 = vld [vmem:[%s670 + $0x348] sm:$0xff]
        %v858 = vld [vmem:[%s670 + $0x350] sm:$0xff]
        %v859 = vld [vmem:[%s670 + $0x358] sm:$0xff]
        %v860 = vld [vmem:[%s670 + $0x360] sm:$0xff]
        %v861 = vld [vmem:[%s670 + $0x368] sm:$0xff]
        %v862 = vld [vmem:[%s670 + $0x370] sm:$0xff]
        %v863 = vld [vmem:[%s670 + $0x378] sm:$0xff]
        %v864 = vld [vmem:[%s670 + $0x380] sm:$0xff]
        %v865 = vld [vmem:[%s670 + $0x388] sm:$0xff]
        %v866 = vld [vmem:[%s670 + $0x390] sm:$0xff]
        %v867 = vld [vmem:[%s670 + $0x398] sm:$0xff]
        %v868 = vld [vmem:[%s670 + $0x3a0] sm:$0xff]
        %v869 = vld [vmem:[%s670 + $0x3a8] sm:$0xff]
        %v870 = vld [vmem:[%s670 + $0x3b0] sm:$0xff]
        %v871 = vld [vmem:[%s670 + $0x3b8] sm:$0xff]
        %v872 = vld [vmem:[%s670 + $0x3c0] sm:$0xff]
        %v873 = vld [vmem:[%s670 + $0x3c8] sm:$0xff]
        %v874 = vld [vmem:[%s670 + $0x3d0] sm:$0xff]
        %v875 = vld [vmem:[%s670 + $0x3d8] sm:$0xff]
        %v876 = vld [vmem:[%s670 + $0x3e0] sm:$0xff]
        %v877 = vld [vmem:[%s670 + $0x3e8] sm:$0xff]
        %v878 = vld [vmem:[%s670 + $0x3f0] sm:$0xff]
        %v879 = vld [vmem:[%s670 + $0x3f8] sm:$0xff]
        %v880 = vld [vmem:[%s670 + $0x400] sm:$0xff]
        %v881 = vld [vmem:[%s670 + $0x408] sm:$0xff]
        %v882 = vld [vmem:[%s670 + $0x410] sm:$0xff]
        %v883 = vld [vmem:[%s670 + $0x418] sm:$0xff]
        %v884 = vld [vmem:[%s670 + $0x420] sm:$0xff]
        %v885 = vld [vmem:[%s670 + $0x428] sm:$0xff]
        %v886 = vld [vmem:[%s670 + $0x430] sm:$0xff]
        %v887 = vld [vmem:[%s670 + $0x438] sm:$0xff]
        %v888 = vld [vmem:[%s670 + $0x440] sm:$0xff]
        %v889 = vld [vmem:[%s670 + $0x448] sm:$0xff]
        %v890 = vld [vmem:[%s670 + $0x450] sm:$0xff]
        %v891 = vld [vmem:[%s670 + $0x458] sm:$0xff]
        %v892 = vld [vmem:[%s670 + $0x460] sm:$0xff]
        %v893 = vld [vmem:[%s670 + $0x468] sm:$0xff]
        %v894 = vld [vmem:[%s670 + $0x470] sm:$0xff]
        %v895 = vld [vmem:[%s670 + $0x478] sm:$0xff]
        %v896 = vld [vmem:[%s670 + $0x480] sm:$0xff]
        %v897 = vld [vmem:[%s670 + $0x488] sm:$0xff]
        %v898 = vld [vmem:[%s670 + $0x490] sm:$0xff]
        %v899 = vld [vmem:[%s670 + $0x498] sm:$0xff]
        %v900 = vld [vmem:[%s670 + $0x4a0] sm:$0xff]
        %v901 = vld [vmem:[%s670 + $0x4a8] sm:$0xff]
        %v902 = vld [vmem:[%s670 + $0x4b0] sm:$0xff]
        %v903 = vld [vmem:[%s670 + $0x4b8] sm:$0xff]
        %v904 = vld [vmem:[%s670 + $0x4c0] sm:$0xff]
        %v905 = vld [vmem:[%s670 + $0x4c8] sm:$0xff]
        %v906 = vld [vmem:[%s670 + $0x4d0] sm:$0xff]
        %v907 = vld [vmem:[%s670 + $0x4d8] sm:$0xff]
        %v908 = vld [vmem:[%s670 + $0x4e0] sm:$0xff]
        %v909 = vld [vmem:[%s670 + $0x4e8] sm:$0xff]
        %v910 = vld [vmem:[%s670 + $0x4f0] sm:$0xff]
        %v911 = vld [vmem:[%s670 + $0x4f8] sm:$0xff]
        %v912 = vld [vmem:[%s670 + $0x500] sm:$0xff]
        %v913 = vld [vmem:[%s670 + $0x508] sm:$0xff]
        %v914 = vld [vmem:[%s670 + $0x510] sm:$0xff]
        %v915 = vld [vmem:[%s670 + $0x518] sm:$0xff]
        %v916 = vld [vmem:[%s670 + $0x520] sm:$0xff]
        %v917 = vld [vmem:[%s670 + $0x528] sm:$0xff]
        %v918 = vld [vmem:[%s670 + $0x530] sm:$0xff]
        %v919 = vld [vmem:[%s670 + $0x538] sm:$0xff]
        %v920 = vld [vmem:[%s670 + $0x540] sm:$0xff]
        %v921 = vld [vmem:[%s670 + $0x548] sm:$0xff]
        %v922 = vld [vmem:[%s670 + $0x550] sm:$0xff]
        %v923 = vld [vmem:[%s670 + $0x558] sm:$0xff]
        %v924 = vld [vmem:[%s670 + $0x560] sm:$0xff]
        %v925 = vld [vmem:[%s670 + $0x568] sm:$0xff]
        %v926 = vld [vmem:[%s670 + $0x570] sm:$0xff]
        %v927 = vld [vmem:[%s670 + $0x578] sm:$0xff]
        %v928 = vld [vmem:[%s670 + $0x580] sm:$0xff]
        %v929 = vld [vmem:[%s670 + $0x588] sm:$0xff]
        %v930 = vld [vmem:[%s670 + $0x590] sm:$0xff]
        %v931 = vld [vmem:[%s670 + $0x598] sm:$0xff]
        %v932 = vld [vmem:[%s670 + $0x5a0] sm:$0xff]
        %v933 = vld [vmem:[%s670 + $0x5a8] sm:$0xff]
        %v934 = vld [vmem:[%s670 + $0x5b0] sm:$0xff]
        %v935 = vld [vmem:[%s670 + $0x5b8] sm:$0xff]
        %v936 = vld [vmem:[%s670 + $0x5c0] sm:$0xff]
        %v937 = vld [vmem:[%s670 + $0x5c8] sm:$0xff]
        %v938 = vld [vmem:[%s670 + $0x5d0] sm:$0xff]
        %v939 = vld [vmem:[%s670 + $0x5d8] sm:$0xff]
        %v940 = vld [vmem:[%s670 + $0x5e0] sm:$0xff]
        %v941 = vld [vmem:[%s670 + $0x5e8] sm:$0xff]
        %v942 = vld [vmem:[%s670 + $0x5f0] sm:$0xff]
        %v943 = vld [vmem:[%s670 + $0x5f8] sm:$0xff]
        %v944 = vld [vmem:[%s670 + $0x600] sm:$0xff]
        %v945 = vld [vmem:[%s670 + $0x608] sm:$0xff]
        %v946 = vld [vmem:[%s670 + $0x610] sm:$0xff]
        %v947 = vld [vmem:[%s670 + $0x618] sm:$0xff]
        %v948 = vld [vmem:[%s724] sm:$0x7]
        %950 = vset.pattern.permute.xlu0 0
        %951 = vperm.xlu0 %950, %v948
        %v952 = vpop.permute.xlu0 %951
        %v955 = vcombine.high %v751, %v751
        %v957 = vunpack.c.l.s4 1983009808
        %v958 = vunpack.c.0.s8 %v957
        %v959 = vlaneseq
        %v960 = vshrl.u32 %v959, 7
        %v961 = vsub.s32 %v958, %v960
        %v962 = vrot.slane %v751, %v961
        %v964 = vunpack.c.l.s4 1983009808
        %v965 = vunpack.c.0.s8 %v964
        %v966 = vlaneseq
        %v967 = vshrl.u32 %v966, 7
        %v968 = vsub.s32 %v965, %v967
        %v969 = vrot.slane %v955, %v968
        %v970 = vcombine.high %v962, %v962
        %v971 = vcombine.high %v969, %v969
        %v1171 = vunpack.c.l.b16 %v752
        %v1172 = vunpack.c.h.b16 %v752
        %v1173 = vunpack.c.l.b16 %v753
        %v1174 = vunpack.c.h.b16 %v753
        %v1175 = vunpack.c.l.b16 %v754
        %v1176 = vunpack.c.h.b16 %v754
        %v1177 = vunpack.c.l.b16 %v755
        %v1178 = vunpack.c.h.b16 %v755
        %v1179 = vunpack.c.l.b16 %v756
        %v1180 = vunpack.c.h.b16 %v756
        %v1181 = vunpack.c.l.b16 %v757
        %v1182 = vunpack.c.h.b16 %v757
        %v1183 = vunpack.c.l.b16 %v758
        %v1184 = vunpack.c.h.b16 %v758
        %v1185 = vunpack.c.l.b16 %v759
        %v1186 = vunpack.c.h.b16 %v759
        %v1187 = vunpack.c.l.b16 %v760
        %v1188 = vunpack.c.h.b16 %v760
        %v1189 = vunpack.c.l.b16 %v761
        %v1190 = vunpack.c.h.b16 %v761
        %v1191 = vunpack.c.l.b16 %v762
        %v1192 = vunpack.c.h.b16 %v762
        %v1193 = vunpack.c.l.b16 %v763
        %v1194 = vunpack.c.h.b16 %v763
        %v1195 = vunpack.c.l.b16 %v764
        %v1196 = vunpack.c.h.b16 %v764
        %v1197 = vunpack.c.l.b16 %v765
        %v1198 = vunpack.c.h.b16 %v765
        %v1199 = vunpack.c.l.b16 %v766
        %v1200 = vunpack.c.h.b16 %v766
        %v1201 = vunpack.c.l.b16 %v767
        %v1202 = vunpack.c.h.b16 %v767
        %v1203 = vunpack.c.l.b16 %v768
        %v1204 = vunpack.c.h.b16 %v768
        %v1205 = vunpack.c.l.b16 %v769
        %v1206 = vunpack.c.h.b16 %v769
        %v1207 = vunpack.c.l.b16 %v770
        %v1208 = vunpack.c.h.b16 %v770
        %v1209 = vunpack.c.l.b16 %v771
        %v1210 = vunpack.c.h.b16 %v771
        %v1211 = vunpack.c.l.b16 %v772
        %v1212 = vunpack.c.h.b16 %v772
        %v1213 = vunpack.c.l.b16 %v773
        %v1214 = vunpack.c.h.b16 %v773
        %v1215 = vunpack.c.l.b16 %v774
        %v1216 = vunpack.c.h.b16 %v774
        %v1217 = vunpack.c.l.b16 %v775
        %v1218 = vunpack.c.h.b16 %v775
        %v1219 = vunpack.c.l.b16 %v776
        %v1220 = vunpack.c.h.b16 %v776
        %v1221 = vunpack.c.l.b16 %v777
        %v1222 = vunpack.c.h.b16 %v777
        %v1223 = vunpack.c.l.b16 %v778
        %v1224 = vunpack.c.h.b16 %v778
        %v1225 = vunpack.c.l.b16 %v779
        %v1226 = vunpack.c.h.b16 %v779
        %v1227 = vunpack.c.l.b16 %v780
        %v1228 = vunpack.c.h.b16 %v780
        %v1229 = vunpack.c.l.b16 %v781
        %v1230 = vunpack.c.h.b16 %v781
        %v1231 = vunpack.c.l.b16 %v782
        %v1232 = vunpack.c.h.b16 %v782
        %v1233 = vunpack.c.l.b16 %v783
        %v1234 = vunpack.c.h.b16 %v783
        %v1235 = vunpack.c.l.b16 %v784
        %v1236 = vunpack.c.h.b16 %v784
        %v1237 = vunpack.c.l.b16 %v785
        %v1238 = vunpack.c.h.b16 %v785
        %v1239 = vunpack.c.l.b16 %v786
        %v1240 = vunpack.c.h.b16 %v786
        %v1241 = vunpack.c.l.b16 %v787
        %v1242 = vunpack.c.h.b16 %v787
        %v1243 = vunpack.c.l.b16 %v788
        %v1244 = vunpack.c.h.b16 %v788
        %v1245 = vunpack.c.l.b16 %v789
        %v1246 = vunpack.c.h.b16 %v789
        %v1247 = vunpack.c.l.b16 %v790
        %v1248 = vunpack.c.h.b16 %v790
        %v1249 = vunpack.c.l.b16 %v791
        %v1250 = vunpack.c.h.b16 %v791
        %v1251 = vunpack.c.l.b16 %v792
        %v1252 = vunpack.c.h.b16 %v792
        %v1253 = vunpack.c.l.b16 %v793
        %v1254 = vunpack.c.h.b16 %v793
        %v1255 = vunpack.c.l.b16 %v794
        %v1256 = vunpack.c.h.b16 %v794
        %v1257 = vunpack.c.l.b16 %v795
        %v1258 = vunpack.c.h.b16 %v795
        %v1259 = vunpack.c.l.b16 %v796
        %v1260 = vunpack.c.h.b16 %v796
        %v1261 = vunpack.c.l.b16 %v797
        %v1262 = vunpack.c.h.b16 %v797
        %v1263 = vunpack.c.l.b16 %v798
        %v1264 = vunpack.c.h.b16 %v798
        %v1265 = vunpack.c.l.b16 %v799
        %v1266 = vunpack.c.h.b16 %v799
        %v1267 = vunpack.c.l.b16 %v800
        %v1268 = vunpack.c.h.b16 %v800
        %v1269 = vunpack.c.l.b16 %v801
        %v1270 = vunpack.c.h.b16 %v801
        %v1271 = vunpack.c.l.b16 %v802
        %v1272 = vunpack.c.h.b16 %v802
        %v1273 = vunpack.c.l.b16 %v803
        %v1274 = vunpack.c.h.b16 %v803
        %v1275 = vunpack.c.l.b16 %v804
        %v1276 = vunpack.c.h.b16 %v804
        %v1277 = vunpack.c.l.b16 %v805
        %v1278 = vunpack.c.h.b16 %v805
        %v1279 = vunpack.c.l.b16 %v806
        %v1280 = vunpack.c.h.b16 %v806
        %v1281 = vunpack.c.l.b16 %v807
        %v1282 = vunpack.c.h.b16 %v807
        %v1283 = vunpack.c.l.b16 %v808
        %v1284 = vunpack.c.h.b16 %v808
        %v1285 = vunpack.c.l.b16 %v809
        %v1286 = vunpack.c.h.b16 %v809
        %v1287 = vunpack.c.l.b16 %v810
        %v1288 = vunpack.c.h.b16 %v810
        %v1289 = vunpack.c.l.b16 %v811
        %v1290 = vunpack.c.h.b16 %v811
        %v1291 = vunpack.c.l.b16 %v812
        %v1292 = vunpack.c.h.b16 %v812
        %v1293 = vunpack.c.l.b16 %v813
        %v1294 = vunpack.c.h.b16 %v813
        %v1295 = vunpack.c.l.b16 %v814
        %v1296 = vunpack.c.h.b16 %v814
        %v1297 = vunpack.c.l.b16 %v815
        %v1298 = vunpack.c.h.b16 %v815
        %v1299 = vunpack.c.l.b16 %v816
        %v1300 = vunpack.c.h.b16 %v816
        %v1301 = vunpack.c.l.b16 %v817
        %v1302 = vunpack.c.h.b16 %v817
        %v1303 = vunpack.c.l.b16 %v818
        %v1304 = vunpack.c.h.b16 %v818
        %v1305 = vunpack.c.l.b16 %v819
        %v1306 = vunpack.c.h.b16 %v819
        %v1307 = vunpack.c.l.b16 %v820
        %v1308 = vunpack.c.h.b16 %v820
        %v1309 = vunpack.c.l.b16 %v821
        %v1310 = vunpack.c.h.b16 %v821
        %v1311 = vunpack.c.l.b16 %v822
        %v1312 = vunpack.c.h.b16 %v822
        %v1313 = vunpack.c.l.b16 %v823
        %v1314 = vunpack.c.h.b16 %v823
        %v1315 = vunpack.c.l.b16 %v824
        %v1316 = vunpack.c.h.b16 %v824
        %v1317 = vunpack.c.l.b16 %v825
        %v1318 = vunpack.c.h.b16 %v825
        %v1319 = vunpack.c.l.b16 %v826
        %v1320 = vunpack.c.h.b16 %v826
        %v1321 = vunpack.c.l.b16 %v827
        %v1322 = vunpack.c.h.b16 %v827
        %v1323 = vunpack.c.l.b16 %v828
        %v1324 = vunpack.c.h.b16 %v828
        %v1325 = vunpack.c.l.b16 %v829
        %v1326 = vunpack.c.h.b16 %v829
        %v1327 = vunpack.c.l.b16 %v830
        %v1328 = vunpack.c.h.b16 %v830
        %v1329 = vunpack.c.l.b16 %v831
        %v1330 = vunpack.c.h.b16 %v831
        %v1331 = vunpack.c.l.b16 %v832
        %v1332 = vunpack.c.h.b16 %v832
        %v1333 = vunpack.c.l.b16 %v833
        %v1334 = vunpack.c.h.b16 %v833
        %v1335 = vunpack.c.l.b16 %v834
        %v1336 = vunpack.c.h.b16 %v834
        %v1337 = vunpack.c.l.b16 %v835
        %v1338 = vunpack.c.h.b16 %v835
        %v1339 = vunpack.c.l.b16 %v836
        %v1340 = vunpack.c.h.b16 %v836
        %v1341 = vunpack.c.l.b16 %v837
        %v1342 = vunpack.c.h.b16 %v837
        %v1343 = vunpack.c.l.b16 %v838
        %v1344 = vunpack.c.h.b16 %v838
        %v1345 = vunpack.c.l.b16 %v839
        %v1346 = vunpack.c.h.b16 %v839
        %v1347 = vunpack.c.l.b16 %v840
        %v1348 = vunpack.c.h.b16 %v840
        %v1349 = vunpack.c.l.b16 %v841
        %v1350 = vunpack.c.h.b16 %v841
        %v1351 = vunpack.c.l.b16 %v842
        %v1352 = vunpack.c.h.b16 %v842
        %v1353 = vunpack.c.l.b16 %v843
        %v1354 = vunpack.c.h.b16 %v843
        %v1355 = vunpack.c.l.b16 %v844
        %v1356 = vunpack.c.h.b16 %v844
        %v1357 = vunpack.c.l.b16 %v845
        %v1358 = vunpack.c.h.b16 %v845
        %v1359 = vunpack.c.l.b16 %v846
        %v1360 = vunpack.c.h.b16 %v846
        %v1361 = vunpack.c.l.b16 %v847
        %v1362 = vunpack.c.h.b16 %v847
        %v1363 = vunpack.c.l.b16 %v848
        %v1364 = vunpack.c.h.b16 %v848
        %v1365 = vunpack.c.l.b16 %v849
        %v1366 = vunpack.c.h.b16 %v849
        %v1367 = vunpack.c.l.b16 %v850
        %v1368 = vunpack.c.h.b16 %v850
        %v1369 = vunpack.c.l.b16 %v851
        %v1370 = vunpack.c.h.b16 %v851
        %v1371 = vunpack.c.l.b16 %v852
        %v1372 = vunpack.c.h.b16 %v852
        %v1373 = vunpack.c.l.b16 %v853
        %v1374 = vunpack.c.h.b16 %v853
        %v1375 = vunpack.c.l.b16 %v854
        %v1376 = vunpack.c.h.b16 %v854
        %v1377 = vunpack.c.l.b16 %v855
        %v1378 = vunpack.c.h.b16 %v855
        %v1379 = vunpack.c.l.b16 %v856
        %v1380 = vunpack.c.h.b16 %v856
        %v1381 = vunpack.c.l.b16 %v857
        %v1382 = vunpack.c.h.b16 %v857
        %v1383 = vunpack.c.l.b16 %v858
        %v1384 = vunpack.c.h.b16 %v858
        %v1385 = vunpack.c.l.b16 %v859
        %v1386 = vunpack.c.h.b16 %v859
        %v1387 = vunpack.c.l.b16 %v860
        %v1388 = vunpack.c.h.b16 %v860
        %v1389 = vunpack.c.l.b16 %v861
        %v1390 = vunpack.c.h.b16 %v861
        %v1391 = vunpack.c.l.b16 %v862
        %v1392 = vunpack.c.h.b16 %v862
        %v1393 = vunpack.c.l.b16 %v863
        %v1394 = vunpack.c.h.b16 %v863
        %v1395 = vunpack.c.l.b16 %v864
        %v1396 = vunpack.c.h.b16 %v864
        %v1397 = vunpack.c.l.b16 %v865
        %v1398 = vunpack.c.h.b16 %v865
        %v1399 = vunpack.c.l.b16 %v866
        %v1400 = vunpack.c.h.b16 %v866
        %v1401 = vunpack.c.l.b16 %v867
        %v1402 = vunpack.c.h.b16 %v867
        %v1403 = vunpack.c.l.b16 %v868
        %v1404 = vunpack.c.h.b16 %v868
        %v1405 = vunpack.c.l.b16 %v869
        %v1406 = vunpack.c.h.b16 %v869
        %v1407 = vunpack.c.l.b16 %v870
        %v1408 = vunpack.c.h.b16 %v870
        %v1409 = vunpack.c.l.b16 %v871
        %v1410 = vunpack.c.h.b16 %v871
        %v1411 = vunpack.c.l.b16 %v872
        %v1412 = vunpack.c.h.b16 %v872
        %v1413 = vunpack.c.l.b16 %v873
        %v1414 = vunpack.c.h.b16 %v873
        %v1415 = vunpack.c.l.b16 %v874
        %v1416 = vunpack.c.h.b16 %v874
        %v1417 = vunpack.c.l.b16 %v875
        %v1418 = vunpack.c.h.b16 %v875
        %v1419 = vunpack.c.l.b16 %v876
        %v1420 = vunpack.c.h.b16 %v876
        %v1421 = vunpack.c.l.b16 %v877
        %v1422 = vunpack.c.h.b16 %v877
        %v1423 = vunpack.c.l.b16 %v878
        %v1424 = vunpack.c.h.b16 %v878
        %v1425 = vunpack.c.l.b16 %v879
        %v1426 = vunpack.c.h.b16 %v879
        %v1427 = vunpack.c.l.b16 %v880
        %v1428 = vunpack.c.h.b16 %v880
        %v1429 = vunpack.c.l.b16 %v881
        %v1430 = vunpack.c.h.b16 %v881
        %v1431 = vunpack.c.l.b16 %v882
        %v1432 = vunpack.c.h.b16 %v882
        %v1433 = vunpack.c.l.b16 %v883
        %v1434 = vunpack.c.h.b16 %v883
        %v1435 = vunpack.c.l.b16 %v884
        %v1436 = vunpack.c.h.b16 %v884
        %v1437 = vunpack.c.l.b16 %v885
        %v1438 = vunpack.c.h.b16 %v885
        %v1439 = vunpack.c.l.b16 %v886
        %v1440 = vunpack.c.h.b16 %v886
        %v1441 = vunpack.c.l.b16 %v887
        %v1442 = vunpack.c.h.b16 %v887
        %v1443 = vunpack.c.l.b16 %v888
        %v1444 = vunpack.c.h.b16 %v888
        %v1445 = vunpack.c.l.b16 %v889
        %v1446 = vunpack.c.h.b16 %v889
        %v1447 = vunpack.c.l.b16 %v890
        %v1448 = vunpack.c.h.b16 %v890
        %v1449 = vunpack.c.l.b16 %v891
        %v1450 = vunpack.c.h.b16 %v891
        %v1451 = vunpack.c.l.b16 %v892
        %v1452 = vunpack.c.h.b16 %v892
        %v1453 = vunpack.c.l.b16 %v893
        %v1454 = vunpack.c.h.b16 %v893
        %v1455 = vunpack.c.l.b16 %v894
        %v1456 = vunpack.c.h.b16 %v894
        %v1457 = vunpack.c.l.b16 %v895
        %v1458 = vunpack.c.h.b16 %v895
        %v1459 = vunpack.c.l.b16 %v896
        %v1460 = vunpack.c.h.b16 %v896
        %v1461 = vunpack.c.l.b16 %v897
        %v1462 = vunpack.c.h.b16 %v897
        %v1463 = vunpack.c.l.b16 %v898
        %v1464 = vunpack.c.h.b16 %v898
        %v1465 = vunpack.c.l.b16 %v899
        %v1466 = vunpack.c.h.b16 %v899
        %v1467 = vunpack.c.l.b16 %v900
        %v1468 = vunpack.c.h.b16 %v900
        %v1469 = vunpack.c.l.b16 %v901
        %v1470 = vunpack.c.h.b16 %v901
        %v1471 = vunpack.c.l.b16 %v902
        %v1472 = vunpack.c.h.b16 %v902
        %v1473 = vunpack.c.l.b16 %v903
        %v1474 = vunpack.c.h.b16 %v903
        %v1475 = vunpack.c.l.b16 %v904
        %v1476 = vunpack.c.h.b16 %v904
        %v1477 = vunpack.c.l.b16 %v905
        %v1478 = vunpack.c.h.b16 %v905
        %v1479 = vunpack.c.l.b16 %v906
        %v1480 = vunpack.c.h.b16 %v906
        %v1481 = vunpack.c.l.b16 %v907
        %v1482 = vunpack.c.h.b16 %v907
        %v1483 = vunpack.c.l.b16 %v908
        %v1484 = vunpack.c.h.b16 %v908
        %v1485 = vunpack.c.l.b16 %v909
        %v1486 = vunpack.c.h.b16 %v909
        %v1487 = vunpack.c.l.b16 %v910
        %v1488 = vunpack.c.h.b16 %v910
        %v1489 = vunpack.c.l.b16 %v911
        %v1490 = vunpack.c.h.b16 %v911
        %v1491 = vunpack.c.l.b16 %v912
        %v1492 = vunpack.c.h.b16 %v912
        %v1493 = vunpack.c.l.b16 %v913
        %v1494 = vunpack.c.h.b16 %v913
        %v1495 = vunpack.c.l.b16 %v914
        %v1496 = vunpack.c.h.b16 %v914
        %v1497 = vunpack.c.l.b16 %v915
        %v1498 = vunpack.c.h.b16 %v915
        %v1499 = vunpack.c.l.b16 %v916
        %v1500 = vunpack.c.h.b16 %v916
        %v1501 = vunpack.c.l.b16 %v917
        %v1502 = vunpack.c.h.b16 %v917
        %v1503 = vunpack.c.l.b16 %v918
        %v1504 = vunpack.c.h.b16 %v918
        %v1505 = vunpack.c.l.b16 %v919
        %v1506 = vunpack.c.h.b16 %v919
        %v1507 = vunpack.c.l.b16 %v920
        %v1508 = vunpack.c.h.b16 %v920
        %v1509 = vunpack.c.l.b16 %v921
        %v1510 = vunpack.c.h.b16 %v921
        %v1511 = vunpack.c.l.b16 %v922
        %v1512 = vunpack.c.h.b16 %v922
        %v1513 = vunpack.c.l.b16 %v923
        %v1514 = vunpack.c.h.b16 %v923
        %v1515 = vunpack.c.l.b16 %v924
        %v1516 = vunpack.c.h.b16 %v924
        %v1517 = vunpack.c.l.b16 %v925
        %v1518 = vunpack.c.h.b16 %v925
        %v1519 = vunpack.c.l.b16 %v926
        %v1520 = vunpack.c.h.b16 %v926
        %v1521 = vunpack.c.l.b16 %v927
        %v1522 = vunpack.c.h.b16 %v927
        %v1523 = vunpack.c.l.b16 %v928
        %v1524 = vunpack.c.h.b16 %v928
        %v1525 = vunpack.c.l.b16 %v929
        %v1526 = vunpack.c.h.b16 %v929
        %v1527 = vunpack.c.l.b16 %v930
        %v1528 = vunpack.c.h.b16 %v930
        %v1529 = vunpack.c.l.b16 %v931
        %v1530 = vunpack.c.h.b16 %v931
        %v1531 = vunpack.c.l.b16 %v932
        %v1532 = vunpack.c.h.b16 %v932
        %v1533 = vunpack.c.l.b16 %v933
        %v1534 = vunpack.c.h.b16 %v933
        %v1535 = vunpack.c.l.b16 %v934
        %v1536 = vunpack.c.h.b16 %v934
        %v1537 = vunpack.c.l.b16 %v935
        %v1538 = vunpack.c.h.b16 %v935
        %v1539 = vunpack.c.l.b16 %v936
        %v1540 = vunpack.c.h.b16 %v936
        %v1541 = vunpack.c.l.b16 %v937
        %v1542 = vunpack.c.h.b16 %v937
        %v1543 = vunpack.c.l.b16 %v938
        %v1544 = vunpack.c.h.b16 %v938
        %v1545 = vunpack.c.l.b16 %v939
        %v1546 = vunpack.c.h.b16 %v939
        %v1547 = vunpack.c.l.b16 %v940
        %v1548 = vunpack.c.h.b16 %v940
        %v1549 = vunpack.c.l.b16 %v941
        %v1550 = vunpack.c.h.b16 %v941
        %v1551 = vunpack.c.l.b16 %v942
        %v1552 = vunpack.c.h.b16 %v942
        %v1553 = vunpack.c.l.b16 %v943
        %v1554 = vunpack.c.h.b16 %v943
        %v1555 = vunpack.c.l.b16 %v944
        %v1556 = vunpack.c.h.b16 %v944
        %v1557 = vunpack.c.l.b16 %v945
        %v1558 = vunpack.c.h.b16 %v945
        %v1559 = vunpack.c.l.b16 %v946
        %v1560 = vunpack.c.h.b16 %v946
        %v1561 = vunpack.c.l.b16 %v947
        %v1562 = vunpack.c.h.b16 %v947
        %v1563 = vpack.c.b16 %v1179, %v1171
        %v1564 = vpack.c.b16 %v1180, %v1172
        %v1565 = vpack.c.b16 %v1181, %v1173
        %v1566 = vpack.c.b16 %v1182, %v1174
        %v1567 = vpack.c.b16 %v1183, %v1175
        %v1568 = vpack.c.b16 %v1184, %v1176
        %v1569 = vpack.c.b16 %v1185, %v1177
        %v1570 = vpack.c.b16 %v1186, %v1178
        %v1571 = vpack.c.b16 %v1195, %v1187
        %v1572 = vpack.c.b16 %v1196, %v1188
        %v1573 = vpack.c.b16 %v1197, %v1189
        %v1574 = vpack.c.b16 %v1198, %v1190
        %v1575 = vpack.c.b16 %v1199, %v1191
        %v1576 = vpack.c.b16 %v1200, %v1192
        %v1577 = vpack.c.b16 %v1201, %v1193
        %v1578 = vpack.c.b16 %v1202, %v1194
        %v1579 = vpack.c.b16 %v1211, %v1203
        %v1580 = vpack.c.b16 %v1212, %v1204
        %v1581 = vpack.c.b16 %v1213, %v1205
        %v1582 = vpack.c.b16 %v1214, %v1206
        %v1583 = vpack.c.b16 %v1215, %v1207
        %v1584 = vpack.c.b16 %v1216, %v1208
        %v1585 = vpack.c.b16 %v1217, %v1209
        %v1586 = vpack.c.b16 %v1218, %v1210
        %v1587 = vpack.c.b16 %v1227, %v1219
        %v1588 = vpack.c.b16 %v1228, %v1220
        %v1589 = vpack.c.b16 %v1229, %v1221
        %v1590 = vpack.c.b16 %v1230, %v1222
        %v1591 = vpack.c.b16 %v1231, %v1223
        %v1592 = vpack.c.b16 %v1232, %v1224
        %v1593 = vpack.c.b16 %v1233, %v1225
        %v1594 = vpack.c.b16 %v1234, %v1226
        %v1595 = vpack.c.b16 %v1243, %v1235
        %v1596 = vpack.c.b16 %v1244, %v1236
        %v1597 = vpack.c.b16 %v1245, %v1237
        %v1598 = vpack.c.b16 %v1246, %v1238
        %v1599 = vpack.c.b16 %v1247, %v1239
        %v1600 = vpack.c.b16 %v1248, %v1240
        %v1601 = vpack.c.b16 %v1249, %v1241
        %v1602 = vpack.c.b16 %v1250, %v1242
        %v1603 = vpack.c.b16 %v1259, %v1251
        %v1604 = vpack.c.b16 %v1260, %v1252
        %v1605 = vpack.c.b16 %v1261, %v1253
        %v1606 = vpack.c.b16 %v1262, %v1254
        %v1607 = vpack.c.b16 %v1263, %v1255
        %v1608 = vpack.c.b16 %v1264, %v1256
        %v1609 = vpack.c.b16 %v1265, %v1257
        %v1610 = vpack.c.b16 %v1266, %v1258
        %v1611 = vpack.c.b16 %v1275, %v1267
        %v1612 = vpack.c.b16 %v1276, %v1268
        %v1613 = vpack.c.b16 %v1277, %v1269
        %v1614 = vpack.c.b16 %v1278, %v1270
        %v1615 = vpack.c.b16 %v1279, %v1271
        %v1616 = vpack.c.b16 %v1280, %v1272
        %v1617 = vpack.c.b16 %v1281, %v1273
        %v1618 = vpack.c.b16 %v1282, %v1274
        %v1619 = vpack.c.b16 %v1291, %v1283
        %v1620 = vpack.c.b16 %v1292, %v1284
        %v1621 = vpack.c.b16 %v1293, %v1285
        %v1622 = vpack.c.b16 %v1294, %v1286
        %v1623 = vpack.c.b16 %v1295, %v1287
        %v1624 = vpack.c.b16 %v1296, %v1288
        %v1625 = vpack.c.b16 %v1297, %v1289
        %v1626 = vpack.c.b16 %v1298, %v1290
        %v1627 = vpack.c.b16 %v1307, %v1299
        %v1628 = vpack.c.b16 %v1308, %v1300
        %v1629 = vpack.c.b16 %v1309, %v1301
        %v1630 = vpack.c.b16 %v1310, %v1302
        %v1631 = vpack.c.b16 %v1311, %v1303
        %v1632 = vpack.c.b16 %v1312, %v1304
        %v1633 = vpack.c.b16 %v1313, %v1305
        %v1634 = vpack.c.b16 %v1314, %v1306
        %v1635 = vpack.c.b16 %v1323, %v1315
        %v1636 = vpack.c.b16 %v1324, %v1316
        %v1637 = vpack.c.b16 %v1325, %v1317
        %v1638 = vpack.c.b16 %v1326, %v1318
        %v1639 = vpack.c.b16 %v1327, %v1319
        %v1640 = vpack.c.b16 %v1328, %v1320
        %v1641 = vpack.c.b16 %v1329, %v1321
        %v1642 = vpack.c.b16 %v1330, %v1322
        %v1643 = vpack.c.b16 %v1339, %v1331
        %v1644 = vpack.c.b16 %v1340, %v1332
        %v1645 = vpack.c.b16 %v1341, %v1333
        %v1646 = vpack.c.b16 %v1342, %v1334
        %v1647 = vpack.c.b16 %v1343, %v1335
        %v1648 = vpack.c.b16 %v1344, %v1336
        %v1649 = vpack.c.b16 %v1345, %v1337
        %v1650 = vpack.c.b16 %v1346, %v1338
        %v1651 = vpack.c.b16 %v1355, %v1347
        %v1652 = vpack.c.b16 %v1356, %v1348
        %v1653 = vpack.c.b16 %v1357, %v1349
        %v1654 = vpack.c.b16 %v1358, %v1350
        %v1655 = vpack.c.b16 %v1359, %v1351
        %v1656 = vpack.c.b16 %v1360, %v1352
        %v1657 = vpack.c.b16 %v1361, %v1353
        %v1658 = vpack.c.b16 %v1362, %v1354
        %v1659 = vpack.c.b16 %v1371, %v1363
        %v1660 = vpack.c.b16 %v1372, %v1364
        %v1661 = vpack.c.b16 %v1373, %v1365
        %v1662 = vpack.c.b16 %v1374, %v1366
        %v1663 = vpack.c.b16 %v1375, %v1367
        %v1664 = vpack.c.b16 %v1376, %v1368
        %v1665 = vpack.c.b16 %v1377, %v1369
        %v1666 = vpack.c.b16 %v1378, %v1370
        %v1667 = vpack.c.b16 %v1387, %v1379
        %v1668 = vpack.c.b16 %v1388, %v1380
        %v1669 = vpack.c.b16 %v1389, %v1381
        %v1670 = vpack.c.b16 %v1390, %v1382
        %v1671 = vpack.c.b16 %v1391, %v1383
        %v1672 = vpack.c.b16 %v1392, %v1384
        %v1673 = vpack.c.b16 %v1393, %v1385
        %v1674 = vpack.c.b16 %v1394, %v1386
        %v1675 = vpack.c.b16 %v1403, %v1395
        %v1676 = vpack.c.b16 %v1404, %v1396
        %v1677 = vpack.c.b16 %v1405, %v1397
        %v1678 = vpack.c.b16 %v1406, %v1398
        %v1679 = vpack.c.b16 %v1407, %v1399
        %v1680 = vpack.c.b16 %v1408, %v1400
        %v1681 = vpack.c.b16 %v1409, %v1401
        %v1682 = vpack.c.b16 %v1410, %v1402
        %v1683 = vpack.c.b16 %v1419, %v1411
        %v1684 = vpack.c.b16 %v1420, %v1412
        %v1685 = vpack.c.b16 %v1421, %v1413
        %v1686 = vpack.c.b16 %v1422, %v1414
        %v1687 = vpack.c.b16 %v1423, %v1415
        %v1688 = vpack.c.b16 %v1424, %v1416
        %v1689 = vpack.c.b16 %v1425, %v1417
        %v1690 = vpack.c.b16 %v1426, %v1418
        %v1691 = vpack.c.b16 %v1435, %v1427
        %v1692 = vpack.c.b16 %v1436, %v1428
        %v1693 = vpack.c.b16 %v1437, %v1429
        %v1694 = vpack.c.b16 %v1438, %v1430
        %v1695 = vpack.c.b16 %v1439, %v1431
        %v1696 = vpack.c.b16 %v1440, %v1432
        %v1697 = vpack.c.b16 %v1441, %v1433
        %v1698 = vpack.c.b16 %v1442, %v1434
        %v1699 = vpack.c.b16 %v1451, %v1443
        %v1700 = vpack.c.b16 %v1452, %v1444
        %v1701 = vpack.c.b16 %v1453, %v1445
        %v1702 = vpack.c.b16 %v1454, %v1446
        %v1703 = vpack.c.b16 %v1455, %v1447
        %v1704 = vpack.c.b16 %v1456, %v1448
        %v1705 = vpack.c.b16 %v1457, %v1449
        %v1706 = vpack.c.b16 %v1458, %v1450
        %v1707 = vpack.c.b16 %v1467, %v1459
        %v1708 = vpack.c.b16 %v1468, %v1460
        %v1709 = vpack.c.b16 %v1469, %v1461
        %v1710 = vpack.c.b16 %v1470, %v1462
        %v1711 = vpack.c.b16 %v1471, %v1463
        %v1712 = vpack.c.b16 %v1472, %v1464
        %v1713 = vpack.c.b16 %v1473, %v1465
        %v1714 = vpack.c.b16 %v1474, %v1466
        %v1715 = vpack.c.b16 %v1483, %v1475
        %v1716 = vpack.c.b16 %v1484, %v1476
        %v1717 = vpack.c.b16 %v1485, %v1477
        %v1718 = vpack.c.b16 %v1486, %v1478
        %v1719 = vpack.c.b16 %v1487, %v1479
        %v1720 = vpack.c.b16 %v1488, %v1480
        %v1721 = vpack.c.b16 %v1489, %v1481
        %v1722 = vpack.c.b16 %v1490, %v1482
        %v1723 = vpack.c.b16 %v1499, %v1491
        %v1724 = vpack.c.b16 %v1500, %v1492
        %v1725 = vpack.c.b16 %v1501, %v1493
        %v1726 = vpack.c.b16 %v1502, %v1494
        %v1727 = vpack.c.b16 %v1503, %v1495
        %v1728 = vpack.c.b16 %v1504, %v1496
        %v1729 = vpack.c.b16 %v1505, %v1497
        %v1730 = vpack.c.b16 %v1506, %v1498
        %v1731 = vpack.c.b16 %v1515, %v1507
        %v1732 = vpack.c.b16 %v1516, %v1508
        %v1733 = vpack.c.b16 %v1517, %v1509
        %v1734 = vpack.c.b16 %v1518, %v1510
        %v1735 = vpack.c.b16 %v1519, %v1511
        %v1736 = vpack.c.b16 %v1520, %v1512
        %v1737 = vpack.c.b16 %v1521, %v1513
        %v1738 = vpack.c.b16 %v1522, %v1514
        %v1739 = vpack.c.b16 %v1531, %v1523
        %v1740 = vpack.c.b16 %v1532, %v1524
        %v1741 = vpack.c.b16 %v1533, %v1525
        %v1742 = vpack.c.b16 %v1534, %v1526
        %v1743 = vpack.c.b16 %v1535, %v1527
        %v1744 = vpack.c.b16 %v1536, %v1528
        %v1745 = vpack.c.b16 %v1537, %v1529
        %v1746 = vpack.c.b16 %v1538, %v1530
        %v1747 = vpack.c.b16 %v1547, %v1539
        %v1748 = vpack.c.b16 %v1548, %v1540
        %v1749 = vpack.c.b16 %v1549, %v1541
        %v1750 = vpack.c.b16 %v1550, %v1542
        %v1751 = vpack.c.b16 %v1551, %v1543
        %v1752 = vpack.c.b16 %v1552, %v1544
        %v1753 = vpack.c.b16 %v1553, %v1545
        %v1754 = vpack.c.b16 %v1554, %v1546
        %v1755 = vpack.c.b16 %v1555, %v1555
        %v1756 = vpack.c.b16 %v1556, %v1556
        %v1757 = vpack.c.b16 %v1557, %v1557
        %v1758 = vpack.c.b16 %v1558, %v1558
        %v1759 = vpack.c.b16 %v1559, %v1559
        %v1760 = vpack.c.b16 %v1560, %v1560
        %v1761 = vpack.c.b16 %v1561, %v1561
        %v1762 = vpack.c.b16 %v1562, %v1562
        %vm1955 = vcmask 64512
        %v1957 = vsel %vm1955, %v971, 0
        %vm1959 = vcmask 1043456
        %v1961 = vsel %vm1959, %v1755, 0
        %v1964 = vsel %vm1959, %v1756, 0
        %v1967 = vsel %vm1959, %v1757, 0
        %v1970 = vsel %vm1959, %v1758, 0
        %v1973 = vsel %vm1959, %v1759, 0
        %v1976 = vsel %vm1959, %v1760, 0
        %v1979 = vsel %vm1959, %v1761, 0
        %v1982 = vsel %vm1959, %v1762, 0
        %1984 = vmatprep.subr.bf16.mxu0 %v1620
        %1985 = vmatpush1.bf16.msra.mxu0 %v1619
        %1986 = vmatprep.subr.bf16.mxu0 %v1612
        %1987 = vmatpush1.bf16.msra.mxu0 %v1611
        %1988 = vmatprep.subr.bf16.mxu0 %v1604
        %1989 = vmatpush1.bf16.msra.mxu0 %v1603
        %1990 = vmatprep.subr.bf16.mxu0 %v1596
        %1991 = vmatpush1.bf16.msra.mxu0 %v1595
        %1992 = vmatprep.subr.bf16.mxu0 %v1588
        %1993 = vmatpush1.bf16.msra.mxu0 %v1587
        %1994 = vmatprep.subr.bf16.mxu0 %v1580
        %1995 = vmatpush1.bf16.msra.mxu0 %v1579
        %1996 = vmatprep.subr.bf16.mxu0 %v1572
        %1997 = vmatpush1.bf16.msra.mxu0 %v1571
        %1998 = vmatprep.subr.bf16.mxu0 %v1564
        %1999 = vmatpush1.bf16.msra.mxu0 %v1563
        %2000 = vmatprep.subr.bf16.mxu0 %v1684
        %2001 = vmatpush2.bf16.msra.mxu0 %v1683
        %2002 = vmatprep.subr.bf16.mxu0 %v1676
        %2003 = vmatpush2.bf16.msra.mxu0 %v1675
        %2004 = vmatprep.subr.bf16.mxu0 %v1668
        %2005 = vmatpush2.bf16.msra.mxu0 %v1667
        %2006 = vmatprep.subr.bf16.mxu0 %v1660
        %2007 = vmatpush2.bf16.msra.mxu0 %v1659
        %2008 = vmatprep.subr.bf16.mxu0 %v1652
        %2009 = vmatpush2.bf16.msra.mxu0 %v1651
        %2010 = vmatprep.subr.bf16.mxu0 %v1644
        %2011 = vmatpush2.bf16.msra.mxu0 %v1643
        %2012 = vmatprep.subr.bf16.mxu0 %v1636
        %2013 = vmatpush2.bf16.msra.mxu0 %v1635
        %2014 = vmatprep.subr.bf16.mxu0 %v1628
        %2015 = vmatpush2.bf16.msra.mxu0 %v1627
        %2016 = vmatprep.mubr.bf16.mxu0 %v970
        %2017 = vmatmul.mubr.bf16.gmra.mxu0 %v962
        %v2018 = vpop.f32.mrf.mxu0
        %v2019 = vadd.f32 %v952, %v2018
        %v2020 = vpop.f32.mrf.mxu0
        %v2021 = vadd.f32 %v952, %v2020
        %v2022 = vpop.f32.mrf.mxu0
        %v2023 = vpop.f32.mrf.mxu0
        %2024 = vdwg.mxu0
        %2025 = vmatprep.subr.bf16.mxu0 %v1748
        %2026 = vmatpush1.bf16.msra.mxu0 %v1747
        %2027 = vmatprep.subr.bf16.mxu0 %v1740
        %2028 = vmatpush1.bf16.msra.mxu0 %v1739
        %2029 = vmatprep.subr.bf16.mxu0 %v1732
        %2030 = vmatpush1.bf16.msra.mxu0 %v1731
        %2031 = vmatprep.subr.bf16.mxu0 %v1724
        %2032 = vmatpush1.bf16.msra.mxu0 %v1723
        %2033 = vmatprep.subr.bf16.mxu0 %v1716
        %2034 = vmatpush1.bf16.msra.mxu0 %v1715
        %2035 = vmatprep.subr.bf16.mxu0 %v1708
        %2036 = vmatpush1.bf16.msra.mxu0 %v1707
        %2037 = vmatprep.subr.bf16.mxu0 %v1700
        %2038 = vmatpush1.bf16.msra.mxu0 %v1699
        %2039 = vmatprep.subr.bf16.mxu0 %v1692
        %2040 = vmatpush1.bf16.msra.mxu0 %v1691
        %2041 = vmatprep.subr.bf16.mxu0 0
        %2042 = vmatpush2.bf16.msra.mxu0 0
        %2043 = vmatprep.subr.bf16.mxu0 0
        %2044 = vmatpush2.bf16.msra.mxu0 0
        %2045 = vmatprep.subr.bf16.mxu0 0
        %2046 = vmatpush2.bf16.msra.mxu0 0
        %2047 = vmatprep.subr.bf16.mxu0 0
        %2048 = vmatpush2.bf16.msra.mxu0 0
        %2049 = vmatprep.subr.bf16.mxu0 0
        %2050 = vmatpush2.bf16.msra.mxu0 0
        %2051 = vmatprep.subr.bf16.mxu0 0
        %2052 = vmatpush2.bf16.msra.mxu0 0
        %2053 = vmatprep.subr.bf16.mxu0 0
        %2054 = vmatpush2.bf16.msra.mxu0 0
        %2055 = vmatprep.subr.bf16.mxu0 %v1964
        %2056 = vmatpush2.bf16.msra.mxu0 %v1961
        %2057 = vmatprep.mubr.bf16.mxu0 %v1957
        %2058 = vmatmul.mubr.bf16.gmra.mxu0 %v969
        %v2059 = vpop.f32.mrf.mxu0
        %v2060 = vadd.f32 %v2019, %v2059
        %v2061 = vpop.f32.mrf.mxu0
        %v2062 = vadd.f32 %v2021, %v2061
        %v2063 = vpop.f32.mrf.mxu0
        %v2064 = vpop.f32.mrf.mxu0
        %2065 = vdwg.mxu0
        %2066 = vmatprep.subr.bf16.mxu0 %v1622
        %2067 = vmatpush1.bf16.msra.mxu0 %v1621
        %2068 = vmatprep.subr.bf16.mxu0 %v1614
        %2069 = vmatpush1.bf16.msra.mxu0 %v1613
        %2070 = vmatprep.subr.bf16.mxu0 %v1606
        %2071 = vmatpush1.bf16.msra.mxu0 %v1605
        %2072 = vmatprep.subr.bf16.mxu0 %v1598
        %2073 = vmatpush1.bf16.msra.mxu0 %v1597
        %2074 = vmatprep.subr.bf16.mxu0 %v1590
        %2075 = vmatpush1.bf16.msra.mxu0 %v1589
        %2076 = vmatprep.subr.bf16.mxu0 %v1582
        %2077 = vmatpush1.bf16.msra.mxu0 %v1581
        %2078 = vmatprep.subr.bf16.mxu0 %v1574
        %2079 = vmatpush1.bf16.msra.mxu0 %v1573
        %2080 = vmatprep.subr.bf16.mxu0 %v1566
        %2081 = vmatpush1.bf16.msra.mxu0 %v1565
        %2082 = vmatprep.subr.bf16.mxu0 %v1686
        %2083 = vmatpush2.bf16.msra.mxu0 %v1685
        %2084 = vmatprep.subr.bf16.mxu0 %v1678
        %2085 = vmatpush2.bf16.msra.mxu0 %v1677
        %2086 = vmatprep.subr.bf16.mxu0 %v1670
        %2087 = vmatpush2.bf16.msra.mxu0 %v1669
        %2088 = vmatprep.subr.bf16.mxu0 %v1662
        %2089 = vmatpush2.bf16.msra.mxu0 %v1661
        %2090 = vmatprep.subr.bf16.mxu0 %v1654
        %2091 = vmatpush2.bf16.msra.mxu0 %v1653
        %2092 = vmatprep.subr.bf16.mxu0 %v1646
        %2093 = vmatpush2.bf16.msra.mxu0 %v1645
        %2094 = vmatprep.subr.bf16.mxu0 %v1638
        %2095 = vmatpush2.bf16.msra.mxu0 %v1637
        %2096 = vmatprep.subr.bf16.mxu0 %v1630
        %2097 = vmatpush2.bf16.msra.mxu0 %v1629
        %2098 = vmatprep.mubr.bf16.mxu0 %v970
        %2099 = vmatmul.mubr.bf16.gmra.mxu0 %v962
        %v2100 = vpop.f32.mrf.mxu0
        %v2101 = vadd.f32 %v952, %v2100
        %v2102 = vpop.f32.mrf.mxu0
        %v2103 = vadd.f32 %v952, %v2102
        %v2104 = vpop.f32.mrf.mxu0
        %v2105 = vpop.f32.mrf.mxu0
        %2106 = vdwg.mxu0
        %2107 = vmatprep.subr.bf16.mxu0 %v1750
        %2108 = vmatpush1.bf16.msra.mxu0 %v1749
        %2109 = vmatprep.subr.bf16.mxu0 %v1742
        %2110 = vmatpush1.bf16.msra.mxu0 %v1741
        %2111 = vmatprep.subr.bf16.mxu0 %v1734
        %2112 = vmatpush1.bf16.msra.mxu0 %v1733
        %2113 = vmatprep.subr.bf16.mxu0 %v1726
        %2114 = vmatpush1.bf16.msra.mxu0 %v1725
        %2115 = vmatprep.subr.bf16.mxu0 %v1718
        %2116 = vmatpush1.bf16.msra.mxu0 %v1717
        %2117 = vmatprep.subr.bf16.mxu0 %v1710
        %2118 = vmatpush1.bf16.msra.mxu0 %v1709
        %2119 = vmatprep.subr.bf16.mxu0 %v1702
        %2120 = vmatpush1.bf16.msra.mxu0 %v1701
        %2121 = vmatprep.subr.bf16.mxu0 %v1694
        %2122 = vmatpush1.bf16.msra.mxu0 %v1693
        %2123 = vmatprep.subr.bf16.mxu0 0
        %2124 = vmatpush2.bf16.msra.mxu0 0
        %2125 = vmatprep.subr.bf16.mxu0 0
        %2126 = vmatpush2.bf16.msra.mxu0 0
        %2127 = vmatprep.subr.bf16.mxu0 0
        %2128 = vmatpush2.bf16.msra.mxu0 0
        %2129 = vmatprep.subr.bf16.mxu0 0
        %2130 = vmatpush2.bf16.msra.mxu0 0
        %2131 = vmatprep.subr.bf16.mxu0 0
        %2132 = vmatpush2.bf16.msra.mxu0 0
        %2133 = vmatprep.subr.bf16.mxu0 0
        %2134 = vmatpush2.bf16.msra.mxu0 0
        %2135 = vmatprep.subr.bf16.mxu0 0
        %2136 = vmatpush2.bf16.msra.mxu0 0
        %2137 = vmatprep.subr.bf16.mxu0 %v1970
        %2138 = vmatpush2.bf16.msra.mxu0 %v1967
        %2139 = vmatprep.mubr.bf16.mxu0 %v1957
        %2140 = vmatmul.mubr.bf16.gmra.mxu0 %v969
        %v2141 = vpop.f32.mrf.mxu0
        %v2142 = vadd.f32 %v2101, %v2141
        %v2143 = vpop.f32.mrf.mxu0
        %v2144 = vadd.f32 %v2103, %v2143
        %v2145 = vpop.f32.mrf.mxu0
        %v2146 = vpop.f32.mrf.mxu0
        %2147 = vdwg.mxu0
        %2148 = vmatprep.subr.bf16.mxu0 %v1624
        %2149 = vmatpush1.bf16.msra.mxu0 %v1623
        %2150 = vmatprep.subr.bf16.mxu0 %v1616
        %2151 = vmatpush1.bf16.msra.mxu0 %v1615
        %2152 = vmatprep.subr.bf16.mxu0 %v1608
        %2153 = vmatpush1.bf16.msra.mxu0 %v1607
        %2154 = vmatprep.subr.bf16.mxu0 %v1600
        %2155 = vmatpush1.bf16.msra.mxu0 %v1599
        %2156 = vmatprep.subr.bf16.mxu0 %v1592
        %2157 = vmatpush1.bf16.msra.mxu0 %v1591
        %2158 = vmatprep.subr.bf16.mxu0 %v1584
        %2159 = vmatpush1.bf16.msra.mxu0 %v1583
        %2160 = vmatprep.subr.bf16.mxu0 %v1576
        %2161 = vmatpush1.bf16.msra.mxu0 %v1575
        %2162 = vmatprep.subr.bf16.mxu0 %v1568
        %2163 = vmatpush1.bf16.msra.mxu0 %v1567
        %2164 = vmatprep.subr.bf16.mxu0 %v1688
        %2165 = vmatpush2.bf16.msra.mxu0 %v1687
        %2166 = vmatprep.subr.bf16.mxu0 %v1680
        %2167 = vmatpush2.bf16.msra.mxu0 %v1679
        %2168 = vmatprep.subr.bf16.mxu0 %v1672
        %2169 = vmatpush2.bf16.msra.mxu0 %v1671
        %2170 = vmatprep.subr.bf16.mxu0 %v1664
        %2171 = vmatpush2.bf16.msra.mxu0 %v1663
        %2172 = vmatprep.subr.bf16.mxu0 %v1656
        %2173 = vmatpush2.bf16.msra.mxu0 %v1655
        %2174 = vmatprep.subr.bf16.mxu0 %v1648
        %2175 = vmatpush2.bf16.msra.mxu0 %v1647
        %2176 = vmatprep.subr.bf16.mxu0 %v1640
        %2177 = vmatpush2.bf16.msra.mxu0 %v1639
        %2178 = vmatprep.subr.bf16.mxu0 %v1632
        %2179 = vmatpush2.bf16.msra.mxu0 %v1631
        %2180 = vmatprep.mubr.bf16.mxu0 %v970
        %2181 = vmatmul.mubr.bf16.gmra.mxu0 %v962
        %v2182 = vpop.f32.mrf.mxu0
        %v2183 = vadd.f32 %v952, %v2182
        %v2184 = vpop.f32.mrf.mxu0
        %v2185 = vadd.f32 %v952, %v2184
        %v2186 = vpop.f32.mrf.mxu0
        %v2187 = vpop.f32.mrf.mxu0
        %2188 = vdwg.mxu0
        %2189 = vmatprep.subr.bf16.mxu0 %v1752
        %2190 = vmatpush1.bf16.msra.mxu0 %v1751
        %2191 = vmatprep.subr.bf16.mxu0 %v1744
        %2192 = vmatpush1.bf16.msra.mxu0 %v1743
        %2193 = vmatprep.subr.bf16.mxu0 %v1736
        %2194 = vmatpush1.bf16.msra.mxu0 %v1735
        %2195 = vmatprep.subr.bf16.mxu0 %v1728
        %2196 = vmatpush1.bf16.msra.mxu0 %v1727
        %2197 = vmatprep.subr.bf16.mxu0 %v1720
        %2198 = vmatpush1.bf16.msra.mxu0 %v1719
        %2199 = vmatprep.subr.bf16.mxu0 %v1712
        %2200 = vmatpush1.bf16.msra.mxu0 %v1711
        %2201 = vmatprep.subr.bf16.mxu0 %v1704
        %2202 = vmatpush1.bf16.msra.mxu0 %v1703
        %2203 = vmatprep.subr.bf16.mxu0 %v1696
        %2204 = vmatpush1.bf16.msra.mxu0 %v1695
        %2205 = vmatprep.subr.bf16.mxu0 0
        %2206 = vmatpush2.bf16.msra.mxu0 0
        %2207 = vmatprep.subr.bf16.mxu0 0
        %2208 = vmatpush2.bf16.msra.mxu0 0
        %2209 = vmatprep.subr.bf16.mxu0 0
        %2210 = vmatpush2.bf16.msra.mxu0 0
        %2211 = vmatprep.subr.bf16.mxu0 0
        %2212 = vmatpush2.bf16.msra.mxu0 0
        %2213 = vmatprep.subr.bf16.mxu0 0
        %2214 = vmatpush2.bf16.msra.mxu0 0
        %2215 = vmatprep.subr.bf16.mxu0 0
        %2216 = vmatpush2.bf16.msra.mxu0 0
        %2217 = vmatprep.subr.bf16.mxu0 0
        %2218 = vmatpush2.bf16.msra.mxu0 0
        %2219 = vmatprep.subr.bf16.mxu0 %v1976
        %2220 = vmatpush2.bf16.msra.mxu0 %v1973
        %2221 = vmatprep.mubr.bf16.mxu0 %v1957
        %2222 = vmatmul.mubr.bf16.gmra.mxu0 %v969
        %v2223 = vpop.f32.mrf.mxu0
        %v2224 = vadd.f32 %v2183, %v2223
        %v2225 = vpop.f32.mrf.mxu0
        %v2226 = vadd.f32 %v2185, %v2225
        %v2227 = vpop.f32.mrf.mxu0
        %v2228 = vpop.f32.mrf.mxu0
        %2229 = vdwg.mxu0
        %2230 = vmatprep.subr.bf16.mxu0 %v1626
        %2231 = vmatpush1.bf16.msra.mxu0 %v1625
        %2232 = vmatprep.subr.bf16.mxu0 %v1618
        %2233 = vmatpush1.bf16.msra.mxu0 %v1617
        %2234 = vmatprep.subr.bf16.mxu0 %v1610
        %2235 = vmatpush1.bf16.msra.mxu0 %v1609
        %2236 = vmatprep.subr.bf16.mxu0 %v1602
        %2237 = vmatpush1.bf16.msra.mxu0 %v1601
        %2238 = vmatprep.subr.bf16.mxu0 %v1594
        %2239 = vmatpush1.bf16.msra.mxu0 %v1593
        %2240 = vmatprep.subr.bf16.mxu0 %v1586
        %2241 = vmatpush1.bf16.msra.mxu0 %v1585
        %2242 = vmatprep.subr.bf16.mxu0 %v1578
        %2243 = vmatpush1.bf16.msra.mxu0 %v1577
        %2244 = vmatprep.subr.bf16.mxu0 %v1570
        %2245 = vmatpush1.bf16.msra.mxu0 %v1569
        %2246 = vmatprep.subr.bf16.mxu0 %v1690
        %2247 = vmatpush2.bf16.msra.mxu0 %v1689
        %2248 = vmatprep.subr.bf16.mxu0 %v1682
        %2249 = vmatpush2.bf16.msra.mxu0 %v1681
        %2250 = vmatprep.subr.bf16.mxu0 %v1674
        %2251 = vmatpush2.bf16.msra.mxu0 %v1673
        %2252 = vmatprep.subr.bf16.mxu0 %v1666
        %2253 = vmatpush2.bf16.msra.mxu0 %v1665
        %2254 = vmatprep.subr.bf16.mxu0 %v1658
        %2255 = vmatpush2.bf16.msra.mxu0 %v1657
        %2256 = vmatprep.subr.bf16.mxu0 %v1650
        %2257 = vmatpush2.bf16.msra.mxu0 %v1649
        %2258 = vmatprep.subr.bf16.mxu0 %v1642
        %2259 = vmatpush2.bf16.msra.mxu0 %v1641
        %2260 = vmatprep.subr.bf16.mxu0 %v1634
        %2261 = vmatpush2.bf16.msra.mxu0 %v1633
        %2262 = vmatprep.mubr.bf16.mxu0 %v970
        %2263 = vmatmul.mubr.bf16.gmra.mxu0 %v962
        %v2264 = vpop.f32.mrf.mxu0
        %v2265 = vadd.f32 %v952, %v2264
        %v2266 = vpop.f32.mrf.mxu0
        %v2267 = vadd.f32 %v952, %v2266
        %v2268 = vpop.f32.mrf.mxu0
        %v2269 = vpop.f32.mrf.mxu0
        %2270 = vdwg.mxu0
        %2271 = vmatprep.subr.bf16.mxu0 %v1754
        %2272 = vmatpush1.bf16.msra.mxu0 %v1753
        %2273 = vmatprep.subr.bf16.mxu0 %v1746
        %2274 = vmatpush1.bf16.msra.mxu0 %v1745
        %2275 = vmatprep.subr.bf16.mxu0 %v1738
        %2276 = vmatpush1.bf16.msra.mxu0 %v1737
        %2277 = vmatprep.subr.bf16.mxu0 %v1730
        %2278 = vmatpush1.bf16.msra.mxu0 %v1729
        %2279 = vmatprep.subr.bf16.mxu0 %v1722
        %2280 = vmatpush1.bf16.msra.mxu0 %v1721
        %2281 = vmatprep.subr.bf16.mxu0 %v1714
        %2282 = vmatpush1.bf16.msra.mxu0 %v1713
        %2283 = vmatprep.subr.bf16.mxu0 %v1706
        %2284 = vmatpush1.bf16.msra.mxu0 %v1705
        %2285 = vmatprep.subr.bf16.mxu0 %v1698
        %2286 = vmatpush1.bf16.msra.mxu0 %v1697
        %2287 = vmatprep.subr.bf16.mxu0 0
        %2288 = vmatpush2.bf16.msra.mxu0 0
        %2289 = vmatprep.subr.bf16.mxu0 0
        %2290 = vmatpush2.bf16.msra.mxu0 0
        %2291 = vmatprep.subr.bf16.mxu0 0
        %2292 = vmatpush2.bf16.msra.mxu0 0
        %2293 = vmatprep.subr.bf16.mxu0 0
        %2294 = vmatpush2.bf16.msra.mxu0 0
        %2295 = vmatprep.subr.bf16.mxu0 0
        %2296 = vmatpush2.bf16.msra.mxu0 0
        %2297 = vmatprep.subr.bf16.mxu0 0
        %2298 = vmatpush2.bf16.msra.mxu0 0
        %2299 = vmatprep.subr.bf16.mxu0 0
        %2300 = vmatpush2.bf16.msra.mxu0 0
        %2301 = vmatprep.subr.bf16.mxu0 %v1982
        %2302 = vmatpush2.bf16.msra.mxu0 %v1979
        %2303 = vmatprep.mubr.bf16.mxu0 %v1957
        %2304 = vmatmul.mubr.bf16.gmra.mxu0 %v969
        %v2305 = vpop.f32.mrf.mxu0
        %v2306 = vadd.f32 %v2265, %v2305
        %v2307 = vpop.f32.mrf.mxu0
        %v2308 = vadd.f32 %v2267, %v2307
        %v2309 = vpop.f32.mrf.mxu0
        %v2310 = vpop.f32.mrf.mxu0
        %2311 = vdwg.mxu0
        %v2312 = vld [vmem:[%s731] sm:$0xff]
        %v2313 = vxor.u32 %v2060, 2147483648
        %v2314 = vxor.u32 %v2062, 2147483648
        %v2315 = vxor.u32 %v2142, 2147483648
        %v2316 = vxor.u32 %v2144, 2147483648
        %v2317 = vxor.u32 %v2224, 2147483648
        %v2318 = vxor.u32 %v2226, 2147483648
        %v2319 = vxor.u32 %v2306, 2147483648
        %v2320 = vxor.u32 %v2308, 2147483648
        %v2321 = vmul.f32 %v2313, 1.442695
        %v2322 = vpow.pop %v2321
        %v2323 = vmul.f32 %v2314, 1.442695
        %v2324 = vpow.pop %v2323
        %v2325 = vmul.f32 %v2315, 1.442695
        %v2326 = vpow.pop %v2325
        %v2327 = vmul.f32 %v2316, 1.442695
        %v2328 = vpow.pop %v2327
        %v2329 = vmul.f32 %v2317, 1.442695
        %v2330 = vpow.pop %v2329
        %v2331 = vmul.f32 %v2318, 1.442695
        %v2332 = vpow.pop %v2331
        %v2333 = vmul.f32 %v2319, 1.442695
        %v2334 = vpow.pop %v2333
        %v2335 = vmul.f32 %v2320, 1.442695
        %v2336 = vpow.pop %v2335
        %v2337 = vadd.f32 %v2322, 1.0
        %v2338 = vadd.f32 %v2324, 1.0
        %v2339 = vadd.f32 %v2326, 1.0
        %v2340 = vadd.f32 %v2328, 1.0
        %v2341 = vadd.f32 %v2330, 1.0
        %v2342 = vadd.f32 %v2332, 1.0
        %v2343 = vadd.f32 %v2334, 1.0
        %v2344 = vadd.f32 %v2336, 1.0
        %v2345 = vrcp.pop %v2337
        %v2346 = vmul.f32 1.0, %v2345
        %v2347 = vrcp.pop %v2338
        %v2348 = vmul.f32 1.0, %v2347
        %v2349 = vrcp.pop %v2339
        %v2350 = vmul.f32 1.0, %v2349
        %v2351 = vrcp.pop %v2340
        %v2352 = vmul.f32 1.0, %v2351
        %v2353 = vrcp.pop %v2341
        %v2354 = vmul.f32 1.0, %v2353
        %v2355 = vrcp.pop %v2342
        %v2356 = vmul.f32 1.0, %v2355
        %v2357 = vrcp.pop %v2343
        %v2358 = vmul.f32 1.0, %v2357
        %v2359 = vrcp.pop %v2344
        %v2360 = vmul.f32 1.0, %v2359
        %v2361 = vsub.f32 1.0, %v2312
        %v2363 = vlaneseq
        %v2364 = vshrl.u32 %v2363, 7
        %v2365 = vsub.s32 0, %v2364
        %v2366 = vrot.slane %v2361, %v2365
        %v2367 = vlaneseq
        %v2368 = vshrl.u32 %v2367, 7
        %v2369 = vsub.s32 1, %v2368
        %v2370 = vrot.slane %v2361, %v2369
        %v2371 = vlaneseq
        %v2372 = vshrl.u32 %v2371, 7
        %v2373 = vsub.s32 2, %v2372
        %v2374 = vrot.slane %v2361, %v2373
        %v2375 = vlaneseq
        %v2376 = vshrl.u32 %v2375, 7
        %v2377 = vsub.s32 3, %v2376
        %v2378 = vrot.slane %v2361, %v2377
        %v2379 = vlaneseq
        %v2380 = vshrl.u32 %v2379, 7
        %v2381 = vsub.s32 4, %v2380
        %v2382 = vrot.slane %v2361, %v2381
        %v2383 = vlaneseq
        %v2384 = vshrl.u32 %v2383, 7
        %v2385 = vsub.s32 5, %v2384
        %v2386 = vrot.slane %v2361, %v2385
        %v2387 = vlaneseq
        %v2388 = vshrl.u32 %v2387, 7
        %v2389 = vsub.s32 6, %v2388
        %v2390 = vrot.slane %v2361, %v2389
        %v2391 = vlaneseq
        %v2392 = vshrl.u32 %v2391, 7
        %v2393 = vsub.s32 7, %v2392
        %v2394 = vrot.slane %v2361, %v2393
        %v2403 = vmul.f32 %v2346, %v2366
        %v2404 = vmul.f32 %v2348, %v2370
        %v2405 = vmul.f32 %v2350, %v2374
        %v2406 = vmul.f32 %v2352, %v2378
        %v2407 = vmul.f32 %v2354, %v2382
        %v2408 = vmul.f32 %v2356, %v2386
        %v2409 = vmul.f32 %v2358, %v2390
        %v2410 = vmul.f32 %v2360, %v2394
        %v2411 = vld [vmem:[%s739] sm:$0xff]
        %v2412 = vld [vmem:[%s739 + $0x8] sm:$0xff]
        %v2413 = vunpack.c.l.bf16 %v2411
        %v2414 = vunpack.c.h.bf16 %v2411
        %v2415 = vunpack.c.l.bf16 %v2412
        %v2416 = vunpack.c.h.bf16 %v2412
        %v2418 = vlaneseq
        %v2419 = vshrl.u32 %v2418, 7
        %v2420 = vsub.s32 0, %v2419
        %v2421 = vrot.slane %v2312, %v2420
        %v2422 = vlaneseq
        %v2423 = vshrl.u32 %v2422, 7
        %v2424 = vsub.s32 1, %v2423
        %v2425 = vrot.slane %v2312, %v2424
        %v2426 = vlaneseq
        %v2427 = vshrl.u32 %v2426, 7
        %v2428 = vsub.s32 2, %v2427
        %v2429 = vrot.slane %v2312, %v2428
        %v2430 = vlaneseq
        %v2431 = vshrl.u32 %v2430, 7
        %v2432 = vsub.s32 3, %v2431
        %v2433 = vrot.slane %v2312, %v2432
        %v2434 = vlaneseq
        %v2435 = vshrl.u32 %v2434, 7
        %v2436 = vsub.s32 4, %v2435
        %v2437 = vrot.slane %v2312, %v2436
        %v2438 = vlaneseq
        %v2439 = vshrl.u32 %v2438, 7
        %v2440 = vsub.s32 5, %v2439
        %v2441 = vrot.slane %v2312, %v2440
        %v2442 = vlaneseq
        %v2443 = vshrl.u32 %v2442, 7
        %v2444 = vsub.s32 6, %v2443
        %v2445 = vrot.slane %v2312, %v2444
        %v2446 = vlaneseq
        %v2447 = vshrl.u32 %v2446, 7
        %v2448 = vsub.s32 7, %v2447
        %v2449 = vrot.slane %v2312, %v2448
        %v2450 = vcombine.low %v2421, %v2425
        %v2451 = vcombine.low %v2429, %v2433
        %v2452 = vcombine.low %v2437, %v2441
        %v2453 = vcombine.low %v2445, %v2449
        %v2458 = vmul.f32 %v2413, %v2450
        %v2459 = vmul.f32 %v2414, %v2451
        %v2460 = vmul.f32 %v2415, %v2452
        %v2461 = vmul.f32 %v2416, %v2453
        %v2466 = vcombine.high %v2458, %v2458
        %v2467 = vcombine.high %v2459, %v2459
        %v2468 = vcombine.high %v2460, %v2460
        %v2469 = vcombine.high %v2461, %v2461
        %v2474 = vadd.f32 %v2403, %v2458
        %v2475 = vadd.f32 %v2404, %v2466
        %v2476 = vadd.f32 %v2405, %v2459
        %v2477 = vadd.f32 %v2406, %v2467
        %v2478 = vadd.f32 %v2407, %v2460
        %v2479 = vadd.f32 %v2408, %v2468
        %v2480 = vadd.f32 %v2409, %v2461
        %v2481 = vadd.f32 %v2410, %v2469
        %v2490 = vcombine.low %v2474, %v2475
        %v2491 = vcombine.low %v2476, %v2477
        %v2492 = vcombine.low %v2478, %v2479
        %v2493 = vcombine.low %v2480, %v2481
        %2498 = vst [vmem:[%s747] sm:$0x77] %v2490
        %2499 = vst [vmem:[%s747 + $0x8] sm:$0x77] %v2491
        %2500 = vst [vmem:[%s747 + $0x10] sm:$0x77] %v2492
        %2501 = vst [vmem:[%s747 + $0x18] sm:$0x77] %v2493
        %s2502 = sadd.s32 %s20, %s21
        %s2503 = smul.u32 8, %s2502
        %p2504 = scmp.lt.s32.totalorder %s2503, 15
        %s2505 = scalar_select %p2504, %s2503, 15
        %s2506 = smul.addr %s2505, 4
        %s2507 = scalar_lea.vmem %s5, %s2506
        // Predicated region
        $region64: #{forward.27} parent=58 // pred_check
          %p2508 = pneg %p184
        $region65: #{forward.27} parent=58 // pred_check_branch
          %2510 = sbr.rel (%p2508) target = $region67
        $region66: #{forward.27} parent=58 // pred_region
          %s2511 = sadd.s32 %s20, %s21
          %s2512 = smul.u32 8, %s2511
        $region67: #{forward.27} parent=58 // pred_fallthru
          _
      $region59: #{forward.27} parent=5 // pred_fallthru
        _
      %p2513 = scmp.le.s32.totalorder 2, %s11
      // Predicated region
      $region68: #{forward.27} parent=5 // pred_check
        %p2514 = pneg %p2513
      $region69: #{forward.27} parent=5 // pred_check_branch
        %2516 = sbr.rel (%p2514) target = $region71
      $region70: #{forward.27} parent=5 // pred_region
        %s2517 = ssub.s32 %s11, 2
        // Predicated region
        $region72: #{forward.27} parent=70 // pred_check
          %p2518 = pneg %p190
        $region73: #{forward.27} parent=70 // pred_check_branch
          %2520 = sbr.rel (%p2518) target = $region75
        $region74: #{forward.27} parent=70 // pred_region
          %s2521 = sadd.s32 %s22, %s23
          %s2522 = smul.u32 8, %s2521
          %p2523 = scmp.lt.s32.totalorder %s2522, 15
          %s2524 = scalar_select %p2523, %s2522, 15
          %s2525 = smul.addr %s2524, 4
          %s2526 = scalar_lea.vmem %s5, %s2525
        $region75: #{forward.27} parent=70 // pred_fallthru
          _
      $region71: #{forward.27} parent=5 // pred_fallthru
        _
    $region6: #{forward.27} parent=1 // loop_footer
      %s15 = sadd.s32 1, %s11
    $region7: #{forward.27} parent=1 // loop_footer_branch
      %10 = sbr.rel target = $region3
    $region8: #{forward.27} parent=1 // loop_exit
      _

</llo_original>
